<compile_context>
chip_gen: v5e
topology: v5e:2x2
jax: 0.10.0
libtpu: 0.0.40
codegen_flags: <defaults>
</compile_context>

<pallas_src>
import functools

import jax
import jax.numpy as jnp
from jax import lax
from jax.experimental import pallas as pl
from jax.experimental.pallas import tpu as pltpu

_VMEM_LIMIT = 32 * 1024 * 1024    # plenty for the ~4-6 MB we use; safe on v5e/v6e/v7x


# ----------------------------------------------------------------------------
# Fully fused kernel: conv1+pool -> conv2+pool -> conv3 -> fc1 -> fc2
# ----------------------------------------------------------------------------
def _convnet_kernel(x_ref, w1_ref, b1_ref, w2_ref, b2_ref, w3_ref, b3_ref,
                    w1f_ref, b1f_ref, w2f_ref, b2f_ref, o_ref,
                    exp2_ref, act2_ref, *, nt):
    """One grid step processes `nt` images end to end.

    x_ref   : (nt, 1024, 32) bf16  conv1 im2col patches, rows ordered
              (dh*512 + dw*256 + hq*16 + wq), K = 27 taps padded to 32
    w1_ref  : (32, 32)        bf16  conv1 weights (K x 32out)
    w2_ref  : (5, 160, 64)    bf16  conv2 weights, (kw,C) folded into K=160 per kh
    w3_ref  : (9, 64, 64)     bf16  conv3 weights per tap
    w1f_ref : (4, 64, 64)     bf16  fc1 weights per conv3 output position
    w2f_ref : (64, 128)       bf16  fc2 weights (classes padded to 128 lanes)
    o_ref   : (nt, 128)       f32   logits (padded)
    exp2_ref: (nt, 16, 16, 160) bf16 scratch: conv2 input with kw*C folded into lanes
    act2_ref: (nt, 4, 4, 64)  bf16  scratch: pooled conv2 output
    """
    f32 = jnp.float32
    bf16 = jnp.bfloat16

    # ---- conv1 (k3, pad1) + bias + ReLU + MaxPool(2,2): ONE MXU matmul -------
    lhs1 = x_ref[...].reshape(nt * 1024, 32)
    r1 = jnp.dot(lhs1, w1_ref[...], preferred_element_type=f32)      # (nt*1024, 32)
    r1 = jnp.maximum(r1 + b1_ref[...], 0.0)
    r1 = r1.reshape(nt, 4, 256, 32)                                  # (n, dh*dw, hq*wq, c)
    p1 = jnp.maximum(jnp.maximum(r1[:, 0], r1[:, 1]),                # pool = max over the
                     jnp.maximum(r1[:, 2], r1[:, 3]))                # 4 contiguous blocks
    act1 = p1.reshape(nt, 16, 16, 32).astype(bf16)                   # (n, h1, w1, 32)

    # ---- conv2 (k5) with (kw, C) folded into K=160 via VMEM expansion --------
    # exp2[n, h1, w2, dj*32 + c] = act1[n, h1, w2 + dj, c];  w2 padded 12 -> 16.
    exp2_ref[:, :, 12:, :] = jnp.zeros((nt, 16, 4, 160), bf16)
    for dj in range(5):
        exp2_ref[:, :, 0:12, dj * 32:(dj + 1) * 32] = act1[:, :, dj:dj + 12, :]

    acc2 = jnp.zeros((nt * 12 * 16, 64), f32)
    for di in range(5):                                              # 5 matmuls, M=nt*192
        lhs2 = exp2_ref[:, di:di + 12, :, :].reshape(nt * 12 * 16, 160)
        acc2 = acc2 + jnp.dot(lhs2, w2_ref[di], preferred_element_type=f32)
    y2 = jnp.maximum(acc2 + b2_ref[...], 0.0).reshape(nt, 12, 16, 64)

    # ---- MaxPool(3,3) in vregs (padded w2 columns 12..15 are never read) -----
    for hp in range(4):
        rmax = jnp.maximum(jnp.maximum(y2[:, 3 * hp], y2[:, 3 * hp + 1]),
                           y2[:, 3 * hp + 2])                        # (nt, 16, 64)
        for wp in range(4):
            v = jnp.maximum(jnp.maximum(rmax[:, 3 * wp, :], rmax[:, 3 * wp + 1, :]),
                            rmax[:, 3 * wp + 2, :])                  # (nt, 64)
            act2_ref[:, hp, wp, :] = v.astype(bf16)

    # ---- conv3 (k3) + ReLU fused directly into the fc1 accumulation ----------
    fc1_acc = jnp.zeros((nt, 64), f32)
    for h3 in range(2):
        for w3 in range(2):
            acc3 = jnp.zeros((nt, 64), f32)
            for di in range(3):
                for dj in range(3):
                    acc3 = acc3 + jnp.dot(act2_ref[:, h3 + di, w3 + dj, :],
                                          w3_ref[di * 3 + dj],
                                          preferred_element_type=f32)
            y3 = jnp.maximum(acc3 + b3_ref[...], 0.0).astype(bf16)   # (nt, 64)
            fc1_acc = fc1_acc + jnp.dot(y3, w1f_ref[h3 * 2 + w3],
                                        preferred_element_type=f32)

    # ---- fc1 ReLU + fc2 (hidden layer never leaves vregs) --------------------
    h = jnp.maximum(fc1_acc + b1f_ref[...], 0.0).astype(bf16)        # (nt, 64)
    o_ref[...] = jnp.dot(h, w2f_ref[...], preferred_element_type=f32) + b2f_ref[...]


# ----------------------------------------------------------------------------
# Parameter preparation (runs ONCE at init, hoisted out of the forward pass)
# ----------------------------------------------------------------------------
def prepare_params(params):
    """PyTorch-layout parameters -> kernel-layout (bf16 weights, f32 biases)."""
    n_classes = params["f2w"].shape[0]
    # conv1 (32, 3, 3, 3) -> (27, 32), K padded to 32 (tap index di*9 + dj*3 + c).
    w1 = jnp.transpose(params["c1w"], (2, 3, 1, 0)).reshape(27, 32)
    w1 = jnp.pad(w1, ((0, 5), (0, 0))).astype(jnp.bfloat16)
    b1 = params["c1b"].reshape(1, 32).astype(jnp.float32)
    # conv2 (64, 32, 5, 5) -> (5, 160, 64): per kh row, K = kw*C = 160.
    w2 = jnp.transpose(params["c2w"], (2, 3, 1, 0)).reshape(5, 160, 64).astype(jnp.bfloat16)
    b2 = params["c2b"].reshape(1, 64).astype(jnp.float32)
    # conv3 (64, 64, 3, 3) -> (9, 64, 64): one (64, 64) matrix per tap.
    w3 = jnp.transpose(params["c3w"], (2, 3, 1, 0)).reshape(9, 64, 64).astype(jnp.bfloat16)
    b3 = params["c3b"].reshape(1, 64).astype(jnp.float32)
    # fc1 (64, 256): PyTorch flatten order is (c, h3, w3) -> split per position p=(h3,w3).
    w1f = jnp.transpose(params["f1w"].reshape(64, 64, 2, 2), (2, 3, 1, 0))
    w1f = w1f.reshape(4, 64, 64).astype(jnp.bfloat16)
    b1f = params["f1b"].reshape(1, 64).astype(jnp.float32)
    # fc2 (n_classes, 64) -> (64, 128): classes padded to a full lane width.
    w2f = jnp.pad(params["f2w"].T, ((0, 0), (0, 128 - n_classes))).astype(jnp.bfloat16)
    b2f = jnp.pad(params["f2b"], (0, 128 - n_classes)).reshape(1, 128).astype(jnp.float32)
    return dict(w1=w1, b1=b1, w2=w2, b2=b2, w3=w3, b3=b3,
                w1f=w1f, b1f=b1f, w2f=w2f, b2f=b2f)


# ----------------------------------------------------------------------------
# Forward pass
# ----------------------------------------------------------------------------
def convnet_forward(x, prep, n_classes):
    """x: (B, 3, 32, 32) f32 NCHW (PyTorch layout). Returns (B, n_classes) f32."""
    B = x.shape[0]
    nt = 8 if B >= 8 else B                      # images per grid step
    bp = ((B + nt - 1) // nt) * nt               # pad batch to a multiple of nt

    # Boundary prep (XLA, once per call): NCHW->NHWC, bf16, spatial pad, then the
    # conv1 im2col (K = 27 -> 32) in a pool-friendly row order so conv1+pool is a
    # single matmul followed by a max over 4 contiguous row blocks.
    xh = jnp.transpose(x, (0, 2, 3, 1)).astype(jnp.bfloat16)
    if bp != B:
        xh = jnp.pad(xh, ((0, bp - B), (0, 0), (0, 0), (0, 0)))
    xp = jnp.pad(xh, ((0, 0), (1, 1), (1, 1), (0, 0)))               # (bp, 34, 34, 3)
    cols = [xp[:, di:di + 32, dj:dj + 32, :] for di in range(3) for dj in range(3)]
    p = jnp.concatenate(cols, axis=-1)                               # (bp, 32, 32, 27)
    p = jnp.pad(p, ((0, 0), (0, 0), (0, 0), (0, 5)))                 # K -> 32
    # h = 2*hq + dh, w = 2*wq + dw  ->  rows ordered (dh, dw, hq, wq)
    p = p.reshape(bp, 16, 2, 16, 2, 32).transpose(0, 2, 4, 1, 3, 5).reshape(bp, 1024, 32)

    # Honest cost estimate from the real (unpadded-K) problem.
    flops = 2 * bp * (32 * 32 * 27 * 32 + 12 * 12 * (25 * 32) * 64
                      + 4 * (9 * 64) * 64 + 256 * 64 + 64 * 128)
    w_bytes = sum(int(v.size) * v.dtype.itemsize for v in prep.values())
    bytes_accessed = int(p.size) * 2 + w_bytes + bp * 128 * 4

    kern = functools.partial(_convnet_kernel, nt=nt)
    out = pl.pallas_call(
        kern,
        out_shape=jax.ShapeDtypeStruct((bp, 128), jnp.float32),
        grid=(bp // nt,),
        in_specs=[
            pl.BlockSpec((nt, 1024, 32), lambda i: (i, 0, 0)),       # per-tile patches
            pl.BlockSpec((32, 32), lambda i: (0, 0)),                # resident weights
            pl.BlockSpec((1, 32), lambda i: (0, 0)),
            pl.BlockSpec((5, 160, 64), lambda i: (0, 0, 0)),
            pl.BlockSpec((1, 64), lambda i: (0, 0)),
            pl.BlockSpec((9, 64, 64), lambda i: (0, 0, 0)),
            pl.BlockSpec((1, 64), lambda i: (0, 0)),
            pl.BlockSpec((4, 64, 64), lambda i: (0, 0, 0)),
            pl.BlockSpec((1, 64), lambda i: (0, 0)),
            pl.BlockSpec((64, 128), lambda i: (0, 0)),
            pl.BlockSpec((1, 128), lambda i: (0, 0)),
        ],
        out_specs=pl.BlockSpec((nt, 128), lambda i: (i, 0)),
        scratch_shapes=[
            pltpu.VMEM((nt, 16, 16, 160), jnp.bfloat16),             # conv2 folded-K input
            pltpu.VMEM((nt, 4, 4, 64), jnp.bfloat16),                # pooled conv2 output
        ],
        compiler_params=pltpu.CompilerParams(
            dimension_semantics=("parallel",),
            vmem_limit_bytes=_VMEM_LIMIT),
        cost_estimate=pl.CostEstimate(flops=flops, transcendentals=0,
                                      bytes_accessed=bytes_accessed),
    )(p, prep["w1"], prep["b1"], prep["w2"], prep["b2"], prep["w3"], prep["b3"],
      prep["w1f"], prep["b1f"], prep["w2f"], prep["b2f"])
    return out[:B, :n_classes]


# ----------------------------------------------------------------------------
# Pure-JAX reference (PyTorch semantics) and test harness
# ----------------------------------------------------------------------------
def convnet_reference(x, params):
    def conv(x, w, b, pad):
        y = lax.conv_general_dilated(x, w, (1, 1), [(pad, pad), (pad, pad)],
                                     dimension_numbers=("NCHW", "OIHW", "NCHW"))
        return y + b[None, :, None, None]

    def pool(x, k):
        return lax.reduce_window(x, -jnp.inf, lax.max,
                                 (1, 1, k, k), (1, 1, k, k), "VALID")

    x = jax.nn.relu(conv(x, params["c1w"], params["c1b"], 1))
    x = pool(x, 2)
    x = jax.nn.relu(conv(x, params["c2w"], params["c2b"], 0))
    x = pool(x, 3)
    x = jax.nn.relu(conv(x, params["c3w"], params["c3b"], 0))
    x = x.reshape(x.shape[0], -1)
    x = jax.nn.relu(x @ params["f1w"].T + params["f1b"])
    return x @ params["f2w"].T + params["f2b"]


def init_params(key, n_classes):
    ks = jax.random.split(key, 10)
    s = 0.05
    return {
        "c1w": s * jax.random.normal(ks[0], (32, 3, 3, 3), jnp.float32),
        "c1b": s * jax.random.normal(ks[1], (32,), jnp.float32),
        "c2w": s * jax.random.normal(ks[2], (64, 32, 5, 5), jnp.float32),
        "c2b": s * jax.random.normal(ks[3], (64,), jnp.float32),
        "c3w": s * jax.random.normal(ks[4], (64, 64, 3, 3), jnp.float32),
        "c3b": s * jax.random.normal(ks[5], (64,), jnp.float32),
        "f1w": s * jax.random.normal(ks[6], (64, 64 * 2 * 2), jnp.float32),
        "f1b": s * jax.random.normal(ks[7], (64,), jnp.float32),
        "f2w": s * jax.random.normal(ks[8], (n_classes, 64), jnp.float32),
        "f2b": s * jax.random.normal(ks[9], (n_classes,), jnp.float32),
    }


if __name__ == "__main__":
    n_classes = 10
    key = jax.random.PRNGKey(0)
    kx, kp = jax.random.split(key)
    # Flatten(64*2*2) in the module implies 3x32x32 inputs (CIFAR); batch=2.
    x = jax.random.normal(kx, (2, 3, 32, 32), jnp.float32)
    params = init_params(kp, n_classes)

    prep = prepare_params(params)                       # hoisted: runs once at init
    fwd = jax.jit(functools.partial(convnet_forward, n_classes=n_classes))
    out = jax.block_until_ready(fwd(x, prep))
    assert out.shape == (2, n_classes), out.shape

    # Correctness check vs a pure-JAX f32 reference (bf16 MXU inputs -> loose tol).
    ref = convnet_reference(x, params)
    err = float(jnp.max(jnp.abs(out - ref)))
    assert err < 5e-2, f"max |pallas - reference| = {err}"

    print("KERNEL_OK")
</pallas_src>

<mosaic_0001>
module attributes {stable_mosaic.version = 11 : i64} {
  func.func @_convnet_kernel(%arg0: i32, %arg1: memref<2x1024x32xbf16, #tpu.memory_space<vmem>>, %arg2: memref<32x32xbf16, #tpu.memory_space<vmem>>, %arg3: memref<1x32xf32, #tpu.memory_space<vmem>>, %arg4: memref<5x160x64xbf16, #tpu.memory_space<vmem>>, %arg5: memref<1x64xf32, #tpu.memory_space<vmem>>, %arg6: memref<9x64x64xbf16, #tpu.memory_space<vmem>>, %arg7: memref<1x64xf32, #tpu.memory_space<vmem>>, %arg8: memref<4x64x64xbf16, #tpu.memory_space<vmem>>, %arg9: memref<1x64xf32, #tpu.memory_space<vmem>>, %arg10: memref<64x128xbf16, #tpu.memory_space<vmem>>, %arg11: memref<1x128xf32, #tpu.memory_space<vmem>>, %arg12: memref<2x128xf32, #tpu.memory_space<vmem>>, %arg13: memref<2x16x16x160xbf16, #tpu.memory_space<vmem>>, %arg14: memref<2x4x4x64xbf16, #tpu.memory_space<vmem>>) attributes {dimension_semantics = [#tpu.dimension_semantics<parallel>], iteration_bounds = array<i64: 1>, scalar_prefetch = 0 : i64, scratch_operands = 2 : i64, tpu.core_type = #tpu.core_type<tc>, window_params = [{transform_indices = @transform_0, window_bounds = array<i64: 2, 1024, 32>}, {pipeline_mode = #tpu.pipeline_mode<synchronous>, transform_indices = @transform_1, window_bounds = array<i64: 32, 32>}, {pipeline_mode = #tpu.pipeline_mode<synchronous>, transform_indices = @transform_2, window_bounds = array<i64: 1, 32>}, {pipeline_mode = #tpu.pipeline_mode<synchronous>, transform_indices = @transform_3, window_bounds = array<i64: 5, 160, 64>}, {pipeline_mode = #tpu.pipeline_mode<synchronous>, transform_indices = @transform_4, window_bounds = array<i64: 1, 64>}, {pipeline_mode = #tpu.pipeline_mode<synchronous>, transform_indices = @transform_5, window_bounds = array<i64: 9, 64, 64>}, {pipeline_mode = #tpu.pipeline_mode<synchronous>, transform_indices = @transform_6, window_bounds = array<i64: 1, 64>}, {pipeline_mode = #tpu.pipeline_mode<synchronous>, transform_indices = @transform_7, window_bounds = array<i64: 4, 64, 64>}, {pipeline_mode = #tpu.pipeline_mode<synchronous>, transform_indices = @transform_8, window_bounds = array<i64: 1, 64>}, {pipeline_mode = #tpu.pipeline_mode<synchronous>, transform_indices = @transform_9, window_bounds = array<i64: 64, 128>}, {pipeline_mode = #tpu.pipeline_mode<synchronous>, transform_indices = @transform_10, window_bounds = array<i64: 1, 128>}, {transform_indices = @transform_11, window_bounds = array<i64: 2, 128>}]} {
    %c0 = arith.constant 0 : index
    %c0_0 = arith.constant 0 : index
    %c0_1 = arith.constant 0 : index
    %0 = vector.load %arg1[%c0, %c0_0, %c0_1] : memref<2x1024x32xbf16, #tpu.memory_space<vmem>>, vector<2x1024x32xbf16>
    %1 = vector.shape_cast %0 : vector<2x1024x32xbf16> to vector<2048x32xbf16>
    %c0_2 = arith.constant 0 : index
    %c0_3 = arith.constant 0 : index
    %2 = vector.load %arg2[%c0_2, %c0_3] : memref<32x32xbf16, #tpu.memory_space<vmem>>, vector<32x32xbf16>
    %cst = arith.constant dense<0.000000e+00> : vector<2048x32xf32>
    %3 = tpu.matmul %1, %2, %cst {dimension_numbers = #tpu.dot_dimension_numbers<[1], [0], [0], [1], [0, 0, 1, 1], [], []>} : vector<2048x32xbf16>, vector<32x32xbf16>, vector<2048x32xf32> -> vector<2048x32xf32>
    %c0_4 = arith.constant 0 : index
    %c0_5 = arith.constant 0 : index
    %4 = vector.load %arg3[%c0_4, %c0_5] : memref<1x32xf32, #tpu.memory_space<vmem>>, vector<1x32xf32>
    %5 = vector.broadcast %4 : vector<1x32xf32> to vector<2048x32xf32>
    %6 = arith.addf %3, %5 : vector<2048x32xf32>
    %cst_6 = arith.constant 0.000000e+00 : f32
    %7 = vector.broadcast %cst_6 : f32 to vector<2048x32xf32>
    %8 = arith.maximumf %6, %7 : vector<2048x32xf32>
    %9 = vector.shape_cast %8 : vector<2048x32xf32> to vector<2x4x256x32xf32>
    %10 = vector.extract_strided_slice %9 {offsets = [0, 0, 0, 0], sizes = [2, 1, 256, 32], strides = [1, 1, 1, 1]} : vector<2x4x256x32xf32> to vector<2x1x256x32xf32>
    %11 = vector.shape_cast %10 : vector<2x1x256x32xf32> to vector<2x256x32xf32>
    %12 = vector.extract_strided_slice %9 {offsets = [0, 1, 0, 0], sizes = [2, 1, 256, 32], strides = [1, 1, 1, 1]} : vector<2x4x256x32xf32> to vector<2x1x256x32xf32>
    %13 = vector.shape_cast %12 : vector<2x1x256x32xf32> to vector<2x256x32xf32>
    %14 = arith.maximumf %11, %13 : vector<2x256x32xf32>
    %15 = vector.extract_strided_slice %9 {offsets = [0, 2, 0, 0], sizes = [2, 1, 256, 32], strides = [1, 1, 1, 1]} : vector<2x4x256x32xf32> to vector<2x1x256x32xf32>
    %16 = vector.shape_cast %15 : vector<2x1x256x32xf32> to vector<2x256x32xf32>
    %17 = vector.extract_strided_slice %9 {offsets = [0, 3, 0, 0], sizes = [2, 1, 256, 32], strides = [1, 1, 1, 1]} : vector<2x4x256x32xf32> to vector<2x1x256x32xf32>
    %18 = vector.shape_cast %17 : vector<2x1x256x32xf32> to vector<2x256x32xf32>
    %19 = arith.maximumf %16, %18 : vector<2x256x32xf32>
    %20 = arith.maximumf %14, %19 : vector<2x256x32xf32>
    %21 = vector.shape_cast %20 : vector<2x256x32xf32> to vector<2x16x16x32xf32>
    %22 = arith.truncf %21 : vector<2x16x16x32xf32> to vector<2x16x16x32xbf16>
    %cst_7 = arith.constant 0.000000e+00 : bf16
    %23 = vector.broadcast %cst_7 : bf16 to vector<2x16x4x160xbf16>
    %c0_8 = arith.constant 0 : index
    %c0_9 = arith.constant 0 : index
    %c12 = arith.constant 12 : index
    %c0_10 = arith.constant 0 : index
    %24 = vector.load %arg13[%c0_8, %c0_9, %c12, %c0_10] : memref<2x16x16x160xbf16, #tpu.memory_space<vmem>>, vector<2x16x4x160xbf16>
    tpu.vector_store %arg13[%c0_8, %c0_9, %c12, %c0_10], %23 {strides = array<i32>} : memref<2x16x16x160xbf16, #tpu.memory_space<vmem>>, vector<2x16x4x160xbf16>,
    %25 = vector.extract_strided_slice %22 {offsets = [0, 0, 0, 0], sizes = [2, 16, 12, 32], strides = [1, 1, 1, 1]} : vector<2x16x16x32xbf16> to vector<2x16x12x32xbf16>
    %c0_11 = arith.constant 0 : index
    %c0_12 = arith.constant 0 : index
    %c0_13 = arith.constant 0 : index
    %c0_14 = arith.constant 0 : index
    %26 = vector.load %arg13[%c0_11, %c0_12, %c0_13, %c0_14] : memref<2x16x16x160xbf16, #tpu.memory_space<vmem>>, vector<2x16x12x32xbf16>
    tpu.vector_store %arg13[%c0_11, %c0_12, %c0_13, %c0_14], %25 {strides = array<i32>} : memref<2x16x16x160xbf16, #tpu.memory_space<vmem>>, vector<2x16x12x32xbf16>,
    %27 = vector.extract_strided_slice %22 {offsets = [0, 0, 1, 0], sizes = [2, 16, 12, 32], strides = [1, 1, 1, 1]} : vector<2x16x16x32xbf16> to vector<2x16x12x32xbf16>
    %c0_15 = arith.constant 0 : index
    %c0_16 = arith.constant 0 : index
    %c0_17 = arith.constant 0 : index
    %c32 = arith.constant 32 : index
    %28 = vector.load %arg13[%c0_15, %c0_16, %c0_17, %c32] : memref<2x16x16x160xbf16, #tpu.memory_space<vmem>>, vector<2x16x12x32xbf16>
    tpu.vector_store %arg13[%c0_15, %c0_16, %c0_17, %c32], %27 {strides = array<i32>} : memref<2x16x16x160xbf16, #tpu.memory_space<vmem>>, vector<2x16x12x32xbf16>,
    %29 = vector.extract_strided_slice %22 {offsets = [0, 0, 2, 0], sizes = [2, 16, 12, 32], strides = [1, 1, 1, 1]} : vector<2x16x16x32xbf16> to vector<2x16x12x32xbf16>
    %c0_18 = arith.constant 0 : index
    %c0_19 = arith.constant 0 : index
    %c0_20 = arith.constant 0 : index
    %c64 = arith.constant 64 : index
    %30 = vector.load %arg13[%c0_18, %c0_19, %c0_20, %c64] : memref<2x16x16x160xbf16, #tpu.memory_space<vmem>>, vector<2x16x12x32xbf16>
    tpu.vector_store %arg13[%c0_18, %c0_19, %c0_20, %c64], %29 {strides = array<i32>} : memref<2x16x16x160xbf16, #tpu.memory_space<vmem>>, vector<2x16x12x32xbf16>,
    %31 = vector.extract_strided_slice %22 {offsets = [0, 0, 3, 0], sizes = [2, 16, 12, 32], strides = [1, 1, 1, 1]} : vector<2x16x16x32xbf16> to vector<2x16x12x32xbf16>
    %c0_21 = arith.constant 0 : index
    %c0_22 = arith.constant 0 : index
    %c0_23 = arith.constant 0 : index
    %c96 = arith.constant 96 : index
    %32 = vector.load %arg13[%c0_21, %c0_22, %c0_23, %c96] : memref<2x16x16x160xbf16, #tpu.memory_space<vmem>>, vector<2x16x12x32xbf16>
    tpu.vector_store %arg13[%c0_21, %c0_22, %c0_23, %c96], %31 {strides = array<i32>} : memref<2x16x16x160xbf16, #tpu.memory_space<vmem>>, vector<2x16x12x32xbf16>,
    %33 = vector.extract_strided_slice %22 {offsets = [0, 0, 4, 0], sizes = [2, 16, 12, 32], strides = [1, 1, 1, 1]} : vector<2x16x16x32xbf16> to vector<2x16x12x32xbf16>
    %c0_24 = arith.constant 0 : index
    %c0_25 = arith.constant 0 : index
    %c0_26 = arith.constant 0 : index
    %c128 = arith.constant 128 : index
    %34 = vector.load %arg13[%c0_24, %c0_25, %c0_26, %c128] : memref<2x16x16x160xbf16, #tpu.memory_space<vmem>>, vector<2x16x12x32xbf16>
    tpu.vector_store %arg13[%c0_24, %c0_25, %c0_26, %c128], %33 {strides = array<i32>} : memref<2x16x16x160xbf16, #tpu.memory_space<vmem>>, vector<2x16x12x32xbf16>,
    %cst_27 = arith.constant 0.000000e+00 : f32
    %35 = vector.broadcast %cst_27 : f32 to vector<384x64xf32>
    %c0_28 = arith.constant 0 : index
    %c0_29 = arith.constant 0 : index
    %c0_30 = arith.constant 0 : index
    %c0_31 = arith.constant 0 : index
    %36 = vector.load %arg13[%c0_28, %c0_29, %c0_30, %c0_31] : memref<2x16x16x160xbf16, #tpu.memory_space<vmem>>, vector<2x12x16x160xbf16>
    %37 = vector.shape_cast %36 : vector<2x12x16x160xbf16> to vector<384x160xbf16>
    %c0_32 = arith.constant 0 : index
    %c0_33 = arith.constant 0 : index
    %c0_34 = arith.constant 0 : index
    %38 = vector.load %arg4[%c0_32, %c0_33, %c0_34] : memref<5x160x64xbf16, #tpu.memory_space<vmem>>, vector<1x160x64xbf16>
    %39 = vector.shape_cast %38 : vector<1x160x64xbf16> to vector<160x64xbf16>
    %cst_35 = arith.constant dense<0.000000e+00> : vector<384x64xf32>
    %40 = tpu.matmul %37, %39, %cst_35 {dimension_numbers = #tpu.dot_dimension_numbers<[1], [0], [0], [1], [0, 0, 1, 1], [], []>} : vector<384x160xbf16>, vector<160x64xbf16>, vector<384x64xf32> -> vector<384x64xf32>
    %41 = arith.addf %35, %40 : vector<384x64xf32>
    %c0_36 = arith.constant 0 : index
    %c1 = arith.constant 1 : index
    %c0_37 = arith.constant 0 : index
    %c0_38 = arith.constant 0 : index
    %42 = vector.load %arg13[%c0_36, %c1, %c0_37, %c0_38] : memref<2x16x16x160xbf16, #tpu.memory_space<vmem>>, vector<2x12x16x160xbf16>
    %43 = vector.shape_cast %42 : vector<2x12x16x160xbf16> to vector<384x160xbf16>
    %c1_39 = arith.constant 1 : index
    %c0_40 = arith.constant 0 : index
    %c0_41 = arith.constant 0 : index
    %44 = vector.load %arg4[%c1_39, %c0_40, %c0_41] : memref<5x160x64xbf16, #tpu.memory_space<vmem>>, vector<1x160x64xbf16>
    %45 = vector.shape_cast %44 : vector<1x160x64xbf16> to vector<160x64xbf16>
    %cst_42 = arith.constant dense<0.000000e+00> : vector<384x64xf32>
    %46 = tpu.matmul %43, %45, %cst_42 {dimension_numbers = #tpu.dot_dimension_numbers<[1], [0], [0], [1], [0, 0, 1, 1], [], []>} : vector<384x160xbf16>, vector<160x64xbf16>, vector<384x64xf32> -> vector<384x64xf32>
    %47 = arith.addf %41, %46 : vector<384x64xf32>
    %c0_43 = arith.constant 0 : index
    %c2 = arith.constant 2 : index
    %c0_44 = arith.constant 0 : index
    %c0_45 = arith.constant 0 : index
    %48 = vector.load %arg13[%c0_43, %c2, %c0_44, %c0_45] : memref<2x16x16x160xbf16, #tpu.memory_space<vmem>>, vector<2x12x16x160xbf16>
    %49 = vector.shape_cast %48 : vector<2x12x16x160xbf16> to vector<384x160xbf16>
    %c2_46 = arith.constant 2 : index
    %c0_47 = arith.constant 0 : index
    %c0_48 = arith.constant 0 : index
    %50 = vector.load %arg4[%c2_46, %c0_47, %c0_48] : memref<5x160x64xbf16, #tpu.memory_space<vmem>>, vector<1x160x64xbf16>
    %51 = vector.shape_cast %50 : vector<1x160x64xbf16> to vector<160x64xbf16>
    %cst_49 = arith.constant dense<0.000000e+00> : vector<384x64xf32>
    %52 = tpu.matmul %49, %51, %cst_49 {dimension_numbers = #tpu.dot_dimension_numbers<[1], [0], [0], [1], [0, 0, 1, 1], [], []>} : vector<384x160xbf16>, vector<160x64xbf16>, vector<384x64xf32> -> vector<384x64xf32>
    %53 = arith.addf %47, %52 : vector<384x64xf32>
    %c0_50 = arith.constant 0 : index
    %c3 = arith.constant 3 : index
    %c0_51 = arith.constant 0 : index
    %c0_52 = arith.constant 0 : index
    %54 = vector.load %arg13[%c0_50, %c3, %c0_51, %c0_52] : memref<2x16x16x160xbf16, #tpu.memory_space<vmem>>, vector<2x12x16x160xbf16>
    %55 = vector.shape_cast %54 : vector<2x12x16x160xbf16> to vector<384x160xbf16>
    %c3_53 = arith.constant 3 : index
    %c0_54 = arith.constant 0 : index
    %c0_55 = arith.constant 0 : index
    %56 = vector.load %arg4[%c3_53, %c0_54, %c0_55] : memref<5x160x64xbf16, #tpu.memory_space<vmem>>, vector<1x160x64xbf16>
    %57 = vector.shape_cast %56 : vector<1x160x64xbf16> to vector<160x64xbf16>
    %cst_56 = arith.constant dense<0.000000e+00> : vector<384x64xf32>
    %58 = tpu.matmul %55, %57, %cst_56 {dimension_numbers = #tpu.dot_dimension_numbers<[1], [0], [0], [1], [0, 0, 1, 1], [], []>} : vector<384x160xbf16>, vector<160x64xbf16>, vector<384x64xf32> -> vector<384x64xf32>
    %59 = arith.addf %53, %58 : vector<384x64xf32>
    %c0_57 = arith.constant 0 : index
    %c4 = arith.constant 4 : index
    %c0_58 = arith.constant 0 : index
    %c0_59 = arith.constant 0 : index
    %60 = vector.load %arg13[%c0_57, %c4, %c0_58, %c0_59] : memref<2x16x16x160xbf16, #tpu.memory_space<vmem>>, vector<2x12x16x160xbf16>
    %61 = vector.shape_cast %60 : vector<2x12x16x160xbf16> to vector<384x160xbf16>
    %c4_60 = arith.constant 4 : index
    %c0_61 = arith.constant 0 : index
    %c0_62 = arith.constant 0 : index
    %62 = vector.load %arg4[%c4_60, %c0_61, %c0_62] : memref<5x160x64xbf16, #tpu.memory_space<vmem>>, vector<1x160x64xbf16>
    %63 = vector.shape_cast %62 : vector<1x160x64xbf16> to vector<160x64xbf16>
    %cst_63 = arith.constant dense<0.000000e+00> : vector<384x64xf32>
    %64 = tpu.matmul %61, %63, %cst_63 {dimension_numbers = #tpu.dot_dimension_numbers<[1], [0], [0], [1], [0, 0, 1, 1], [], []>} : vector<384x160xbf16>, vector<160x64xbf16>, vector<384x64xf32> -> vector<384x64xf32>
    %65 = arith.addf %59, %64 : vector<384x64xf32>
    %c0_64 = arith.constant 0 : index
    %c0_65 = arith.constant 0 : index
    %66 = vector.load %arg5[%c0_64, %c0_65] : memref<1x64xf32, #tpu.memory_space<vmem>>, vector<1x64xf32>
    %67 = vector.broadcast %66 : vector<1x64xf32> to vector<384x64xf32>
    %68 = arith.addf %65, %67 : vector<384x64xf32>
    %cst_66 = arith.constant 0.000000e+00 : f32
    %69 = vector.broadcast %cst_66 : f32 to vector<384x64xf32>
    %70 = arith.maximumf %68, %69 : vector<384x64xf32>
    %71 = vector.shape_cast %70 : vector<384x64xf32> to vector<2x12x16x64xf32>
    %72 = vector.extract_strided_slice %71 {offsets = [0, 0, 0, 0], sizes = [2, 1, 16, 64], strides = [1, 1, 1, 1]} : vector<2x12x16x64xf32> to vector<2x1x16x64xf32>
    %73 = vector.shape_cast %72 : vector<2x1x16x64xf32> to vector<2x16x64xf32>
    %74 = vector.extract_strided_slice %71 {offsets = [0, 1, 0, 0], sizes = [2, 1, 16, 64], strides = [1, 1, 1, 1]} : vector<2x12x16x64xf32> to vector<2x1x16x64xf32>
    %75 = vector.shape_cast %74 : vector<2x1x16x64xf32> to vector<2x16x64xf32>
    %76 = arith.maximumf %73, %75 : vector<2x16x64xf32>
    %77 = vector.extract_strided_slice %71 {offsets = [0, 2, 0, 0], sizes = [2, 1, 16, 64], strides = [1, 1, 1, 1]} : vector<2x12x16x64xf32> to vector<2x1x16x64xf32>
    %78 = vector.shape_cast %77 : vector<2x1x16x64xf32> to vector<2x16x64xf32>
    %79 = arith.maximumf %76, %78 : vector<2x16x64xf32>
    %80 = vector.extract_strided_slice %79 {offsets = [0, 0, 0], sizes = [2, 1, 64], strides = [1, 1, 1]} : vector<2x16x64xf32> to vector<2x1x64xf32>
    %81 = vector.shape_cast %80 : vector<2x1x64xf32> to vector<2x64xf32>
    %82 = vector.extract_strided_slice %79 {offsets = [0, 1, 0], sizes = [2, 1, 64], strides = [1, 1, 1]} : vector<2x16x64xf32> to vector<2x1x64xf32>
    %83 = vector.shape_cast %82 : vector<2x1x64xf32> to vector<2x64xf32>
    %84 = arith.maximumf %81, %83 : vector<2x64xf32>
    %85 = vector.extract_strided_slice %79 {offsets = [0, 2, 0], sizes = [2, 1, 64], strides = [1, 1, 1]} : vector<2x16x64xf32> to vector<2x1x64xf32>
    %86 = vector.shape_cast %85 : vector<2x1x64xf32> to vector<2x64xf32>
    %87 = arith.maximumf %84, %86 : vector<2x64xf32>
    %88 = arith.truncf %87 : vector<2x64xf32> to vector<2x64xbf16>
    %c0_67 = arith.constant 0 : index
    %c0_68 = arith.constant 0 : index
    %c0_69 = arith.constant 0 : index
    %c0_70 = arith.constant 0 : index
    %89 = vector.load %arg14[%c0_67, %c0_68, %c0_69, %c0_70] : memref<2x4x4x64xbf16, #tpu.memory_space<vmem>>, vector<2x1x1x64xbf16>
    %90 = vector.shape_cast %89 : vector<2x1x1x64xbf16> to vector<2x64xbf16>
    %91 = vector.shape_cast %88 : vector<2x64xbf16> to vector<2x1x1x64xbf16>
    tpu.vector_store %arg14[%c0_67, %c0_68, %c0_69, %c0_70], %91 {strides = array<i32>} : memref<2x4x4x64xbf16, #tpu.memory_space<vmem>>, vector<2x1x1x64xbf16>,
    %92 = vector.extract_strided_slice %79 {offsets = [0, 3, 0], sizes = [2, 1, 64], strides = [1, 1, 1]} : vector<2x16x64xf32> to vector<2x1x64xf32>
    %93 = vector.shape_cast %92 : vector<2x1x64xf32> to vector<2x64xf32>
    %94 = vector.extract_strided_slice %79 {offsets = [0, 4, 0], sizes = [2, 1, 64], strides = [1, 1, 1]} : vector<2x16x64xf32> to vector<2x1x64xf32>
    %95 = vector.shape_cast %94 : vector<2x1x64xf32> to vector<2x64xf32>
    %96 = arith.maximumf %93, %95 : vector<2x64xf32>
    %97 = vector.extract_strided_slice %79 {offsets = [0, 5, 0], sizes = [2, 1, 64], strides = [1, 1, 1]} : vector<2x16x64xf32> to vector<2x1x64xf32>
    %98 = vector.shape_cast %97 : vector<2x1x64xf32> to vector<2x64xf32>
    %99 = arith.maximumf %96, %98 : vector<2x64xf32>
    %100 = arith.truncf %99 : vector<2x64xf32> to vector<2x64xbf16>
    %c0_71 = arith.constant 0 : index
    %c0_72 = arith.constant 0 : index
    %c1_73 = arith.constant 1 : index
    %c0_74 = arith.constant 0 : index
    %101 = vector.load %arg14[%c0_71, %c0_72, %c1_73, %c0_74] : memref<2x4x4x64xbf16, #tpu.memory_space<vmem>>, vector<2x1x1x64xbf16>
    %102 = vector.shape_cast %101 : vector<2x1x1x64xbf16> to vector<2x64xbf16>
    %103 = vector.shape_cast %100 : vector<2x64xbf16> to vector<2x1x1x64xbf16>
    tpu.vector_store %arg14[%c0_71, %c0_72, %c1_73, %c0_74], %103 {strides = array<i32>} : memref<2x4x4x64xbf16, #tpu.memory_space<vmem>>, vector<2x1x1x64xbf16>,
    %104 = vector.extract_strided_slice %79 {offsets = [0, 6, 0], sizes = [2, 1, 64], strides = [1, 1, 1]} : vector<2x16x64xf32> to vector<2x1x64xf32>
    %105 = vector.shape_cast %104 : vector<2x1x64xf32> to vector<2x64xf32>
    %106 = vector.extract_strided_slice %79 {offsets = [0, 7, 0], sizes = [2, 1, 64], strides = [1, 1, 1]} : vector<2x16x64xf32> to vector<2x1x64xf32>
    %107 = vector.shape_cast %106 : vector<2x1x64xf32> to vector<2x64xf32>
    %108 = arith.maximumf %105, %107 : vector<2x64xf32>
    %109 = vector.extract_strided_slice %79 {offsets = [0, 8, 0], sizes = [2, 1, 64], strides = [1, 1, 1]} : vector<2x16x64xf32> to vector<2x1x64xf32>
    %110 = vector.shape_cast %109 : vector<2x1x64xf32> to vector<2x64xf32>
    %111 = arith.maximumf %108, %110 : vector<2x64xf32>
    %112 = arith.truncf %111 : vector<2x64xf32> to vector<2x64xbf16>
    %c0_75 = arith.constant 0 : index
    %c0_76 = arith.constant 0 : index
    %c2_77 = arith.constant 2 : index
    %c0_78 = arith.constant 0 : index
    %113 = vector.load %arg14[%c0_75, %c0_76, %c2_77, %c0_78] : memref<2x4x4x64xbf16, #tpu.memory_space<vmem>>, vector<2x1x1x64xbf16>
    %114 = vector.shape_cast %113 : vector<2x1x1x64xbf16> to vector<2x64xbf16>
    %115 = vector.shape_cast %112 : vector<2x64xbf16> to vector<2x1x1x64xbf16>
    tpu.vector_store %arg14[%c0_75, %c0_76, %c2_77, %c0_78], %115 {strides = array<i32>} : memref<2x4x4x64xbf16, #tpu.memory_space<vmem>>, vector<2x1x1x64xbf16>,
    %116 = vector.extract_strided_slice %79 {offsets = [0, 9, 0], sizes = [2, 1, 64], strides = [1, 1, 1]} : vector<2x16x64xf32> to vector<2x1x64xf32>
    %117 = vector.shape_cast %116 : vector<2x1x64xf32> to vector<2x64xf32>
    %118 = vector.extract_strided_slice %79 {offsets = [0, 10, 0], sizes = [2, 1, 64], strides = [1, 1, 1]} : vector<2x16x64xf32> to vector<2x1x64xf32>
    %119 = vector.shape_cast %118 : vector<2x1x64xf32> to vector<2x64xf32>
    %120 = arith.maximumf %117, %119 : vector<2x64xf32>
    %121 = vector.extract_strided_slice %79 {offsets = [0, 11, 0], sizes = [2, 1, 64], strides = [1, 1, 1]} : vector<2x16x64xf32> to vector<2x1x64xf32>
    %122 = vector.shape_cast %121 : vector<2x1x64xf32> to vector<2x64xf32>
    %123 = arith.maximumf %120, %122 : vector<2x64xf32>
    %124 = arith.truncf %123 : vector<2x64xf32> to vector<2x64xbf16>
    %c0_79 = arith.constant 0 : index
    %c0_80 = arith.constant 0 : index
    %c3_81 = arith.constant 3 : index
    %c0_82 = arith.constant 0 : index
    %125 = vector.load %arg14[%c0_79, %c0_80, %c3_81, %c0_82] : memref<2x4x4x64xbf16, #tpu.memory_space<vmem>>, vector<2x1x1x64xbf16>
    %126 = vector.shape_cast %125 : vector<2x1x1x64xbf16> to vector<2x64xbf16>
    %127 = vector.shape_cast %124 : vector<2x64xbf16> to vector<2x1x1x64xbf16>
    tpu.vector_store %arg14[%c0_79, %c0_80, %c3_81, %c0_82], %127 {strides = array<i32>} : memref<2x4x4x64xbf16, #tpu.memory_space<vmem>>, vector<2x1x1x64xbf16>,
    %128 = vector.extract_strided_slice %71 {offsets = [0, 3, 0, 0], sizes = [2, 1, 16, 64], strides = [1, 1, 1, 1]} : vector<2x12x16x64xf32> to vector<2x1x16x64xf32>
    %129 = vector.shape_cast %128 : vector<2x1x16x64xf32> to vector<2x16x64xf32>
    %130 = vector.extract_strided_slice %71 {offsets = [0, 4, 0, 0], sizes = [2, 1, 16, 64], strides = [1, 1, 1, 1]} : vector<2x12x16x64xf32> to vector<2x1x16x64xf32>
    %131 = vector.shape_cast %130 : vector<2x1x16x64xf32> to vector<2x16x64xf32>
    %132 = arith.maximumf %129, %131 : vector<2x16x64xf32>
    %133 = vector.extract_strided_slice %71 {offsets = [0, 5, 0, 0], sizes = [2, 1, 16, 64], strides = [1, 1, 1, 1]} : vector<2x12x16x64xf32> to vector<2x1x16x64xf32>
    %134 = vector.shape_cast %133 : vector<2x1x16x64xf32> to vector<2x16x64xf32>
    %135 = arith.maximumf %132, %134 : vector<2x16x64xf32>
    %136 = vector.extract_strided_slice %135 {offsets = [0, 0, 0], sizes = [2, 1, 64], strides = [1, 1, 1]} : vector<2x16x64xf32> to vector<2x1x64xf32>
    %137 = vector.shape_cast %136 : vector<2x1x64xf32> to vector<2x64xf32>
    %138 = vector.extract_strided_slice %135 {offsets = [0, 1, 0], sizes = [2, 1, 64], strides = [1, 1, 1]} : vector<2x16x64xf32> to vector<2x1x64xf32>
    %139 = vector.shape_cast %138 : vector<2x1x64xf32> to vector<2x64xf32>
    %140 = arith.maximumf %137, %139 : vector<2x64xf32>
    %141 = vector.extract_strided_slice %135 {offsets = [0, 2, 0], sizes = [2, 1, 64], strides = [1, 1, 1]} : vector<2x16x64xf32> to vector<2x1x64xf32>
    %142 = vector.shape_cast %141 : vector<2x1x64xf32> to vector<2x64xf32>
    %143 = arith.maximumf %140, %142 : vector<2x64xf32>
    %144 = arith.truncf %143 : vector<2x64xf32> to vector<2x64xbf16>
    %c0_83 = arith.constant 0 : index
    %c1_84 = arith.constant 1 : index
    %c0_85 = arith.constant 0 : index
    %c0_86 = arith.constant 0 : index
    %145 = vector.load %arg14[%c0_83, %c1_84, %c0_85, %c0_86] : memref<2x4x4x64xbf16, #tpu.memory_space<vmem>>, vector<2x1x1x64xbf16>
    %146 = vector.shape_cast %145 : vector<2x1x1x64xbf16> to vector<2x64xbf16>
    %147 = vector.shape_cast %144 : vector<2x64xbf16> to vector<2x1x1x64xbf16>
    tpu.vector_store %arg14[%c0_83, %c1_84, %c0_85, %c0_86], %147 {strides = array<i32>} : memref<2x4x4x64xbf16, #tpu.memory_space<vmem>>, vector<2x1x1x64xbf16>,
    %148 = vector.extract_strided_slice %135 {offsets = [0, 3, 0], sizes = [2, 1, 64], strides = [1, 1, 1]} : vector<2x16x64xf32> to vector<2x1x64xf32>
    %149 = vector.shape_cast %148 : vector<2x1x64xf32> to vector<2x64xf32>
    %150 = vector.extract_strided_slice %135 {offsets = [0, 4, 0], sizes = [2, 1, 64], strides = [1, 1, 1]} : vector<2x16x64xf32> to vector<2x1x64xf32>
    %151 = vector.shape_cast %150 : vector<2x1x64xf32> to vector<2x64xf32>
    %152 = arith.maximumf %149, %151 : vector<2x64xf32>
    %153 = vector.extract_strided_slice %135 {offsets = [0, 5, 0], sizes = [2, 1, 64], strides = [1, 1, 1]} : vector<2x16x64xf32> to vector<2x1x64xf32>
    %154 = vector.shape_cast %153 : vector<2x1x64xf32> to vector<2x64xf32>
    %155 = arith.maximumf %152, %154 : vector<2x64xf32>
    %156 = arith.truncf %155 : vector<2x64xf32> to vector<2x64xbf16>
    %c0_87 = arith.constant 0 : index
    %c1_88 = arith.constant 1 : index
    %c1_89 = arith.constant 1 : index
    %c0_90 = arith.constant 0 : index
    %157 = vector.load %arg14[%c0_87, %c1_88, %c1_89, %c0_90] : memref<2x4x4x64xbf16, #tpu.memory_space<vmem>>, vector<2x1x1x64xbf16>
    %158 = vector.shape_cast %157 : vector<2x1x1x64xbf16> to vector<2x64xbf16>
    %159 = vector.shape_cast %156 : vector<2x64xbf16> to vector<2x1x1x64xbf16>
    tpu.vector_store %arg14[%c0_87, %c1_88, %c1_89, %c0_90], %159 {strides = array<i32>} : memref<2x4x4x64xbf16, #tpu.memory_space<vmem>>, vector<2x1x1x64xbf16>,
    %160 = vector.extract_strided_slice %135 {offsets = [0, 6, 0], sizes = [2, 1, 64], strides = [1, 1, 1]} : vector<2x16x64xf32> to vector<2x1x64xf32>
    %161 = vector.shape_cast %160 : vector<2x1x64xf32> to vector<2x64xf32>
    %162 = vector.extract_strided_slice %135 {offsets = [0, 7, 0], sizes = [2, 1, 64], strides = [1, 1, 1]} : vector<2x16x64xf32> to vector<2x1x64xf32>
    %163 = vector.shape_cast %162 : vector<2x1x64xf32> to vector<2x64xf32>
    %164 = arith.maximumf %161, %163 : vector<2x64xf32>
    %165 = vector.extract_strided_slice %135 {offsets = [0, 8, 0], sizes = [2, 1, 64], strides = [1, 1, 1]} : vector<2x16x64xf32> to vector<2x1x64xf32>
    %166 = vector.shape_cast %165 : vector<2x1x64xf32> to vector<2x64xf32>
    %167 = arith.maximumf %164, %166 : vector<2x64xf32>
    %168 = arith.truncf %167 : vector<2x64xf32> to vector<2x64xbf16>
    %c0_91 = arith.constant 0 : index
    %c1_92 = arith.constant 1 : index
    %c2_93 = arith.constant 2 : index
    %c0_94 = arith.constant 0 : index
    %169 = vector.load %arg14[%c0_91, %c1_92, %c2_93, %c0_94] : memref<2x4x4x64xbf16, #tpu.memory_space<vmem>>, vector<2x1x1x64xbf16>
    %170 = vector.shape_cast %169 : vector<2x1x1x64xbf16> to vector<2x64xbf16>
    %171 = vector.shape_cast %168 : vector<2x64xbf16> to vector<2x1x1x64xbf16>
    tpu.vector_store %arg14[%c0_91, %c1_92, %c2_93, %c0_94], %171 {strides = array<i32>} : memref<2x4x4x64xbf16, #tpu.memory_space<vmem>>, vector<2x1x1x64xbf16>,
    %172 = vector.extract_strided_slice %135 {offsets = [0, 9, 0], sizes = [2, 1, 64], strides = [1, 1, 1]} : vector<2x16x64xf32> to vector<2x1x64xf32>
    %173 = vector.shape_cast %172 : vector<2x1x64xf32> to vector<2x64xf32>
    %174 = vector.extract_strided_slice %135 {offsets = [0, 10, 0], sizes = [2, 1, 64], strides = [1, 1, 1]} : vector<2x16x64xf32> to vector<2x1x64xf32>
    %175 = vector.shape_cast %174 : vector<2x1x64xf32> to vector<2x64xf32>
    %176 = arith.maximumf %173, %175 : vector<2x64xf32>
    %177 = vector.extract_strided_slice %135 {offsets = [0, 11, 0], sizes = [2, 1, 64], strides = [1, 1, 1]} : vector<2x16x64xf32> to vector<2x1x64xf32>
    %178 = vector.shape_cast %177 : vector<2x1x64xf32> to vector<2x64xf32>
    %179 = arith.maximumf %176, %178 : vector<2x64xf32>
    %180 = arith.truncf %179 : vector<2x64xf32> to vector<2x64xbf16>
    %c0_95 = arith.constant 0 : index
    %c1_96 = arith.constant 1 : index
    %c3_97 = arith.constant 3 : index
    %c0_98 = arith.constant 0 : index
    %181 = vector.load %arg14[%c0_95, %c1_96, %c3_97, %c0_98] : memref<2x4x4x64xbf16, #tpu.memory_space<vmem>>, vector<2x1x1x64xbf16>
    %182 = vector.shape_cast %181 : vector<2x1x1x64xbf16> to vector<2x64xbf16>
    %183 = vector.shape_cast %180 : vector<2x64xbf16> to vector<2x1x1x64xbf16>
    tpu.vector_store %arg14[%c0_95, %c1_96, %c3_97, %c0_98], %183 {strides = array<i32>} : memref<2x4x4x64xbf16, #tpu.memory_space<vmem>>, vector<2x1x1x64xbf16>,
    %184 = vector.extract_strided_slice %71 {offsets = [0, 6, 0, 0], sizes = [2, 1, 16, 64], strides = [1, 1, 1, 1]} : vector<2x12x16x64xf32> to vector<2x1x16x64xf32>
    %185 = vector.shape_cast %184 : vector<2x1x16x64xf32> to vector<2x16x64xf32>
    %186 = vector.extract_strided_slice %71 {offsets = [0, 7, 0, 0], sizes = [2, 1, 16, 64], strides = [1, 1, 1, 1]} : vector<2x12x16x64xf32> to vector<2x1x16x64xf32>
    %187 = vector.shape_cast %186 : vector<2x1x16x64xf32> to vector<2x16x64xf32>
    %188 = arith.maximumf %185, %187 : vector<2x16x64xf32>
    %189 = vector.extract_strided_slice %71 {offsets = [0, 8, 0, 0], sizes = [2, 1, 16, 64], strides = [1, 1, 1, 1]} : vector<2x12x16x64xf32> to vector<2x1x16x64xf32>
    %190 = vector.shape_cast %189 : vector<2x1x16x64xf32> to vector<2x16x64xf32>
    %191 = arith.maximumf %188, %190 : vector<2x16x64xf32>
    %192 = vector.extract_strided_slice %191 {offsets = [0, 0, 0], sizes = [2, 1, 64], strides = [1, 1, 1]} : vector<2x16x64xf32> to vector<2x1x64xf32>
    %193 = vector.shape_cast %192 : vector<2x1x64xf32> to vector<2x64xf32>
    %194 = vector.extract_strided_slice %191 {offsets = [0, 1, 0], sizes = [2, 1, 64], strides = [1, 1, 1]} : vector<2x16x64xf32> to vector<2x1x64xf32>
    %195 = vector.shape_cast %194 : vector<2x1x64xf32> to vector<2x64xf32>
    %196 = arith.maximumf %193, %195 : vector<2x64xf32>
    %197 = vector.extract_strided_slice %191 {offsets = [0, 2, 0], sizes = [2, 1, 64], strides = [1, 1, 1]} : vector<2x16x64xf32> to vector<2x1x64xf32>
    %198 = vector.shape_cast %197 : vector<2x1x64xf32> to vector<2x64xf32>
    %199 = arith.maximumf %196, %198 : vector<2x64xf32>
    %200 = arith.truncf %199 : vector<2x64xf32> to vector<2x64xbf16>
    %c0_99 = arith.constant 0 : index
    %c2_100 = arith.constant 2 : index
    %c0_101 = arith.constant 0 : index
    %c0_102 = arith.constant 0 : index
    %201 = vector.load %arg14[%c0_99, %c2_100, %c0_101, %c0_102] : memref<2x4x4x64xbf16, #tpu.memory_space<vmem>>, vector<2x1x1x64xbf16>
    %202 = vector.shape_cast %201 : vector<2x1x1x64xbf16> to vector<2x64xbf16>
    %203 = vector.shape_cast %200 : vector<2x64xbf16> to vector<2x1x1x64xbf16>
    tpu.vector_store %arg14[%c0_99, %c2_100, %c0_101, %c0_102], %203 {strides = array<i32>} : memref<2x4x4x64xbf16, #tpu.memory_space<vmem>>, vector<2x1x1x64xbf16>,
    %204 = vector.extract_strided_slice %191 {offsets = [0, 3, 0], sizes = [2, 1, 64], strides = [1, 1, 1]} : vector<2x16x64xf32> to vector<2x1x64xf32>
    %205 = vector.shape_cast %204 : vector<2x1x64xf32> to vector<2x64xf32>
    %206 = vector.extract_strided_slice %191 {offsets = [0, 4, 0], sizes = [2, 1, 64], strides = [1, 1, 1]} : vector<2x16x64xf32> to vector<2x1x64xf32>
    %207 = vector.shape_cast %206 : vector<2x1x64xf32> to vector<2x64xf32>
    %208 = arith.maximumf %205, %207 : vector<2x64xf32>
    %209 = vector.extract_strided_slice %191 {offsets = [0, 5, 0], sizes = [2, 1, 64], strides = [1, 1, 1]} : vector<2x16x64xf32> to vector<2x1x64xf32>
    %210 = vector.shape_cast %209 : vector<2x1x64xf32> to vector<2x64xf32>
    %211 = arith.maximumf %208, %210 : vector<2x64xf32>
    %212 = arith.truncf %211 : vector<2x64xf32> to vector<2x64xbf16>
    %c0_103 = arith.constant 0 : index
    %c2_104 = arith.constant 2 : index
    %c1_105 = arith.constant 1 : index
    %c0_106 = arith.constant 0 : index
    %213 = vector.load %arg14[%c0_103, %c2_104, %c1_105, %c0_106] : memref<2x4x4x64xbf16, #tpu.memory_space<vmem>>, vector<2x1x1x64xbf16>
    %214 = vector.shape_cast %213 : vector<2x1x1x64xbf16> to vector<2x64xbf16>
    %215 = vector.shape_cast %212 : vector<2x64xbf16> to vector<2x1x1x64xbf16>
    tpu.vector_store %arg14[%c0_103, %c2_104, %c1_105, %c0_106], %215 {strides = array<i32>} : memref<2x4x4x64xbf16, #tpu.memory_space<vmem>>, vector<2x1x1x64xbf16>,
    %216 = vector.extract_strided_slice %191 {offsets = [0, 6, 0], sizes = [2, 1, 64], strides = [1, 1, 1]} : vector<2x16x64xf32> to vector<2x1x64xf32>
    %217 = vector.shape_cast %216 : vector<2x1x64xf32> to vector<2x64xf32>
    %218 = vector.extract_strided_slice %191 {offsets = [0, 7, 0], sizes = [2, 1, 64], strides = [1, 1, 1]} : vector<2x16x64xf32> to vector<2x1x64xf32>
    %219 = vector.shape_cast %218 : vector<2x1x64xf32> to vector<2x64xf32>
    %220 = arith.maximumf %217, %219 : vector<2x64xf32>
    %221 = vector.extract_strided_slice %191 {offsets = [0, 8, 0], sizes = [2, 1, 64], strides = [1, 1, 1]} : vector<2x16x64xf32> to vector<2x1x64xf32>
    %222 = vector.shape_cast %221 : vector<2x1x64xf32> to vector<2x64xf32>
    %223 = arith.maximumf %220, %222 : vector<2x64xf32>
    %224 = arith.truncf %223 : vector<2x64xf32> to vector<2x64xbf16>
    %c0_107 = arith.constant 0 : index
    %c2_108 = arith.constant 2 : index
    %c2_109 = arith.constant 2 : index
    %c0_110 = arith.constant 0 : index
    %225 = vector.load %arg14[%c0_107, %c2_108, %c2_109, %c0_110] : memref<2x4x4x64xbf16, #tpu.memory_space<vmem>>, vector<2x1x1x64xbf16>
    %226 = vector.shape_cast %225 : vector<2x1x1x64xbf16> to vector<2x64xbf16>
    %227 = vector.shape_cast %224 : vector<2x64xbf16> to vector<2x1x1x64xbf16>
    tpu.vector_store %arg14[%c0_107, %c2_108, %c2_109, %c0_110], %227 {strides = array<i32>} : memref<2x4x4x64xbf16, #tpu.memory_space<vmem>>, vector<2x1x1x64xbf16>,
    %228 = vector.extract_strided_slice %191 {offsets = [0, 9, 0], sizes = [2, 1, 64], strides = [1, 1, 1]} : vector<2x16x64xf32> to vector<2x1x64xf32>
    %229 = vector.shape_cast %228 : vector<2x1x64xf32> to vector<2x64xf32>
    %230 = vector.extract_strided_slice %191 {offsets = [0, 10, 0], sizes = [2, 1, 64], strides = [1, 1, 1]} : vector<2x16x64xf32> to vector<2x1x64xf32>
    %231 = vector.shape_cast %230 : vector<2x1x64xf32> to vector<2x64xf32>
    %232 = arith.maximumf %229, %231 : vector<2x64xf32>
    %233 = vector.extract_strided_slice %191 {offsets = [0, 11, 0], sizes = [2, 1, 64], strides = [1, 1, 1]} : vector<2x16x64xf32> to vector<2x1x64xf32>
    %234 = vector.shape_cast %233 : vector<2x1x64xf32> to vector<2x64xf32>
    %235 = arith.maximumf %232, %234 : vector<2x64xf32>
    %236 = arith.truncf %235 : vector<2x64xf32> to vector<2x64xbf16>
    %c0_111 = arith.constant 0 : index
    %c2_112 = arith.constant 2 : index
    %c3_113 = arith.constant 3 : index
    %c0_114 = arith.constant 0 : index
    %237 = vector.load %arg14[%c0_111, %c2_112, %c3_113, %c0_114] : memref<2x4x4x64xbf16, #tpu.memory_space<vmem>>, vector<2x1x1x64xbf16>
    %238 = vector.shape_cast %237 : vector<2x1x1x64xbf16> to vector<2x64xbf16>
    %239 = vector.shape_cast %236 : vector<2x64xbf16> to vector<2x1x1x64xbf16>
    tpu.vector_store %arg14[%c0_111, %c2_112, %c3_113, %c0_114], %239 {strides = array<i32>} : memref<2x4x4x64xbf16, #tpu.memory_space<vmem>>, vector<2x1x1x64xbf16>,
    %240 = vector.extract_strided_slice %71 {offsets = [0, 9, 0, 0], sizes = [2, 1, 16, 64], strides = [1, 1, 1, 1]} : vector<2x12x16x64xf32> to vector<2x1x16x64xf32>
    %241 = vector.shape_cast %240 : vector<2x1x16x64xf32> to vector<2x16x64xf32>
    %242 = vector.extract_strided_slice %71 {offsets = [0, 10, 0, 0], sizes = [2, 1, 16, 64], strides = [1, 1, 1, 1]} : vector<2x12x16x64xf32> to vector<2x1x16x64xf32>
    %243 = vector.shape_cast %242 : vector<2x1x16x64xf32> to vector<2x16x64xf32>
    %244 = arith.maximumf %241, %243 : vector<2x16x64xf32>
    %245 = vector.extract_strided_slice %71 {offsets = [0, 11, 0, 0], sizes = [2, 1, 16, 64], strides = [1, 1, 1, 1]} : vector<2x12x16x64xf32> to vector<2x1x16x64xf32>
    %246 = vector.shape_cast %245 : vector<2x1x16x64xf32> to vector<2x16x64xf32>
    %247 = arith.maximumf %244, %246 : vector<2x16x64xf32>
    %248 = vector.extract_strided_slice %247 {offsets = [0, 0, 0], sizes = [2, 1, 64], strides = [1, 1, 1]} : vector<2x16x64xf32> to vector<2x1x64xf32>
    %249 = vector.shape_cast %248 : vector<2x1x64xf32> to vector<2x64xf32>
    %250 = vector.extract_strided_slice %247 {offsets = [0, 1, 0], sizes = [2, 1, 64], strides = [1, 1, 1]} : vector<2x16x64xf32> to vector<2x1x64xf32>
    %251 = vector.shape_cast %250 : vector<2x1x64xf32> to vector<2x64xf32>
    %252 = arith.maximumf %249, %251 : vector<2x64xf32>
    %253 = vector.extract_strided_slice %247 {offsets = [0, 2, 0], sizes = [2, 1, 64], strides = [1, 1, 1]} : vector<2x16x64xf32> to vector<2x1x64xf32>
    %254 = vector.shape_cast %253 : vector<2x1x64xf32> to vector<2x64xf32>
    %255 = arith.maximumf %252, %254 : vector<2x64xf32>
    %256 = arith.truncf %255 : vector<2x64xf32> to vector<2x64xbf16>
    %c0_115 = arith.constant 0 : index
    %c3_116 = arith.constant 3 : index
    %c0_117 = arith.constant 0 : index
    %c0_118 = arith.constant 0 : index
    %257 = vector.load %arg14[%c0_115, %c3_116, %c0_117, %c0_118] : memref<2x4x4x64xbf16, #tpu.memory_space<vmem>>, vector<2x1x1x64xbf16>
    %258 = vector.shape_cast %257 : vector<2x1x1x64xbf16> to vector<2x64xbf16>
    %259 = vector.shape_cast %256 : vector<2x64xbf16> to vector<2x1x1x64xbf16>
    tpu.vector_store %arg14[%c0_115, %c3_116, %c0_117, %c0_118], %259 {strides = array<i32>} : memref<2x4x4x64xbf16, #tpu.memory_space<vmem>>, vector<2x1x1x64xbf16>,
    %260 = vector.extract_strided_slice %247 {offsets = [0, 3, 0], sizes = [2, 1, 64], strides = [1, 1, 1]} : vector<2x16x64xf32> to vector<2x1x64xf32>
    %261 = vector.shape_cast %260 : vector<2x1x64xf32> to vector<2x64xf32>
    %262 = vector.extract_strided_slice %247 {offsets = [0, 4, 0], sizes = [2, 1, 64], strides = [1, 1, 1]} : vector<2x16x64xf32> to vector<2x1x64xf32>
    %263 = vector.shape_cast %262 : vector<2x1x64xf32> to vector<2x64xf32>
    %264 = arith.maximumf %261, %263 : vector<2x64xf32>
    %265 = vector.extract_strided_slice %247 {offsets = [0, 5, 0], sizes = [2, 1, 64], strides = [1, 1, 1]} : vector<2x16x64xf32> to vector<2x1x64xf32>
    %266 = vector.shape_cast %265 : vector<2x1x64xf32> to vector<2x64xf32>
    %267 = arith.maximumf %264, %266 : vector<2x64xf32>
    %268 = arith.truncf %267 : vector<2x64xf32> to vector<2x64xbf16>
    %c0_119 = arith.constant 0 : index
    %c3_120 = arith.constant 3 : index
    %c1_121 = arith.constant 1 : index
    %c0_122 = arith.constant 0 : index
    %269 = vector.load %arg14[%c0_119, %c3_120, %c1_121, %c0_122] : memref<2x4x4x64xbf16, #tpu.memory_space<vmem>>, vector<2x1x1x64xbf16>
    %270 = vector.shape_cast %269 : vector<2x1x1x64xbf16> to vector<2x64xbf16>
    %271 = vector.shape_cast %268 : vector<2x64xbf16> to vector<2x1x1x64xbf16>
    tpu.vector_store %arg14[%c0_119, %c3_120, %c1_121, %c0_122], %271 {strides = array<i32>} : memref<2x4x4x64xbf16, #tpu.memory_space<vmem>>, vector<2x1x1x64xbf16>,
    %272 = vector.extract_strided_slice %247 {offsets = [0, 6, 0], sizes = [2, 1, 64], strides = [1, 1, 1]} : vector<2x16x64xf32> to vector<2x1x64xf32>
    %273 = vector.shape_cast %272 : vector<2x1x64xf32> to vector<2x64xf32>
    %274 = vector.extract_strided_slice %247 {offsets = [0, 7, 0], sizes = [2, 1, 64], strides = [1, 1, 1]} : vector<2x16x64xf32> to vector<2x1x64xf32>
    %275 = vector.shape_cast %274 : vector<2x1x64xf32> to vector<2x64xf32>
    %276 = arith.maximumf %273, %275 : vector<2x64xf32>
    %277 = vector.extract_strided_slice %247 {offsets = [0, 8, 0], sizes = [2, 1, 64], strides = [1, 1, 1]} : vector<2x16x64xf32> to vector<2x1x64xf32>
    %278 = vector.shape_cast %277 : vector<2x1x64xf32> to vector<2x64xf32>
    %279 = arith.maximumf %276, %278 : vector<2x64xf32>
    %280 = arith.truncf %279 : vector<2x64xf32> to vector<2x64xbf16>
    %c0_123 = arith.constant 0 : index
    %c3_124 = arith.constant 3 : index
    %c2_125 = arith.constant 2 : index
    %c0_126 = arith.constant 0 : index
    %281 = vector.load %arg14[%c0_123, %c3_124, %c2_125, %c0_126] : memref<2x4x4x64xbf16, #tpu.memory_space<vmem>>, vector<2x1x1x64xbf16>
    %282 = vector.shape_cast %281 : vector<2x1x1x64xbf16> to vector<2x64xbf16>
    %283 = vector.shape_cast %280 : vector<2x64xbf16> to vector<2x1x1x64xbf16>
    tpu.vector_store %arg14[%c0_123, %c3_124, %c2_125, %c0_126], %283 {strides = array<i32>} : memref<2x4x4x64xbf16, #tpu.memory_space<vmem>>, vector<2x1x1x64xbf16>,
    %284 = vector.extract_strided_slice %247 {offsets = [0, 9, 0], sizes = [2, 1, 64], strides = [1, 1, 1]} : vector<2x16x64xf32> to vector<2x1x64xf32>
    %285 = vector.shape_cast %284 : vector<2x1x64xf32> to vector<2x64xf32>
    %286 = vector.extract_strided_slice %247 {offsets = [0, 10, 0], sizes = [2, 1, 64], strides = [1, 1, 1]} : vector<2x16x64xf32> to vector<2x1x64xf32>
    %287 = vector.shape_cast %286 : vector<2x1x64xf32> to vector<2x64xf32>
    %288 = arith.maximumf %285, %287 : vector<2x64xf32>
    %289 = vector.extract_strided_slice %247 {offsets = [0, 11, 0], sizes = [2, 1, 64], strides = [1, 1, 1]} : vector<2x16x64xf32> to vector<2x1x64xf32>
    %290 = vector.shape_cast %289 : vector<2x1x64xf32> to vector<2x64xf32>
    %291 = arith.maximumf %288, %290 : vector<2x64xf32>
    %292 = arith.truncf %291 : vector<2x64xf32> to vector<2x64xbf16>
    %c0_127 = arith.constant 0 : index
    %c3_128 = arith.constant 3 : index
    %c3_129 = arith.constant 3 : index
    %c0_130 = arith.constant 0 : index
    %293 = vector.load %arg14[%c0_127, %c3_128, %c3_129, %c0_130] : memref<2x4x4x64xbf16, #tpu.memory_space<vmem>>, vector<2x1x1x64xbf16>
    %294 = vector.shape_cast %293 : vector<2x1x1x64xbf16> to vector<2x64xbf16>
    %295 = vector.shape_cast %292 : vector<2x64xbf16> to vector<2x1x1x64xbf16>
    tpu.vector_store %arg14[%c0_127, %c3_128, %c3_129, %c0_130], %295 {strides = array<i32>} : memref<2x4x4x64xbf16, #tpu.memory_space<vmem>>, vector<2x1x1x64xbf16>,
    %cst_131 = arith.constant 0.000000e+00 : f32
    %296 = vector.broadcast %cst_131 : f32 to vector<2x64xf32>
    %cst_132 = arith.constant 0.000000e+00 : f32
    %297 = vector.broadcast %cst_132 : f32 to vector<2x64xf32>
    %c0_133 = arith.constant 0 : index
    %c0_134 = arith.constant 0 : index
    %c0_135 = arith.constant 0 : index
    %c0_136 = arith.constant 0 : index
    %298 = vector.load %arg14[%c0_133, %c0_134, %c0_135, %c0_136] : memref<2x4x4x64xbf16, #tpu.memory_space<vmem>>, vector<2x1x1x64xbf16>
    %299 = vector.shape_cast %298 : vector<2x1x1x64xbf16> to vector<2x64xbf16>
    %c0_137 = arith.constant 0 : index
    %c0_138 = arith.constant 0 : index
    %c0_139 = arith.constant 0 : index
    %300 = vector.load %arg6[%c0_137, %c0_138, %c0_139] : memref<9x64x64xbf16, #tpu.memory_space<vmem>>, vector<1x64x64xbf16>
    %301 = vector.shape_cast %300 : vector<1x64x64xbf16> to vector<64x64xbf16>
    %cst_140 = arith.constant dense<0.000000e+00> : vector<2x64xf32>
    %302 = tpu.matmul %299, %301, %cst_140 {dimension_numbers = #tpu.dot_dimension_numbers<[1], [0], [0], [1], [0, 0, 1, 1], [], []>} : vector<2x64xbf16>, vector<64x64xbf16>, vector<2x64xf32> -> vector<2x64xf32>
    %303 = arith.addf %297, %302 : vector<2x64xf32>
    %c0_141 = arith.constant 0 : index
    %c0_142 = arith.constant 0 : index
    %c1_143 = arith.constant 1 : index
    %c0_144 = arith.constant 0 : index
    %304 = vector.load %arg14[%c0_141, %c0_142, %c1_143, %c0_144] : memref<2x4x4x64xbf16, #tpu.memory_space<vmem>>, vector<2x1x1x64xbf16>
    %305 = vector.shape_cast %304 : vector<2x1x1x64xbf16> to vector<2x64xbf16>
    %c1_145 = arith.constant 1 : index
    %c0_146 = arith.constant 0 : index
    %c0_147 = arith.constant 0 : index
    %306 = vector.load %arg6[%c1_145, %c0_146, %c0_147] : memref<9x64x64xbf16, #tpu.memory_space<vmem>>, vector<1x64x64xbf16>
    %307 = vector.shape_cast %306 : vector<1x64x64xbf16> to vector<64x64xbf16>
    %cst_148 = arith.constant dense<0.000000e+00> : vector<2x64xf32>
    %308 = tpu.matmul %305, %307, %cst_148 {dimension_numbers = #tpu.dot_dimension_numbers<[1], [0], [0], [1], [0, 0, 1, 1], [], []>} : vector<2x64xbf16>, vector<64x64xbf16>, vector<2x64xf32> -> vector<2x64xf32>
    %309 = arith.addf %303, %308 : vector<2x64xf32>
    %c0_149 = arith.constant 0 : index
    %c0_150 = arith.constant 0 : index
    %c2_151 = arith.constant 2 : index
    %c0_152 = arith.constant 0 : index
    %310 = vector.load %arg14[%c0_149, %c0_150, %c2_151, %c0_152] : memref<2x4x4x64xbf16, #tpu.memory_space<vmem>>, vector<2x1x1x64xbf16>
    %311 = vector.shape_cast %310 : vector<2x1x1x64xbf16> to vector<2x64xbf16>
    %c2_153 = arith.constant 2 : index
    %c0_154 = arith.constant 0 : index
    %c0_155 = arith.constant 0 : index
    %312 = vector.load %arg6[%c2_153, %c0_154, %c0_155] : memref<9x64x64xbf16, #tpu.memory_space<vmem>>, vector<1x64x64xbf16>
    %313 = vector.shape_cast %312 : vector<1x64x64xbf16> to vector<64x64xbf16>
    %cst_156 = arith.constant dense<0.000000e+00> : vector<2x64xf32>
    %314 = tpu.matmul %311, %313, %cst_156 {dimension_numbers = #tpu.dot_dimension_numbers<[1], [0], [0], [1], [0, 0, 1, 1], [], []>} : vector<2x64xbf16>, vector<64x64xbf16>, vector<2x64xf32> -> vector<2x64xf32>
    %315 = arith.addf %309, %314 : vector<2x64xf32>
    %c0_157 = arith.constant 0 : index
    %c1_158 = arith.constant 1 : index
    %c0_159 = arith.constant 0 : index
    %c0_160 = arith.constant 0 : index
    %316 = vector.load %arg14[%c0_157, %c1_158, %c0_159, %c0_160] : memref<2x4x4x64xbf16, #tpu.memory_space<vmem>>, vector<2x1x1x64xbf16>
    %317 = vector.shape_cast %316 : vector<2x1x1x64xbf16> to vector<2x64xbf16>
    %c3_161 = arith.constant 3 : index
    %c0_162 = arith.constant 0 : index
    %c0_163 = arith.constant 0 : index
    %318 = vector.load %arg6[%c3_161, %c0_162, %c0_163] : memref<9x64x64xbf16, #tpu.memory_space<vmem>>, vector<1x64x64xbf16>
    %319 = vector.shape_cast %318 : vector<1x64x64xbf16> to vector<64x64xbf16>
    %cst_164 = arith.constant dense<0.000000e+00> : vector<2x64xf32>
    %320 = tpu.matmul %317, %319, %cst_164 {dimension_numbers = #tpu.dot_dimension_numbers<[1], [0], [0], [1], [0, 0, 1, 1], [], []>} : vector<2x64xbf16>, vector<64x64xbf16>, vector<2x64xf32> -> vector<2x64xf32>
    %321 = arith.addf %315, %320 : vector<2x64xf32>
    %c0_165 = arith.constant 0 : index
    %c1_166 = arith.constant 1 : index
    %c1_167 = arith.constant 1 : index
    %c0_168 = arith.constant 0 : index
    %322 = vector.load %arg14[%c0_165, %c1_166, %c1_167, %c0_168] : memref<2x4x4x64xbf16, #tpu.memory_space<vmem>>, vector<2x1x1x64xbf16>
    %323 = vector.shape_cast %322 : vector<2x1x1x64xbf16> to vector<2x64xbf16>
    %c4_169 = arith.constant 4 : index
    %c0_170 = arith.constant 0 : index
    %c0_171 = arith.constant 0 : index
    %324 = vector.load %arg6[%c4_169, %c0_170, %c0_171] : memref<9x64x64xbf16, #tpu.memory_space<vmem>>, vector<1x64x64xbf16>
    %325 = vector.shape_cast %324 : vector<1x64x64xbf16> to vector<64x64xbf16>
    %cst_172 = arith.constant dense<0.000000e+00> : vector<2x64xf32>
    %326 = tpu.matmul %323, %325, %cst_172 {dimension_numbers = #tpu.dot_dimension_numbers<[1], [0], [0], [1], [0, 0, 1, 1], [], []>} : vector<2x64xbf16>, vector<64x64xbf16>, vector<2x64xf32> -> vector<2x64xf32>
    %327 = arith.addf %321, %326 : vector<2x64xf32>
    %c0_173 = arith.constant 0 : index
    %c1_174 = arith.constant 1 : index
    %c2_175 = arith.constant 2 : index
    %c0_176 = arith.constant 0 : index
    %328 = vector.load %arg14[%c0_173, %c1_174, %c2_175, %c0_176] : memref<2x4x4x64xbf16, #tpu.memory_space<vmem>>, vector<2x1x1x64xbf16>
    %329 = vector.shape_cast %328 : vector<2x1x1x64xbf16> to vector<2x64xbf16>
    %c5 = arith.constant 5 : index
    %c0_177 = arith.constant 0 : index
    %c0_178 = arith.constant 0 : index
    %330 = vector.load %arg6[%c5, %c0_177, %c0_178] : memref<9x64x64xbf16, #tpu.memory_space<vmem>>, vector<1x64x64xbf16>
    %331 = vector.shape_cast %330 : vector<1x64x64xbf16> to vector<64x64xbf16>
    %cst_179 = arith.constant dense<0.000000e+00> : vector<2x64xf32>
    %332 = tpu.matmul %329, %331, %cst_179 {dimension_numbers = #tpu.dot_dimension_numbers<[1], [0], [0], [1], [0, 0, 1, 1], [], []>} : vector<2x64xbf16>, vector<64x64xbf16>, vector<2x64xf32> -> vector<2x64xf32>
    %333 = arith.addf %327, %332 : vector<2x64xf32>
    %c0_180 = arith.constant 0 : index
    %c2_181 = arith.constant 2 : index
    %c0_182 = arith.constant 0 : index
    %c0_183 = arith.constant 0 : index
    %334 = vector.load %arg14[%c0_180, %c2_181, %c0_182, %c0_183] : memref<2x4x4x64xbf16, #tpu.memory_space<vmem>>, vector<2x1x1x64xbf16>
    %335 = vector.shape_cast %334 : vector<2x1x1x64xbf16> to vector<2x64xbf16>
    %c6 = arith.constant 6 : index
    %c0_184 = arith.constant 0 : index
    %c0_185 = arith.constant 0 : index
    %336 = vector.load %arg6[%c6, %c0_184, %c0_185] : memref<9x64x64xbf16, #tpu.memory_space<vmem>>, vector<1x64x64xbf16>
    %337 = vector.shape_cast %336 : vector<1x64x64xbf16> to vector<64x64xbf16>
    %cst_186 = arith.constant dense<0.000000e+00> : vector<2x64xf32>
    %338 = tpu.matmul %335, %337, %cst_186 {dimension_numbers = #tpu.dot_dimension_numbers<[1], [0], [0], [1], [0, 0, 1, 1], [], []>} : vector<2x64xbf16>, vector<64x64xbf16>, vector<2x64xf32> -> vector<2x64xf32>
    %339 = arith.addf %333, %338 : vector<2x64xf32>
    %c0_187 = arith.constant 0 : index
    %c2_188 = arith.constant 2 : index
    %c1_189 = arith.constant 1 : index
    %c0_190 = arith.constant 0 : index
    %340 = vector.load %arg14[%c0_187, %c2_188, %c1_189, %c0_190] : memref<2x4x4x64xbf16, #tpu.memory_space<vmem>>, vector<2x1x1x64xbf16>
    %341 = vector.shape_cast %340 : vector<2x1x1x64xbf16> to vector<2x64xbf16>
    %c7 = arith.constant 7 : index
    %c0_191 = arith.constant 0 : index
    %c0_192 = arith.constant 0 : index
    %342 = vector.load %arg6[%c7, %c0_191, %c0_192] : memref<9x64x64xbf16, #tpu.memory_space<vmem>>, vector<1x64x64xbf16>
    %343 = vector.shape_cast %342 : vector<1x64x64xbf16> to vector<64x64xbf16>
    %cst_193 = arith.constant dense<0.000000e+00> : vector<2x64xf32>
    %344 = tpu.matmul %341, %343, %cst_193 {dimension_numbers = #tpu.dot_dimension_numbers<[1], [0], [0], [1], [0, 0, 1, 1], [], []>} : vector<2x64xbf16>, vector<64x64xbf16>, vector<2x64xf32> -> vector<2x64xf32>
    %345 = arith.addf %339, %344 : vector<2x64xf32>
    %c0_194 = arith.constant 0 : index
    %c2_195 = arith.constant 2 : index
    %c2_196 = arith.constant 2 : index
    %c0_197 = arith.constant 0 : index
    %346 = vector.load %arg14[%c0_194, %c2_195, %c2_196, %c0_197] : memref<2x4x4x64xbf16, #tpu.memory_space<vmem>>, vector<2x1x1x64xbf16>
    %347 = vector.shape_cast %346 : vector<2x1x1x64xbf16> to vector<2x64xbf16>
    %c8 = arith.constant 8 : index
    %c0_198 = arith.constant 0 : index
    %c0_199 = arith.constant 0 : index
    %348 = vector.load %arg6[%c8, %c0_198, %c0_199] : memref<9x64x64xbf16, #tpu.memory_space<vmem>>, vector<1x64x64xbf16>
    %349 = vector.shape_cast %348 : vector<1x64x64xbf16> to vector<64x64xbf16>
    %cst_200 = arith.constant dense<0.000000e+00> : vector<2x64xf32>
    %350 = tpu.matmul %347, %349, %cst_200 {dimension_numbers = #tpu.dot_dimension_numbers<[1], [0], [0], [1], [0, 0, 1, 1], [], []>} : vector<2x64xbf16>, vector<64x64xbf16>, vector<2x64xf32> -> vector<2x64xf32>
    %351 = arith.addf %345, %350 : vector<2x64xf32>
    %c0_201 = arith.constant 0 : index
    %c0_202 = arith.constant 0 : index
    %352 = vector.load %arg7[%c0_201, %c0_202] : memref<1x64xf32, #tpu.memory_space<vmem>>, vector<1x64xf32>
    %353 = vector.broadcast %352 : vector<1x64xf32> to vector<2x64xf32>
    %354 = arith.addf %351, %353 : vector<2x64xf32>
    %cst_203 = arith.constant 0.000000e+00 : f32
    %355 = vector.broadcast %cst_203 : f32 to vector<2x64xf32>
    %356 = arith.maximumf %354, %355 : vector<2x64xf32>
    %357 = arith.truncf %356 : vector<2x64xf32> to vector<2x64xbf16>
    %c0_204 = arith.constant 0 : index
    %c0_205 = arith.constant 0 : index
    %c0_206 = arith.constant 0 : index
    %358 = vector.load %arg8[%c0_204, %c0_205, %c0_206] : memref<4x64x64xbf16, #tpu.memory_space<vmem>>, vector<1x64x64xbf16>
    %359 = vector.shape_cast %358 : vector<1x64x64xbf16> to vector<64x64xbf16>
    %cst_207 = arith.constant dense<0.000000e+00> : vector<2x64xf32>
    %360 = tpu.matmul %357, %359, %cst_207 {dimension_numbers = #tpu.dot_dimension_numbers<[1], [0], [0], [1], [0, 0, 1, 1], [], []>} : vector<2x64xbf16>, vector<64x64xbf16>, vector<2x64xf32> -> vector<2x64xf32>
    %361 = arith.addf %296, %360 : vector<2x64xf32>
    %cst_208 = arith.constant 0.000000e+00 : f32
    %362 = vector.broadcast %cst_208 : f32 to vector<2x64xf32>
    %c0_209 = arith.constant 0 : index
    %c0_210 = arith.constant 0 : index
    %c1_211 = arith.constant 1 : index
    %c0_212 = arith.constant 0 : index
    %363 = vector.load %arg14[%c0_209, %c0_210, %c1_211, %c0_212] : memref<2x4x4x64xbf16, #tpu.memory_space<vmem>>, vector<2x1x1x64xbf16>
    %364 = vector.shape_cast %363 : vector<2x1x1x64xbf16> to vector<2x64xbf16>
    %c0_213 = arith.constant 0 : index
    %c0_214 = arith.constant 0 : index
    %c0_215 = arith.constant 0 : index
    %365 = vector.load %arg6[%c0_213, %c0_214, %c0_215] : memref<9x64x64xbf16, #tpu.memory_space<vmem>>, vector<1x64x64xbf16>
    %366 = vector.shape_cast %365 : vector<1x64x64xbf16> to vector<64x64xbf16>
    %cst_216 = arith.constant dense<0.000000e+00> : vector<2x64xf32>
    %367 = tpu.matmul %364, %366, %cst_216 {dimension_numbers = #tpu.dot_dimension_numbers<[1], [0], [0], [1], [0, 0, 1, 1], [], []>} : vector<2x64xbf16>, vector<64x64xbf16>, vector<2x64xf32> -> vector<2x64xf32>
    %368 = arith.addf %362, %367 : vector<2x64xf32>
    %c0_217 = arith.constant 0 : index
    %c0_218 = arith.constant 0 : index
    %c2_219 = arith.constant 2 : index
    %c0_220 = arith.constant 0 : index
    %369 = vector.load %arg14[%c0_217, %c0_218, %c2_219, %c0_220] : memref<2x4x4x64xbf16, #tpu.memory_space<vmem>>, vector<2x1x1x64xbf16>
    %370 = vector.shape_cast %369 : vector<2x1x1x64xbf16> to vector<2x64xbf16>
    %c1_221 = arith.constant 1 : index
    %c0_222 = arith.constant 0 : index
    %c0_223 = arith.constant 0 : index
    %371 = vector.load %arg6[%c1_221, %c0_222, %c0_223] : memref<9x64x64xbf16, #tpu.memory_space<vmem>>, vector<1x64x64xbf16>
    %372 = vector.shape_cast %371 : vector<1x64x64xbf16> to vector<64x64xbf16>
    %cst_224 = arith.constant dense<0.000000e+00> : vector<2x64xf32>
    %373 = tpu.matmul %370, %372, %cst_224 {dimension_numbers = #tpu.dot_dimension_numbers<[1], [0], [0], [1], [0, 0, 1, 1], [], []>} : vector<2x64xbf16>, vector<64x64xbf16>, vector<2x64xf32> -> vector<2x64xf32>
    %374 = arith.addf %368, %373 : vector<2x64xf32>
    %c0_225 = arith.constant 0 : index
    %c0_226 = arith.constant 0 : index
    %c3_227 = arith.constant 3 : index
    %c0_228 = arith.constant 0 : index
    %375 = vector.load %arg14[%c0_225, %c0_226, %c3_227, %c0_228] : memref<2x4x4x64xbf16, #tpu.memory_space<vmem>>, vector<2x1x1x64xbf16>
    %376 = vector.shape_cast %375 : vector<2x1x1x64xbf16> to vector<2x64xbf16>
    %c2_229 = arith.constant 2 : index
    %c0_230 = arith.constant 0 : index
    %c0_231 = arith.constant 0 : index
    %377 = vector.load %arg6[%c2_229, %c0_230, %c0_231] : memref<9x64x64xbf16, #tpu.memory_space<vmem>>, vector<1x64x64xbf16>
    %378 = vector.shape_cast %377 : vector<1x64x64xbf16> to vector<64x64xbf16>
    %cst_232 = arith.constant dense<0.000000e+00> : vector<2x64xf32>
    %379 = tpu.matmul %376, %378, %cst_232 {dimension_numbers = #tpu.dot_dimension_numbers<[1], [0], [0], [1], [0, 0, 1, 1], [], []>} : vector<2x64xbf16>, vector<64x64xbf16>, vector<2x64xf32> -> vector<2x64xf32>
    %380 = arith.addf %374, %379 : vector<2x64xf32>
    %c0_233 = arith.constant 0 : index
    %c1_234 = arith.constant 1 : index
    %c1_235 = arith.constant 1 : index
    %c0_236 = arith.constant 0 : index
    %381 = vector.load %arg14[%c0_233, %c1_234, %c1_235, %c0_236] : memref<2x4x4x64xbf16, #tpu.memory_space<vmem>>, vector<2x1x1x64xbf16>
    %382 = vector.shape_cast %381 : vector<2x1x1x64xbf16> to vector<2x64xbf16>
    %c3_237 = arith.constant 3 : index
    %c0_238 = arith.constant 0 : index
    %c0_239 = arith.constant 0 : index
    %383 = vector.load %arg6[%c3_237, %c0_238, %c0_239] : memref<9x64x64xbf16, #tpu.memory_space<vmem>>, vector<1x64x64xbf16>
    %384 = vector.shape_cast %383 : vector<1x64x64xbf16> to vector<64x64xbf16>
    %cst_240 = arith.constant dense<0.000000e+00> : vector<2x64xf32>
    %385 = tpu.matmul %382, %384, %cst_240 {dimension_numbers = #tpu.dot_dimension_numbers<[1], [0], [0], [1], [0, 0, 1, 1], [], []>} : vector<2x64xbf16>, vector<64x64xbf16>, vector<2x64xf32> -> vector<2x64xf32>
    %386 = arith.addf %380, %385 : vector<2x64xf32>
    %c0_241 = arith.constant 0 : index
    %c1_242 = arith.constant 1 : index
    %c2_243 = arith.constant 2 : index
    %c0_244 = arith.constant 0 : index
    %387 = vector.load %arg14[%c0_241, %c1_242, %c2_243, %c0_244] : memref<2x4x4x64xbf16, #tpu.memory_space<vmem>>, vector<2x1x1x64xbf16>
    %388 = vector.shape_cast %387 : vector<2x1x1x64xbf16> to vector<2x64xbf16>
    %c4_245 = arith.constant 4 : index
    %c0_246 = arith.constant 0 : index
    %c0_247 = arith.constant 0 : index
    %389 = vector.load %arg6[%c4_245, %c0_246, %c0_247] : memref<9x64x64xbf16, #tpu.memory_space<vmem>>, vector<1x64x64xbf16>
    %390 = vector.shape_cast %389 : vector<1x64x64xbf16> to vector<64x64xbf16>
    %cst_248 = arith.constant dense<0.000000e+00> : vector<2x64xf32>
    %391 = tpu.matmul %388, %390, %cst_248 {dimension_numbers = #tpu.dot_dimension_numbers<[1], [0], [0], [1], [0, 0, 1, 1], [], []>} : vector<2x64xbf16>, vector<64x64xbf16>, vector<2x64xf32> -> vector<2x64xf32>
    %392 = arith.addf %386, %391 : vector<2x64xf32>
    %c0_249 = arith.constant 0 : index
    %c1_250 = arith.constant 1 : index
    %c3_251 = arith.constant 3 : index
    %c0_252 = arith.constant 0 : index
    %393 = vector.load %arg14[%c0_249, %c1_250, %c3_251, %c0_252] : memref<2x4x4x64xbf16, #tpu.memory_space<vmem>>, vector<2x1x1x64xbf16>
    %394 = vector.shape_cast %393 : vector<2x1x1x64xbf16> to vector<2x64xbf16>
    %c5_253 = arith.constant 5 : index
    %c0_254 = arith.constant 0 : index
    %c0_255 = arith.constant 0 : index
    %395 = vector.load %arg6[%c5_253, %c0_254, %c0_255] : memref<9x64x64xbf16, #tpu.memory_space<vmem>>, vector<1x64x64xbf16>
    %396 = vector.shape_cast %395 : vector<1x64x64xbf16> to vector<64x64xbf16>
    %cst_256 = arith.constant dense<0.000000e+00> : vector<2x64xf32>
    %397 = tpu.matmul %394, %396, %cst_256 {dimension_numbers = #tpu.dot_dimension_numbers<[1], [0], [0], [1], [0, 0, 1, 1], [], []>} : vector<2x64xbf16>, vector<64x64xbf16>, vector<2x64xf32> -> vector<2x64xf32>
    %398 = arith.addf %392, %397 : vector<2x64xf32>
    %c0_257 = arith.constant 0 : index
    %c2_258 = arith.constant 2 : index
    %c1_259 = arith.constant 1 : index
    %c0_260 = arith.constant 0 : index
    %399 = vector.load %arg14[%c0_257, %c2_258, %c1_259, %c0_260] : memref<2x4x4x64xbf16, #tpu.memory_space<vmem>>, vector<2x1x1x64xbf16>
    %400 = vector.shape_cast %399 : vector<2x1x1x64xbf16> to vector<2x64xbf16>
    %c6_261 = arith.constant 6 : index
    %c0_262 = arith.constant 0 : index
    %c0_263 = arith.constant 0 : index
    %401 = vector.load %arg6[%c6_261, %c0_262, %c0_263] : memref<9x64x64xbf16, #tpu.memory_space<vmem>>, vector<1x64x64xbf16>
    %402 = vector.shape_cast %401 : vector<1x64x64xbf16> to vector<64x64xbf16>
    %cst_264 = arith.constant dense<0.000000e+00> : vector<2x64xf32>
    %403 = tpu.matmul %400, %402, %cst_264 {dimension_numbers = #tpu.dot_dimension_numbers<[1], [0], [0], [1], [0, 0, 1, 1], [], []>} : vector<2x64xbf16>, vector<64x64xbf16>, vector<2x64xf32> -> vector<2x64xf32>
    %404 = arith.addf %398, %403 : vector<2x64xf32>
    %c0_265 = arith.constant 0 : index
    %c2_266 = arith.constant 2 : index
    %c2_267 = arith.constant 2 : index
    %c0_268 = arith.constant 0 : index
    %405 = vector.load %arg14[%c0_265, %c2_266, %c2_267, %c0_268] : memref<2x4x4x64xbf16, #tpu.memory_space<vmem>>, vector<2x1x1x64xbf16>
    %406 = vector.shape_cast %405 : vector<2x1x1x64xbf16> to vector<2x64xbf16>
    %c7_269 = arith.constant 7 : index
    %c0_270 = arith.constant 0 : index
    %c0_271 = arith.constant 0 : index
    %407 = vector.load %arg6[%c7_269, %c0_270, %c0_271] : memref<9x64x64xbf16, #tpu.memory_space<vmem>>, vector<1x64x64xbf16>
    %408 = vector.shape_cast %407 : vector<1x64x64xbf16> to vector<64x64xbf16>
    %cst_272 = arith.constant dense<0.000000e+00> : vector<2x64xf32>
    %409 = tpu.matmul %406, %408, %cst_272 {dimension_numbers = #tpu.dot_dimension_numbers<[1], [0], [0], [1], [0, 0, 1, 1], [], []>} : vector<2x64xbf16>, vector<64x64xbf16>, vector<2x64xf32> -> vector<2x64xf32>
    %410 = arith.addf %404, %409 : vector<2x64xf32>
    %c0_273 = arith.constant 0 : index
    %c2_274 = arith.constant 2 : index
    %c3_275 = arith.constant 3 : index
    %c0_276 = arith.constant 0 : index
    %411 = vector.load %arg14[%c0_273, %c2_274, %c3_275, %c0_276] : memref<2x4x4x64xbf16, #tpu.memory_space<vmem>>, vector<2x1x1x64xbf16>
    %412 = vector.shape_cast %411 : vector<2x1x1x64xbf16> to vector<2x64xbf16>
    %c8_277 = arith.constant 8 : index
    %c0_278 = arith.constant 0 : index
    %c0_279 = arith.constant 0 : index
    %413 = vector.load %arg6[%c8_277, %c0_278, %c0_279] : memref<9x64x64xbf16, #tpu.memory_space<vmem>>, vector<1x64x64xbf16>
    %414 = vector.shape_cast %413 : vector<1x64x64xbf16> to vector<64x64xbf16>
    %cst_280 = arith.constant dense<0.000000e+00> : vector<2x64xf32>
    %415 = tpu.matmul %412, %414, %cst_280 {dimension_numbers = #tpu.dot_dimension_numbers<[1], [0], [0], [1], [0, 0, 1, 1], [], []>} : vector<2x64xbf16>, vector<64x64xbf16>, vector<2x64xf32> -> vector<2x64xf32>
    %416 = arith.addf %410, %415 : vector<2x64xf32>
    %c0_281 = arith.constant 0 : index
    %c0_282 = arith.constant 0 : index
    %417 = vector.load %arg7[%c0_281, %c0_282] : memref<1x64xf32, #tpu.memory_space<vmem>>, vector<1x64xf32>
    %418 = vector.broadcast %417 : vector<1x64xf32> to vector<2x64xf32>
    %419 = arith.addf %416, %418 : vector<2x64xf32>
    %cst_283 = arith.constant 0.000000e+00 : f32
    %420 = vector.broadcast %cst_283 : f32 to vector<2x64xf32>
    %421 = arith.maximumf %419, %420 : vector<2x64xf32>
    %422 = arith.truncf %421 : vector<2x64xf32> to vector<2x64xbf16>
    %c1_284 = arith.constant 1 : index
    %c0_285 = arith.constant 0 : index
    %c0_286 = arith.constant 0 : index
    %423 = vector.load %arg8[%c1_284, %c0_285, %c0_286] : memref<4x64x64xbf16, #tpu.memory_space<vmem>>, vector<1x64x64xbf16>
    %424 = vector.shape_cast %423 : vector<1x64x64xbf16> to vector<64x64xbf16>
    %cst_287 = arith.constant dense<0.000000e+00> : vector<2x64xf32>
    %425 = tpu.matmul %422, %424, %cst_287 {dimension_numbers = #tpu.dot_dimension_numbers<[1], [0], [0], [1], [0, 0, 1, 1], [], []>} : vector<2x64xbf16>, vector<64x64xbf16>, vector<2x64xf32> -> vector<2x64xf32>
    %426 = arith.addf %361, %425 : vector<2x64xf32>
    %cst_288 = arith.constant 0.000000e+00 : f32
    %427 = vector.broadcast %cst_288 : f32 to vector<2x64xf32>
    %c0_289 = arith.constant 0 : index
    %c1_290 = arith.constant 1 : index
    %c0_291 = arith.constant 0 : index
    %c0_292 = arith.constant 0 : index
    %428 = vector.load %arg14[%c0_289, %c1_290, %c0_291, %c0_292] : memref<2x4x4x64xbf16, #tpu.memory_space<vmem>>, vector<2x1x1x64xbf16>
    %429 = vector.shape_cast %428 : vector<2x1x1x64xbf16> to vector<2x64xbf16>
    %c0_293 = arith.constant 0 : index
    %c0_294 = arith.constant 0 : index
    %c0_295 = arith.constant 0 : index
    %430 = vector.load %arg6[%c0_293, %c0_294, %c0_295] : memref<9x64x64xbf16, #tpu.memory_space<vmem>>, vector<1x64x64xbf16>
    %431 = vector.shape_cast %430 : vector<1x64x64xbf16> to vector<64x64xbf16>
    %cst_296 = arith.constant dense<0.000000e+00> : vector<2x64xf32>
    %432 = tpu.matmul %429, %431, %cst_296 {dimension_numbers = #tpu.dot_dimension_numbers<[1], [0], [0], [1], [0, 0, 1, 1], [], []>} : vector<2x64xbf16>, vector<64x64xbf16>, vector<2x64xf32> -> vector<2x64xf32>
    %433 = arith.addf %427, %432 : vector<2x64xf32>
    %c0_297 = arith.constant 0 : index
    %c1_298 = arith.constant 1 : index
    %c1_299 = arith.constant 1 : index
    %c0_300 = arith.constant 0 : index
    %434 = vector.load %arg14[%c0_297, %c1_298, %c1_299, %c0_300] : memref<2x4x4x64xbf16, #tpu.memory_space<vmem>>, vector<2x1x1x64xbf16>
    %435 = vector.shape_cast %434 : vector<2x1x1x64xbf16> to vector<2x64xbf16>
    %c1_301 = arith.constant 1 : index
    %c0_302 = arith.constant 0 : index
    %c0_303 = arith.constant 0 : index
    %436 = vector.load %arg6[%c1_301, %c0_302, %c0_303] : memref<9x64x64xbf16, #tpu.memory_space<vmem>>, vector<1x64x64xbf16>
    %437 = vector.shape_cast %436 : vector<1x64x64xbf16> to vector<64x64xbf16>
    %cst_304 = arith.constant dense<0.000000e+00> : vector<2x64xf32>
    %438 = tpu.matmul %435, %437, %cst_304 {dimension_numbers = #tpu.dot_dimension_numbers<[1], [0], [0], [1], [0, 0, 1, 1], [], []>} : vector<2x64xbf16>, vector<64x64xbf16>, vector<2x64xf32> -> vector<2x64xf32>
    %439 = arith.addf %433, %438 : vector<2x64xf32>
    %c0_305 = arith.constant 0 : index
    %c1_306 = arith.constant 1 : index
    %c2_307 = arith.constant 2 : index
    %c0_308 = arith.constant 0 : index
    %440 = vector.load %arg14[%c0_305, %c1_306, %c2_307, %c0_308] : memref<2x4x4x64xbf16, #tpu.memory_space<vmem>>, vector<2x1x1x64xbf16>
    %441 = vector.shape_cast %440 : vector<2x1x1x64xbf16> to vector<2x64xbf16>
    %c2_309 = arith.constant 2 : index
    %c0_310 = arith.constant 0 : index
    %c0_311 = arith.constant 0 : index
    %442 = vector.load %arg6[%c2_309, %c0_310, %c0_311] : memref<9x64x64xbf16, #tpu.memory_space<vmem>>, vector<1x64x64xbf16>
    %443 = vector.shape_cast %442 : vector<1x64x64xbf16> to vector<64x64xbf16>
    %cst_312 = arith.constant dense<0.000000e+00> : vector<2x64xf32>
    %444 = tpu.matmul %441, %443, %cst_312 {dimension_numbers = #tpu.dot_dimension_numbers<[1], [0], [0], [1], [0, 0, 1, 1], [], []>} : vector<2x64xbf16>, vector<64x64xbf16>, vector<2x64xf32> -> vector<2x64xf32>
    %445 = arith.addf %439, %444 : vector<2x64xf32>
    %c0_313 = arith.constant 0 : index
    %c2_314 = arith.constant 2 : index
    %c0_315 = arith.constant 0 : index
    %c0_316 = arith.constant 0 : index
    %446 = vector.load %arg14[%c0_313, %c2_314, %c0_315, %c0_316] : memref<2x4x4x64xbf16, #tpu.memory_space<vmem>>, vector<2x1x1x64xbf16>
    %447 = vector.shape_cast %446 : vector<2x1x1x64xbf16> to vector<2x64xbf16>
    %c3_317 = arith.constant 3 : index
    %c0_318 = arith.constant 0 : index
    %c0_319 = arith.constant 0 : index
    %448 = vector.load %arg6[%c3_317, %c0_318, %c0_319] : memref<9x64x64xbf16, #tpu.memory_space<vmem>>, vector<1x64x64xbf16>
    %449 = vector.shape_cast %448 : vector<1x64x64xbf16> to vector<64x64xbf16>
    %cst_320 = arith.constant dense<0.000000e+00> : vector<2x64xf32>
    %450 = tpu.matmul %447, %449, %cst_320 {dimension_numbers = #tpu.dot_dimension_numbers<[1], [0], [0], [1], [0, 0, 1, 1], [], []>} : vector<2x64xbf16>, vector<64x64xbf16>, vector<2x64xf32> -> vector<2x64xf32>
    %451 = arith.addf %445, %450 : vector<2x64xf32>
    %c0_321 = arith.constant 0 : index
    %c2_322 = arith.constant 2 : index
    %c1_323 = arith.constant 1 : index
    %c0_324 = arith.constant 0 : index
    %452 = vector.load %arg14[%c0_321, %c2_322, %c1_323, %c0_324] : memref<2x4x4x64xbf16, #tpu.memory_space<vmem>>, vector<2x1x1x64xbf16>
    %453 = vector.shape_cast %452 : vector<2x1x1x64xbf16> to vector<2x64xbf16>
    %c4_325 = arith.constant 4 : index
    %c0_326 = arith.constant 0 : index
    %c0_327 = arith.constant 0 : index
    %454 = vector.load %arg6[%c4_325, %c0_326, %c0_327] : memref<9x64x64xbf16, #tpu.memory_space<vmem>>, vector<1x64x64xbf16>
    %455 = vector.shape_cast %454 : vector<1x64x64xbf16> to vector<64x64xbf16>
    %cst_328 = arith.constant dense<0.000000e+00> : vector<2x64xf32>
    %456 = tpu.matmul %453, %455, %cst_328 {dimension_numbers = #tpu.dot_dimension_numbers<[1], [0], [0], [1], [0, 0, 1, 1], [], []>} : vector<2x64xbf16>, vector<64x64xbf16>, vector<2x64xf32> -> vector<2x64xf32>
    %457 = arith.addf %451, %456 : vector<2x64xf32>
    %c0_329 = arith.constant 0 : index
    %c2_330 = arith.constant 2 : index
    %c2_331 = arith.constant 2 : index
    %c0_332 = arith.constant 0 : index
    %458 = vector.load %arg14[%c0_329, %c2_330, %c2_331, %c0_332] : memref<2x4x4x64xbf16, #tpu.memory_space<vmem>>, vector<2x1x1x64xbf16>
    %459 = vector.shape_cast %458 : vector<2x1x1x64xbf16> to vector<2x64xbf16>
    %c5_333 = arith.constant 5 : index
    %c0_334 = arith.constant 0 : index
    %c0_335 = arith.constant 0 : index
    %460 = vector.load %arg6[%c5_333, %c0_334, %c0_335] : memref<9x64x64xbf16, #tpu.memory_space<vmem>>, vector<1x64x64xbf16>
    %461 = vector.shape_cast %460 : vector<1x64x64xbf16> to vector<64x64xbf16>
    %cst_336 = arith.constant dense<0.000000e+00> : vector<2x64xf32>
    %462 = tpu.matmul %459, %461, %cst_336 {dimension_numbers = #tpu.dot_dimension_numbers<[1], [0], [0], [1], [0, 0, 1, 1], [], []>} : vector<2x64xbf16>, vector<64x64xbf16>, vector<2x64xf32> -> vector<2x64xf32>
    %463 = arith.addf %457, %462 : vector<2x64xf32>
    %c0_337 = arith.constant 0 : index
    %c3_338 = arith.constant 3 : index
    %c0_339 = arith.constant 0 : index
    %c0_340 = arith.constant 0 : index
    %464 = vector.load %arg14[%c0_337, %c3_338, %c0_339, %c0_340] : memref<2x4x4x64xbf16, #tpu.memory_space<vmem>>, vector<2x1x1x64xbf16>
    %465 = vector.shape_cast %464 : vector<2x1x1x64xbf16> to vector<2x64xbf16>
    %c6_341 = arith.constant 6 : index
    %c0_342 = arith.constant 0 : index
    %c0_343 = arith.constant 0 : index
    %466 = vector.load %arg6[%c6_341, %c0_342, %c0_343] : memref<9x64x64xbf16, #tpu.memory_space<vmem>>, vector<1x64x64xbf16>
    %467 = vector.shape_cast %466 : vector<1x64x64xbf16> to vector<64x64xbf16>
    %cst_344 = arith.constant dense<0.000000e+00> : vector<2x64xf32>
    %468 = tpu.matmul %465, %467, %cst_344 {dimension_numbers = #tpu.dot_dimension_numbers<[1], [0], [0], [1], [0, 0, 1, 1], [], []>} : vector<2x64xbf16>, vector<64x64xbf16>, vector<2x64xf32> -> vector<2x64xf32>
    %469 = arith.addf %463, %468 : vector<2x64xf32>
    %c0_345 = arith.constant 0 : index
    %c3_346 = arith.constant 3 : index
    %c1_347 = arith.constant 1 : index
    %c0_348 = arith.constant 0 : index
    %470 = vector.load %arg14[%c0_345, %c3_346, %c1_347, %c0_348] : memref<2x4x4x64xbf16, #tpu.memory_space<vmem>>, vector<2x1x1x64xbf16>
    %471 = vector.shape_cast %470 : vector<2x1x1x64xbf16> to vector<2x64xbf16>
    %c7_349 = arith.constant 7 : index
    %c0_350 = arith.constant 0 : index
    %c0_351 = arith.constant 0 : index
    %472 = vector.load %arg6[%c7_349, %c0_350, %c0_351] : memref<9x64x64xbf16, #tpu.memory_space<vmem>>, vector<1x64x64xbf16>
    %473 = vector.shape_cast %472 : vector<1x64x64xbf16> to vector<64x64xbf16>
    %cst_352 = arith.constant dense<0.000000e+00> : vector<2x64xf32>
    %474 = tpu.matmul %471, %473, %cst_352 {dimension_numbers = #tpu.dot_dimension_numbers<[1], [0], [0], [1], [0, 0, 1, 1], [], []>} : vector<2x64xbf16>, vector<64x64xbf16>, vector<2x64xf32> -> vector<2x64xf32>
    %475 = arith.addf %469, %474 : vector<2x64xf32>
    %c0_353 = arith.constant 0 : index
    %c3_354 = arith.constant 3 : index
    %c2_355 = arith.constant 2 : index
    %c0_356 = arith.constant 0 : index
    %476 = vector.load %arg14[%c0_353, %c3_354, %c2_355, %c0_356] : memref<2x4x4x64xbf16, #tpu.memory_space<vmem>>, vector<2x1x1x64xbf16>
    %477 = vector.shape_cast %476 : vector<2x1x1x64xbf16> to vector<2x64xbf16>
    %c8_357 = arith.constant 8 : index
    %c0_358 = arith.constant 0 : index
    %c0_359 = arith.constant 0 : index
    %478 = vector.load %arg6[%c8_357, %c0_358, %c0_359] : memref<9x64x64xbf16, #tpu.memory_space<vmem>>, vector<1x64x64xbf16>
    %479 = vector.shape_cast %478 : vector<1x64x64xbf16> to vector<64x64xbf16>
    %cst_360 = arith.constant dense<0.000000e+00> : vector<2x64xf32>
    %480 = tpu.matmul %477, %479, %cst_360 {dimension_numbers = #tpu.dot_dimension_numbers<[1], [0], [0], [1], [0, 0, 1, 1], [], []>} : vector<2x64xbf16>, vector<64x64xbf16>, vector<2x64xf32> -> vector<2x64xf32>
    %481 = arith.addf %475, %480 : vector<2x64xf32>
    %c0_361 = arith.constant 0 : index
    %c0_362 = arith.constant 0 : index
    %482 = vector.load %arg7[%c0_361, %c0_362] : memref<1x64xf32, #tpu.memory_space<vmem>>, vector<1x64xf32>
    %483 = vector.broadcast %482 : vector<1x64xf32> to vector<2x64xf32>
    %484 = arith.addf %481, %483 : vector<2x64xf32>
    %cst_363 = arith.constant 0.000000e+00 : f32
    %485 = vector.broadcast %cst_363 : f32 to vector<2x64xf32>
    %486 = arith.maximumf %484, %485 : vector<2x64xf32>
    %487 = arith.truncf %486 : vector<2x64xf32> to vector<2x64xbf16>
    %c2_364 = arith.constant 2 : index
    %c0_365 = arith.constant 0 : index
    %c0_366 = arith.constant 0 : index
    %488 = vector.load %arg8[%c2_364, %c0_365, %c0_366] : memref<4x64x64xbf16, #tpu.memory_space<vmem>>, vector<1x64x64xbf16>
    %489 = vector.shape_cast %488 : vector<1x64x64xbf16> to vector<64x64xbf16>
    %cst_367 = arith.constant dense<0.000000e+00> : vector<2x64xf32>
    %490 = tpu.matmul %487, %489, %cst_367 {dimension_numbers = #tpu.dot_dimension_numbers<[1], [0], [0], [1], [0, 0, 1, 1], [], []>} : vector<2x64xbf16>, vector<64x64xbf16>, vector<2x64xf32> -> vector<2x64xf32>
    %491 = arith.addf %426, %490 : vector<2x64xf32>
    %cst_368 = arith.constant 0.000000e+00 : f32
    %492 = vector.broadcast %cst_368 : f32 to vector<2x64xf32>
    %c0_369 = arith.constant 0 : index
    %c1_370 = arith.constant 1 : index
    %c1_371 = arith.constant 1 : index
    %c0_372 = arith.constant 0 : index
    %493 = vector.load %arg14[%c0_369, %c1_370, %c1_371, %c0_372] : memref<2x4x4x64xbf16, #tpu.memory_space<vmem>>, vector<2x1x1x64xbf16>
    %494 = vector.shape_cast %493 : vector<2x1x1x64xbf16> to vector<2x64xbf16>
    %c0_373 = arith.constant 0 : index
    %c0_374 = arith.constant 0 : index
    %c0_375 = arith.constant 0 : index
    %495 = vector.load %arg6[%c0_373, %c0_374, %c0_375] : memref<9x64x64xbf16, #tpu.memory_space<vmem>>, vector<1x64x64xbf16>
    %496 = vector.shape_cast %495 : vector<1x64x64xbf16> to vector<64x64xbf16>
    %cst_376 = arith.constant dense<0.000000e+00> : vector<2x64xf32>
    %497 = tpu.matmul %494, %496, %cst_376 {dimension_numbers = #tpu.dot_dimension_numbers<[1], [0], [0], [1], [0, 0, 1, 1], [], []>} : vector<2x64xbf16>, vector<64x64xbf16>, vector<2x64xf32> -> vector<2x64xf32>
    %498 = arith.addf %492, %497 : vector<2x64xf32>
    %c0_377 = arith.constant 0 : index
    %c1_378 = arith.constant 1 : index
    %c2_379 = arith.constant 2 : index
    %c0_380 = arith.constant 0 : index
    %499 = vector.load %arg14[%c0_377, %c1_378, %c2_379, %c0_380] : memref<2x4x4x64xbf16, #tpu.memory_space<vmem>>, vector<2x1x1x64xbf16>
    %500 = vector.shape_cast %499 : vector<2x1x1x64xbf16> to vector<2x64xbf16>
    %c1_381 = arith.constant 1 : index
    %c0_382 = arith.constant 0 : index
    %c0_383 = arith.constant 0 : index
    %501 = vector.load %arg6[%c1_381, %c0_382, %c0_383] : memref<9x64x64xbf16, #tpu.memory_space<vmem>>, vector<1x64x64xbf16>
    %502 = vector.shape_cast %501 : vector<1x64x64xbf16> to vector<64x64xbf16>
    %cst_384 = arith.constant dense<0.000000e+00> : vector<2x64xf32>
    %503 = tpu.matmul %500, %502, %cst_384 {dimension_numbers = #tpu.dot_dimension_numbers<[1], [0], [0], [1], [0, 0, 1, 1], [], []>} : vector<2x64xbf16>, vector<64x64xbf16>, vector<2x64xf32> -> vector<2x64xf32>
    %504 = arith.addf %498, %503 : vector<2x64xf32>
    %c0_385 = arith.constant 0 : index
    %c1_386 = arith.constant 1 : index
    %c3_387 = arith.constant 3 : index
    %c0_388 = arith.constant 0 : index
    %505 = vector.load %arg14[%c0_385, %c1_386, %c3_387, %c0_388] : memref<2x4x4x64xbf16, #tpu.memory_space<vmem>>, vector<2x1x1x64xbf16>
    %506 = vector.shape_cast %505 : vector<2x1x1x64xbf16> to vector<2x64xbf16>
    %c2_389 = arith.constant 2 : index
    %c0_390 = arith.constant 0 : index
    %c0_391 = arith.constant 0 : index
    %507 = vector.load %arg6[%c2_389, %c0_390, %c0_391] : memref<9x64x64xbf16, #tpu.memory_space<vmem>>, vector<1x64x64xbf16>
    %508 = vector.shape_cast %507 : vector<1x64x64xbf16> to vector<64x64xbf16>
    %cst_392 = arith.constant dense<0.000000e+00> : vector<2x64xf32>
    %509 = tpu.matmul %506, %508, %cst_392 {dimension_numbers = #tpu.dot_dimension_numbers<[1], [0], [0], [1], [0, 0, 1, 1], [], []>} : vector<2x64xbf16>, vector<64x64xbf16>, vector<2x64xf32> -> vector<2x64xf32>
    %510 = arith.addf %504, %509 : vector<2x64xf32>
    %c0_393 = arith.constant 0 : index
    %c2_394 = arith.constant 2 : index
    %c1_395 = arith.constant 1 : index
    %c0_396 = arith.constant 0 : index
    %511 = vector.load %arg14[%c0_393, %c2_394, %c1_395, %c0_396] : memref<2x4x4x64xbf16, #tpu.memory_space<vmem>>, vector<2x1x1x64xbf16>
    %512 = vector.shape_cast %511 : vector<2x1x1x64xbf16> to vector<2x64xbf16>
    %c3_397 = arith.constant 3 : index
    %c0_398 = arith.constant 0 : index
    %c0_399 = arith.constant 0 : index
    %513 = vector.load %arg6[%c3_397, %c0_398, %c0_399] : memref<9x64x64xbf16, #tpu.memory_space<vmem>>, vector<1x64x64xbf16>
    %514 = vector.shape_cast %513 : vector<1x64x64xbf16> to vector<64x64xbf16>
    %cst_400 = arith.constant dense<0.000000e+00> : vector<2x64xf32>
    %515 = tpu.matmul %512, %514, %cst_400 {dimension_numbers = #tpu.dot_dimension_numbers<[1], [0], [0], [1], [0, 0, 1, 1], [], []>} : vector<2x64xbf16>, vector<64x64xbf16>, vector<2x64xf32> -> vector<2x64xf32>
    %516 = arith.addf %510, %515 : vector<2x64xf32>
    %c0_401 = arith.constant 0 : index
    %c2_402 = arith.constant 2 : index
    %c2_403 = arith.constant 2 : index
    %c0_404 = arith.constant 0 : index
    %517 = vector.load %arg14[%c0_401, %c2_402, %c2_403, %c0_404] : memref<2x4x4x64xbf16, #tpu.memory_space<vmem>>, vector<2x1x1x64xbf16>
    %518 = vector.shape_cast %517 : vector<2x1x1x64xbf16> to vector<2x64xbf16>
    %c4_405 = arith.constant 4 : index
    %c0_406 = arith.constant 0 : index
    %c0_407 = arith.constant 0 : index
    %519 = vector.load %arg6[%c4_405, %c0_406, %c0_407] : memref<9x64x64xbf16, #tpu.memory_space<vmem>>, vector<1x64x64xbf16>
    %520 = vector.shape_cast %519 : vector<1x64x64xbf16> to vector<64x64xbf16>
    %cst_408 = arith.constant dense<0.000000e+00> : vector<2x64xf32>
    %521 = tpu.matmul %518, %520, %cst_408 {dimension_numbers = #tpu.dot_dimension_numbers<[1], [0], [0], [1], [0, 0, 1, 1], [], []>} : vector<2x64xbf16>, vector<64x64xbf16>, vector<2x64xf32> -> vector<2x64xf32>
    %522 = arith.addf %516, %521 : vector<2x64xf32>
    %c0_409 = arith.constant 0 : index
    %c2_410 = arith.constant 2 : index
    %c3_411 = arith.constant 3 : index
    %c0_412 = arith.constant 0 : index
    %523 = vector.load %arg14[%c0_409, %c2_410, %c3_411, %c0_412] : memref<2x4x4x64xbf16, #tpu.memory_space<vmem>>, vector<2x1x1x64xbf16>
    %524 = vector.shape_cast %523 : vector<2x1x1x64xbf16> to vector<2x64xbf16>
    %c5_413 = arith.constant 5 : index
    %c0_414 = arith.constant 0 : index
    %c0_415 = arith.constant 0 : index
    %525 = vector.load %arg6[%c5_413, %c0_414, %c0_415] : memref<9x64x64xbf16, #tpu.memory_space<vmem>>, vector<1x64x64xbf16>
    %526 = vector.shape_cast %525 : vector<1x64x64xbf16> to vector<64x64xbf16>
    %cst_416 = arith.constant dense<0.000000e+00> : vector<2x64xf32>
    %527 = tpu.matmul %524, %526, %cst_416 {dimension_numbers = #tpu.dot_dimension_numbers<[1], [0], [0], [1], [0, 0, 1, 1], [], []>} : vector<2x64xbf16>, vector<64x64xbf16>, vector<2x64xf32> -> vector<2x64xf32>
    %528 = arith.addf %522, %527 : vector<2x64xf32>
    %c0_417 = arith.constant 0 : index
    %c3_418 = arith.constant 3 : index
    %c1_419 = arith.constant 1 : index
    %c0_420 = arith.constant 0 : index
    %529 = vector.load %arg14[%c0_417, %c3_418, %c1_419, %c0_420] : memref<2x4x4x64xbf16, #tpu.memory_space<vmem>>, vector<2x1x1x64xbf16>
    %530 = vector.shape_cast %529 : vector<2x1x1x64xbf16> to vector<2x64xbf16>
    %c6_421 = arith.constant 6 : index
    %c0_422 = arith.constant 0 : index
    %c0_423 = arith.constant 0 : index
    %531 = vector.load %arg6[%c6_421, %c0_422, %c0_423] : memref<9x64x64xbf16, #tpu.memory_space<vmem>>, vector<1x64x64xbf16>
    %532 = vector.shape_cast %531 : vector<1x64x64xbf16> to vector<64x64xbf16>
    %cst_424 = arith.constant dense<0.000000e+00> : vector<2x64xf32>
    %533 = tpu.matmul %530, %532, %cst_424 {dimension_numbers = #tpu.dot_dimension_numbers<[1], [0], [0], [1], [0, 0, 1, 1], [], []>} : vector<2x64xbf16>, vector<64x64xbf16>, vector<2x64xf32> -> vector<2x64xf32>
    %534 = arith.addf %528, %533 : vector<2x64xf32>
    %c0_425 = arith.constant 0 : index
    %c3_426 = arith.constant 3 : index
    %c2_427 = arith.constant 2 : index
    %c0_428 = arith.constant 0 : index
    %535 = vector.load %arg14[%c0_425, %c3_426, %c2_427, %c0_428] : memref<2x4x4x64xbf16, #tpu.memory_space<vmem>>, vector<2x1x1x64xbf16>
    %536 = vector.shape_cast %535 : vector<2x1x1x64xbf16> to vector<2x64xbf16>
    %c7_429 = arith.constant 7 : index
    %c0_430 = arith.constant 0 : index
    %c0_431 = arith.constant 0 : index
    %537 = vector.load %arg6[%c7_429, %c0_430, %c0_431] : memref<9x64x64xbf16, #tpu.memory_space<vmem>>, vector<1x64x64xbf16>
    %538 = vector.shape_cast %537 : vector<1x64x64xbf16> to vector<64x64xbf16>
    %cst_432 = arith.constant dense<0.000000e+00> : vector<2x64xf32>
    %539 = tpu.matmul %536, %538, %cst_432 {dimension_numbers = #tpu.dot_dimension_numbers<[1], [0], [0], [1], [0, 0, 1, 1], [], []>} : vector<2x64xbf16>, vector<64x64xbf16>, vector<2x64xf32> -> vector<2x64xf32>
    %540 = arith.addf %534, %539 : vector<2x64xf32>
    %c0_433 = arith.constant 0 : index
    %c3_434 = arith.constant 3 : index
    %c3_435 = arith.constant 3 : index
    %c0_436 = arith.constant 0 : index
    %541 = vector.load %arg14[%c0_433, %c3_434, %c3_435, %c0_436] : memref<2x4x4x64xbf16, #tpu.memory_space<vmem>>, vector<2x1x1x64xbf16>
    %542 = vector.shape_cast %541 : vector<2x1x1x64xbf16> to vector<2x64xbf16>
    %c8_437 = arith.constant 8 : index
    %c0_438 = arith.constant 0 : index
    %c0_439 = arith.constant 0 : index
    %543 = vector.load %arg6[%c8_437, %c0_438, %c0_439] : memref<9x64x64xbf16, #tpu.memory_space<vmem>>, vector<1x64x64xbf16>
    %544 = vector.shape_cast %543 : vector<1x64x64xbf16> to vector<64x64xbf16>
    %cst_440 = arith.constant dense<0.000000e+00> : vector<2x64xf32>
    %545 = tpu.matmul %542, %544, %cst_440 {dimension_numbers = #tpu.dot_dimension_numbers<[1], [0], [0], [1], [0, 0, 1, 1], [], []>} : vector<2x64xbf16>, vector<64x64xbf16>, vector<2x64xf32> -> vector<2x64xf32>
    %546 = arith.addf %540, %545 : vector<2x64xf32>
    %c0_441 = arith.constant 0 : index
    %c0_442 = arith.constant 0 : index
    %547 = vector.load %arg7[%c0_441, %c0_442] : memref<1x64xf32, #tpu.memory_space<vmem>>, vector<1x64xf32>
    %548 = vector.broadcast %547 : vector<1x64xf32> to vector<2x64xf32>
    %549 = arith.addf %546, %548 : vector<2x64xf32>
    %cst_443 = arith.constant 0.000000e+00 : f32
    %550 = vector.broadcast %cst_443 : f32 to vector<2x64xf32>
    %551 = arith.maximumf %549, %550 : vector<2x64xf32>
    %552 = arith.truncf %551 : vector<2x64xf32> to vector<2x64xbf16>
    %c3_444 = arith.constant 3 : index
    %c0_445 = arith.constant 0 : index
    %c0_446 = arith.constant 0 : index
    %553 = vector.load %arg8[%c3_444, %c0_445, %c0_446] : memref<4x64x64xbf16, #tpu.memory_space<vmem>>, vector<1x64x64xbf16>
    %554 = vector.shape_cast %553 : vector<1x64x64xbf16> to vector<64x64xbf16>
    %cst_447 = arith.constant dense<0.000000e+00> : vector<2x64xf32>
    %555 = tpu.matmul %552, %554, %cst_447 {dimension_numbers = #tpu.dot_dimension_numbers<[1], [0], [0], [1], [0, 0, 1, 1], [], []>} : vector<2x64xbf16>, vector<64x64xbf16>, vector<2x64xf32> -> vector<2x64xf32>
    %556 = arith.addf %491, %555 : vector<2x64xf32>
    %c0_448 = arith.constant 0 : index
    %c0_449 = arith.constant 0 : index
    %557 = vector.load %arg9[%c0_448, %c0_449] : memref<1x64xf32, #tpu.memory_space<vmem>>, vector<1x64xf32>
    %558 = vector.broadcast %557 : vector<1x64xf32> to vector<2x64xf32>
    %559 = arith.addf %556, %558 : vector<2x64xf32>
    %cst_450 = arith.constant 0.000000e+00 : f32
    %560 = vector.broadcast %cst_450 : f32 to vector<2x64xf32>
    %561 = arith.maximumf %559, %560 : vector<2x64xf32>
    %562 = arith.truncf %561 : vector<2x64xf32> to vector<2x64xbf16>
    %c0_451 = arith.constant 0 : index
    %c0_452 = arith.constant 0 : index
    %563 = vector.load %arg10[%c0_451, %c0_452] : memref<64x128xbf16, #tpu.memory_space<vmem>>, vector<64x128xbf16>
    %cst_453 = arith.constant dense<0.000000e+00> : vector<2x128xf32>
    %564 = tpu.matmul %562, %563, %cst_453 {dimension_numbers = #tpu.dot_dimension_numbers<[1], [0], [0], [1], [0, 0, 1, 1], [], []>} : vector<2x64xbf16>, vector<64x128xbf16>, vector<2x128xf32> -> vector<2x128xf32>
    %c0_454 = arith.constant 0 : index
    %c0_455 = arith.constant 0 : index
    %565 = vector.load %arg11[%c0_454, %c0_455] : memref<1x128xf32, #tpu.memory_space<vmem>>, vector<1x128xf32>
    %566 = vector.broadcast %565 : vector<1x128xf32> to vector<2x128xf32>
    %567 = arith.addf %564, %566 : vector<2x128xf32>
    %c0_456 = arith.constant 0 : index
    %c0_457 = arith.constant 0 : index
    %568 = vector.load %arg12[%c0_456, %c0_457] : memref<2x128xf32, #tpu.memory_space<vmem>>, vector<2x128xf32>
    tpu.vector_store %arg12[%c0_456, %c0_457], %567 {strides = array<i32>} : memref<2x128xf32, #tpu.memory_space<vmem>>, vector<2x128xf32>,
    return
  }
  func.func @transform_0(%arg0: i32) -> (i32, i32, i32) {
    %c0_i32 = arith.constant 0 : i32
    %c0_i32_0 = arith.constant 0 : i32
    %c0_i32_1 = arith.constant 0 : i32
    return %arg0, %c0_i32, %c0_i32_0 : i32, i32, i32
  }
  func.func @transform_1(%arg0: i32) -> (i32, i32) {
    %c0_i32 = arith.constant 0 : i32
    %c0_i32_0 = arith.constant 0 : i32
    %c0_i32_1 = arith.constant 0 : i32
    return %c0_i32, %c0_i32_0 : i32, i32
  }
  func.func @transform_2(%arg0: i32) -> (i32, i32) {
    %c0_i32 = arith.constant 0 : i32
    %c0_i32_0 = arith.constant 0 : i32
    %c0_i32_1 = arith.constant 0 : i32
    return %c0_i32, %c0_i32_0 : i32, i32
  }
  func.func @transform_3(%arg0: i32) -> (i32, i32, i32) {
    %c0_i32 = arith.constant 0 : i32
    %c0_i32_0 = arith.constant 0 : i32
    %c0_i32_1 = arith.constant 0 : i32
    %c0_i32_2 = arith.constant 0 : i32
    return %c0_i32, %c0_i32_0, %c0_i32_1 : i32, i32, i32
  }
  func.func @transform_4(%arg0: i32) -> (i32, i32) {
    %c0_i32 = arith.constant 0 : i32
    %c0_i32_0 = arith.constant 0 : i32
    %c0_i32_1 = arith.constant 0 : i32
    return %c0_i32, %c0_i32_0 : i32, i32
  }
  func.func @transform_5(%arg0: i32) -> (i32, i32, i32) {
    %c0_i32 = arith.constant 0 : i32
    %c0_i32_0 = arith.constant 0 : i32
    %c0_i32_1 = arith.constant 0 : i32
    %c0_i32_2 = arith.constant 0 : i32
    return %c0_i32, %c0_i32_0, %c0_i32_1 : i32, i32, i32
  }
  func.func @transform_6(%arg0: i32) -> (i32, i32) {
    %c0_i32 = arith.constant 0 : i32
    %c0_i32_0 = arith.constant 0 : i32
    %c0_i32_1 = arith.constant 0 : i32
    return %c0_i32, %c0_i32_0 : i32, i32
  }
  func.func @transform_7(%arg0: i32) -> (i32, i32, i32) {
    %c0_i32 = arith.constant 0 : i32
    %c0_i32_0 = arith.constant 0 : i32
    %c0_i32_1 = arith.constant 0 : i32
    %c0_i32_2 = arith.constant 0 : i32
    return %c0_i32, %c0_i32_0, %c0_i32_1 : i32, i32, i32
  }
  func.func @transform_8(%arg0: i32) -> (i32, i32) {
    %c0_i32 = arith.constant 0 : i32
    %c0_i32_0 = arith.constant 0 : i32
    %c0_i32_1 = arith.constant 0 : i32
    return %c0_i32, %c0_i32_0 : i32, i32
  }
  func.func @transform_9(%arg0: i32) -> (i32, i32) {
    %c0_i32 = arith.constant 0 : i32
    %c0_i32_0 = arith.constant 0 : i32
    %c0_i32_1 = arith.constant 0 : i32
    return %c0_i32, %c0_i32_0 : i32, i32
  }
  func.func @transform_10(%arg0: i32) -> (i32, i32) {
    %c0_i32 = arith.constant 0 : i32
    %c0_i32_0 = arith.constant 0 : i32
    %c0_i32_1 = arith.constant 0 : i32
    return %c0_i32, %c0_i32_0 : i32, i32
  }
  func.func @transform_11(%arg0: i32) -> (i32, i32) {
    %c0_i32 = arith.constant 0 : i32
    %c0_i32_0 = arith.constant 0 : i32
    return %arg0, %c0_i32 : i32, i32
  }
}

</mosaic_0001>

<llo_original>
// kernel: convnet_forward.1
$region0: #{convnet_forward.1}
  #allocation0 [shape = 'u32[]', space=smem, size = 0x4, offset = 0x4, fixed_abs, tag = 'smem constant byte address 0x4 - core index']
  #allocation1 [shape = 'u32[72,128]{1,0:T(1,128)}', space=vmem, size = 0x9000, scoped, tag = 'internal scratch']
  #allocation2 [shape = 'bf16[2,16,16,160]{3,2,1,0:T(8,128)(2,1)}', space=vmem, size = 0x40000, scoped, tag = 'scratch operand']
  #allocation3 [shape = 'bf16[2,4,4,64]{3,2,1,0:T(4,128)(2,1)}', space=vmem, size = 0x2000, scoped, tag = 'scratch operand']
  %s0 = inlined_call_operand.vmem [shape: bf16[2,1024,32], index: 0, kind: input, shape index: {}]
  %s1 = inlined_call_operand.vmem [shape: bf16[32,32], index: 1, kind: input, shape index: {}]
  %s2 = inlined_call_operand.vmem [shape: f32[1,32], index: 2, kind: input, shape index: {}]
  %s3 = inlined_call_operand.vmem [shape: bf16[5,160,64], index: 3, kind: input, shape index: {}]
  %s4 = inlined_call_operand.vmem [shape: f32[1,64], index: 4, kind: input, shape index: {}]
  %s5 = inlined_call_operand.vmem [shape: bf16[9,64,64], index: 5, kind: input, shape index: {}]
  %s6 = inlined_call_operand.vmem [shape: f32[1,64], index: 6, kind: input, shape index: {}]
  %s7 = inlined_call_operand.vmem [shape: bf16[4,64,64], index: 7, kind: input, shape index: {}]
  %s8 = inlined_call_operand.vmem [shape: f32[1,64], index: 8, kind: input, shape index: {}]
  %s9 = inlined_call_operand.vmem [shape: bf16[64,128], index: 9, kind: input, shape index: {}]
  %s10 = inlined_call_operand.vmem [shape: f32[1,128], index: 10, kind: input, shape index: {}]
  %s11 = inlined_call_operand.hbm [shape: f32[2,128], index: 11, kind: output, shape index: {}]
  %s12 = sld [smem:[#allocation0]]
  $region54: #{convnet_forward.1} parent=0
    _
  %s14 = ssub.s32 1, %s12
  %s15 = scalar_select 0, %s14, %s12
  $region1: #{convnet_forward.1} parent=0
    #allocation4 [shape = 'u8[1024]{0}', space=vmem, size = 0x400, scoped, tag = 'output window, operand 0, single buffered']
    #allocation5 [shape = 's32[1]{0}', space=sflag, size = 0x4, scoped, tag = 'scoped memory for convnet_forward.1']
    %16 = vsyncpa [#allocation5], 0
    // Predicated region
    $region2: #{convnet_forward.1} parent=1 // pred_check
      _
    $region3: #{convnet_forward.1} parent=1 // pred_check_branch
      %18 = sbr.rel (0) target = $region5
    $region4: #{convnet_forward.1} parent=1 // pred_region
      _
    $region5: #{convnet_forward.1} parent=1 // pred_fallthru
      _
    // Predicated region
    $region6: #{convnet_forward.1} parent=1 // pred_check
      _
    $region7: #{convnet_forward.1} parent=1 // pred_check_branch
      %20 = sbr.rel (0) target = $region9
    $region8: #{convnet_forward.1} parent=1 // pred_region
      _
    $region9: #{convnet_forward.1} parent=1 // pred_fallthru
      _
    // Predicated region
    $region10: #{convnet_forward.1} parent=1 // pred_check
      _
    $region11: #{convnet_forward.1} parent=1 // pred_check_branch
      %22 = sbr.rel (0) target = $region13
    $region12: #{convnet_forward.1} parent=1 // pred_region
      _
    $region13: #{convnet_forward.1} parent=1 // pred_fallthru
      _
    // Predicated region
    $region14: #{convnet_forward.1} parent=1 // pred_check
      _
    $region15: #{convnet_forward.1} parent=1 // pred_check_branch
      %24 = sbr.rel (0) target = $region17
    $region16: #{convnet_forward.1} parent=1 // pred_region
      _
    $region17: #{convnet_forward.1} parent=1 // pred_fallthru
      _
    // Predicated region
    $region18: #{convnet_forward.1} parent=1 // pred_check
      _
    $region19: #{convnet_forward.1} parent=1 // pred_check_branch
      %26 = sbr.rel (0) target = $region21
    $region20: #{convnet_forward.1} parent=1 // pred_region
      _
    $region21: #{convnet_forward.1} parent=1 // pred_fallthru
      _
    // Predicated region
    $region22: #{convnet_forward.1} parent=1 // pred_check
      _
    $region23: #{convnet_forward.1} parent=1 // pred_check_branch
      %28 = sbr.rel (0) target = $region25
    $region24: #{convnet_forward.1} parent=1 // pred_region
      _
    $region25: #{convnet_forward.1} parent=1 // pred_fallthru
      _
    // Predicated region
    $region26: #{convnet_forward.1} parent=1 // pred_check
      _
    $region27: #{convnet_forward.1} parent=1 // pred_check_branch
      %30 = sbr.rel (0) target = $region29
    $region28: #{convnet_forward.1} parent=1 // pred_region
      _
    $region29: #{convnet_forward.1} parent=1 // pred_fallthru
      _
    // Predicated region
    $region30: #{convnet_forward.1} parent=1 // pred_check
      _
    $region31: #{convnet_forward.1} parent=1 // pred_check_branch
      %32 = sbr.rel (0) target = $region33
    $region32: #{convnet_forward.1} parent=1 // pred_region
      _
    $region33: #{convnet_forward.1} parent=1 // pred_fallthru
      _
    // Predicated region
    $region34: #{convnet_forward.1} parent=1 // pred_check
      _
    $region35: #{convnet_forward.1} parent=1 // pred_check_branch
      %34 = sbr.rel (0) target = $region37
    $region36: #{convnet_forward.1} parent=1 // pred_region
      _
    $region37: #{convnet_forward.1} parent=1 // pred_fallthru
      _
    // Predicated region
    $region38: #{convnet_forward.1} parent=1 // pred_check
      _
    $region39: #{convnet_forward.1} parent=1 // pred_check_branch
      %36 = sbr.rel (0) target = $region41
    $region40: #{convnet_forward.1} parent=1 // pred_region
      _
    $region41: #{convnet_forward.1} parent=1 // pred_fallthru
      _
    // Predicated region
    $region42: #{convnet_forward.1} parent=1 // pred_check
      _
    $region43: #{convnet_forward.1} parent=1 // pred_check_branch
      %38 = sbr.rel (0) target = $region45
    $region44: #{convnet_forward.1} parent=1 // pred_region
      _
    $region45: #{convnet_forward.1} parent=1 // pred_fallthru
      _
    %v40 = vld [vmem:[%s0] sm:$0xf]
    %v41 = vld [vmem:[%s0 + $0x4] sm:$0xf]
    %v42 = vld [vmem:[%s0 + $0x8] sm:$0xf]
    %v43 = vld [vmem:[%s0 + $0xc] sm:$0xf]
    %v44 = vld [vmem:[%s0 + $0x10] sm:$0xf]
    %v45 = vld [vmem:[%s0 + $0x14] sm:$0xf]
    %v46 = vld [vmem:[%s0 + $0x18] sm:$0xf]
    %v47 = vld [vmem:[%s0 + $0x1c] sm:$0xf]
    %v48 = vld [vmem:[%s0 + $0x20] sm:$0xf]
    %v49 = vld [vmem:[%s0 + $0x24] sm:$0xf]
    %v50 = vld [vmem:[%s0 + $0x28] sm:$0xf]
    %v51 = vld [vmem:[%s0 + $0x2c] sm:$0xf]
    %v52 = vld [vmem:[%s0 + $0x30] sm:$0xf]
    %v53 = vld [vmem:[%s0 + $0x34] sm:$0xf]
    %v54 = vld [vmem:[%s0 + $0x38] sm:$0xf]
    %v55 = vld [vmem:[%s0 + $0x3c] sm:$0xf]
    %v56 = vld [vmem:[%s0 + $0x40] sm:$0xf]
    %v57 = vld [vmem:[%s0 + $0x44] sm:$0xf]
    %v58 = vld [vmem:[%s0 + $0x48] sm:$0xf]
    %v59 = vld [vmem:[%s0 + $0x4c] sm:$0xf]
    %v60 = vld [vmem:[%s0 + $0x50] sm:$0xf]
    %v61 = vld [vmem:[%s0 + $0x54] sm:$0xf]
    %v62 = vld [vmem:[%s0 + $0x58] sm:$0xf]
    %v63 = vld [vmem:[%s0 + $0x5c] sm:$0xf]
    %v64 = vld [vmem:[%s0 + $0x60] sm:$0xf]
    %v65 = vld [vmem:[%s0 + $0x64] sm:$0xf]
    %v66 = vld [vmem:[%s0 + $0x68] sm:$0xf]
    %v67 = vld [vmem:[%s0 + $0x6c] sm:$0xf]
    %v68 = vld [vmem:[%s0 + $0x70] sm:$0xf]
    %v69 = vld [vmem:[%s0 + $0x74] sm:$0xf]
    %v70 = vld [vmem:[%s0 + $0x78] sm:$0xf]
    %v71 = vld [vmem:[%s0 + $0x7c] sm:$0xf]
    %v72 = vld [vmem:[%s0 + $0x80] sm:$0xf]
    %v73 = vld [vmem:[%s0 + $0x84] sm:$0xf]
    %v74 = vld [vmem:[%s0 + $0x88] sm:$0xf]
    %v75 = vld [vmem:[%s0 + $0x8c] sm:$0xf]
    %v76 = vld [vmem:[%s0 + $0x90] sm:$0xf]
    %v77 = vld [vmem:[%s0 + $0x94] sm:$0xf]
    %v78 = vld [vmem:[%s0 + $0x98] sm:$0xf]
    %v79 = vld [vmem:[%s0 + $0x9c] sm:$0xf]
    %v80 = vld [vmem:[%s0 + $0xa0] sm:$0xf]
    %v81 = vld [vmem:[%s0 + $0xa4] sm:$0xf]
    %v82 = vld [vmem:[%s0 + $0xa8] sm:$0xf]
    %v83 = vld [vmem:[%s0 + $0xac] sm:$0xf]
    %v84 = vld [vmem:[%s0 + $0xb0] sm:$0xf]
    %v85 = vld [vmem:[%s0 + $0xb4] sm:$0xf]
    %v86 = vld [vmem:[%s0 + $0xb8] sm:$0xf]
    %v87 = vld [vmem:[%s0 + $0xbc] sm:$0xf]
    %v88 = vld [vmem:[%s0 + $0xc0] sm:$0xf]
    %v89 = vld [vmem:[%s0 + $0xc4] sm:$0xf]
    %v90 = vld [vmem:[%s0 + $0xc8] sm:$0xf]
    %v91 = vld [vmem:[%s0 + $0xcc] sm:$0xf]
    %v92 = vld [vmem:[%s0 + $0xd0] sm:$0xf]
    %v93 = vld [vmem:[%s0 + $0xd4] sm:$0xf]
    %v94 = vld [vmem:[%s0 + $0xd8] sm:$0xf]
    %v95 = vld [vmem:[%s0 + $0xdc] sm:$0xf]
    %v96 = vld [vmem:[%s0 + $0xe0] sm:$0xf]
    %v97 = vld [vmem:[%s0 + $0xe4] sm:$0xf]
    %v98 = vld [vmem:[%s0 + $0xe8] sm:$0xf]
    %v99 = vld [vmem:[%s0 + $0xec] sm:$0xf]
    %v100 = vld [vmem:[%s0 + $0xf0] sm:$0xf]
    %v101 = vld [vmem:[%s0 + $0xf4] sm:$0xf]
    %v102 = vld [vmem:[%s0 + $0xf8] sm:$0xf]
    %v103 = vld [vmem:[%s0 + $0xfc] sm:$0xf]
    %v104 = vld [vmem:[%s0 + $0x100] sm:$0xf]
    %v105 = vld [vmem:[%s0 + $0x104] sm:$0xf]
    %v106 = vld [vmem:[%s0 + $0x108] sm:$0xf]
    %v107 = vld [vmem:[%s0 + $0x10c] sm:$0xf]
    %v108 = vld [vmem:[%s0 + $0x110] sm:$0xf]
    %v109 = vld [vmem:[%s0 + $0x114] sm:$0xf]
    %v110 = vld [vmem:[%s0 + $0x118] sm:$0xf]
    %v111 = vld [vmem:[%s0 + $0x11c] sm:$0xf]
    %v112 = vld [vmem:[%s0 + $0x120] sm:$0xf]
    %v113 = vld [vmem:[%s0 + $0x124] sm:$0xf]
    %v114 = vld [vmem:[%s0 + $0x128] sm:$0xf]
    %v115 = vld [vmem:[%s0 + $0x12c] sm:$0xf]
    %v116 = vld [vmem:[%s0 + $0x130] sm:$0xf]
    %v117 = vld [vmem:[%s0 + $0x134] sm:$0xf]
    %v118 = vld [vmem:[%s0 + $0x138] sm:$0xf]
    %v119 = vld [vmem:[%s0 + $0x13c] sm:$0xf]
    %v120 = vld [vmem:[%s0 + $0x140] sm:$0xf]
    %v121 = vld [vmem:[%s0 + $0x144] sm:$0xf]
    %v122 = vld [vmem:[%s0 + $0x148] sm:$0xf]
    %v123 = vld [vmem:[%s0 + $0x14c] sm:$0xf]
    %v124 = vld [vmem:[%s0 + $0x150] sm:$0xf]
    %v125 = vld [vmem:[%s0 + $0x154] sm:$0xf]
    %v126 = vld [vmem:[%s0 + $0x158] sm:$0xf]
    %v127 = vld [vmem:[%s0 + $0x15c] sm:$0xf]
    %v128 = vld [vmem:[%s0 + $0x160] sm:$0xf]
    %v129 = vld [vmem:[%s0 + $0x164] sm:$0xf]
    %v130 = vld [vmem:[%s0 + $0x168] sm:$0xf]
    %v131 = vld [vmem:[%s0 + $0x16c] sm:$0xf]
    %v132 = vld [vmem:[%s0 + $0x170] sm:$0xf]
    %v133 = vld [vmem:[%s0 + $0x174] sm:$0xf]
    %v134 = vld [vmem:[%s0 + $0x178] sm:$0xf]
    %v135 = vld [vmem:[%s0 + $0x17c] sm:$0xf]
    %v136 = vld [vmem:[%s0 + $0x180] sm:$0xf]
    %v137 = vld [vmem:[%s0 + $0x184] sm:$0xf]
    %v138 = vld [vmem:[%s0 + $0x188] sm:$0xf]
    %v139 = vld [vmem:[%s0 + $0x18c] sm:$0xf]
    %v140 = vld [vmem:[%s0 + $0x190] sm:$0xf]
    %v141 = vld [vmem:[%s0 + $0x194] sm:$0xf]
    %v142 = vld [vmem:[%s0 + $0x198] sm:$0xf]
    %v143 = vld [vmem:[%s0 + $0x19c] sm:$0xf]
    %v144 = vld [vmem:[%s0 + $0x1a0] sm:$0xf]
    %v145 = vld [vmem:[%s0 + $0x1a4] sm:$0xf]
    %v146 = vld [vmem:[%s0 + $0x1a8] sm:$0xf]
    %v147 = vld [vmem:[%s0 + $0x1ac] sm:$0xf]
    %v148 = vld [vmem:[%s0 + $0x1b0] sm:$0xf]
    %v149 = vld [vmem:[%s0 + $0x1b4] sm:$0xf]
    %v150 = vld [vmem:[%s0 + $0x1b8] sm:$0xf]
    %v151 = vld [vmem:[%s0 + $0x1bc] sm:$0xf]
    %v152 = vld [vmem:[%s0 + $0x1c0] sm:$0xf]
    %v153 = vld [vmem:[%s0 + $0x1c4] sm:$0xf]
    %v154 = vld [vmem:[%s0 + $0x1c8] sm:$0xf]
    %v155 = vld [vmem:[%s0 + $0x1cc] sm:$0xf]
    %v156 = vld [vmem:[%s0 + $0x1d0] sm:$0xf]
    %v157 = vld [vmem:[%s0 + $0x1d4] sm:$0xf]
    %v158 = vld [vmem:[%s0 + $0x1d8] sm:$0xf]
    %v159 = vld [vmem:[%s0 + $0x1dc] sm:$0xf]
    %v160 = vld [vmem:[%s0 + $0x1e0] sm:$0xf]
    %v161 = vld [vmem:[%s0 + $0x1e4] sm:$0xf]
    %v162 = vld [vmem:[%s0 + $0x1e8] sm:$0xf]
    %v163 = vld [vmem:[%s0 + $0x1ec] sm:$0xf]
    %v164 = vld [vmem:[%s0 + $0x1f0] sm:$0xf]
    %v165 = vld [vmem:[%s0 + $0x1f4] sm:$0xf]
    %v166 = vld [vmem:[%s0 + $0x1f8] sm:$0xf]
    %v167 = vld [vmem:[%s0 + $0x1fc] sm:$0xf]
    %v168 = vld [vmem:[%s0 + $0x200] sm:$0xf]
    %v169 = vld [vmem:[%s0 + $0x204] sm:$0xf]
    %v170 = vld [vmem:[%s0 + $0x208] sm:$0xf]
    %v171 = vld [vmem:[%s0 + $0x20c] sm:$0xf]
    %v172 = vld [vmem:[%s0 + $0x210] sm:$0xf]
    %v173 = vld [vmem:[%s0 + $0x214] sm:$0xf]
    %v174 = vld [vmem:[%s0 + $0x218] sm:$0xf]
    %v175 = vld [vmem:[%s0 + $0x21c] sm:$0xf]
    %v176 = vld [vmem:[%s0 + $0x220] sm:$0xf]
    %v177 = vld [vmem:[%s0 + $0x224] sm:$0xf]
    %v178 = vld [vmem:[%s0 + $0x228] sm:$0xf]
    %v179 = vld [vmem:[%s0 + $0x22c] sm:$0xf]
    %v180 = vld [vmem:[%s0 + $0x230] sm:$0xf]
    %v181 = vld [vmem:[%s0 + $0x234] sm:$0xf]
    %v182 = vld [vmem:[%s0 + $0x238] sm:$0xf]
    %v183 = vld [vmem:[%s0 + $0x23c] sm:$0xf]
    %v184 = vld [vmem:[%s0 + $0x240] sm:$0xf]
    %v185 = vld [vmem:[%s0 + $0x244] sm:$0xf]
    %v186 = vld [vmem:[%s0 + $0x248] sm:$0xf]
    %v187 = vld [vmem:[%s0 + $0x24c] sm:$0xf]
    %v188 = vld [vmem:[%s0 + $0x250] sm:$0xf]
    %v189 = vld [vmem:[%s0 + $0x254] sm:$0xf]
    %v190 = vld [vmem:[%s0 + $0x258] sm:$0xf]
    %v191 = vld [vmem:[%s0 + $0x25c] sm:$0xf]
    %v192 = vld [vmem:[%s0 + $0x260] sm:$0xf]
    %v193 = vld [vmem:[%s0 + $0x264] sm:$0xf]
    %v194 = vld [vmem:[%s0 + $0x268] sm:$0xf]
    %v195 = vld [vmem:[%s0 + $0x26c] sm:$0xf]
    %v196 = vld [vmem:[%s0 + $0x270] sm:$0xf]
    %v197 = vld [vmem:[%s0 + $0x274] sm:$0xf]
    %v198 = vld [vmem:[%s0 + $0x278] sm:$0xf]
    %v199 = vld [vmem:[%s0 + $0x27c] sm:$0xf]
    %v200 = vld [vmem:[%s0 + $0x280] sm:$0xf]
    %v201 = vld [vmem:[%s0 + $0x284] sm:$0xf]
    %v202 = vld [vmem:[%s0 + $0x288] sm:$0xf]
    %v203 = vld [vmem:[%s0 + $0x28c] sm:$0xf]
    %v204 = vld [vmem:[%s0 + $0x290] sm:$0xf]
    %v205 = vld [vmem:[%s0 + $0x294] sm:$0xf]
    %v206 = vld [vmem:[%s0 + $0x298] sm:$0xf]
    %v207 = vld [vmem:[%s0 + $0x29c] sm:$0xf]
    %v208 = vld [vmem:[%s0 + $0x2a0] sm:$0xf]
    %v209 = vld [vmem:[%s0 + $0x2a4] sm:$0xf]
    %v210 = vld [vmem:[%s0 + $0x2a8] sm:$0xf]
    %v211 = vld [vmem:[%s0 + $0x2ac] sm:$0xf]
    %v212 = vld [vmem:[%s0 + $0x2b0] sm:$0xf]
    %v213 = vld [vmem:[%s0 + $0x2b4] sm:$0xf]
    %v214 = vld [vmem:[%s0 + $0x2b8] sm:$0xf]
    %v215 = vld [vmem:[%s0 + $0x2bc] sm:$0xf]
    %v216 = vld [vmem:[%s0 + $0x2c0] sm:$0xf]
    %v217 = vld [vmem:[%s0 + $0x2c4] sm:$0xf]
    %v218 = vld [vmem:[%s0 + $0x2c8] sm:$0xf]
    %v219 = vld [vmem:[%s0 + $0x2cc] sm:$0xf]
    %v220 = vld [vmem:[%s0 + $0x2d0] sm:$0xf]
    %v221 = vld [vmem:[%s0 + $0x2d4] sm:$0xf]
    %v222 = vld [vmem:[%s0 + $0x2d8] sm:$0xf]
    %v223 = vld [vmem:[%s0 + $0x2dc] sm:$0xf]
    %v224 = vld [vmem:[%s0 + $0x2e0] sm:$0xf]
    %v225 = vld [vmem:[%s0 + $0x2e4] sm:$0xf]
    %v226 = vld [vmem:[%s0 + $0x2e8] sm:$0xf]
    %v227 = vld [vmem:[%s0 + $0x2ec] sm:$0xf]
    %v228 = vld [vmem:[%s0 + $0x2f0] sm:$0xf]
    %v229 = vld [vmem:[%s0 + $0x2f4] sm:$0xf]
    %v230 = vld [vmem:[%s0 + $0x2f8] sm:$0xf]
    %v231 = vld [vmem:[%s0 + $0x2fc] sm:$0xf]
    %v232 = vld [vmem:[%s0 + $0x300] sm:$0xf]
    %v233 = vld [vmem:[%s0 + $0x304] sm:$0xf]
    %v234 = vld [vmem:[%s0 + $0x308] sm:$0xf]
    %v235 = vld [vmem:[%s0 + $0x30c] sm:$0xf]
    %v236 = vld [vmem:[%s0 + $0x310] sm:$0xf]
    %v237 = vld [vmem:[%s0 + $0x314] sm:$0xf]
    %v238 = vld [vmem:[%s0 + $0x318] sm:$0xf]
    %v239 = vld [vmem:[%s0 + $0x31c] sm:$0xf]
    %v240 = vld [vmem:[%s0 + $0x320] sm:$0xf]
    %v241 = vld [vmem:[%s0 + $0x324] sm:$0xf]
    %v242 = vld [vmem:[%s0 + $0x328] sm:$0xf]
    %v243 = vld [vmem:[%s0 + $0x32c] sm:$0xf]
    %v244 = vld [vmem:[%s0 + $0x330] sm:$0xf]
    %v245 = vld [vmem:[%s0 + $0x334] sm:$0xf]
    %v246 = vld [vmem:[%s0 + $0x338] sm:$0xf]
    %v247 = vld [vmem:[%s0 + $0x33c] sm:$0xf]
    %v248 = vld [vmem:[%s0 + $0x340] sm:$0xf]
    %v249 = vld [vmem:[%s0 + $0x344] sm:$0xf]
    %v250 = vld [vmem:[%s0 + $0x348] sm:$0xf]
    %v251 = vld [vmem:[%s0 + $0x34c] sm:$0xf]
    %v252 = vld [vmem:[%s0 + $0x350] sm:$0xf]
    %v253 = vld [vmem:[%s0 + $0x354] sm:$0xf]
    %v254 = vld [vmem:[%s0 + $0x358] sm:$0xf]
    %v255 = vld [vmem:[%s0 + $0x35c] sm:$0xf]
    %v256 = vld [vmem:[%s0 + $0x360] sm:$0xf]
    %v257 = vld [vmem:[%s0 + $0x364] sm:$0xf]
    %v258 = vld [vmem:[%s0 + $0x368] sm:$0xf]
    %v259 = vld [vmem:[%s0 + $0x36c] sm:$0xf]
    %v260 = vld [vmem:[%s0 + $0x370] sm:$0xf]
    %v261 = vld [vmem:[%s0 + $0x374] sm:$0xf]
    %v262 = vld [vmem:[%s0 + $0x378] sm:$0xf]
    %v263 = vld [vmem:[%s0 + $0x37c] sm:$0xf]
    %v264 = vld [vmem:[%s0 + $0x380] sm:$0xf]
    %v265 = vld [vmem:[%s0 + $0x384] sm:$0xf]
    %v266 = vld [vmem:[%s0 + $0x388] sm:$0xf]
    %v267 = vld [vmem:[%s0 + $0x38c] sm:$0xf]
    %v268 = vld [vmem:[%s0 + $0x390] sm:$0xf]
    %v269 = vld [vmem:[%s0 + $0x394] sm:$0xf]
    %v270 = vld [vmem:[%s0 + $0x398] sm:$0xf]
    %v271 = vld [vmem:[%s0 + $0x39c] sm:$0xf]
    %v272 = vld [vmem:[%s0 + $0x3a0] sm:$0xf]
    %v273 = vld [vmem:[%s0 + $0x3a4] sm:$0xf]
    %v274 = vld [vmem:[%s0 + $0x3a8] sm:$0xf]
    %v275 = vld [vmem:[%s0 + $0x3ac] sm:$0xf]
    %v276 = vld [vmem:[%s0 + $0x3b0] sm:$0xf]
    %v277 = vld [vmem:[%s0 + $0x3b4] sm:$0xf]
    %v278 = vld [vmem:[%s0 + $0x3b8] sm:$0xf]
    %v279 = vld [vmem:[%s0 + $0x3bc] sm:$0xf]
    %v280 = vld [vmem:[%s0 + $0x3c0] sm:$0xf]
    %v281 = vld [vmem:[%s0 + $0x3c4] sm:$0xf]
    %v282 = vld [vmem:[%s0 + $0x3c8] sm:$0xf]
    %v283 = vld [vmem:[%s0 + $0x3cc] sm:$0xf]
    %v284 = vld [vmem:[%s0 + $0x3d0] sm:$0xf]
    %v285 = vld [vmem:[%s0 + $0x3d4] sm:$0xf]
    %v286 = vld [vmem:[%s0 + $0x3d8] sm:$0xf]
    %v287 = vld [vmem:[%s0 + $0x3dc] sm:$0xf]
    %v288 = vld [vmem:[%s0 + $0x3e0] sm:$0xf]
    %v289 = vld [vmem:[%s0 + $0x3e4] sm:$0xf]
    %v290 = vld [vmem:[%s0 + $0x3e8] sm:$0xf]
    %v291 = vld [vmem:[%s0 + $0x3ec] sm:$0xf]
    %v292 = vld [vmem:[%s0 + $0x3f0] sm:$0xf]
    %v293 = vld [vmem:[%s0 + $0x3f4] sm:$0xf]
    %v294 = vld [vmem:[%s0 + $0x3f8] sm:$0xf]
    %v295 = vld [vmem:[%s0 + $0x3fc] sm:$0xf]
    %v296 = vld [vmem:[%s1] sm:$0xf]
    %v297 = vld [vmem:[%s1 + $0x4] sm:$0xf]
    %v298 = vld [vmem:[%s1 + $0x8] sm:$0xf]
    %v299 = vld [vmem:[%s1 + $0xc] sm:$0xf]
    %v300 = vld [vmem:[%s2] sm:$0x1]
    %v302 = vperm.slane %v300, 0
    %v560 = vunpack.c.l.b16 %v40
    %v561 = vunpack.c.l.b16 %v41
    %v562 = vunpack.c.l.b16 %v42
    %v563 = vunpack.c.l.b16 %v43
    %v564 = vunpack.c.l.b16 %v44
    %v565 = vunpack.c.l.b16 %v45
    %v566 = vunpack.c.l.b16 %v46
    %v567 = vunpack.c.l.b16 %v47
    %v568 = vunpack.c.l.b16 %v48
    %v569 = vunpack.c.l.b16 %v49
    %v570 = vunpack.c.l.b16 %v50
    %v571 = vunpack.c.l.b16 %v51
    %v572 = vunpack.c.l.b16 %v52
    %v573 = vunpack.c.l.b16 %v53
    %v574 = vunpack.c.l.b16 %v54
    %v575 = vunpack.c.l.b16 %v55
    %v576 = vunpack.c.l.b16 %v56
    %v577 = vunpack.c.l.b16 %v57
    %v578 = vunpack.c.l.b16 %v58
    %v579 = vunpack.c.l.b16 %v59
    %v580 = vunpack.c.l.b16 %v60
    %v581 = vunpack.c.l.b16 %v61
    %v582 = vunpack.c.l.b16 %v62
    %v583 = vunpack.c.l.b16 %v63
    %v584 = vunpack.c.l.b16 %v64
    %v585 = vunpack.c.l.b16 %v65
    %v586 = vunpack.c.l.b16 %v66
    %v587 = vunpack.c.l.b16 %v67
    %v588 = vunpack.c.l.b16 %v68
    %v589 = vunpack.c.l.b16 %v69
    %v590 = vunpack.c.l.b16 %v70
    %v591 = vunpack.c.l.b16 %v71
    %v592 = vunpack.c.l.b16 %v72
    %v593 = vunpack.c.l.b16 %v73
    %v594 = vunpack.c.l.b16 %v74
    %v595 = vunpack.c.l.b16 %v75
    %v596 = vunpack.c.l.b16 %v76
    %v597 = vunpack.c.l.b16 %v77
    %v598 = vunpack.c.l.b16 %v78
    %v599 = vunpack.c.l.b16 %v79
    %v600 = vunpack.c.l.b16 %v80
    %v601 = vunpack.c.l.b16 %v81
    %v602 = vunpack.c.l.b16 %v82
    %v603 = vunpack.c.l.b16 %v83
    %v604 = vunpack.c.l.b16 %v84
    %v605 = vunpack.c.l.b16 %v85
    %v606 = vunpack.c.l.b16 %v86
    %v607 = vunpack.c.l.b16 %v87
    %v608 = vunpack.c.l.b16 %v88
    %v609 = vunpack.c.l.b16 %v89
    %v610 = vunpack.c.l.b16 %v90
    %v611 = vunpack.c.l.b16 %v91
    %v612 = vunpack.c.l.b16 %v92
    %v613 = vunpack.c.l.b16 %v93
    %v614 = vunpack.c.l.b16 %v94
    %v615 = vunpack.c.l.b16 %v95
    %v616 = vunpack.c.l.b16 %v96
    %v617 = vunpack.c.l.b16 %v97
    %v618 = vunpack.c.l.b16 %v98
    %v619 = vunpack.c.l.b16 %v99
    %v620 = vunpack.c.l.b16 %v100
    %v621 = vunpack.c.l.b16 %v101
    %v622 = vunpack.c.l.b16 %v102
    %v623 = vunpack.c.l.b16 %v103
    %v624 = vunpack.c.l.b16 %v104
    %v625 = vunpack.c.l.b16 %v105
    %v626 = vunpack.c.l.b16 %v106
    %v627 = vunpack.c.l.b16 %v107
    %v628 = vunpack.c.l.b16 %v108
    %v629 = vunpack.c.l.b16 %v109
    %v630 = vunpack.c.l.b16 %v110
    %v631 = vunpack.c.l.b16 %v111
    %v632 = vunpack.c.l.b16 %v112
    %v633 = vunpack.c.l.b16 %v113
    %v634 = vunpack.c.l.b16 %v114
    %v635 = vunpack.c.l.b16 %v115
    %v636 = vunpack.c.l.b16 %v116
    %v637 = vunpack.c.l.b16 %v117
    %v638 = vunpack.c.l.b16 %v118
    %v639 = vunpack.c.l.b16 %v119
    %v640 = vunpack.c.l.b16 %v120
    %v641 = vunpack.c.l.b16 %v121
    %v642 = vunpack.c.l.b16 %v122
    %v643 = vunpack.c.l.b16 %v123
    %v644 = vunpack.c.l.b16 %v124
    %v645 = vunpack.c.l.b16 %v125
    %v646 = vunpack.c.l.b16 %v126
    %v647 = vunpack.c.l.b16 %v127
    %v648 = vunpack.c.l.b16 %v128
    %v649 = vunpack.c.l.b16 %v129
    %v650 = vunpack.c.l.b16 %v130
    %v651 = vunpack.c.l.b16 %v131
    %v652 = vunpack.c.l.b16 %v132
    %v653 = vunpack.c.l.b16 %v133
    %v654 = vunpack.c.l.b16 %v134
    %v655 = vunpack.c.l.b16 %v135
    %v656 = vunpack.c.l.b16 %v136
    %v657 = vunpack.c.l.b16 %v137
    %v658 = vunpack.c.l.b16 %v138
    %v659 = vunpack.c.l.b16 %v139
    %v660 = vunpack.c.l.b16 %v140
    %v661 = vunpack.c.l.b16 %v141
    %v662 = vunpack.c.l.b16 %v142
    %v663 = vunpack.c.l.b16 %v143
    %v664 = vunpack.c.l.b16 %v144
    %v665 = vunpack.c.l.b16 %v145
    %v666 = vunpack.c.l.b16 %v146
    %v667 = vunpack.c.l.b16 %v147
    %v668 = vunpack.c.l.b16 %v148
    %v669 = vunpack.c.l.b16 %v149
    %v670 = vunpack.c.l.b16 %v150
    %v671 = vunpack.c.l.b16 %v151
    %v672 = vunpack.c.l.b16 %v152
    %v673 = vunpack.c.l.b16 %v153
    %v674 = vunpack.c.l.b16 %v154
    %v675 = vunpack.c.l.b16 %v155
    %v676 = vunpack.c.l.b16 %v156
    %v677 = vunpack.c.l.b16 %v157
    %v678 = vunpack.c.l.b16 %v158
    %v679 = vunpack.c.l.b16 %v159
    %v680 = vunpack.c.l.b16 %v160
    %v681 = vunpack.c.l.b16 %v161
    %v682 = vunpack.c.l.b16 %v162
    %v683 = vunpack.c.l.b16 %v163
    %v684 = vunpack.c.l.b16 %v164
    %v685 = vunpack.c.l.b16 %v165
    %v686 = vunpack.c.l.b16 %v166
    %v687 = vunpack.c.l.b16 %v167
    %v688 = vunpack.c.l.b16 %v168
    %v689 = vunpack.c.l.b16 %v169
    %v690 = vunpack.c.l.b16 %v170
    %v691 = vunpack.c.l.b16 %v171
    %v692 = vunpack.c.l.b16 %v172
    %v693 = vunpack.c.l.b16 %v173
    %v694 = vunpack.c.l.b16 %v174
    %v695 = vunpack.c.l.b16 %v175
    %v696 = vunpack.c.l.b16 %v176
    %v697 = vunpack.c.l.b16 %v177
    %v698 = vunpack.c.l.b16 %v178
    %v699 = vunpack.c.l.b16 %v179
    %v700 = vunpack.c.l.b16 %v180
    %v701 = vunpack.c.l.b16 %v181
    %v702 = vunpack.c.l.b16 %v182
    %v703 = vunpack.c.l.b16 %v183
    %v704 = vunpack.c.l.b16 %v184
    %v705 = vunpack.c.l.b16 %v185
    %v706 = vunpack.c.l.b16 %v186
    %v707 = vunpack.c.l.b16 %v187
    %v708 = vunpack.c.l.b16 %v188
    %v709 = vunpack.c.l.b16 %v189
    %v710 = vunpack.c.l.b16 %v190
    %v711 = vunpack.c.l.b16 %v191
    %v712 = vunpack.c.l.b16 %v192
    %v713 = vunpack.c.l.b16 %v193
    %v714 = vunpack.c.l.b16 %v194
    %v715 = vunpack.c.l.b16 %v195
    %v716 = vunpack.c.l.b16 %v196
    %v717 = vunpack.c.l.b16 %v197
    %v718 = vunpack.c.l.b16 %v198
    %v719 = vunpack.c.l.b16 %v199
    %v720 = vunpack.c.l.b16 %v200
    %v721 = vunpack.c.l.b16 %v201
    %v722 = vunpack.c.l.b16 %v202
    %v723 = vunpack.c.l.b16 %v203
    %v724 = vunpack.c.l.b16 %v204
    %v725 = vunpack.c.l.b16 %v205
    %v726 = vunpack.c.l.b16 %v206
    %v727 = vunpack.c.l.b16 %v207
    %v728 = vunpack.c.l.b16 %v208
    %v729 = vunpack.c.l.b16 %v209
    %v730 = vunpack.c.l.b16 %v210
    %v731 = vunpack.c.l.b16 %v211
    %v732 = vunpack.c.l.b16 %v212
    %v733 = vunpack.c.l.b16 %v213
    %v734 = vunpack.c.l.b16 %v214
    %v735 = vunpack.c.l.b16 %v215
    %v736 = vunpack.c.l.b16 %v216
    %v737 = vunpack.c.l.b16 %v217
    %v738 = vunpack.c.l.b16 %v218
    %v739 = vunpack.c.l.b16 %v219
    %v740 = vunpack.c.l.b16 %v220
    %v741 = vunpack.c.l.b16 %v221
    %v742 = vunpack.c.l.b16 %v222
    %v743 = vunpack.c.l.b16 %v223
    %v744 = vunpack.c.l.b16 %v224
    %v745 = vunpack.c.l.b16 %v225
    %v746 = vunpack.c.l.b16 %v226
    %v747 = vunpack.c.l.b16 %v227
    %v748 = vunpack.c.l.b16 %v228
    %v749 = vunpack.c.l.b16 %v229
    %v750 = vunpack.c.l.b16 %v230
    %v751 = vunpack.c.l.b16 %v231
    %v752 = vunpack.c.l.b16 %v232
    %v753 = vunpack.c.l.b16 %v233
    %v754 = vunpack.c.l.b16 %v234
    %v755 = vunpack.c.l.b16 %v235
    %v756 = vunpack.c.l.b16 %v236
    %v757 = vunpack.c.l.b16 %v237
    %v758 = vunpack.c.l.b16 %v238
    %v759 = vunpack.c.l.b16 %v239
    %v760 = vunpack.c.l.b16 %v240
    %v761 = vunpack.c.l.b16 %v241
    %v762 = vunpack.c.l.b16 %v242
    %v763 = vunpack.c.l.b16 %v243
    %v764 = vunpack.c.l.b16 %v244
    %v765 = vunpack.c.l.b16 %v245
    %v766 = vunpack.c.l.b16 %v246
    %v767 = vunpack.c.l.b16 %v247
    %v768 = vunpack.c.l.b16 %v248
    %v769 = vunpack.c.l.b16 %v249
    %v770 = vunpack.c.l.b16 %v250
    %v771 = vunpack.c.l.b16 %v251
    %v772 = vunpack.c.l.b16 %v252
    %v773 = vunpack.c.l.b16 %v253
    %v774 = vunpack.c.l.b16 %v254
    %v775 = vunpack.c.l.b16 %v255
    %v776 = vunpack.c.l.b16 %v256
    %v777 = vunpack.c.l.b16 %v257
    %v778 = vunpack.c.l.b16 %v258
    %v779 = vunpack.c.l.b16 %v259
    %v780 = vunpack.c.l.b16 %v260
    %v781 = vunpack.c.l.b16 %v261
    %v782 = vunpack.c.l.b16 %v262
    %v783 = vunpack.c.l.b16 %v263
    %v784 = vunpack.c.l.b16 %v264
    %v785 = vunpack.c.l.b16 %v265
    %v786 = vunpack.c.l.b16 %v266
    %v787 = vunpack.c.l.b16 %v267
    %v788 = vunpack.c.l.b16 %v268
    %v789 = vunpack.c.l.b16 %v269
    %v790 = vunpack.c.l.b16 %v270
    %v791 = vunpack.c.l.b16 %v271
    %v792 = vunpack.c.l.b16 %v272
    %v793 = vunpack.c.l.b16 %v273
    %v794 = vunpack.c.l.b16 %v274
    %v795 = vunpack.c.l.b16 %v275
    %v796 = vunpack.c.l.b16 %v276
    %v797 = vunpack.c.l.b16 %v277
    %v798 = vunpack.c.l.b16 %v278
    %v799 = vunpack.c.l.b16 %v279
    %v800 = vunpack.c.l.b16 %v280
    %v801 = vunpack.c.l.b16 %v281
    %v802 = vunpack.c.l.b16 %v282
    %v803 = vunpack.c.l.b16 %v283
    %v804 = vunpack.c.l.b16 %v284
    %v805 = vunpack.c.l.b16 %v285
    %v806 = vunpack.c.l.b16 %v286
    %v807 = vunpack.c.l.b16 %v287
    %v808 = vunpack.c.l.b16 %v288
    %v809 = vunpack.c.l.b16 %v289
    %v810 = vunpack.c.l.b16 %v290
    %v811 = vunpack.c.l.b16 %v291
    %v812 = vunpack.c.l.b16 %v292
    %v813 = vunpack.c.l.b16 %v293
    %v814 = vunpack.c.l.b16 %v294
    %v815 = vunpack.c.l.b16 %v295
    %v816 = vpack.c.b16 %v561, %v560
    %v817 = vpack.c.b16 %v563, %v562
    %v818 = vpack.c.b16 %v565, %v564
    %v819 = vpack.c.b16 %v567, %v566
    %v820 = vpack.c.b16 %v569, %v568
    %v821 = vpack.c.b16 %v571, %v570
    %v822 = vpack.c.b16 %v573, %v572
    %v823 = vpack.c.b16 %v575, %v574
    %v824 = vpack.c.b16 %v577, %v576
    %v825 = vpack.c.b16 %v579, %v578
    %v826 = vpack.c.b16 %v581, %v580
    %v827 = vpack.c.b16 %v583, %v582
    %v828 = vpack.c.b16 %v585, %v584
    %v829 = vpack.c.b16 %v587, %v586
    %v830 = vpack.c.b16 %v589, %v588
    %v831 = vpack.c.b16 %v591, %v590
    %v832 = vpack.c.b16 %v593, %v592
    %v833 = vpack.c.b16 %v595, %v594
    %v834 = vpack.c.b16 %v597, %v596
    %v835 = vpack.c.b16 %v599, %v598
    %v836 = vpack.c.b16 %v601, %v600
    %v837 = vpack.c.b16 %v603, %v602
    %v838 = vpack.c.b16 %v605, %v604
    %v839 = vpack.c.b16 %v607, %v606
    %v840 = vpack.c.b16 %v609, %v608
    %v841 = vpack.c.b16 %v611, %v610
    %v842 = vpack.c.b16 %v613, %v612
    %v843 = vpack.c.b16 %v615, %v614
    %v844 = vpack.c.b16 %v617, %v616
    %v845 = vpack.c.b16 %v619, %v618
    %v846 = vpack.c.b16 %v621, %v620
    %v847 = vpack.c.b16 %v623, %v622
    %v848 = vpack.c.b16 %v625, %v624
    %v849 = vpack.c.b16 %v627, %v626
    %v850 = vpack.c.b16 %v629, %v628
    %v851 = vpack.c.b16 %v631, %v630
    %v852 = vpack.c.b16 %v633, %v632
    %v853 = vpack.c.b16 %v635, %v634
    %v854 = vpack.c.b16 %v637, %v636
    %v855 = vpack.c.b16 %v639, %v638
    %v856 = vpack.c.b16 %v641, %v640
    %v857 = vpack.c.b16 %v643, %v642
    %v858 = vpack.c.b16 %v645, %v644
    %v859 = vpack.c.b16 %v647, %v646
    %v860 = vpack.c.b16 %v649, %v648
    %v861 = vpack.c.b16 %v651, %v650
    %v862 = vpack.c.b16 %v653, %v652
    %v863 = vpack.c.b16 %v655, %v654
    %v864 = vpack.c.b16 %v657, %v656
    %v865 = vpack.c.b16 %v659, %v658
    %v866 = vpack.c.b16 %v661, %v660
    %v867 = vpack.c.b16 %v663, %v662
    %v868 = vpack.c.b16 %v665, %v664
    %v869 = vpack.c.b16 %v667, %v666
    %v870 = vpack.c.b16 %v669, %v668
    %v871 = vpack.c.b16 %v671, %v670
    %v872 = vpack.c.b16 %v673, %v672
    %v873 = vpack.c.b16 %v675, %v674
    %v874 = vpack.c.b16 %v677, %v676
    %v875 = vpack.c.b16 %v679, %v678
    %v876 = vpack.c.b16 %v681, %v680
    %v877 = vpack.c.b16 %v683, %v682
    %v878 = vpack.c.b16 %v685, %v684
    %v879 = vpack.c.b16 %v687, %v686
    %v880 = vpack.c.b16 %v689, %v688
    %v881 = vpack.c.b16 %v691, %v690
    %v882 = vpack.c.b16 %v693, %v692
    %v883 = vpack.c.b16 %v695, %v694
    %v884 = vpack.c.b16 %v697, %v696
    %v885 = vpack.c.b16 %v699, %v698
    %v886 = vpack.c.b16 %v701, %v700
    %v887 = vpack.c.b16 %v703, %v702
    %v888 = vpack.c.b16 %v705, %v704
    %v889 = vpack.c.b16 %v707, %v706
    %v890 = vpack.c.b16 %v709, %v708
    %v891 = vpack.c.b16 %v711, %v710
    %v892 = vpack.c.b16 %v713, %v712
    %v893 = vpack.c.b16 %v715, %v714
    %v894 = vpack.c.b16 %v717, %v716
    %v895 = vpack.c.b16 %v719, %v718
    %v896 = vpack.c.b16 %v721, %v720
    %v897 = vpack.c.b16 %v723, %v722
    %v898 = vpack.c.b16 %v725, %v724
    %v899 = vpack.c.b16 %v727, %v726
    %v900 = vpack.c.b16 %v729, %v728
    %v901 = vpack.c.b16 %v731, %v730
    %v902 = vpack.c.b16 %v733, %v732
    %v903 = vpack.c.b16 %v735, %v734
    %v904 = vpack.c.b16 %v737, %v736
    %v905 = vpack.c.b16 %v739, %v738
    %v906 = vpack.c.b16 %v741, %v740
    %v907 = vpack.c.b16 %v743, %v742
    %v908 = vpack.c.b16 %v745, %v744
    %v909 = vpack.c.b16 %v747, %v746
    %v910 = vpack.c.b16 %v749, %v748
    %v911 = vpack.c.b16 %v751, %v750
    %v912 = vpack.c.b16 %v753, %v752
    %v913 = vpack.c.b16 %v755, %v754
    %v914 = vpack.c.b16 %v757, %v756
    %v915 = vpack.c.b16 %v759, %v758
    %v916 = vpack.c.b16 %v761, %v760
    %v917 = vpack.c.b16 %v763, %v762
    %v918 = vpack.c.b16 %v765, %v764
    %v919 = vpack.c.b16 %v767, %v766
    %v920 = vpack.c.b16 %v769, %v768
    %v921 = vpack.c.b16 %v771, %v770
    %v922 = vpack.c.b16 %v773, %v772
    %v923 = vpack.c.b16 %v775, %v774
    %v924 = vpack.c.b16 %v777, %v776
    %v925 = vpack.c.b16 %v779, %v778
    %v926 = vpack.c.b16 %v781, %v780
    %v927 = vpack.c.b16 %v783, %v782
    %v928 = vpack.c.b16 %v785, %v784
    %v929 = vpack.c.b16 %v787, %v786
    %v930 = vpack.c.b16 %v789, %v788
    %v931 = vpack.c.b16 %v791, %v790
    %v932 = vpack.c.b16 %v793, %v792
    %v933 = vpack.c.b16 %v795, %v794
    %v934 = vpack.c.b16 %v797, %v796
    %v935 = vpack.c.b16 %v799, %v798
    %v936 = vpack.c.b16 %v801, %v800
    %v937 = vpack.c.b16 %v803, %v802
    %v938 = vpack.c.b16 %v805, %v804
    %v939 = vpack.c.b16 %v807, %v806
    %v940 = vpack.c.b16 %v809, %v808
    %v941 = vpack.c.b16 %v811, %v810
    %v942 = vpack.c.b16 %v813, %v812
    %v943 = vpack.c.b16 %v815, %v814
    %v948 = vunpack.c.l.b16 %v296
    %v949 = vunpack.c.l.b16 %v297
    %v950 = vunpack.c.l.b16 %v298
    %v951 = vunpack.c.l.b16 %v299
    %v952 = vpack.c.b16 %v949, %v948
    %v953 = vpack.c.b16 %v951, %v950
    %vm956 = vcmask 261120
    %v958 = vsel %vm956, %v816, 0
    %v961 = vsel %vm956, %v817, 0
    %v964 = vsel %vm956, %v818, 0
    %v967 = vsel %vm956, %v819, 0
    %v970 = vsel %vm956, %v820, 0
    %v973 = vsel %vm956, %v821, 0
    %v976 = vsel %vm956, %v822, 0
    %v979 = vsel %vm956, %v823, 0
    %v982 = vsel %vm956, %v824, 0
    %v985 = vsel %vm956, %v825, 0
    %v988 = vsel %vm956, %v826, 0
    %v991 = vsel %vm956, %v827, 0
    %v994 = vsel %vm956, %v828, 0
    %v997 = vsel %vm956, %v829, 0
    %v1000 = vsel %vm956, %v830, 0
    %v1003 = vsel %vm956, %v831, 0
    %v1006 = vsel %vm956, %v832, 0
    %v1009 = vsel %vm956, %v833, 0
    %v1012 = vsel %vm956, %v834, 0
    %v1015 = vsel %vm956, %v835, 0
    %v1018 = vsel %vm956, %v836, 0
    %v1021 = vsel %vm956, %v837, 0
    %v1024 = vsel %vm956, %v838, 0
    %v1027 = vsel %vm956, %v839, 0
    %v1030 = vsel %vm956, %v840, 0
    %v1033 = vsel %vm956, %v841, 0
    %v1036 = vsel %vm956, %v842, 0
    %v1039 = vsel %vm956, %v843, 0
    %v1042 = vsel %vm956, %v844, 0
    %v1045 = vsel %vm956, %v845, 0
    %v1048 = vsel %vm956, %v846, 0
    %v1051 = vsel %vm956, %v847, 0
    %v1054 = vsel %vm956, %v848, 0
    %v1057 = vsel %vm956, %v849, 0
    %v1060 = vsel %vm956, %v850, 0
    %v1063 = vsel %vm956, %v851, 0
    %v1066 = vsel %vm956, %v852, 0
    %v1069 = vsel %vm956, %v853, 0
    %v1072 = vsel %vm956, %v854, 0
    %v1075 = vsel %vm956, %v855, 0
    %v1078 = vsel %vm956, %v856, 0
    %v1081 = vsel %vm956, %v857, 0
    %v1084 = vsel %vm956, %v858, 0
    %v1087 = vsel %vm956, %v859, 0
    %v1090 = vsel %vm956, %v860, 0
    %v1093 = vsel %vm956, %v861, 0
    %v1096 = vsel %vm956, %v862, 0
    %v1099 = vsel %vm956, %v863, 0
    %v1102 = vsel %vm956, %v864, 0
    %v1105 = vsel %vm956, %v865, 0
    %v1108 = vsel %vm956, %v866, 0
    %v1111 = vsel %vm956, %v867, 0
    %v1114 = vsel %vm956, %v868, 0
    %v1117 = vsel %vm956, %v869, 0
    %v1120 = vsel %vm956, %v870, 0
    %v1123 = vsel %vm956, %v871, 0
    %v1126 = vsel %vm956, %v872, 0
    %v1129 = vsel %vm956, %v873, 0
    %v1132 = vsel %vm956, %v874, 0
    %v1135 = vsel %vm956, %v875, 0
    %v1138 = vsel %vm956, %v876, 0
    %v1141 = vsel %vm956, %v877, 0
    %v1144 = vsel %vm956, %v878, 0
    %v1147 = vsel %vm956, %v879, 0
    %v1150 = vsel %vm956, %v880, 0
    %v1153 = vsel %vm956, %v881, 0
    %v1156 = vsel %vm956, %v882, 0
    %v1159 = vsel %vm956, %v883, 0
    %v1162 = vsel %vm956, %v884, 0
    %v1165 = vsel %vm956, %v885, 0
    %v1168 = vsel %vm956, %v886, 0
    %v1171 = vsel %vm956, %v887, 0
    %v1174 = vsel %vm956, %v888, 0
    %v1177 = vsel %vm956, %v889, 0
    %v1180 = vsel %vm956, %v890, 0
    %v1183 = vsel %vm956, %v891, 0
    %v1186 = vsel %vm956, %v892, 0
    %v1189 = vsel %vm956, %v893, 0
    %v1192 = vsel %vm956, %v894, 0
    %v1195 = vsel %vm956, %v895, 0
    %v1198 = vsel %vm956, %v896, 0
    %v1201 = vsel %vm956, %v897, 0
    %v1204 = vsel %vm956, %v898, 0
    %v1207 = vsel %vm956, %v899, 0
    %v1210 = vsel %vm956, %v900, 0
    %v1213 = vsel %vm956, %v901, 0
    %v1216 = vsel %vm956, %v902, 0
    %v1219 = vsel %vm956, %v903, 0
    %v1222 = vsel %vm956, %v904, 0
    %v1225 = vsel %vm956, %v905, 0
    %v1228 = vsel %vm956, %v906, 0
    %v1231 = vsel %vm956, %v907, 0
    %v1234 = vsel %vm956, %v908, 0
    %v1237 = vsel %vm956, %v909, 0
    %v1240 = vsel %vm956, %v910, 0
    %v1243 = vsel %vm956, %v911, 0
    %v1246 = vsel %vm956, %v912, 0
    %v1249 = vsel %vm956, %v913, 0
    %v1252 = vsel %vm956, %v914, 0
    %v1255 = vsel %vm956, %v915, 0
    %v1258 = vsel %vm956, %v916, 0
    %v1261 = vsel %vm956, %v917, 0
    %v1264 = vsel %vm956, %v918, 0
    %v1267 = vsel %vm956, %v919, 0
    %v1270 = vsel %vm956, %v920, 0
    %v1273 = vsel %vm956, %v921, 0
    %v1276 = vsel %vm956, %v922, 0
    %v1279 = vsel %vm956, %v923, 0
    %v1282 = vsel %vm956, %v924, 0
    %v1285 = vsel %vm956, %v925, 0
    %v1288 = vsel %vm956, %v926, 0
    %v1291 = vsel %vm956, %v927, 0
    %v1294 = vsel %vm956, %v928, 0
    %v1297 = vsel %vm956, %v929, 0
    %v1300 = vsel %vm956, %v930, 0
    %v1303 = vsel %vm956, %v931, 0
    %v1306 = vsel %vm956, %v932, 0
    %v1309 = vsel %vm956, %v933, 0
    %v1312 = vsel %vm956, %v934, 0
    %v1315 = vsel %vm956, %v935, 0
    %v1318 = vsel %vm956, %v936, 0
    %v1321 = vsel %vm956, %v937, 0
    %v1324 = vsel %vm956, %v938, 0
    %v1327 = vsel %vm956, %v939, 0
    %v1330 = vsel %vm956, %v940, 0
    %v1333 = vsel %vm956, %v941, 0
    %v1336 = vsel %vm956, %v942, 0
    %v1339 = vsel %vm956, %v943, 0
    %1341 = vmatpush.bf16.msra.mxu0 0
    %1342 = vmatpush.bf16.msra.mxu0 0
    %1343 = vmatpush.bf16.msra.mxu0 0
    %1344 = vmatpush.bf16.msra.mxu0 0
    %1345 = vmatpush.bf16.msra.mxu0 0
    %1346 = vmatpush.bf16.msra.mxu0 0
    %1347 = vmatpush.bf16.msra.mxu0 %v953
    %1348 = vmatpush.bf16.msra.mxu0 %v952
    %1349 = vmatmul.bf16.gmra.mxu0 %v958
    %v1350 = vpop.f32.mrf.mxu0
    %v1351 = vadd.f32 %v302, %v1350
    %v1352 = vpop.f32.mrf.mxu0
    %v1353 = vadd.f32 %v302, %v1352
    %1354 = vmatmul.bf16.gmra.mxu0 %v961
    %v1355 = vpop.f32.mrf.mxu0
    %v1356 = vadd.f32 %v302, %v1355
    %v1357 = vpop.f32.mrf.mxu0
    %v1358 = vadd.f32 %v302, %v1357
    %1359 = vmatmul.bf16.gmra.mxu0 %v964
    %v1360 = vpop.f32.mrf.mxu0
    %v1361 = vadd.f32 %v302, %v1360
    %v1362 = vpop.f32.mrf.mxu0
    %v1363 = vadd.f32 %v302, %v1362
    %1364 = vmatmul.bf16.gmra.mxu0 %v967
    %v1365 = vpop.f32.mrf.mxu0
    %v1366 = vadd.f32 %v302, %v1365
    %v1367 = vpop.f32.mrf.mxu0
    %v1368 = vadd.f32 %v302, %v1367
    %1369 = vmatmul.bf16.gmra.mxu0 %v970
    %v1370 = vpop.f32.mrf.mxu0
    %v1371 = vadd.f32 %v302, %v1370
    %v1372 = vpop.f32.mrf.mxu0
    %v1373 = vadd.f32 %v302, %v1372
    %1374 = vmatmul.bf16.gmra.mxu0 %v973
    %v1375 = vpop.f32.mrf.mxu0
    %v1376 = vadd.f32 %v302, %v1375
    %v1377 = vpop.f32.mrf.mxu0
    %v1378 = vadd.f32 %v302, %v1377
    %1379 = vmatmul.bf16.gmra.mxu0 %v976
    %v1380 = vpop.f32.mrf.mxu0
    %v1381 = vadd.f32 %v302, %v1380
    %v1382 = vpop.f32.mrf.mxu0
    %v1383 = vadd.f32 %v302, %v1382
    %1384 = vmatmul.bf16.gmra.mxu0 %v979
    %v1385 = vpop.f32.mrf.mxu0
    %v1386 = vadd.f32 %v302, %v1385
    %v1387 = vpop.f32.mrf.mxu0
    %v1388 = vadd.f32 %v302, %v1387
    %1389 = vmatmul.bf16.gmra.mxu0 %v982
    %v1390 = vpop.f32.mrf.mxu0
    %v1391 = vadd.f32 %v302, %v1390
    %v1392 = vpop.f32.mrf.mxu0
    %v1393 = vadd.f32 %v302, %v1392
    %1394 = vmatmul.bf16.gmra.mxu0 %v985
    %v1395 = vpop.f32.mrf.mxu0
    %v1396 = vadd.f32 %v302, %v1395
    %v1397 = vpop.f32.mrf.mxu0
    %v1398 = vadd.f32 %v302, %v1397
    %1399 = vmatmul.bf16.gmra.mxu0 %v988
    %v1400 = vpop.f32.mrf.mxu0
    %v1401 = vadd.f32 %v302, %v1400
    %v1402 = vpop.f32.mrf.mxu0
    %v1403 = vadd.f32 %v302, %v1402
    %1404 = vmatmul.bf16.gmra.mxu0 %v991
    %v1405 = vpop.f32.mrf.mxu0
    %v1406 = vadd.f32 %v302, %v1405
    %v1407 = vpop.f32.mrf.mxu0
    %v1408 = vadd.f32 %v302, %v1407
    %1409 = vmatmul.bf16.gmra.mxu0 %v994
    %v1410 = vpop.f32.mrf.mxu0
    %v1411 = vadd.f32 %v302, %v1410
    %v1412 = vpop.f32.mrf.mxu0
    %v1413 = vadd.f32 %v302, %v1412
    %1414 = vmatmul.bf16.gmra.mxu0 %v997
    %v1415 = vpop.f32.mrf.mxu0
    %v1416 = vadd.f32 %v302, %v1415
    %v1417 = vpop.f32.mrf.mxu0
    %v1418 = vadd.f32 %v302, %v1417
    %1419 = vmatmul.bf16.gmra.mxu0 %v1000
    %v1420 = vpop.f32.mrf.mxu0
    %v1421 = vadd.f32 %v302, %v1420
    %v1422 = vpop.f32.mrf.mxu0
    %v1423 = vadd.f32 %v302, %v1422
    %1424 = vmatmul.bf16.gmra.mxu0 %v1003
    %v1425 = vpop.f32.mrf.mxu0
    %v1426 = vadd.f32 %v302, %v1425
    %v1427 = vpop.f32.mrf.mxu0
    %v1428 = vadd.f32 %v302, %v1427
    %1429 = vmatmul.bf16.gmra.mxu0 %v1006
    %v1430 = vpop.f32.mrf.mxu0
    %v1431 = vadd.f32 %v302, %v1430
    %v1432 = vpop.f32.mrf.mxu0
    %v1433 = vadd.f32 %v302, %v1432
    %1434 = vmatmul.bf16.gmra.mxu0 %v1009
    %v1435 = vpop.f32.mrf.mxu0
    %v1436 = vadd.f32 %v302, %v1435
    %v1437 = vpop.f32.mrf.mxu0
    %v1438 = vadd.f32 %v302, %v1437
    %1439 = vmatmul.bf16.gmra.mxu0 %v1012
    %v1440 = vpop.f32.mrf.mxu0
    %v1441 = vadd.f32 %v302, %v1440
    %v1442 = vpop.f32.mrf.mxu0
    %v1443 = vadd.f32 %v302, %v1442
    %1444 = vmatmul.bf16.gmra.mxu0 %v1015
    %v1445 = vpop.f32.mrf.mxu0
    %v1446 = vadd.f32 %v302, %v1445
    %v1447 = vpop.f32.mrf.mxu0
    %v1448 = vadd.f32 %v302, %v1447
    %1449 = vmatmul.bf16.gmra.mxu0 %v1018
    %v1450 = vpop.f32.mrf.mxu0
    %v1451 = vadd.f32 %v302, %v1450
    %v1452 = vpop.f32.mrf.mxu0
    %v1453 = vadd.f32 %v302, %v1452
    %1454 = vmatmul.bf16.gmra.mxu0 %v1021
    %v1455 = vpop.f32.mrf.mxu0
    %v1456 = vadd.f32 %v302, %v1455
    %v1457 = vpop.f32.mrf.mxu0
    %v1458 = vadd.f32 %v302, %v1457
    %1459 = vmatmul.bf16.gmra.mxu0 %v1024
    %v1460 = vpop.f32.mrf.mxu0
    %v1461 = vadd.f32 %v302, %v1460
    %v1462 = vpop.f32.mrf.mxu0
    %v1463 = vadd.f32 %v302, %v1462
    %1464 = vmatmul.bf16.gmra.mxu0 %v1027
    %v1465 = vpop.f32.mrf.mxu0
    %v1466 = vadd.f32 %v302, %v1465
    %v1467 = vpop.f32.mrf.mxu0
    %v1468 = vadd.f32 %v302, %v1467
    %1469 = vmatmul.bf16.gmra.mxu0 %v1030
    %v1470 = vpop.f32.mrf.mxu0
    %v1471 = vadd.f32 %v302, %v1470
    %v1472 = vpop.f32.mrf.mxu0
    %v1473 = vadd.f32 %v302, %v1472
    %1474 = vmatmul.bf16.gmra.mxu0 %v1033
    %v1475 = vpop.f32.mrf.mxu0
    %v1476 = vadd.f32 %v302, %v1475
    %v1477 = vpop.f32.mrf.mxu0
    %v1478 = vadd.f32 %v302, %v1477
    %1479 = vmatmul.bf16.gmra.mxu0 %v1036
    %v1480 = vpop.f32.mrf.mxu0
    %v1481 = vadd.f32 %v302, %v1480
    %v1482 = vpop.f32.mrf.mxu0
    %v1483 = vadd.f32 %v302, %v1482
    %1484 = vmatmul.bf16.gmra.mxu0 %v1039
    %v1485 = vpop.f32.mrf.mxu0
    %v1486 = vadd.f32 %v302, %v1485
    %v1487 = vpop.f32.mrf.mxu0
    %v1488 = vadd.f32 %v302, %v1487
    %1489 = vmatmul.bf16.gmra.mxu0 %v1042
    %v1490 = vpop.f32.mrf.mxu0
    %v1491 = vadd.f32 %v302, %v1490
    %v1492 = vpop.f32.mrf.mxu0
    %v1493 = vadd.f32 %v302, %v1492
    %1494 = vmatmul.bf16.gmra.mxu0 %v1045
    %v1495 = vpop.f32.mrf.mxu0
    %v1496 = vadd.f32 %v302, %v1495
    %v1497 = vpop.f32.mrf.mxu0
    %v1498 = vadd.f32 %v302, %v1497
    %1499 = vmatmul.bf16.gmra.mxu0 %v1048
    %v1500 = vpop.f32.mrf.mxu0
    %v1501 = vadd.f32 %v302, %v1500
    %v1502 = vpop.f32.mrf.mxu0
    %v1503 = vadd.f32 %v302, %v1502
    %1504 = vmatmul.bf16.gmra.mxu0 %v1051
    %v1505 = vpop.f32.mrf.mxu0
    %v1506 = vadd.f32 %v302, %v1505
    %v1507 = vpop.f32.mrf.mxu0
    %v1508 = vadd.f32 %v302, %v1507
    %1509 = vmatmul.bf16.gmra.mxu0 %v1054
    %v1510 = vpop.f32.mrf.mxu0
    %v1511 = vadd.f32 %v302, %v1510
    %v1512 = vpop.f32.mrf.mxu0
    %v1513 = vadd.f32 %v302, %v1512
    %1514 = vmatmul.bf16.gmra.mxu0 %v1057
    %v1515 = vpop.f32.mrf.mxu0
    %v1516 = vadd.f32 %v302, %v1515
    %v1517 = vpop.f32.mrf.mxu0
    %v1518 = vadd.f32 %v302, %v1517
    %1519 = vmatmul.bf16.gmra.mxu0 %v1060
    %v1520 = vpop.f32.mrf.mxu0
    %v1521 = vadd.f32 %v302, %v1520
    %v1522 = vpop.f32.mrf.mxu0
    %v1523 = vadd.f32 %v302, %v1522
    %1524 = vmatmul.bf16.gmra.mxu0 %v1063
    %v1525 = vpop.f32.mrf.mxu0
    %v1526 = vadd.f32 %v302, %v1525
    %v1527 = vpop.f32.mrf.mxu0
    %v1528 = vadd.f32 %v302, %v1527
    %1529 = vmatmul.bf16.gmra.mxu0 %v1066
    %v1530 = vpop.f32.mrf.mxu0
    %v1531 = vadd.f32 %v302, %v1530
    %v1532 = vpop.f32.mrf.mxu0
    %v1533 = vadd.f32 %v302, %v1532
    %1534 = vmatmul.bf16.gmra.mxu0 %v1069
    %v1535 = vpop.f32.mrf.mxu0
    %v1536 = vadd.f32 %v302, %v1535
    %v1537 = vpop.f32.mrf.mxu0
    %v1538 = vadd.f32 %v302, %v1537
    %1539 = vmatmul.bf16.gmra.mxu0 %v1072
    %v1540 = vpop.f32.mrf.mxu0
    %v1541 = vadd.f32 %v302, %v1540
    %v1542 = vpop.f32.mrf.mxu0
    %v1543 = vadd.f32 %v302, %v1542
    %1544 = vmatmul.bf16.gmra.mxu0 %v1075
    %v1545 = vpop.f32.mrf.mxu0
    %v1546 = vadd.f32 %v302, %v1545
    %v1547 = vpop.f32.mrf.mxu0
    %v1548 = vadd.f32 %v302, %v1547
    %1549 = vmatmul.bf16.gmra.mxu0 %v1078
    %v1550 = vpop.f32.mrf.mxu0
    %v1551 = vadd.f32 %v302, %v1550
    %v1552 = vpop.f32.mrf.mxu0
    %v1553 = vadd.f32 %v302, %v1552
    %1554 = vmatmul.bf16.gmra.mxu0 %v1081
    %v1555 = vpop.f32.mrf.mxu0
    %v1556 = vadd.f32 %v302, %v1555
    %v1557 = vpop.f32.mrf.mxu0
    %v1558 = vadd.f32 %v302, %v1557
    %1559 = vmatmul.bf16.gmra.mxu0 %v1084
    %v1560 = vpop.f32.mrf.mxu0
    %v1561 = vadd.f32 %v302, %v1560
    %v1562 = vpop.f32.mrf.mxu0
    %v1563 = vadd.f32 %v302, %v1562
    %1564 = vmatmul.bf16.gmra.mxu0 %v1087
    %v1565 = vpop.f32.mrf.mxu0
    %v1566 = vadd.f32 %v302, %v1565
    %v1567 = vpop.f32.mrf.mxu0
    %v1568 = vadd.f32 %v302, %v1567
    %1569 = vmatmul.bf16.gmra.mxu0 %v1090
    %v1570 = vpop.f32.mrf.mxu0
    %v1571 = vadd.f32 %v302, %v1570
    %v1572 = vpop.f32.mrf.mxu0
    %v1573 = vadd.f32 %v302, %v1572
    %1574 = vmatmul.bf16.gmra.mxu0 %v1093
    %v1575 = vpop.f32.mrf.mxu0
    %v1576 = vadd.f32 %v302, %v1575
    %v1577 = vpop.f32.mrf.mxu0
    %v1578 = vadd.f32 %v302, %v1577
    %1579 = vmatmul.bf16.gmra.mxu0 %v1096
    %v1580 = vpop.f32.mrf.mxu0
    %v1581 = vadd.f32 %v302, %v1580
    %v1582 = vpop.f32.mrf.mxu0
    %v1583 = vadd.f32 %v302, %v1582
    %1584 = vmatmul.bf16.gmra.mxu0 %v1099
    %v1585 = vpop.f32.mrf.mxu0
    %v1586 = vadd.f32 %v302, %v1585
    %v1587 = vpop.f32.mrf.mxu0
    %v1588 = vadd.f32 %v302, %v1587
    %1589 = vmatmul.bf16.gmra.mxu0 %v1102
    %v1590 = vpop.f32.mrf.mxu0
    %v1591 = vadd.f32 %v302, %v1590
    %v1592 = vpop.f32.mrf.mxu0
    %v1593 = vadd.f32 %v302, %v1592
    %1594 = vmatmul.bf16.gmra.mxu0 %v1105
    %v1595 = vpop.f32.mrf.mxu0
    %v1596 = vadd.f32 %v302, %v1595
    %v1597 = vpop.f32.mrf.mxu0
    %v1598 = vadd.f32 %v302, %v1597
    %1599 = vmatmul.bf16.gmra.mxu0 %v1108
    %v1600 = vpop.f32.mrf.mxu0
    %v1601 = vadd.f32 %v302, %v1600
    %v1602 = vpop.f32.mrf.mxu0
    %v1603 = vadd.f32 %v302, %v1602
    %1604 = vmatmul.bf16.gmra.mxu0 %v1111
    %v1605 = vpop.f32.mrf.mxu0
    %v1606 = vadd.f32 %v302, %v1605
    %v1607 = vpop.f32.mrf.mxu0
    %v1608 = vadd.f32 %v302, %v1607
    %1609 = vmatmul.bf16.gmra.mxu0 %v1114
    %v1610 = vpop.f32.mrf.mxu0
    %v1611 = vadd.f32 %v302, %v1610
    %v1612 = vpop.f32.mrf.mxu0
    %v1613 = vadd.f32 %v302, %v1612
    %1614 = vmatmul.bf16.gmra.mxu0 %v1117
    %v1615 = vpop.f32.mrf.mxu0
    %v1616 = vadd.f32 %v302, %v1615
    %v1617 = vpop.f32.mrf.mxu0
    %v1618 = vadd.f32 %v302, %v1617
    %1619 = vmatmul.bf16.gmra.mxu0 %v1120
    %v1620 = vpop.f32.mrf.mxu0
    %v1621 = vadd.f32 %v302, %v1620
    %v1622 = vpop.f32.mrf.mxu0
    %v1623 = vadd.f32 %v302, %v1622
    %1624 = vmatmul.bf16.gmra.mxu0 %v1123
    %v1625 = vpop.f32.mrf.mxu0
    %v1626 = vadd.f32 %v302, %v1625
    %v1627 = vpop.f32.mrf.mxu0
    %v1628 = vadd.f32 %v302, %v1627
    %1629 = vmatmul.bf16.gmra.mxu0 %v1126
    %v1630 = vpop.f32.mrf.mxu0
    %v1631 = vadd.f32 %v302, %v1630
    %v1632 = vpop.f32.mrf.mxu0
    %v1633 = vadd.f32 %v302, %v1632
    %1634 = vmatmul.bf16.gmra.mxu0 %v1129
    %v1635 = vpop.f32.mrf.mxu0
    %v1636 = vadd.f32 %v302, %v1635
    %v1637 = vpop.f32.mrf.mxu0
    %v1638 = vadd.f32 %v302, %v1637
    %1639 = vmatmul.bf16.gmra.mxu0 %v1132
    %v1640 = vpop.f32.mrf.mxu0
    %v1641 = vadd.f32 %v302, %v1640
    %v1642 = vpop.f32.mrf.mxu0
    %v1643 = vadd.f32 %v302, %v1642
    %1644 = vmatmul.bf16.gmra.mxu0 %v1135
    %v1645 = vpop.f32.mrf.mxu0
    %v1646 = vadd.f32 %v302, %v1645
    %v1647 = vpop.f32.mrf.mxu0
    %v1648 = vadd.f32 %v302, %v1647
    %1649 = vmatmul.bf16.gmra.mxu0 %v1138
    %v1650 = vpop.f32.mrf.mxu0
    %v1651 = vadd.f32 %v302, %v1650
    %v1652 = vpop.f32.mrf.mxu0
    %v1653 = vadd.f32 %v302, %v1652
    %1654 = vmatmul.bf16.gmra.mxu0 %v1141
    %v1655 = vpop.f32.mrf.mxu0
    %v1656 = vadd.f32 %v302, %v1655
    %v1657 = vpop.f32.mrf.mxu0
    %v1658 = vadd.f32 %v302, %v1657
    %1659 = vmatmul.bf16.gmra.mxu0 %v1144
    %v1660 = vpop.f32.mrf.mxu0
    %v1661 = vadd.f32 %v302, %v1660
    %v1662 = vpop.f32.mrf.mxu0
    %v1663 = vadd.f32 %v302, %v1662
    %1664 = vmatmul.bf16.gmra.mxu0 %v1147
    %v1665 = vpop.f32.mrf.mxu0
    %v1666 = vadd.f32 %v302, %v1665
    %v1667 = vpop.f32.mrf.mxu0
    %v1668 = vadd.f32 %v302, %v1667
    %1669 = vmatmul.bf16.gmra.mxu0 %v1150
    %v1670 = vpop.f32.mrf.mxu0
    %v1671 = vadd.f32 %v302, %v1670
    %v1672 = vpop.f32.mrf.mxu0
    %v1673 = vadd.f32 %v302, %v1672
    %1674 = vmatmul.bf16.gmra.mxu0 %v1153
    %v1675 = vpop.f32.mrf.mxu0
    %v1676 = vadd.f32 %v302, %v1675
    %v1677 = vpop.f32.mrf.mxu0
    %v1678 = vadd.f32 %v302, %v1677
    %1679 = vmatmul.bf16.gmra.mxu0 %v1156
    %v1680 = vpop.f32.mrf.mxu0
    %v1681 = vadd.f32 %v302, %v1680
    %v1682 = vpop.f32.mrf.mxu0
    %v1683 = vadd.f32 %v302, %v1682
    %1684 = vmatmul.bf16.gmra.mxu0 %v1159
    %v1685 = vpop.f32.mrf.mxu0
    %v1686 = vadd.f32 %v302, %v1685
    %v1687 = vpop.f32.mrf.mxu0
    %v1688 = vadd.f32 %v302, %v1687
    %1689 = vmatmul.bf16.gmra.mxu0 %v1162
    %v1690 = vpop.f32.mrf.mxu0
    %v1691 = vadd.f32 %v302, %v1690
    %v1692 = vpop.f32.mrf.mxu0
    %v1693 = vadd.f32 %v302, %v1692
    %1694 = vmatmul.bf16.gmra.mxu0 %v1165
    %v1695 = vpop.f32.mrf.mxu0
    %v1696 = vadd.f32 %v302, %v1695
    %v1697 = vpop.f32.mrf.mxu0
    %v1698 = vadd.f32 %v302, %v1697
    %1699 = vmatmul.bf16.gmra.mxu0 %v1168
    %v1700 = vpop.f32.mrf.mxu0
    %v1701 = vadd.f32 %v302, %v1700
    %v1702 = vpop.f32.mrf.mxu0
    %v1703 = vadd.f32 %v302, %v1702
    %1704 = vmatmul.bf16.gmra.mxu0 %v1171
    %v1705 = vpop.f32.mrf.mxu0
    %v1706 = vadd.f32 %v302, %v1705
    %v1707 = vpop.f32.mrf.mxu0
    %v1708 = vadd.f32 %v302, %v1707
    %1709 = vmatmul.bf16.gmra.mxu0 %v1174
    %v1710 = vpop.f32.mrf.mxu0
    %v1711 = vadd.f32 %v302, %v1710
    %v1712 = vpop.f32.mrf.mxu0
    %v1713 = vadd.f32 %v302, %v1712
    %1714 = vmatmul.bf16.gmra.mxu0 %v1177
    %v1715 = vpop.f32.mrf.mxu0
    %v1716 = vadd.f32 %v302, %v1715
    %v1717 = vpop.f32.mrf.mxu0
    %v1718 = vadd.f32 %v302, %v1717
    %1719 = vmatmul.bf16.gmra.mxu0 %v1180
    %v1720 = vpop.f32.mrf.mxu0
    %v1721 = vadd.f32 %v302, %v1720
    %v1722 = vpop.f32.mrf.mxu0
    %v1723 = vadd.f32 %v302, %v1722
    %1724 = vmatmul.bf16.gmra.mxu0 %v1183
    %v1725 = vpop.f32.mrf.mxu0
    %v1726 = vadd.f32 %v302, %v1725
    %v1727 = vpop.f32.mrf.mxu0
    %v1728 = vadd.f32 %v302, %v1727
    %1729 = vmatmul.bf16.gmra.mxu0 %v1186
    %v1730 = vpop.f32.mrf.mxu0
    %v1731 = vadd.f32 %v302, %v1730
    %v1732 = vpop.f32.mrf.mxu0
    %v1733 = vadd.f32 %v302, %v1732
    %1734 = vmatmul.bf16.gmra.mxu0 %v1189
    %v1735 = vpop.f32.mrf.mxu0
    %v1736 = vadd.f32 %v302, %v1735
    %v1737 = vpop.f32.mrf.mxu0
    %v1738 = vadd.f32 %v302, %v1737
    %1739 = vmatmul.bf16.gmra.mxu0 %v1192
    %v1740 = vpop.f32.mrf.mxu0
    %v1741 = vadd.f32 %v302, %v1740
    %v1742 = vpop.f32.mrf.mxu0
    %v1743 = vadd.f32 %v302, %v1742
    %1744 = vmatmul.bf16.gmra.mxu0 %v1195
    %v1745 = vpop.f32.mrf.mxu0
    %v1746 = vadd.f32 %v302, %v1745
    %v1747 = vpop.f32.mrf.mxu0
    %v1748 = vadd.f32 %v302, %v1747
    %1749 = vmatmul.bf16.gmra.mxu0 %v1198
    %v1750 = vpop.f32.mrf.mxu0
    %v1751 = vadd.f32 %v302, %v1750
    %v1752 = vpop.f32.mrf.mxu0
    %v1753 = vadd.f32 %v302, %v1752
    %1754 = vmatmul.bf16.gmra.mxu0 %v1201
    %v1755 = vpop.f32.mrf.mxu0
    %v1756 = vadd.f32 %v302, %v1755
    %v1757 = vpop.f32.mrf.mxu0
    %v1758 = vadd.f32 %v302, %v1757
    %1759 = vmatmul.bf16.gmra.mxu0 %v1204
    %v1760 = vpop.f32.mrf.mxu0
    %v1761 = vadd.f32 %v302, %v1760
    %v1762 = vpop.f32.mrf.mxu0
    %v1763 = vadd.f32 %v302, %v1762
    %1764 = vmatmul.bf16.gmra.mxu0 %v1207
    %v1765 = vpop.f32.mrf.mxu0
    %v1766 = vadd.f32 %v302, %v1765
    %v1767 = vpop.f32.mrf.mxu0
    %v1768 = vadd.f32 %v302, %v1767
    %1769 = vmatmul.bf16.gmra.mxu0 %v1210
    %v1770 = vpop.f32.mrf.mxu0
    %v1771 = vadd.f32 %v302, %v1770
    %v1772 = vpop.f32.mrf.mxu0
    %v1773 = vadd.f32 %v302, %v1772
    %1774 = vmatmul.bf16.gmra.mxu0 %v1213
    %v1775 = vpop.f32.mrf.mxu0
    %v1776 = vadd.f32 %v302, %v1775
    %v1777 = vpop.f32.mrf.mxu0
    %v1778 = vadd.f32 %v302, %v1777
    %1779 = vmatmul.bf16.gmra.mxu0 %v1216
    %v1780 = vpop.f32.mrf.mxu0
    %v1781 = vadd.f32 %v302, %v1780
    %v1782 = vpop.f32.mrf.mxu0
    %v1783 = vadd.f32 %v302, %v1782
    %1784 = vmatmul.bf16.gmra.mxu0 %v1219
    %v1785 = vpop.f32.mrf.mxu0
    %v1786 = vadd.f32 %v302, %v1785
    %v1787 = vpop.f32.mrf.mxu0
    %v1788 = vadd.f32 %v302, %v1787
    %1789 = vmatmul.bf16.gmra.mxu0 %v1222
    %v1790 = vpop.f32.mrf.mxu0
    %v1791 = vadd.f32 %v302, %v1790
    %v1792 = vpop.f32.mrf.mxu0
    %v1793 = vadd.f32 %v302, %v1792
    %1794 = vmatmul.bf16.gmra.mxu0 %v1225
    %v1795 = vpop.f32.mrf.mxu0
    %v1796 = vadd.f32 %v302, %v1795
    %v1797 = vpop.f32.mrf.mxu0
    %v1798 = vadd.f32 %v302, %v1797
    %1799 = vmatmul.bf16.gmra.mxu0 %v1228
    %v1800 = vpop.f32.mrf.mxu0
    %v1801 = vadd.f32 %v302, %v1800
    %v1802 = vpop.f32.mrf.mxu0
    %v1803 = vadd.f32 %v302, %v1802
    %1804 = vmatmul.bf16.gmra.mxu0 %v1231
    %v1805 = vpop.f32.mrf.mxu0
    %v1806 = vadd.f32 %v302, %v1805
    %v1807 = vpop.f32.mrf.mxu0
    %v1808 = vadd.f32 %v302, %v1807
    %1809 = vmatmul.bf16.gmra.mxu0 %v1234
    %v1810 = vpop.f32.mrf.mxu0
    %v1811 = vadd.f32 %v302, %v1810
    %v1812 = vpop.f32.mrf.mxu0
    %v1813 = vadd.f32 %v302, %v1812
    %1814 = vmatmul.bf16.gmra.mxu0 %v1237
    %v1815 = vpop.f32.mrf.mxu0
    %v1816 = vadd.f32 %v302, %v1815
    %v1817 = vpop.f32.mrf.mxu0
    %v1818 = vadd.f32 %v302, %v1817
    %1819 = vmatmul.bf16.gmra.mxu0 %v1240
    %v1820 = vpop.f32.mrf.mxu0
    %v1821 = vadd.f32 %v302, %v1820
    %v1822 = vpop.f32.mrf.mxu0
    %v1823 = vadd.f32 %v302, %v1822
    %1824 = vmatmul.bf16.gmra.mxu0 %v1243
    %v1825 = vpop.f32.mrf.mxu0
    %v1826 = vadd.f32 %v302, %v1825
    %v1827 = vpop.f32.mrf.mxu0
    %v1828 = vadd.f32 %v302, %v1827
    %1829 = vmatmul.bf16.gmra.mxu0 %v1246
    %v1830 = vpop.f32.mrf.mxu0
    %v1831 = vadd.f32 %v302, %v1830
    %v1832 = vpop.f32.mrf.mxu0
    %v1833 = vadd.f32 %v302, %v1832
    %1834 = vmatmul.bf16.gmra.mxu0 %v1249
    %v1835 = vpop.f32.mrf.mxu0
    %v1836 = vadd.f32 %v302, %v1835
    %v1837 = vpop.f32.mrf.mxu0
    %v1838 = vadd.f32 %v302, %v1837
    %1839 = vmatmul.bf16.gmra.mxu0 %v1252
    %v1840 = vpop.f32.mrf.mxu0
    %v1841 = vadd.f32 %v302, %v1840
    %v1842 = vpop.f32.mrf.mxu0
    %v1843 = vadd.f32 %v302, %v1842
    %1844 = vmatmul.bf16.gmra.mxu0 %v1255
    %v1845 = vpop.f32.mrf.mxu0
    %v1846 = vadd.f32 %v302, %v1845
    %v1847 = vpop.f32.mrf.mxu0
    %v1848 = vadd.f32 %v302, %v1847
    %1849 = vmatmul.bf16.gmra.mxu0 %v1258
    %v1850 = vpop.f32.mrf.mxu0
    %v1851 = vadd.f32 %v302, %v1850
    %v1852 = vpop.f32.mrf.mxu0
    %v1853 = vadd.f32 %v302, %v1852
    %1854 = vmatmul.bf16.gmra.mxu0 %v1261
    %v1855 = vpop.f32.mrf.mxu0
    %v1856 = vadd.f32 %v302, %v1855
    %v1857 = vpop.f32.mrf.mxu0
    %v1858 = vadd.f32 %v302, %v1857
    %1859 = vmatmul.bf16.gmra.mxu0 %v1264
    %v1860 = vpop.f32.mrf.mxu0
    %v1861 = vadd.f32 %v302, %v1860
    %v1862 = vpop.f32.mrf.mxu0
    %v1863 = vadd.f32 %v302, %v1862
    %1864 = vmatmul.bf16.gmra.mxu0 %v1267
    %v1865 = vpop.f32.mrf.mxu0
    %v1866 = vadd.f32 %v302, %v1865
    %v1867 = vpop.f32.mrf.mxu0
    %v1868 = vadd.f32 %v302, %v1867
    %1869 = vmatmul.bf16.gmra.mxu0 %v1270
    %v1870 = vpop.f32.mrf.mxu0
    %v1871 = vadd.f32 %v302, %v1870
    %v1872 = vpop.f32.mrf.mxu0
    %v1873 = vadd.f32 %v302, %v1872
    %1874 = vmatmul.bf16.gmra.mxu0 %v1273
    %v1875 = vpop.f32.mrf.mxu0
    %v1876 = vadd.f32 %v302, %v1875
    %v1877 = vpop.f32.mrf.mxu0
    %v1878 = vadd.f32 %v302, %v1877
    %1879 = vmatmul.bf16.gmra.mxu0 %v1276
    %v1880 = vpop.f32.mrf.mxu0
    %v1881 = vadd.f32 %v302, %v1880
    %v1882 = vpop.f32.mrf.mxu0
    %v1883 = vadd.f32 %v302, %v1882
    %1884 = vmatmul.bf16.gmra.mxu0 %v1279
    %v1885 = vpop.f32.mrf.mxu0
    %v1886 = vadd.f32 %v302, %v1885
    %v1887 = vpop.f32.mrf.mxu0
    %v1888 = vadd.f32 %v302, %v1887
    %1889 = vmatmul.bf16.gmra.mxu0 %v1282
    %v1890 = vpop.f32.mrf.mxu0
    %v1891 = vadd.f32 %v302, %v1890
    %v1892 = vpop.f32.mrf.mxu0
    %v1893 = vadd.f32 %v302, %v1892
    %1894 = vmatmul.bf16.gmra.mxu0 %v1285
    %v1895 = vpop.f32.mrf.mxu0
    %v1896 = vadd.f32 %v302, %v1895
    %v1897 = vpop.f32.mrf.mxu0
    %v1898 = vadd.f32 %v302, %v1897
    %1899 = vmatmul.bf16.gmra.mxu0 %v1288
    %v1900 = vpop.f32.mrf.mxu0
    %v1901 = vadd.f32 %v302, %v1900
    %v1902 = vpop.f32.mrf.mxu0
    %v1903 = vadd.f32 %v302, %v1902
    %1904 = vmatmul.bf16.gmra.mxu0 %v1291
    %v1905 = vpop.f32.mrf.mxu0
    %v1906 = vadd.f32 %v302, %v1905
    %v1907 = vpop.f32.mrf.mxu0
    %v1908 = vadd.f32 %v302, %v1907
    %1909 = vmatmul.bf16.gmra.mxu0 %v1294
    %v1910 = vpop.f32.mrf.mxu0
    %v1911 = vadd.f32 %v302, %v1910
    %v1912 = vpop.f32.mrf.mxu0
    %v1913 = vadd.f32 %v302, %v1912
    %1914 = vmatmul.bf16.gmra.mxu0 %v1297
    %v1915 = vpop.f32.mrf.mxu0
    %v1916 = vadd.f32 %v302, %v1915
    %v1917 = vpop.f32.mrf.mxu0
    %v1918 = vadd.f32 %v302, %v1917
    %1919 = vmatmul.bf16.gmra.mxu0 %v1300
    %v1920 = vpop.f32.mrf.mxu0
    %v1921 = vadd.f32 %v302, %v1920
    %v1922 = vpop.f32.mrf.mxu0
    %v1923 = vadd.f32 %v302, %v1922
    %1924 = vmatmul.bf16.gmra.mxu0 %v1303
    %v1925 = vpop.f32.mrf.mxu0
    %v1926 = vadd.f32 %v302, %v1925
    %v1927 = vpop.f32.mrf.mxu0
    %v1928 = vadd.f32 %v302, %v1927
    %1929 = vmatmul.bf16.gmra.mxu0 %v1306
    %v1930 = vpop.f32.mrf.mxu0
    %v1931 = vadd.f32 %v302, %v1930
    %v1932 = vpop.f32.mrf.mxu0
    %v1933 = vadd.f32 %v302, %v1932
    %1934 = vmatmul.bf16.gmra.mxu0 %v1309
    %v1935 = vpop.f32.mrf.mxu0
    %v1936 = vadd.f32 %v302, %v1935
    %v1937 = vpop.f32.mrf.mxu0
    %v1938 = vadd.f32 %v302, %v1937
    %1939 = vmatmul.bf16.gmra.mxu0 %v1312
    %v1940 = vpop.f32.mrf.mxu0
    %v1941 = vadd.f32 %v302, %v1940
    %v1942 = vpop.f32.mrf.mxu0
    %v1943 = vadd.f32 %v302, %v1942
    %1944 = vmatmul.bf16.gmra.mxu0 %v1315
    %v1945 = vpop.f32.mrf.mxu0
    %v1946 = vadd.f32 %v302, %v1945
    %v1947 = vpop.f32.mrf.mxu0
    %v1948 = vadd.f32 %v302, %v1947
    %1949 = vmatmul.bf16.gmra.mxu0 %v1318
    %v1950 = vpop.f32.mrf.mxu0
    %v1951 = vadd.f32 %v302, %v1950
    %v1952 = vpop.f32.mrf.mxu0
    %v1953 = vadd.f32 %v302, %v1952
    %1954 = vmatmul.bf16.gmra.mxu0 %v1321
    %v1955 = vpop.f32.mrf.mxu0
    %v1956 = vadd.f32 %v302, %v1955
    %v1957 = vpop.f32.mrf.mxu0
    %v1958 = vadd.f32 %v302, %v1957
    %1959 = vmatmul.bf16.gmra.mxu0 %v1324
    %v1960 = vpop.f32.mrf.mxu0
    %v1961 = vadd.f32 %v302, %v1960
    %v1962 = vpop.f32.mrf.mxu0
    %v1963 = vadd.f32 %v302, %v1962
    %1964 = vmatmul.bf16.gmra.mxu0 %v1327
    %v1965 = vpop.f32.mrf.mxu0
    %v1966 = vadd.f32 %v302, %v1965
    %v1967 = vpop.f32.mrf.mxu0
    %v1968 = vadd.f32 %v302, %v1967
    %1969 = vmatmul.bf16.gmra.mxu0 %v1330
    %v1970 = vpop.f32.mrf.mxu0
    %v1971 = vadd.f32 %v302, %v1970
    %v1972 = vpop.f32.mrf.mxu0
    %v1973 = vadd.f32 %v302, %v1972
    %1974 = vmatmul.bf16.gmra.mxu0 %v1333
    %v1975 = vpop.f32.mrf.mxu0
    %v1976 = vadd.f32 %v302, %v1975
    %v1977 = vpop.f32.mrf.mxu0
    %v1978 = vadd.f32 %v302, %v1977
    %1979 = vmatmul.bf16.gmra.mxu0 %v1336
    %v1980 = vpop.f32.mrf.mxu0
    %v1981 = vadd.f32 %v302, %v1980
    %v1982 = vpop.f32.mrf.mxu0
    %v1983 = vadd.f32 %v302, %v1982
    %1984 = vmatmul.bf16.gmra.mxu0 %v1339
    %v1985 = vpop.f32.mrf.mxu0
    %v1986 = vadd.f32 %v302, %v1985
    %v1987 = vpop.f32.mrf.mxu0
    %v1988 = vadd.f32 %v302, %v1987
    %1989 = vdwg.mxu0
    %v1990 = vmax.f32 %v1351, 0.0
    %v1991 = vmax.f32 %v1353, 0.0
    %v1992 = vmax.f32 %v1356, 0.0
    %v1993 = vmax.f32 %v1358, 0.0
    %v1994 = vmax.f32 %v1361, 0.0
    %v1995 = vmax.f32 %v1363, 0.0
    %v1996 = vmax.f32 %v1366, 0.0
    %v1997 = vmax.f32 %v1368, 0.0
    %v1998 = vmax.f32 %v1371, 0.0
    %v1999 = vmax.f32 %v1373, 0.0
    %v2000 = vmax.f32 %v1376, 0.0
    %v2001 = vmax.f32 %v1378, 0.0
    %v2002 = vmax.f32 %v1381, 0.0
    %v2003 = vmax.f32 %v1383, 0.0
    %v2004 = vmax.f32 %v1386, 0.0
    %v2005 = vmax.f32 %v1388, 0.0
    %v2006 = vmax.f32 %v1391, 0.0
    %v2007 = vmax.f32 %v1393, 0.0
    %v2008 = vmax.f32 %v1396, 0.0
    %v2009 = vmax.f32 %v1398, 0.0
    %v2010 = vmax.f32 %v1401, 0.0
    %v2011 = vmax.f32 %v1403, 0.0
    %v2012 = vmax.f32 %v1406, 0.0
    %v2013 = vmax.f32 %v1408, 0.0
    %v2014 = vmax.f32 %v1411, 0.0
    %v2015 = vmax.f32 %v1413, 0.0
    %v2016 = vmax.f32 %v1416, 0.0
    %v2017 = vmax.f32 %v1418, 0.0
    %v2018 = vmax.f32 %v1421, 0.0
    %v2019 = vmax.f32 %v1423, 0.0
    %v2020 = vmax.f32 %v1426, 0.0
    %v2021 = vmax.f32 %v1428, 0.0
    %v2022 = vmax.f32 %v1431, 0.0
    %v2023 = vmax.f32 %v1433, 0.0
    %v2024 = vmax.f32 %v1436, 0.0
    %v2025 = vmax.f32 %v1438, 0.0
    %v2026 = vmax.f32 %v1441, 0.0
    %v2027 = vmax.f32 %v1443, 0.0
    %v2028 = vmax.f32 %v1446, 0.0
    %v2029 = vmax.f32 %v1448, 0.0
    %v2030 = vmax.f32 %v1451, 0.0
    %v2031 = vmax.f32 %v1453, 0.0
    %v2032 = vmax.f32 %v1456, 0.0
    %v2033 = vmax.f32 %v1458, 0.0
    %v2034 = vmax.f32 %v1461, 0.0
    %v2035 = vmax.f32 %v1463, 0.0
    %v2036 = vmax.f32 %v1466, 0.0
    %v2037 = vmax.f32 %v1468, 0.0
    %v2038 = vmax.f32 %v1471, 0.0
    %v2039 = vmax.f32 %v1473, 0.0
    %v2040 = vmax.f32 %v1476, 0.0
    %v2041 = vmax.f32 %v1478, 0.0
    %v2042 = vmax.f32 %v1481, 0.0
    %v2043 = vmax.f32 %v1483, 0.0
    %v2044 = vmax.f32 %v1486, 0.0
    %v2045 = vmax.f32 %v1488, 0.0
    %v2046 = vmax.f32 %v1491, 0.0
    %v2047 = vmax.f32 %v1493, 0.0
    %v2048 = vmax.f32 %v1496, 0.0
    %v2049 = vmax.f32 %v1498, 0.0
    %v2050 = vmax.f32 %v1501, 0.0
    %v2051 = vmax.f32 %v1503, 0.0
    %v2052 = vmax.f32 %v1506, 0.0
    %v2053 = vmax.f32 %v1508, 0.0
    %v2054 = vmax.f32 %v1511, 0.0
    %v2055 = vmax.f32 %v1513, 0.0
    %v2056 = vmax.f32 %v1516, 0.0
    %v2057 = vmax.f32 %v1518, 0.0
    %v2058 = vmax.f32 %v1521, 0.0
    %v2059 = vmax.f32 %v1523, 0.0
    %v2060 = vmax.f32 %v1526, 0.0
    %v2061 = vmax.f32 %v1528, 0.0
    %v2062 = vmax.f32 %v1531, 0.0
    %v2063 = vmax.f32 %v1533, 0.0
    %v2064 = vmax.f32 %v1536, 0.0
    %v2065 = vmax.f32 %v1538, 0.0
    %v2066 = vmax.f32 %v1541, 0.0
    %v2067 = vmax.f32 %v1543, 0.0
    %v2068 = vmax.f32 %v1546, 0.0
    %v2069 = vmax.f32 %v1548, 0.0
    %v2070 = vmax.f32 %v1551, 0.0
    %v2071 = vmax.f32 %v1553, 0.0
    %v2072 = vmax.f32 %v1556, 0.0
    %v2073 = vmax.f32 %v1558, 0.0
    %v2074 = vmax.f32 %v1561, 0.0
    %v2075 = vmax.f32 %v1563, 0.0
    %v2076 = vmax.f32 %v1566, 0.0
    %v2077 = vmax.f32 %v1568, 0.0
    %v2078 = vmax.f32 %v1571, 0.0
    %v2079 = vmax.f32 %v1573, 0.0
    %v2080 = vmax.f32 %v1576, 0.0
    %v2081 = vmax.f32 %v1578, 0.0
    %v2082 = vmax.f32 %v1581, 0.0
    %v2083 = vmax.f32 %v1583, 0.0
    %v2084 = vmax.f32 %v1586, 0.0
    %v2085 = vmax.f32 %v1588, 0.0
    %v2086 = vmax.f32 %v1591, 0.0
    %v2087 = vmax.f32 %v1593, 0.0
    %v2088 = vmax.f32 %v1596, 0.0
    %v2089 = vmax.f32 %v1598, 0.0
    %v2090 = vmax.f32 %v1601, 0.0
    %v2091 = vmax.f32 %v1603, 0.0
    %v2092 = vmax.f32 %v1606, 0.0
    %v2093 = vmax.f32 %v1608, 0.0
    %v2094 = vmax.f32 %v1611, 0.0
    %v2095 = vmax.f32 %v1613, 0.0
    %v2096 = vmax.f32 %v1616, 0.0
    %v2097 = vmax.f32 %v1618, 0.0
    %v2098 = vmax.f32 %v1621, 0.0
    %v2099 = vmax.f32 %v1623, 0.0
    %v2100 = vmax.f32 %v1626, 0.0
    %v2101 = vmax.f32 %v1628, 0.0
    %v2102 = vmax.f32 %v1631, 0.0
    %v2103 = vmax.f32 %v1633, 0.0
    %v2104 = vmax.f32 %v1636, 0.0
    %v2105 = vmax.f32 %v1638, 0.0
    %v2106 = vmax.f32 %v1641, 0.0
    %v2107 = vmax.f32 %v1643, 0.0
    %v2108 = vmax.f32 %v1646, 0.0
    %v2109 = vmax.f32 %v1648, 0.0
    %v2110 = vmax.f32 %v1651, 0.0
    %v2111 = vmax.f32 %v1653, 0.0
    %v2112 = vmax.f32 %v1656, 0.0
    %v2113 = vmax.f32 %v1658, 0.0
    %v2114 = vmax.f32 %v1661, 0.0
    %v2115 = vmax.f32 %v1663, 0.0
    %v2116 = vmax.f32 %v1666, 0.0
    %v2117 = vmax.f32 %v1668, 0.0
    %v2118 = vmax.f32 %v1671, 0.0
    %v2119 = vmax.f32 %v1673, 0.0
    %v2120 = vmax.f32 %v1676, 0.0
    %v2121 = vmax.f32 %v1678, 0.0
    %v2122 = vmax.f32 %v1681, 0.0
    %v2123 = vmax.f32 %v1683, 0.0
    %v2124 = vmax.f32 %v1686, 0.0
    %v2125 = vmax.f32 %v1688, 0.0
    %v2126 = vmax.f32 %v1691, 0.0
    %v2127 = vmax.f32 %v1693, 0.0
    %v2128 = vmax.f32 %v1696, 0.0
    %v2129 = vmax.f32 %v1698, 0.0
    %v2130 = vmax.f32 %v1701, 0.0
    %v2131 = vmax.f32 %v1703, 0.0
    %v2132 = vmax.f32 %v1706, 0.0
    %v2133 = vmax.f32 %v1708, 0.0
    %v2134 = vmax.f32 %v1711, 0.0
    %v2135 = vmax.f32 %v1713, 0.0
    %v2136 = vmax.f32 %v1716, 0.0
    %v2137 = vmax.f32 %v1718, 0.0
    %v2138 = vmax.f32 %v1721, 0.0
    %v2139 = vmax.f32 %v1723, 0.0
    %v2140 = vmax.f32 %v1726, 0.0
    %v2141 = vmax.f32 %v1728, 0.0
    %v2142 = vmax.f32 %v1731, 0.0
    %v2143 = vmax.f32 %v1733, 0.0
    %v2144 = vmax.f32 %v1736, 0.0
    %v2145 = vmax.f32 %v1738, 0.0
    %v2146 = vmax.f32 %v1741, 0.0
    %v2147 = vmax.f32 %v1743, 0.0
    %v2148 = vmax.f32 %v1746, 0.0
    %v2149 = vmax.f32 %v1748, 0.0
    %v2150 = vmax.f32 %v1751, 0.0
    %v2151 = vmax.f32 %v1753, 0.0
    %v2152 = vmax.f32 %v1756, 0.0
    %v2153 = vmax.f32 %v1758, 0.0
    %v2154 = vmax.f32 %v1761, 0.0
    %v2155 = vmax.f32 %v1763, 0.0
    %v2156 = vmax.f32 %v1766, 0.0
    %v2157 = vmax.f32 %v1768, 0.0
    %v2158 = vmax.f32 %v1771, 0.0
    %v2159 = vmax.f32 %v1773, 0.0
    %v2160 = vmax.f32 %v1776, 0.0
    %v2161 = vmax.f32 %v1778, 0.0
    %v2162 = vmax.f32 %v1781, 0.0
    %v2163 = vmax.f32 %v1783, 0.0
    %v2164 = vmax.f32 %v1786, 0.0
    %v2165 = vmax.f32 %v1788, 0.0
    %v2166 = vmax.f32 %v1791, 0.0
    %v2167 = vmax.f32 %v1793, 0.0
    %v2168 = vmax.f32 %v1796, 0.0
    %v2169 = vmax.f32 %v1798, 0.0
    %v2170 = vmax.f32 %v1801, 0.0
    %v2171 = vmax.f32 %v1803, 0.0
    %v2172 = vmax.f32 %v1806, 0.0
    %v2173 = vmax.f32 %v1808, 0.0
    %v2174 = vmax.f32 %v1811, 0.0
    %v2175 = vmax.f32 %v1813, 0.0
    %v2176 = vmax.f32 %v1816, 0.0
    %v2177 = vmax.f32 %v1818, 0.0
    %v2178 = vmax.f32 %v1821, 0.0
    %v2179 = vmax.f32 %v1823, 0.0
    %v2180 = vmax.f32 %v1826, 0.0
    %v2181 = vmax.f32 %v1828, 0.0
    %v2182 = vmax.f32 %v1831, 0.0
    %v2183 = vmax.f32 %v1833, 0.0
    %v2184 = vmax.f32 %v1836, 0.0
    %v2185 = vmax.f32 %v1838, 0.0
    %v2186 = vmax.f32 %v1841, 0.0
    %v2187 = vmax.f32 %v1843, 0.0
    %v2188 = vmax.f32 %v1846, 0.0
    %v2189 = vmax.f32 %v1848, 0.0
    %v2190 = vmax.f32 %v1851, 0.0
    %v2191 = vmax.f32 %v1853, 0.0
    %v2192 = vmax.f32 %v1856, 0.0
    %v2193 = vmax.f32 %v1858, 0.0
    %v2194 = vmax.f32 %v1861, 0.0
    %v2195 = vmax.f32 %v1863, 0.0
    %v2196 = vmax.f32 %v1866, 0.0
    %v2197 = vmax.f32 %v1868, 0.0
    %v2198 = vmax.f32 %v1871, 0.0
    %v2199 = vmax.f32 %v1873, 0.0
    %v2200 = vmax.f32 %v1876, 0.0
    %v2201 = vmax.f32 %v1878, 0.0
    %v2202 = vmax.f32 %v1881, 0.0
    %v2203 = vmax.f32 %v1883, 0.0
    %v2204 = vmax.f32 %v1886, 0.0
    %v2205 = vmax.f32 %v1888, 0.0
    %v2206 = vmax.f32 %v1891, 0.0
    %v2207 = vmax.f32 %v1893, 0.0
    %v2208 = vmax.f32 %v1896, 0.0
    %v2209 = vmax.f32 %v1898, 0.0
    %v2210 = vmax.f32 %v1901, 0.0
    %v2211 = vmax.f32 %v1903, 0.0
    %v2212 = vmax.f32 %v1906, 0.0
    %v2213 = vmax.f32 %v1908, 0.0
    %v2214 = vmax.f32 %v1911, 0.0
    %v2215 = vmax.f32 %v1913, 0.0
    %v2216 = vmax.f32 %v1916, 0.0
    %v2217 = vmax.f32 %v1918, 0.0
    %v2218 = vmax.f32 %v1921, 0.0
    %v2219 = vmax.f32 %v1923, 0.0
    %v2220 = vmax.f32 %v1926, 0.0
    %v2221 = vmax.f32 %v1928, 0.0
    %v2222 = vmax.f32 %v1931, 0.0
    %v2223 = vmax.f32 %v1933, 0.0
    %v2224 = vmax.f32 %v1936, 0.0
    %v2225 = vmax.f32 %v1938, 0.0
    %v2226 = vmax.f32 %v1941, 0.0
    %v2227 = vmax.f32 %v1943, 0.0
    %v2228 = vmax.f32 %v1946, 0.0
    %v2229 = vmax.f32 %v1948, 0.0
    %v2230 = vmax.f32 %v1951, 0.0
    %v2231 = vmax.f32 %v1953, 0.0
    %v2232 = vmax.f32 %v1956, 0.0
    %v2233 = vmax.f32 %v1958, 0.0
    %v2234 = vmax.f32 %v1961, 0.0
    %v2235 = vmax.f32 %v1963, 0.0
    %v2236 = vmax.f32 %v1966, 0.0
    %v2237 = vmax.f32 %v1968, 0.0
    %v2238 = vmax.f32 %v1971, 0.0
    %v2239 = vmax.f32 %v1973, 0.0
    %v2240 = vmax.f32 %v1976, 0.0
    %v2241 = vmax.f32 %v1978, 0.0
    %v2242 = vmax.f32 %v1981, 0.0
    %v2243 = vmax.f32 %v1983, 0.0
    %v2244 = vmax.f32 %v1986, 0.0
    %v2245 = vmax.f32 %v1988, 0.0
    %v2246 = vmax.f32 %v1990, %v2022
    %v2247 = vmax.f32 %v1991, %v2023
    %v2248 = vmax.f32 %v1992, %v2024
    %v2249 = vmax.f32 %v1993, %v2025
    %v2250 = vmax.f32 %v1994, %v2026
    %v2251 = vmax.f32 %v1995, %v2027
    %v2252 = vmax.f32 %v1996, %v2028
    %v2253 = vmax.f32 %v1997, %v2029
    %v2254 = vmax.f32 %v1998, %v2030
    %v2255 = vmax.f32 %v1999, %v2031
    %v2256 = vmax.f32 %v2000, %v2032
    %v2257 = vmax.f32 %v2001, %v2033
    %v2258 = vmax.f32 %v2002, %v2034
    %v2259 = vmax.f32 %v2003, %v2035
    %v2260 = vmax.f32 %v2004, %v2036
    %v2261 = vmax.f32 %v2005, %v2037
    %v2262 = vmax.f32 %v2006, %v2038
    %v2263 = vmax.f32 %v2007, %v2039
    %v2264 = vmax.f32 %v2008, %v2040
    %v2265 = vmax.f32 %v2009, %v2041
    %v2266 = vmax.f32 %v2010, %v2042
    %v2267 = vmax.f32 %v2011, %v2043
    %v2268 = vmax.f32 %v2012, %v2044
    %v2269 = vmax.f32 %v2013, %v2045
    %v2270 = vmax.f32 %v2014, %v2046
    %v2271 = vmax.f32 %v2015, %v2047
    %v2272 = vmax.f32 %v2016, %v2048
    %v2273 = vmax.f32 %v2017, %v2049
    %v2274 = vmax.f32 %v2018, %v2050
    %v2275 = vmax.f32 %v2019, %v2051
    %v2276 = vmax.f32 %v2020, %v2052
    %v2277 = vmax.f32 %v2021, %v2053
    %v2278 = vmax.f32 %v2118, %v2150
    %v2279 = vmax.f32 %v2119, %v2151
    %v2280 = vmax.f32 %v2120, %v2152
    %v2281 = vmax.f32 %v2121, %v2153
    %v2282 = vmax.f32 %v2122, %v2154
    %v2283 = vmax.f32 %v2123, %v2155
    %v2284 = vmax.f32 %v2124, %v2156
    %v2285 = vmax.f32 %v2125, %v2157
    %v2286 = vmax.f32 %v2126, %v2158
    %v2287 = vmax.f32 %v2127, %v2159
    %v2288 = vmax.f32 %v2128, %v2160
    %v2289 = vmax.f32 %v2129, %v2161
    %v2290 = vmax.f32 %v2130, %v2162
    %v2291 = vmax.f32 %v2131, %v2163
    %v2292 = vmax.f32 %v2132, %v2164
    %v2293 = vmax.f32 %v2133, %v2165
    %v2294 = vmax.f32 %v2134, %v2166
    %v2295 = vmax.f32 %v2135, %v2167
    %v2296 = vmax.f32 %v2136, %v2168
    %v2297 = vmax.f32 %v2137, %v2169
    %v2298 = vmax.f32 %v2138, %v2170
    %v2299 = vmax.f32 %v2139, %v2171
    %v2300 = vmax.f32 %v2140, %v2172
    %v2301 = vmax.f32 %v2141, %v2173
    %v2302 = vmax.f32 %v2142, %v2174
    %v2303 = vmax.f32 %v2143, %v2175
    %v2304 = vmax.f32 %v2144, %v2176
    %v2305 = vmax.f32 %v2145, %v2177
    %v2306 = vmax.f32 %v2146, %v2178
    %v2307 = vmax.f32 %v2147, %v2179
    %v2308 = vmax.f32 %v2148, %v2180
    %v2309 = vmax.f32 %v2149, %v2181
    %v2310 = vmax.f32 %v2054, %v2086
    %v2311 = vmax.f32 %v2055, %v2087
    %v2312 = vmax.f32 %v2056, %v2088
    %v2313 = vmax.f32 %v2057, %v2089
    %v2314 = vmax.f32 %v2058, %v2090
    %v2315 = vmax.f32 %v2059, %v2091
    %v2316 = vmax.f32 %v2060, %v2092
    %v2317 = vmax.f32 %v2061, %v2093
    %v2318 = vmax.f32 %v2062, %v2094
    %v2319 = vmax.f32 %v2063, %v2095
    %v2320 = vmax.f32 %v2064, %v2096
    %v2321 = vmax.f32 %v2065, %v2097
    %v2322 = vmax.f32 %v2066, %v2098
    %v2323 = vmax.f32 %v2067, %v2099
    %v2324 = vmax.f32 %v2068, %v2100
    %v2325 = vmax.f32 %v2069, %v2101
    %v2326 = vmax.f32 %v2070, %v2102
    %v2327 = vmax.f32 %v2071, %v2103
    %v2328 = vmax.f32 %v2072, %v2104
    %v2329 = vmax.f32 %v2073, %v2105
    %v2330 = vmax.f32 %v2074, %v2106
    %v2331 = vmax.f32 %v2075, %v2107
    %v2332 = vmax.f32 %v2076, %v2108
    %v2333 = vmax.f32 %v2077, %v2109
    %v2334 = vmax.f32 %v2078, %v2110
    %v2335 = vmax.f32 %v2079, %v2111
    %v2336 = vmax.f32 %v2080, %v2112
    %v2337 = vmax.f32 %v2081, %v2113
    %v2338 = vmax.f32 %v2082, %v2114
    %v2339 = vmax.f32 %v2083, %v2115
    %v2340 = vmax.f32 %v2084, %v2116
    %v2341 = vmax.f32 %v2085, %v2117
    %v2342 = vmax.f32 %v2182, %v2214
    %v2343 = vmax.f32 %v2183, %v2215
    %v2344 = vmax.f32 %v2184, %v2216
    %v2345 = vmax.f32 %v2185, %v2217
    %v2346 = vmax.f32 %v2186, %v2218
    %v2347 = vmax.f32 %v2187, %v2219
    %v2348 = vmax.f32 %v2188, %v2220
    %v2349 = vmax.f32 %v2189, %v2221
    %v2350 = vmax.f32 %v2190, %v2222
    %v2351 = vmax.f32 %v2191, %v2223
    %v2352 = vmax.f32 %v2192, %v2224
    %v2353 = vmax.f32 %v2193, %v2225
    %v2354 = vmax.f32 %v2194, %v2226
    %v2355 = vmax.f32 %v2195, %v2227
    %v2356 = vmax.f32 %v2196, %v2228
    %v2357 = vmax.f32 %v2197, %v2229
    %v2358 = vmax.f32 %v2198, %v2230
    %v2359 = vmax.f32 %v2199, %v2231
    %v2360 = vmax.f32 %v2200, %v2232
    %v2361 = vmax.f32 %v2201, %v2233
    %v2362 = vmax.f32 %v2202, %v2234
    %v2363 = vmax.f32 %v2203, %v2235
    %v2364 = vmax.f32 %v2204, %v2236
    %v2365 = vmax.f32 %v2205, %v2237
    %v2366 = vmax.f32 %v2206, %v2238
    %v2367 = vmax.f32 %v2207, %v2239
    %v2368 = vmax.f32 %v2208, %v2240
    %v2369 = vmax.f32 %v2209, %v2241
    %v2370 = vmax.f32 %v2210, %v2242
    %v2371 = vmax.f32 %v2211, %v2243
    %v2372 = vmax.f32 %v2212, %v2244
    %v2373 = vmax.f32 %v2213, %v2245
    %v2374 = vmax.f32 %v2246, %v2310
    %v2375 = vmax.f32 %v2247, %v2311
    %v2376 = vmax.f32 %v2248, %v2312
    %v2377 = vmax.f32 %v2249, %v2313
    %v2378 = vmax.f32 %v2250, %v2314
    %v2379 = vmax.f32 %v2251, %v2315
    %v2380 = vmax.f32 %v2252, %v2316
    %v2381 = vmax.f32 %v2253, %v2317
    %v2382 = vmax.f32 %v2254, %v2318
    %v2383 = vmax.f32 %v2255, %v2319
    %v2384 = vmax.f32 %v2256, %v2320
    %v2385 = vmax.f32 %v2257, %v2321
    %v2386 = vmax.f32 %v2258, %v2322
    %v2387 = vmax.f32 %v2259, %v2323
    %v2388 = vmax.f32 %v2260, %v2324
    %v2389 = vmax.f32 %v2261, %v2325
    %v2390 = vmax.f32 %v2262, %v2326
    %v2391 = vmax.f32 %v2263, %v2327
    %v2392 = vmax.f32 %v2264, %v2328
    %v2393 = vmax.f32 %v2265, %v2329
    %v2394 = vmax.f32 %v2266, %v2330
    %v2395 = vmax.f32 %v2267, %v2331
    %v2396 = vmax.f32 %v2268, %v2332
    %v2397 = vmax.f32 %v2269, %v2333
    %v2398 = vmax.f32 %v2270, %v2334
    %v2399 = vmax.f32 %v2271, %v2335
    %v2400 = vmax.f32 %v2272, %v2336
    %v2401 = vmax.f32 %v2273, %v2337
    %v2402 = vmax.f32 %v2274, %v2338
    %v2403 = vmax.f32 %v2275, %v2339
    %v2404 = vmax.f32 %v2276, %v2340
    %v2405 = vmax.f32 %v2277, %v2341
    %v2406 = vmax.f32 %v2278, %v2342
    %v2407 = vmax.f32 %v2279, %v2343
    %v2408 = vmax.f32 %v2280, %v2344
    %v2409 = vmax.f32 %v2281, %v2345
    %v2410 = vmax.f32 %v2282, %v2346
    %v2411 = vmax.f32 %v2283, %v2347
    %v2412 = vmax.f32 %v2284, %v2348
    %v2413 = vmax.f32 %v2285, %v2349
    %v2414 = vmax.f32 %v2286, %v2350
    %v2415 = vmax.f32 %v2287, %v2351
    %v2416 = vmax.f32 %v2288, %v2352
    %v2417 = vmax.f32 %v2289, %v2353
    %v2418 = vmax.f32 %v2290, %v2354
    %v2419 = vmax.f32 %v2291, %v2355
    %v2420 = vmax.f32 %v2292, %v2356
    %v2421 = vmax.f32 %v2293, %v2357
    %v2422 = vmax.f32 %v2294, %v2358
    %v2423 = vmax.f32 %v2295, %v2359
    %v2424 = vmax.f32 %v2296, %v2360
    %v2425 = vmax.f32 %v2297, %v2361
    %v2426 = vmax.f32 %v2298, %v2362
    %v2427 = vmax.f32 %v2299, %v2363
    %v2428 = vmax.f32 %v2300, %v2364
    %v2429 = vmax.f32 %v2301, %v2365
    %v2430 = vmax.f32 %v2302, %v2366
    %v2431 = vmax.f32 %v2303, %v2367
    %v2432 = vmax.f32 %v2304, %v2368
    %v2433 = vmax.f32 %v2305, %v2369
    %v2434 = vmax.f32 %v2306, %v2370
    %v2435 = vmax.f32 %v2307, %v2371
    %v2436 = vmax.f32 %v2308, %v2372
    %v2437 = vmax.f32 %v2309, %v2373
    %v2438 = vpack.c.bf16 %v2374, %v2374
    %v2439 = vpack.c.bf16 %v2375, %v2375
    %v2440 = vpack.c.bf16 %v2376, %v2376
    %v2441 = vpack.c.bf16 %v2377, %v2377
    %v2442 = vpack.c.bf16 %v2378, %v2378
    %v2443 = vpack.c.bf16 %v2379, %v2379
    %v2444 = vpack.c.bf16 %v2380, %v2380
    %v2445 = vpack.c.bf16 %v2381, %v2381
    %v2446 = vpack.c.bf16 %v2382, %v2382
    %v2447 = vpack.c.bf16 %v2383, %v2383
    %v2448 = vpack.c.bf16 %v2384, %v2384
    %v2449 = vpack.c.bf16 %v2385, %v2385
    %v2450 = vpack.c.bf16 %v2386, %v2386
    %v2451 = vpack.c.bf16 %v2387, %v2387
    %v2452 = vpack.c.bf16 %v2388, %v2388
    %v2453 = vpack.c.bf16 %v2389, %v2389
    %v2454 = vpack.c.bf16 %v2390, %v2390
    %v2455 = vpack.c.bf16 %v2391, %v2391
    %v2456 = vpack.c.bf16 %v2392, %v2392
    %v2457 = vpack.c.bf16 %v2393, %v2393
    %v2458 = vpack.c.bf16 %v2394, %v2394
    %v2459 = vpack.c.bf16 %v2395, %v2395
    %v2460 = vpack.c.bf16 %v2396, %v2396
    %v2461 = vpack.c.bf16 %v2397, %v2397
    %v2462 = vpack.c.bf16 %v2398, %v2398
    %v2463 = vpack.c.bf16 %v2399, %v2399
    %v2464 = vpack.c.bf16 %v2400, %v2400
    %v2465 = vpack.c.bf16 %v2401, %v2401
    %v2466 = vpack.c.bf16 %v2402, %v2402
    %v2467 = vpack.c.bf16 %v2403, %v2403
    %v2468 = vpack.c.bf16 %v2404, %v2404
    %v2469 = vpack.c.bf16 %v2405, %v2405
    %v2470 = vpack.c.bf16 %v2406, %v2406
    %v2471 = vpack.c.bf16 %v2407, %v2407
    %v2472 = vpack.c.bf16 %v2408, %v2408
    %v2473 = vpack.c.bf16 %v2409, %v2409
    %v2474 = vpack.c.bf16 %v2410, %v2410
    %v2475 = vpack.c.bf16 %v2411, %v2411
    %v2476 = vpack.c.bf16 %v2412, %v2412
    %v2477 = vpack.c.bf16 %v2413, %v2413
    %v2478 = vpack.c.bf16 %v2414, %v2414
    %v2479 = vpack.c.bf16 %v2415, %v2415
    %v2480 = vpack.c.bf16 %v2416, %v2416
    %v2481 = vpack.c.bf16 %v2417, %v2417
    %v2482 = vpack.c.bf16 %v2418, %v2418
    %v2483 = vpack.c.bf16 %v2419, %v2419
    %v2484 = vpack.c.bf16 %v2420, %v2420
    %v2485 = vpack.c.bf16 %v2421, %v2421
    %v2486 = vpack.c.bf16 %v2422, %v2422
    %v2487 = vpack.c.bf16 %v2423, %v2423
    %v2488 = vpack.c.bf16 %v2424, %v2424
    %v2489 = vpack.c.bf16 %v2425, %v2425
    %v2490 = vpack.c.bf16 %v2426, %v2426
    %v2491 = vpack.c.bf16 %v2427, %v2427
    %v2492 = vpack.c.bf16 %v2428, %v2428
    %v2493 = vpack.c.bf16 %v2429, %v2429
    %v2494 = vpack.c.bf16 %v2430, %v2430
    %v2495 = vpack.c.bf16 %v2431, %v2431
    %v2496 = vpack.c.bf16 %v2432, %v2432
    %v2497 = vpack.c.bf16 %v2433, %v2433
    %v2498 = vpack.c.bf16 %v2434, %v2434
    %v2499 = vpack.c.bf16 %v2435, %v2435
    %v2500 = vpack.c.bf16 %v2436, %v2436
    %v2501 = vpack.c.bf16 %v2437, %v2437
    %vm2502 = vcmask 1043458
    %vm2503 = vcmask 261126
    %vm2504 = vmor %vm2503, %vm2502
    %2505 = vst.msk [vmem:[#allocation2 + $0x8] sm:$0xcc] %vm2504, 0
    %2506 = vst.msk [vmem:[#allocation2 + $0x18] sm:$0xcc] %vm2504, 0
    %2507 = vst.msk [vmem:[#allocation2 + $0x28] sm:$0xcc] %vm2504, 0
    %2508 = vst.msk [vmem:[#allocation2 + $0x38] sm:$0xcc] %vm2504, 0
    %2509 = vst.msk [vmem:[#allocation2 + $0x48] sm:$0xcc] %vm2504, 0
    %2510 = vst.msk [vmem:[#allocation2 + $0x58] sm:$0xcc] %vm2504, 0
    %2511 = vst.msk [vmem:[#allocation2 + $0x68] sm:$0xcc] %vm2504, 0
    %2512 = vst.msk [vmem:[#allocation2 + $0x78] sm:$0xcc] %vm2504, 0
    %2513 = vst.msk [vmem:[#allocation2 + $0x88] sm:$0xcc] %vm2504, 0
    %2514 = vst.msk [vmem:[#allocation2 + $0x98] sm:$0xcc] %vm2504, 0
    %2515 = vst.msk [vmem:[#allocation2 + $0xa8] sm:$0xcc] %vm2504, 0
    %2516 = vst.msk [vmem:[#allocation2 + $0xb8] sm:$0xcc] %vm2504, 0
    %2517 = vst.msk [vmem:[#allocation2 + $0xc8] sm:$0xcc] %vm2504, 0
    %2518 = vst.msk [vmem:[#allocation2 + $0xd8] sm:$0xcc] %vm2504, 0
    %2519 = vst.msk [vmem:[#allocation2 + $0xe8] sm:$0xcc] %vm2504, 0
    %2520 = vst.msk [vmem:[#allocation2 + $0xf8] sm:$0xcc] %vm2504, 0
    %2521 = vst.msk [vmem:[#allocation2 + $0x108] sm:$0xcc] %vm2504, 0
    %2522 = vst.msk [vmem:[#allocation2 + $0x118] sm:$0xcc] %vm2504, 0
    %2523 = vst.msk [vmem:[#allocation2 + $0x128] sm:$0xcc] %vm2504, 0
    %2524 = vst.msk [vmem:[#allocation2 + $0x138] sm:$0xcc] %vm2504, 0
    %2525 = vst.msk [vmem:[#allocation2 + $0x148] sm:$0xcc] %vm2504, 0
    %2526 = vst.msk [vmem:[#allocation2 + $0x158] sm:$0xcc] %vm2504, 0
    %2527 = vst.msk [vmem:[#allocation2 + $0x168] sm:$0xcc] %vm2504, 0
    %2528 = vst.msk [vmem:[#allocation2 + $0x178] sm:$0xcc] %vm2504, 0
    %2529 = vst.msk [vmem:[#allocation2 + $0x188] sm:$0xcc] %vm2504, 0
    %2530 = vst.msk [vmem:[#allocation2 + $0x198] sm:$0xcc] %vm2504, 0
    %2531 = vst.msk [vmem:[#allocation2 + $0x1a8] sm:$0xcc] %vm2504, 0
    %2532 = vst.msk [vmem:[#allocation2 + $0x1b8] sm:$0xcc] %vm2504, 0
    %2533 = vst.msk [vmem:[#allocation2 + $0x1c8] sm:$0xcc] %vm2504, 0
    %2534 = vst.msk [vmem:[#allocation2 + $0x1d8] sm:$0xcc] %vm2504, 0
    %2535 = vst.msk [vmem:[#allocation2 + $0x1e8] sm:$0xcc] %vm2504, 0
    %2536 = vst.msk [vmem:[#allocation2 + $0x1f8] sm:$0xcc] %vm2504, 0
    %vm2537 = vcmask 257024
    %2538 = vst.msk [vmem:[#allocation2] sm:$0xf] %vm2537, %v2438
    %vm2539 = vcmask 254976
    %2540 = vst.msk [vmem:[#allocation2 + $0x8] sm:$0x3] %vm2539, %v2439
    %2541 = vst.msk [vmem:[#allocation2 + $0x10] sm:$0xf] %vm2537, %v2440
    %2542 = vst.msk [vmem:[#allocation2 + $0x18] sm:$0x3] %vm2539, %v2441
    %2543 = vst.msk [vmem:[#allocation2 + $0x20] sm:$0xf] %vm2537, %v2442
    %2544 = vst.msk [vmem:[#allocation2 + $0x28] sm:$0x3] %vm2539, %v2443
    %2545 = vst.msk [vmem:[#allocation2 + $0x30] sm:$0xf] %vm2537, %v2444
    %2546 = vst.msk [vmem:[#allocation2 + $0x38] sm:$0x3] %vm2539, %v2445
    %2547 = vst.msk [vmem:[#allocation2 + $0x40] sm:$0xf] %vm2537, %v2446
    %2548 = vst.msk [vmem:[#allocation2 + $0x48] sm:$0x3] %vm2539, %v2447
    %2549 = vst.msk [vmem:[#allocation2 + $0x50] sm:$0xf] %vm2537, %v2448
    %2550 = vst.msk [vmem:[#allocation2 + $0x58] sm:$0x3] %vm2539, %v2449
    %2551 = vst.msk [vmem:[#allocation2 + $0x60] sm:$0xf] %vm2537, %v2450
    %2552 = vst.msk [vmem:[#allocation2 + $0x68] sm:$0x3] %vm2539, %v2451
    %2553 = vst.msk [vmem:[#allocation2 + $0x70] sm:$0xf] %vm2537, %v2452
    %2554 = vst.msk [vmem:[#allocation2 + $0x78] sm:$0x3] %vm2539, %v2453
    %2555 = vst.msk [vmem:[#allocation2 + $0x80] sm:$0xf] %vm2537, %v2454
    %2556 = vst.msk [vmem:[#allocation2 + $0x88] sm:$0x3] %vm2539, %v2455
    %2557 = vst.msk [vmem:[#allocation2 + $0x90] sm:$0xf] %vm2537, %v2456
    %2558 = vst.msk [vmem:[#allocation2 + $0x98] sm:$0x3] %vm2539, %v2457
    %2559 = vst.msk [vmem:[#allocation2 + $0xa0] sm:$0xf] %vm2537, %v2458
    %2560 = vst.msk [vmem:[#allocation2 + $0xa8] sm:$0x3] %vm2539, %v2459
    %2561 = vst.msk [vmem:[#allocation2 + $0xb0] sm:$0xf] %vm2537, %v2460
    %2562 = vst.msk [vmem:[#allocation2 + $0xb8] sm:$0x3] %vm2539, %v2461
    %2563 = vst.msk [vmem:[#allocation2 + $0xc0] sm:$0xf] %vm2537, %v2462
    %2564 = vst.msk [vmem:[#allocation2 + $0xc8] sm:$0x3] %vm2539, %v2463
    %2565 = vst.msk [vmem:[#allocation2 + $0xd0] sm:$0xf] %vm2537, %v2464
    %2566 = vst.msk [vmem:[#allocation2 + $0xd8] sm:$0x3] %vm2539, %v2465
    %2567 = vst.msk [vmem:[#allocation2 + $0xe0] sm:$0xf] %vm2537, %v2466
    %2568 = vst.msk [vmem:[#allocation2 + $0xe8] sm:$0x3] %vm2539, %v2467
    %2569 = vst.msk [vmem:[#allocation2 + $0xf0] sm:$0xf] %vm2537, %v2468
    %2570 = vst.msk [vmem:[#allocation2 + $0xf8] sm:$0x3] %vm2539, %v2469
    %2571 = vst.msk [vmem:[#allocation2 + $0x100] sm:$0xf] %vm2537, %v2470
    %2572 = vst.msk [vmem:[#allocation2 + $0x108] sm:$0x3] %vm2539, %v2471
    %2573 = vst.msk [vmem:[#allocation2 + $0x110] sm:$0xf] %vm2537, %v2472
    %2574 = vst.msk [vmem:[#allocation2 + $0x118] sm:$0x3] %vm2539, %v2473
    %2575 = vst.msk [vmem:[#allocation2 + $0x120] sm:$0xf] %vm2537, %v2474
    %2576 = vst.msk [vmem:[#allocation2 + $0x128] sm:$0x3] %vm2539, %v2475
    %2577 = vst.msk [vmem:[#allocation2 + $0x130] sm:$0xf] %vm2537, %v2476
    %2578 = vst.msk [vmem:[#allocation2 + $0x138] sm:$0x3] %vm2539, %v2477
    %2579 = vst.msk [vmem:[#allocation2 + $0x140] sm:$0xf] %vm2537, %v2478
    %2580 = vst.msk [vmem:[#allocation2 + $0x148] sm:$0x3] %vm2539, %v2479
    %2581 = vst.msk [vmem:[#allocation2 + $0x150] sm:$0xf] %vm2537, %v2480
    %2582 = vst.msk [vmem:[#allocation2 + $0x158] sm:$0x3] %vm2539, %v2481
    %2583 = vst.msk [vmem:[#allocation2 + $0x160] sm:$0xf] %vm2537, %v2482
    %2584 = vst.msk [vmem:[#allocation2 + $0x168] sm:$0x3] %vm2539, %v2483
    %2585 = vst.msk [vmem:[#allocation2 + $0x170] sm:$0xf] %vm2537, %v2484
    %2586 = vst.msk [vmem:[#allocation2 + $0x178] sm:$0x3] %vm2539, %v2485
    %2587 = vst.msk [vmem:[#allocation2 + $0x180] sm:$0xf] %vm2537, %v2486
    %2588 = vst.msk [vmem:[#allocation2 + $0x188] sm:$0x3] %vm2539, %v2487
    %2589 = vst.msk [vmem:[#allocation2 + $0x190] sm:$0xf] %vm2537, %v2488
    %2590 = vst.msk [vmem:[#allocation2 + $0x198] sm:$0x3] %vm2539, %v2489
    %2591 = vst.msk [vmem:[#allocation2 + $0x1a0] sm:$0xf] %vm2537, %v2490
    %2592 = vst.msk [vmem:[#allocation2 + $0x1a8] sm:$0x3] %vm2539, %v2491
    %2593 = vst.msk [vmem:[#allocation2 + $0x1b0] sm:$0xf] %vm2537, %v2492
    %2594 = vst.msk [vmem:[#allocation2 + $0x1b8] sm:$0x3] %vm2539, %v2493
    %2595 = vst.msk [vmem:[#allocation2 + $0x1c0] sm:$0xf] %vm2537, %v2494
    %2596 = vst.msk [vmem:[#allocation2 + $0x1c8] sm:$0x3] %vm2539, %v2495
    %2597 = vst.msk [vmem:[#allocation2 + $0x1d0] sm:$0xf] %vm2537, %v2496
    %2598 = vst.msk [vmem:[#allocation2 + $0x1d8] sm:$0x3] %vm2539, %v2497
    %2599 = vst.msk [vmem:[#allocation2 + $0x1e0] sm:$0xf] %vm2537, %v2498
    %2600 = vst.msk [vmem:[#allocation2 + $0x1e8] sm:$0x3] %vm2539, %v2499
    %2601 = vst.msk [vmem:[#allocation2 + $0x1f0] sm:$0xf] %vm2537, %v2500
    %2602 = vst.msk [vmem:[#allocation2 + $0x1f8] sm:$0x3] %vm2539, %v2501
    %vm2603 = vsmask.f32 3328
    %vm2604 = vsmask.f32 7440
    %vm2605 = vmor %vm2603, %vm2604
    %v2607 = vshrl.u32 %v2438, 16
    %v2609 = vrot.slane %v2607, 4
    %v2610 = vshll.u32 %v2438, 16
    %v2612 = vrot.slane %v2610, 5
    %v2613 = vor.u32 %v2609, %v2612
    %v2614 = vrot.slane %v2613, 4
    %v2616 = vshll.u32 %v2439, 16
    %v2618 = vrot.slane %v2616, 5
    %v2619 = vsel %vm2605, %v2614, %v2618
    %v2620 = vshrl.u32 %v2439, 16
    %v2622 = vrot.slane %v2620, 4
    %v2623 = vor.u32 %v2622, %v2618
    %v2624 = vrot.slane %v2623, 4
    %v2626 = vshrl.u32 %v2440, 16
    %v2628 = vrot.slane %v2626, 4
    %v2629 = vshll.u32 %v2440, 16
    %v2631 = vrot.slane %v2629, 5
    %v2632 = vor.u32 %v2628, %v2631
    %v2633 = vrot.slane %v2632, 4
    %v2635 = vshll.u32 %v2441, 16
    %v2637 = vrot.slane %v2635, 5
    %v2638 = vsel %vm2605, %v2633, %v2637
    %v2639 = vshrl.u32 %v2441, 16
    %v2641 = vrot.slane %v2639, 4
    %v2642 = vor.u32 %v2641, %v2637
    %v2643 = vrot.slane %v2642, 4
    %v2645 = vshrl.u32 %v2442, 16
    %v2647 = vrot.slane %v2645, 4
    %v2648 = vshll.u32 %v2442, 16
    %v2650 = vrot.slane %v2648, 5
    %v2651 = vor.u32 %v2647, %v2650
    %v2652 = vrot.slane %v2651, 4
    %v2654 = vshll.u32 %v2443, 16
    %v2656 = vrot.slane %v2654, 5
    %v2657 = vsel %vm2605, %v2652, %v2656
    %v2658 = vshrl.u32 %v2443, 16
    %v2660 = vrot.slane %v2658, 4
    %v2661 = vor.u32 %v2660, %v2656
    %v2662 = vrot.slane %v2661, 4
    %v2664 = vshrl.u32 %v2444, 16
    %v2666 = vrot.slane %v2664, 4
    %v2667 = vshll.u32 %v2444, 16
    %v2669 = vrot.slane %v2667, 5
    %v2670 = vor.u32 %v2666, %v2669
    %v2671 = vrot.slane %v2670, 4
    %v2673 = vshll.u32 %v2445, 16
    %v2675 = vrot.slane %v2673, 5
    %v2676 = vsel %vm2605, %v2671, %v2675
    %v2677 = vshrl.u32 %v2445, 16
    %v2679 = vrot.slane %v2677, 4
    %v2680 = vor.u32 %v2679, %v2675
    %v2681 = vrot.slane %v2680, 4
    %v2683 = vshrl.u32 %v2446, 16
    %v2685 = vrot.slane %v2683, 4
    %v2686 = vshll.u32 %v2446, 16
    %v2688 = vrot.slane %v2686, 5
    %v2689 = vor.u32 %v2685, %v2688
    %v2690 = vrot.slane %v2689, 4
    %v2692 = vshll.u32 %v2447, 16
    %v2694 = vrot.slane %v2692, 5
    %v2695 = vsel %vm2605, %v2690, %v2694
    %v2696 = vshrl.u32 %v2447, 16
    %v2698 = vrot.slane %v2696, 4
    %v2699 = vor.u32 %v2698, %v2694
    %v2700 = vrot.slane %v2699, 4
    %v2702 = vshrl.u32 %v2448, 16
    %v2704 = vrot.slane %v2702, 4
    %v2705 = vshll.u32 %v2448, 16
    %v2707 = vrot.slane %v2705, 5
    %v2708 = vor.u32 %v2704, %v2707
    %v2709 = vrot.slane %v2708, 4
    %v2711 = vshll.u32 %v2449, 16
    %v2713 = vrot.slane %v2711, 5
    %v2714 = vsel %vm2605, %v2709, %v2713
    %v2715 = vshrl.u32 %v2449, 16
    %v2717 = vrot.slane %v2715, 4
    %v2718 = vor.u32 %v2717, %v2713
    %v2719 = vrot.slane %v2718, 4
    %v2721 = vshrl.u32 %v2450, 16
    %v2723 = vrot.slane %v2721, 4
    %v2724 = vshll.u32 %v2450, 16
    %v2726 = vrot.slane %v2724, 5
    %v2727 = vor.u32 %v2723, %v2726
    %v2728 = vrot.slane %v2727, 4
    %v2730 = vshll.u32 %v2451, 16
    %v2732 = vrot.slane %v2730, 5
    %v2733 = vsel %vm2605, %v2728, %v2732
    %v2734 = vshrl.u32 %v2451, 16
    %v2736 = vrot.slane %v2734, 4
    %v2737 = vor.u32 %v2736, %v2732
    %v2738 = vrot.slane %v2737, 4
    %v2740 = vshrl.u32 %v2452, 16
    %v2742 = vrot.slane %v2740, 4
    %v2743 = vshll.u32 %v2452, 16
    %v2745 = vrot.slane %v2743, 5
    %v2746 = vor.u32 %v2742, %v2745
    %v2747 = vrot.slane %v2746, 4
    %v2749 = vshll.u32 %v2453, 16
    %v2751 = vrot.slane %v2749, 5
    %v2752 = vsel %vm2605, %v2747, %v2751
    %v2753 = vshrl.u32 %v2453, 16
    %v2755 = vrot.slane %v2753, 4
    %v2756 = vor.u32 %v2755, %v2751
    %v2757 = vrot.slane %v2756, 4
    %v2759 = vshrl.u32 %v2454, 16
    %v2761 = vrot.slane %v2759, 4
    %v2762 = vshll.u32 %v2454, 16
    %v2764 = vrot.slane %v2762, 5
    %v2765 = vor.u32 %v2761, %v2764
    %v2766 = vrot.slane %v2765, 4
    %v2768 = vshll.u32 %v2455, 16
    %v2770 = vrot.slane %v2768, 5
    %v2771 = vsel %vm2605, %v2766, %v2770
    %v2772 = vshrl.u32 %v2455, 16
    %v2774 = vrot.slane %v2772, 4
    %v2775 = vor.u32 %v2774, %v2770
    %v2776 = vrot.slane %v2775, 4
    %v2778 = vshrl.u32 %v2456, 16
    %v2780 = vrot.slane %v2778, 4
    %v2781 = vshll.u32 %v2456, 16
    %v2783 = vrot.slane %v2781, 5
    %v2784 = vor.u32 %v2780, %v2783
    %v2785 = vrot.slane %v2784, 4
    %v2787 = vshll.u32 %v2457, 16
    %v2789 = vrot.slane %v2787, 5
    %v2790 = vsel %vm2605, %v2785, %v2789
    %v2791 = vshrl.u32 %v2457, 16
    %v2793 = vrot.slane %v2791, 4
    %v2794 = vor.u32 %v2793, %v2789
    %v2795 = vrot.slane %v2794, 4
    %v2797 = vshrl.u32 %v2458, 16
    %v2799 = vrot.slane %v2797, 4
    %v2800 = vshll.u32 %v2458, 16
    %v2802 = vrot.slane %v2800, 5
    %v2803 = vor.u32 %v2799, %v2802
    %v2804 = vrot.slane %v2803, 4
    %v2806 = vshll.u32 %v2459, 16
    %v2808 = vrot.slane %v2806, 5
    %v2809 = vsel %vm2605, %v2804, %v2808
    %v2810 = vshrl.u32 %v2459, 16
    %v2812 = vrot.slane %v2810, 4
    %v2813 = vor.u32 %v2812, %v2808
    %v2814 = vrot.slane %v2813, 4
    %v2816 = vshrl.u32 %v2460, 16
    %v2818 = vrot.slane %v2816, 4
    %v2819 = vshll.u32 %v2460, 16
    %v2821 = vrot.slane %v2819, 5
    %v2822 = vor.u32 %v2818, %v2821
    %v2823 = vrot.slane %v2822, 4
    %v2825 = vshll.u32 %v2461, 16
    %v2827 = vrot.slane %v2825, 5
    %v2828 = vsel %vm2605, %v2823, %v2827
    %v2829 = vshrl.u32 %v2461, 16
    %v2831 = vrot.slane %v2829, 4
    %v2832 = vor.u32 %v2831, %v2827
    %v2833 = vrot.slane %v2832, 4
    %v2835 = vshrl.u32 %v2462, 16
    %v2837 = vrot.slane %v2835, 4
    %v2838 = vshll.u32 %v2462, 16
    %v2840 = vrot.slane %v2838, 5
    %v2841 = vor.u32 %v2837, %v2840
    %v2842 = vrot.slane %v2841, 4
    %v2844 = vshll.u32 %v2463, 16
    %v2846 = vrot.slane %v2844, 5
    %v2847 = vsel %vm2605, %v2842, %v2846
    %v2848 = vshrl.u32 %v2463, 16
    %v2850 = vrot.slane %v2848, 4
    %v2851 = vor.u32 %v2850, %v2846
    %v2852 = vrot.slane %v2851, 4
    %v2854 = vshrl.u32 %v2464, 16
    %v2856 = vrot.slane %v2854, 4
    %v2857 = vshll.u32 %v2464, 16
    %v2859 = vrot.slane %v2857, 5
    %v2860 = vor.u32 %v2856, %v2859
    %v2861 = vrot.slane %v2860, 4
    %v2863 = vshll.u32 %v2465, 16
    %v2865 = vrot.slane %v2863, 5
    %v2866 = vsel %vm2605, %v2861, %v2865
    %v2867 = vshrl.u32 %v2465, 16
    %v2869 = vrot.slane %v2867, 4
    %v2870 = vor.u32 %v2869, %v2865
    %v2871 = vrot.slane %v2870, 4
    %v2873 = vshrl.u32 %v2466, 16
    %v2875 = vrot.slane %v2873, 4
    %v2876 = vshll.u32 %v2466, 16
    %v2878 = vrot.slane %v2876, 5
    %v2879 = vor.u32 %v2875, %v2878
    %v2880 = vrot.slane %v2879, 4
    %v2882 = vshll.u32 %v2467, 16
    %v2884 = vrot.slane %v2882, 5
    %v2885 = vsel %vm2605, %v2880, %v2884
    %v2886 = vshrl.u32 %v2467, 16
    %v2888 = vrot.slane %v2886, 4
    %v2889 = vor.u32 %v2888, %v2884
    %v2890 = vrot.slane %v2889, 4
    %v2892 = vshrl.u32 %v2468, 16
    %v2894 = vrot.slane %v2892, 4
    %v2895 = vshll.u32 %v2468, 16
    %v2897 = vrot.slane %v2895, 5
    %v2898 = vor.u32 %v2894, %v2897
    %v2899 = vrot.slane %v2898, 4
    %v2901 = vshll.u32 %v2469, 16
    %v2903 = vrot.slane %v2901, 5
    %v2904 = vsel %vm2605, %v2899, %v2903
    %v2905 = vshrl.u32 %v2469, 16
    %v2907 = vrot.slane %v2905, 4
    %v2908 = vor.u32 %v2907, %v2903
    %v2909 = vrot.slane %v2908, 4
    %v2911 = vshrl.u32 %v2470, 16
    %v2913 = vrot.slane %v2911, 4
    %v2914 = vshll.u32 %v2470, 16
    %v2916 = vrot.slane %v2914, 5
    %v2917 = vor.u32 %v2913, %v2916
    %v2918 = vrot.slane %v2917, 4
    %v2920 = vshll.u32 %v2471, 16
    %v2922 = vrot.slane %v2920, 5
    %v2923 = vsel %vm2605, %v2918, %v2922
    %v2924 = vshrl.u32 %v2471, 16
    %v2926 = vrot.slane %v2924, 4
    %v2927 = vor.u32 %v2926, %v2922
    %v2928 = vrot.slane %v2927, 4
    %v2930 = vshrl.u32 %v2472, 16
    %v2932 = vrot.slane %v2930, 4
    %v2933 = vshll.u32 %v2472, 16
    %v2935 = vrot.slane %v2933, 5
    %v2936 = vor.u32 %v2932, %v2935
    %v2937 = vrot.slane %v2936, 4
    %v2939 = vshll.u32 %v2473, 16
    %v2941 = vrot.slane %v2939, 5
    %v2942 = vsel %vm2605, %v2937, %v2941
    %v2943 = vshrl.u32 %v2473, 16
    %v2945 = vrot.slane %v2943, 4
    %v2946 = vor.u32 %v2945, %v2941
    %v2947 = vrot.slane %v2946, 4
    %v2949 = vshrl.u32 %v2474, 16
    %v2951 = vrot.slane %v2949, 4
    %v2952 = vshll.u32 %v2474, 16
    %v2954 = vrot.slane %v2952, 5
    %v2955 = vor.u32 %v2951, %v2954
    %v2956 = vrot.slane %v2955, 4
    %v2958 = vshll.u32 %v2475, 16
    %v2960 = vrot.slane %v2958, 5
    %v2961 = vsel %vm2605, %v2956, %v2960
    %v2962 = vshrl.u32 %v2475, 16
    %v2964 = vrot.slane %v2962, 4
    %v2965 = vor.u32 %v2964, %v2960
    %v2966 = vrot.slane %v2965, 4
    %v2968 = vshrl.u32 %v2476, 16
    %v2970 = vrot.slane %v2968, 4
    %v2971 = vshll.u32 %v2476, 16
    %v2973 = vrot.slane %v2971, 5
    %v2974 = vor.u32 %v2970, %v2973
    %v2975 = vrot.slane %v2974, 4
    %v2977 = vshll.u32 %v2477, 16
    %v2979 = vrot.slane %v2977, 5
    %v2980 = vsel %vm2605, %v2975, %v2979
    %v2981 = vshrl.u32 %v2477, 16
    %v2983 = vrot.slane %v2981, 4
    %v2984 = vor.u32 %v2983, %v2979
    %v2985 = vrot.slane %v2984, 4
    %v2987 = vshrl.u32 %v2478, 16
    %v2989 = vrot.slane %v2987, 4
    %v2990 = vshll.u32 %v2478, 16
    %v2992 = vrot.slane %v2990, 5
    %v2993 = vor.u32 %v2989, %v2992
    %v2994 = vrot.slane %v2993, 4
    %v2996 = vshll.u32 %v2479, 16
    %v2998 = vrot.slane %v2996, 5
    %v2999 = vsel %vm2605, %v2994, %v2998
    %v3000 = vshrl.u32 %v2479, 16
    %v3002 = vrot.slane %v3000, 4
    %v3003 = vor.u32 %v3002, %v2998
    %v3004 = vrot.slane %v3003, 4
    %v3006 = vshrl.u32 %v2480, 16
    %v3008 = vrot.slane %v3006, 4
    %v3009 = vshll.u32 %v2480, 16
    %v3011 = vrot.slane %v3009, 5
    %v3012 = vor.u32 %v3008, %v3011
    %v3013 = vrot.slane %v3012, 4
    %v3015 = vshll.u32 %v2481, 16
    %v3017 = vrot.slane %v3015, 5
    %v3018 = vsel %vm2605, %v3013, %v3017
    %v3019 = vshrl.u32 %v2481, 16
    %v3021 = vrot.slane %v3019, 4
    %v3022 = vor.u32 %v3021, %v3017
    %v3023 = vrot.slane %v3022, 4
    %v3025 = vshrl.u32 %v2482, 16
    %v3027 = vrot.slane %v3025, 4
    %v3028 = vshll.u32 %v2482, 16
    %v3030 = vrot.slane %v3028, 5
    %v3031 = vor.u32 %v3027, %v3030
    %v3032 = vrot.slane %v3031, 4
    %v3034 = vshll.u32 %v2483, 16
    %v3036 = vrot.slane %v3034, 5
    %v3037 = vsel %vm2605, %v3032, %v3036
    %v3038 = vshrl.u32 %v2483, 16
    %v3040 = vrot.slane %v3038, 4
    %v3041 = vor.u32 %v3040, %v3036
    %v3042 = vrot.slane %v3041, 4
    %v3044 = vshrl.u32 %v2484, 16
    %v3046 = vrot.slane %v3044, 4
    %v3047 = vshll.u32 %v2484, 16
    %v3049 = vrot.slane %v3047, 5
    %v3050 = vor.u32 %v3046, %v3049
    %v3051 = vrot.slane %v3050, 4
    %v3053 = vshll.u32 %v2485, 16
    %v3055 = vrot.slane %v3053, 5
    %v3056 = vsel %vm2605, %v3051, %v3055
    %v3057 = vshrl.u32 %v2485, 16
    %v3059 = vrot.slane %v3057, 4
    %v3060 = vor.u32 %v3059, %v3055
    %v3061 = vrot.slane %v3060, 4
    %v3063 = vshrl.u32 %v2486, 16
    %v3065 = vrot.slane %v3063, 4
    %v3066 = vshll.u32 %v2486, 16
    %v3068 = vrot.slane %v3066, 5
    %v3069 = vor.u32 %v3065, %v3068
    %v3070 = vrot.slane %v3069, 4
    %v3072 = vshll.u32 %v2487, 16
    %v3074 = vrot.slane %v3072, 5
    %v3075 = vsel %vm2605, %v3070, %v3074
    %v3076 = vshrl.u32 %v2487, 16
    %v3078 = vrot.slane %v3076, 4
    %v3079 = vor.u32 %v3078, %v3074
    %v3080 = vrot.slane %v3079, 4
    %v3082 = vshrl.u32 %v2488, 16
    %v3084 = vrot.slane %v3082, 4
    %v3085 = vshll.u32 %v2488, 16
    %v3087 = vrot.slane %v3085, 5
    %v3088 = vor.u32 %v3084, %v3087
    %v3089 = vrot.slane %v3088, 4
    %v3091 = vshll.u32 %v2489, 16
    %v3093 = vrot.slane %v3091, 5
    %v3094 = vsel %vm2605, %v3089, %v3093
    %v3095 = vshrl.u32 %v2489, 16
    %v3097 = vrot.slane %v3095, 4
    %v3098 = vor.u32 %v3097, %v3093
    %v3099 = vrot.slane %v3098, 4
    %v3101 = vshrl.u32 %v2490, 16
    %v3103 = vrot.slane %v3101, 4
    %v3104 = vshll.u32 %v2490, 16
    %v3106 = vrot.slane %v3104, 5
    %v3107 = vor.u32 %v3103, %v3106
    %v3108 = vrot.slane %v3107, 4
    %v3110 = vshll.u32 %v2491, 16
    %v3112 = vrot.slane %v3110, 5
    %v3113 = vsel %vm2605, %v3108, %v3112
    %v3114 = vshrl.u32 %v2491, 16
    %v3116 = vrot.slane %v3114, 4
    %v3117 = vor.u32 %v3116, %v3112
    %v3118 = vrot.slane %v3117, 4
    %v3120 = vshrl.u32 %v2492, 16
    %v3122 = vrot.slane %v3120, 4
    %v3123 = vshll.u32 %v2492, 16
    %v3125 = vrot.slane %v3123, 5
    %v3126 = vor.u32 %v3122, %v3125
    %v3127 = vrot.slane %v3126, 4
    %v3129 = vshll.u32 %v2493, 16
    %v3131 = vrot.slane %v3129, 5
    %v3132 = vsel %vm2605, %v3127, %v3131
    %v3133 = vshrl.u32 %v2493, 16
    %v3135 = vrot.slane %v3133, 4
    %v3136 = vor.u32 %v3135, %v3131
    %v3137 = vrot.slane %v3136, 4
    %v3139 = vshrl.u32 %v2494, 16
    %v3141 = vrot.slane %v3139, 4
    %v3142 = vshll.u32 %v2494, 16
    %v3144 = vrot.slane %v3142, 5
    %v3145 = vor.u32 %v3141, %v3144
    %v3146 = vrot.slane %v3145, 4
    %v3148 = vshll.u32 %v2495, 16
    %v3150 = vrot.slane %v3148, 5
    %v3151 = vsel %vm2605, %v3146, %v3150
    %v3152 = vshrl.u32 %v2495, 16
    %v3154 = vrot.slane %v3152, 4
    %v3155 = vor.u32 %v3154, %v3150
    %v3156 = vrot.slane %v3155, 4
    %v3158 = vshrl.u32 %v2496, 16
    %v3160 = vrot.slane %v3158, 4
    %v3161 = vshll.u32 %v2496, 16
    %v3163 = vrot.slane %v3161, 5
    %v3164 = vor.u32 %v3160, %v3163
    %v3165 = vrot.slane %v3164, 4
    %v3167 = vshll.u32 %v2497, 16
    %v3169 = vrot.slane %v3167, 5
    %v3170 = vsel %vm2605, %v3165, %v3169
    %v3171 = vshrl.u32 %v2497, 16
    %v3173 = vrot.slane %v3171, 4
    %v3174 = vor.u32 %v3173, %v3169
    %v3175 = vrot.slane %v3174, 4
    %v3177 = vshrl.u32 %v2498, 16
    %v3179 = vrot.slane %v3177, 4
    %v3180 = vshll.u32 %v2498, 16
    %v3182 = vrot.slane %v3180, 5
    %v3183 = vor.u32 %v3179, %v3182
    %v3184 = vrot.slane %v3183, 4
    %v3186 = vshll.u32 %v2499, 16
    %v3188 = vrot.slane %v3186, 5
    %v3189 = vsel %vm2605, %v3184, %v3188
    %v3190 = vshrl.u32 %v2499, 16
    %v3192 = vrot.slane %v3190, 4
    %v3193 = vor.u32 %v3192, %v3188
    %v3194 = vrot.slane %v3193, 4
    %v3196 = vshrl.u32 %v2500, 16
    %v3198 = vrot.slane %v3196, 4
    %v3199 = vshll.u32 %v2500, 16
    %v3201 = vrot.slane %v3199, 5
    %v3202 = vor.u32 %v3198, %v3201
    %v3203 = vrot.slane %v3202, 4
    %v3205 = vshll.u32 %v2501, 16
    %v3207 = vrot.slane %v3205, 5
    %v3208 = vsel %vm2605, %v3203, %v3207
    %v3209 = vshrl.u32 %v2501, 16
    %v3211 = vrot.slane %v3209, 4
    %v3212 = vor.u32 %v3211, %v3207
    %v3213 = vrot.slane %v3212, 4
    %3214 = vrot.lane.b32.xlu0 %v2619, 32
    %v3215 = vpop.permute.xlu0 %3214
    %3216 = vrot.lane.b32.xlu0 %v2624, 32
    %v3217 = vpop.permute.xlu0 %3216
    %3218 = vrot.lane.b32.xlu0 %v2638, 32
    %v3219 = vpop.permute.xlu0 %3218
    %3220 = vrot.lane.b32.xlu0 %v2643, 32
    %v3221 = vpop.permute.xlu0 %3220
    %3222 = vrot.lane.b32.xlu0 %v2657, 32
    %v3223 = vpop.permute.xlu0 %3222
    %3224 = vrot.lane.b32.xlu0 %v2662, 32
    %v3225 = vpop.permute.xlu0 %3224
    %3226 = vrot.lane.b32.xlu0 %v2676, 32
    %v3227 = vpop.permute.xlu0 %3226
    %3228 = vrot.lane.b32.xlu0 %v2681, 32
    %v3229 = vpop.permute.xlu0 %3228
    %3230 = vrot.lane.b32.xlu0 %v2695, 32
    %v3231 = vpop.permute.xlu0 %3230
    %3232 = vrot.lane.b32.xlu0 %v2700, 32
    %v3233 = vpop.permute.xlu0 %3232
    %3234 = vrot.lane.b32.xlu0 %v2714, 32
    %v3235 = vpop.permute.xlu0 %3234
    %3236 = vrot.lane.b32.xlu0 %v2719, 32
    %v3237 = vpop.permute.xlu0 %3236
    %3238 = vrot.lane.b32.xlu0 %v2733, 32
    %v3239 = vpop.permute.xlu0 %3238
    %3240 = vrot.lane.b32.xlu0 %v2738, 32
    %v3241 = vpop.permute.xlu0 %3240
    %3242 = vrot.lane.b32.xlu0 %v2752, 32
    %v3243 = vpop.permute.xlu0 %3242
    %3244 = vrot.lane.b32.xlu0 %v2757, 32
    %v3245 = vpop.permute.xlu0 %3244
    %3246 = vrot.lane.b32.xlu0 %v2771, 32
    %v3247 = vpop.permute.xlu0 %3246
    %3248 = vrot.lane.b32.xlu0 %v2776, 32
    %v3249 = vpop.permute.xlu0 %3248
    %3250 = vrot.lane.b32.xlu0 %v2790, 32
    %v3251 = vpop.permute.xlu0 %3250
    %3252 = vrot.lane.b32.xlu0 %v2795, 32
    %v3253 = vpop.permute.xlu0 %3252
    %3254 = vrot.lane.b32.xlu0 %v2809, 32
    %v3255 = vpop.permute.xlu0 %3254
    %3256 = vrot.lane.b32.xlu0 %v2814, 32
    %v3257 = vpop.permute.xlu0 %3256
    %3258 = vrot.lane.b32.xlu0 %v2828, 32
    %v3259 = vpop.permute.xlu0 %3258
    %3260 = vrot.lane.b32.xlu0 %v2833, 32
    %v3261 = vpop.permute.xlu0 %3260
    %3262 = vrot.lane.b32.xlu0 %v2847, 32
    %v3263 = vpop.permute.xlu0 %3262
    %3264 = vrot.lane.b32.xlu0 %v2852, 32
    %v3265 = vpop.permute.xlu0 %3264
    %3266 = vrot.lane.b32.xlu0 %v2866, 32
    %v3267 = vpop.permute.xlu0 %3266
    %3268 = vrot.lane.b32.xlu0 %v2871, 32
    %v3269 = vpop.permute.xlu0 %3268
    %3270 = vrot.lane.b32.xlu0 %v2885, 32
    %v3271 = vpop.permute.xlu0 %3270
    %3272 = vrot.lane.b32.xlu0 %v2890, 32
    %v3273 = vpop.permute.xlu0 %3272
    %3274 = vrot.lane.b32.xlu0 %v2904, 32
    %v3275 = vpop.permute.xlu0 %3274
    %3276 = vrot.lane.b32.xlu0 %v2909, 32
    %v3277 = vpop.permute.xlu0 %3276
    %3278 = vrot.lane.b32.xlu0 %v2923, 32
    %v3279 = vpop.permute.xlu0 %3278
    %3280 = vrot.lane.b32.xlu0 %v2928, 32
    %v3281 = vpop.permute.xlu0 %3280
    %3282 = vrot.lane.b32.xlu0 %v2942, 32
    %v3283 = vpop.permute.xlu0 %3282
    %3284 = vrot.lane.b32.xlu0 %v2947, 32
    %v3285 = vpop.permute.xlu0 %3284
    %3286 = vrot.lane.b32.xlu0 %v2961, 32
    %v3287 = vpop.permute.xlu0 %3286
    %3288 = vrot.lane.b32.xlu0 %v2966, 32
    %v3289 = vpop.permute.xlu0 %3288
    %3290 = vrot.lane.b32.xlu0 %v2980, 32
    %v3291 = vpop.permute.xlu0 %3290
    %3292 = vrot.lane.b32.xlu0 %v2985, 32
    %v3293 = vpop.permute.xlu0 %3292
    %3294 = vrot.lane.b32.xlu0 %v2999, 32
    %v3295 = vpop.permute.xlu0 %3294
    %3296 = vrot.lane.b32.xlu0 %v3004, 32
    %v3297 = vpop.permute.xlu0 %3296
    %3298 = vrot.lane.b32.xlu0 %v3018, 32
    %v3299 = vpop.permute.xlu0 %3298
    %3300 = vrot.lane.b32.xlu0 %v3023, 32
    %v3301 = vpop.permute.xlu0 %3300
    %3302 = vrot.lane.b32.xlu0 %v3037, 32
    %v3303 = vpop.permute.xlu0 %3302
    %3304 = vrot.lane.b32.xlu0 %v3042, 32
    %v3305 = vpop.permute.xlu0 %3304
    %3306 = vrot.lane.b32.xlu0 %v3056, 32
    %v3307 = vpop.permute.xlu0 %3306
    %3308 = vrot.lane.b32.xlu0 %v3061, 32
    %v3309 = vpop.permute.xlu0 %3308
    %3310 = vrot.lane.b32.xlu0 %v3075, 32
    %v3311 = vpop.permute.xlu0 %3310
    %3312 = vrot.lane.b32.xlu0 %v3080, 32
    %v3313 = vpop.permute.xlu0 %3312
    %3314 = vrot.lane.b32.xlu0 %v3094, 32
    %v3315 = vpop.permute.xlu0 %3314
    %3316 = vrot.lane.b32.xlu0 %v3099, 32
    %v3317 = vpop.permute.xlu0 %3316
    %3318 = vrot.lane.b32.xlu0 %v3113, 32
    %v3319 = vpop.permute.xlu0 %3318
    %3320 = vrot.lane.b32.xlu0 %v3118, 32
    %v3321 = vpop.permute.xlu0 %3320
    %3322 = vrot.lane.b32.xlu0 %v3132, 32
    %v3323 = vpop.permute.xlu0 %3322
    %3324 = vrot.lane.b32.xlu0 %v3137, 32
    %v3325 = vpop.permute.xlu0 %3324
    %3326 = vrot.lane.b32.xlu0 %v3151, 32
    %v3327 = vpop.permute.xlu0 %3326
    %3328 = vrot.lane.b32.xlu0 %v3156, 32
    %v3329 = vpop.permute.xlu0 %3328
    %3330 = vrot.lane.b32.xlu0 %v3170, 32
    %v3331 = vpop.permute.xlu0 %3330
    %3332 = vrot.lane.b32.xlu0 %v3175, 32
    %v3333 = vpop.permute.xlu0 %3332
    %3334 = vrot.lane.b32.xlu0 %v3189, 32
    %v3335 = vpop.permute.xlu0 %3334
    %3336 = vrot.lane.b32.xlu0 %v3194, 32
    %v3337 = vpop.permute.xlu0 %3336
    %3338 = vrot.lane.b32.xlu0 %v3208, 32
    %v3339 = vpop.permute.xlu0 %3338
    %3340 = vrot.lane.b32.xlu0 %v3213, 32
    %v3341 = vpop.permute.xlu0 %3340
    %vm3406 = vcmask 519424
    %3407 = vst.msk [vmem:[#allocation2] sm:$0xf] %vm3406, %v3215
    %vm3408 = vcmask 517376
    %3409 = vst.msk [vmem:[#allocation2 + $0x8] sm:$0x3] %vm3408, %v3217
    %3410 = vst.msk [vmem:[#allocation2 + $0x10] sm:$0xf] %vm3406, %v3219
    %3411 = vst.msk [vmem:[#allocation2 + $0x18] sm:$0x3] %vm3408, %v3221
    %3412 = vst.msk [vmem:[#allocation2 + $0x20] sm:$0xf] %vm3406, %v3223
    %3413 = vst.msk [vmem:[#allocation2 + $0x28] sm:$0x3] %vm3408, %v3225
    %3414 = vst.msk [vmem:[#allocation2 + $0x30] sm:$0xf] %vm3406, %v3227
    %3415 = vst.msk [vmem:[#allocation2 + $0x38] sm:$0x3] %vm3408, %v3229
    %3416 = vst.msk [vmem:[#allocation2 + $0x40] sm:$0xf] %vm3406, %v3231
    %3417 = vst.msk [vmem:[#allocation2 + $0x48] sm:$0x3] %vm3408, %v3233
    %3418 = vst.msk [vmem:[#allocation2 + $0x50] sm:$0xf] %vm3406, %v3235
    %3419 = vst.msk [vmem:[#allocation2 + $0x58] sm:$0x3] %vm3408, %v3237
    %3420 = vst.msk [vmem:[#allocation2 + $0x60] sm:$0xf] %vm3406, %v3239
    %3421 = vst.msk [vmem:[#allocation2 + $0x68] sm:$0x3] %vm3408, %v3241
    %3422 = vst.msk [vmem:[#allocation2 + $0x70] sm:$0xf] %vm3406, %v3243
    %3423 = vst.msk [vmem:[#allocation2 + $0x78] sm:$0x3] %vm3408, %v3245
    %3424 = vst.msk [vmem:[#allocation2 + $0x80] sm:$0xf] %vm3406, %v3247
    %3425 = vst.msk [vmem:[#allocation2 + $0x88] sm:$0x3] %vm3408, %v3249
    %3426 = vst.msk [vmem:[#allocation2 + $0x90] sm:$0xf] %vm3406, %v3251
    %3427 = vst.msk [vmem:[#allocation2 + $0x98] sm:$0x3] %vm3408, %v3253
    %3428 = vst.msk [vmem:[#allocation2 + $0xa0] sm:$0xf] %vm3406, %v3255
    %3429 = vst.msk [vmem:[#allocation2 + $0xa8] sm:$0x3] %vm3408, %v3257
    %3430 = vst.msk [vmem:[#allocation2 + $0xb0] sm:$0xf] %vm3406, %v3259
    %3431 = vst.msk [vmem:[#allocation2 + $0xb8] sm:$0x3] %vm3408, %v3261
    %3432 = vst.msk [vmem:[#allocation2 + $0xc0] sm:$0xf] %vm3406, %v3263
    %3433 = vst.msk [vmem:[#allocation2 + $0xc8] sm:$0x3] %vm3408, %v3265
    %3434 = vst.msk [vmem:[#allocation2 + $0xd0] sm:$0xf] %vm3406, %v3267
    %3435 = vst.msk [vmem:[#allocation2 + $0xd8] sm:$0x3] %vm3408, %v3269
    %3436 = vst.msk [vmem:[#allocation2 + $0xe0] sm:$0xf] %vm3406, %v3271
    %3437 = vst.msk [vmem:[#allocation2 + $0xe8] sm:$0x3] %vm3408, %v3273
    %3438 = vst.msk [vmem:[#allocation2 + $0xf0] sm:$0xf] %vm3406, %v3275
    %3439 = vst.msk [vmem:[#allocation2 + $0xf8] sm:$0x3] %vm3408, %v3277
    %3440 = vst.msk [vmem:[#allocation2 + $0x100] sm:$0xf] %vm3406, %v3279
    %3441 = vst.msk [vmem:[#allocation2 + $0x108] sm:$0x3] %vm3408, %v3281
    %3442 = vst.msk [vmem:[#allocation2 + $0x110] sm:$0xf] %vm3406, %v3283
    %3443 = vst.msk [vmem:[#allocation2 + $0x118] sm:$0x3] %vm3408, %v3285
    %3444 = vst.msk [vmem:[#allocation2 + $0x120] sm:$0xf] %vm3406, %v3287
    %3445 = vst.msk [vmem:[#allocation2 + $0x128] sm:$0x3] %vm3408, %v3289
    %3446 = vst.msk [vmem:[#allocation2 + $0x130] sm:$0xf] %vm3406, %v3291
    %3447 = vst.msk [vmem:[#allocation2 + $0x138] sm:$0x3] %vm3408, %v3293
    %3448 = vst.msk [vmem:[#allocation2 + $0x140] sm:$0xf] %vm3406, %v3295
    %3449 = vst.msk [vmem:[#allocation2 + $0x148] sm:$0x3] %vm3408, %v3297
    %3450 = vst.msk [vmem:[#allocation2 + $0x150] sm:$0xf] %vm3406, %v3299
    %3451 = vst.msk [vmem:[#allocation2 + $0x158] sm:$0x3] %vm3408, %v3301
    %3452 = vst.msk [vmem:[#allocation2 + $0x160] sm:$0xf] %vm3406, %v3303
    %3453 = vst.msk [vmem:[#allocation2 + $0x168] sm:$0x3] %vm3408, %v3305
    %3454 = vst.msk [vmem:[#allocation2 + $0x170] sm:$0xf] %vm3406, %v3307
    %3455 = vst.msk [vmem:[#allocation2 + $0x178] sm:$0x3] %vm3408, %v3309
    %3456 = vst.msk [vmem:[#allocation2 + $0x180] sm:$0xf] %vm3406, %v3311
    %3457 = vst.msk [vmem:[#allocation2 + $0x188] sm:$0x3] %vm3408, %v3313
    %3458 = vst.msk [vmem:[#allocation2 + $0x190] sm:$0xf] %vm3406, %v3315
    %3459 = vst.msk [vmem:[#allocation2 + $0x198] sm:$0x3] %vm3408, %v3317
    %3460 = vst.msk [vmem:[#allocation2 + $0x1a0] sm:$0xf] %vm3406, %v3319
    %3461 = vst.msk [vmem:[#allocation2 + $0x1a8] sm:$0x3] %vm3408, %v3321
    %3462 = vst.msk [vmem:[#allocation2 + $0x1b0] sm:$0xf] %vm3406, %v3323
    %3463 = vst.msk [vmem:[#allocation2 + $0x1b8] sm:$0x3] %vm3408, %v3325
    %3464 = vst.msk [vmem:[#allocation2 + $0x1c0] sm:$0xf] %vm3406, %v3327
    %3465 = vst.msk [vmem:[#allocation2 + $0x1c8] sm:$0x3] %vm3408, %v3329
    %3466 = vst.msk [vmem:[#allocation2 + $0x1d0] sm:$0xf] %vm3406, %v3331
    %3467 = vst.msk [vmem:[#allocation2 + $0x1d8] sm:$0x3] %vm3408, %v3333
    %3468 = vst.msk [vmem:[#allocation2 + $0x1e0] sm:$0xf] %vm3406, %v3335
    %3469 = vst.msk [vmem:[#allocation2 + $0x1e8] sm:$0x3] %vm3408, %v3337
    %3470 = vst.msk [vmem:[#allocation2 + $0x1f0] sm:$0xf] %vm3406, %v3339
    %3471 = vst.msk [vmem:[#allocation2 + $0x1f8] sm:$0x3] %vm3408, %v3341
    %vm3536 = vcmask 1042432
    %vm3537 = vcmask 1046532
    %vm3538 = vmor %vm3536, %vm3537
    %v3539 = vrot.slane %v2438, 5
    %v3540 = vrot.slane %v3539, 4
    %v3541 = vrot.slane %v2439, 5
    %v3542 = vsel %vm3538, %v3540, %v3541
    %v3543 = vrot.slane %v3541, 4
    %v3544 = vrot.slane %v2440, 5
    %v3545 = vrot.slane %v3544, 4
    %v3546 = vrot.slane %v2441, 5
    %v3547 = vsel %vm3538, %v3545, %v3546
    %v3548 = vrot.slane %v3546, 4
    %v3549 = vrot.slane %v2442, 5
    %v3550 = vrot.slane %v3549, 4
    %v3551 = vrot.slane %v2443, 5
    %v3552 = vsel %vm3538, %v3550, %v3551
    %v3553 = vrot.slane %v3551, 4
    %v3554 = vrot.slane %v2444, 5
    %v3555 = vrot.slane %v3554, 4
    %v3556 = vrot.slane %v2445, 5
    %v3557 = vsel %vm3538, %v3555, %v3556
    %v3558 = vrot.slane %v3556, 4
    %v3559 = vrot.slane %v2446, 5
    %v3560 = vrot.slane %v3559, 4
    %v3561 = vrot.slane %v2447, 5
    %v3562 = vsel %vm3538, %v3560, %v3561
    %v3563 = vrot.slane %v3561, 4
    %v3564 = vrot.slane %v2448, 5
    %v3565 = vrot.slane %v3564, 4
    %v3566 = vrot.slane %v2449, 5
    %v3567 = vsel %vm3538, %v3565, %v3566
    %v3568 = vrot.slane %v3566, 4
    %v3569 = vrot.slane %v2450, 5
    %v3570 = vrot.slane %v3569, 4
    %v3571 = vrot.slane %v2451, 5
    %v3572 = vsel %vm3538, %v3570, %v3571
    %v3573 = vrot.slane %v3571, 4
    %v3574 = vrot.slane %v2452, 5
    %v3575 = vrot.slane %v3574, 4
    %v3576 = vrot.slane %v2453, 5
    %v3577 = vsel %vm3538, %v3575, %v3576
    %v3578 = vrot.slane %v3576, 4
    %v3579 = vrot.slane %v2454, 5
    %v3580 = vrot.slane %v3579, 4
    %v3581 = vrot.slane %v2455, 5
    %v3582 = vsel %vm3538, %v3580, %v3581
    %v3583 = vrot.slane %v3581, 4
    %v3584 = vrot.slane %v2456, 5
    %v3585 = vrot.slane %v3584, 4
    %v3586 = vrot.slane %v2457, 5
    %v3587 = vsel %vm3538, %v3585, %v3586
    %v3588 = vrot.slane %v3586, 4
    %v3589 = vrot.slane %v2458, 5
    %v3590 = vrot.slane %v3589, 4
    %v3591 = vrot.slane %v2459, 5
    %v3592 = vsel %vm3538, %v3590, %v3591
    %v3593 = vrot.slane %v3591, 4
    %v3594 = vrot.slane %v2460, 5
    %v3595 = vrot.slane %v3594, 4
    %v3596 = vrot.slane %v2461, 5
    %v3597 = vsel %vm3538, %v3595, %v3596
    %v3598 = vrot.slane %v3596, 4
    %v3599 = vrot.slane %v2462, 5
    %v3600 = vrot.slane %v3599, 4
    %v3601 = vrot.slane %v2463, 5
    %v3602 = vsel %vm3538, %v3600, %v3601
    %v3603 = vrot.slane %v3601, 4
    %v3604 = vrot.slane %v2464, 5
    %v3605 = vrot.slane %v3604, 4
    %v3606 = vrot.slane %v2465, 5
    %v3607 = vsel %vm3538, %v3605, %v3606
    %v3608 = vrot.slane %v3606, 4
    %v3609 = vrot.slane %v2466, 5
    %v3610 = vrot.slane %v3609, 4
    %v3611 = vrot.slane %v2467, 5
    %v3612 = vsel %vm3538, %v3610, %v3611
    %v3613 = vrot.slane %v3611, 4
    %v3614 = vrot.slane %v2468, 5
    %v3615 = vrot.slane %v3614, 4
    %v3616 = vrot.slane %v2469, 5
    %v3617 = vsel %vm3538, %v3615, %v3616
    %v3618 = vrot.slane %v3616, 4
    %v3619 = vrot.slane %v2470, 5
    %v3620 = vrot.slane %v3619, 4
    %v3621 = vrot.slane %v2471, 5
    %v3622 = vsel %vm3538, %v3620, %v3621
    %v3623 = vrot.slane %v3621, 4
    %v3624 = vrot.slane %v2472, 5
    %v3625 = vrot.slane %v3624, 4
    %v3626 = vrot.slane %v2473, 5
    %v3627 = vsel %vm3538, %v3625, %v3626
    %v3628 = vrot.slane %v3626, 4
    %v3629 = vrot.slane %v2474, 5
    %v3630 = vrot.slane %v3629, 4
    %v3631 = vrot.slane %v2475, 5
    %v3632 = vsel %vm3538, %v3630, %v3631
    %v3633 = vrot.slane %v3631, 4
    %v3634 = vrot.slane %v2476, 5
    %v3635 = vrot.slane %v3634, 4
    %v3636 = vrot.slane %v2477, 5
    %v3637 = vsel %vm3538, %v3635, %v3636
    %v3638 = vrot.slane %v3636, 4
    %v3639 = vrot.slane %v2478, 5
    %v3640 = vrot.slane %v3639, 4
    %v3641 = vrot.slane %v2479, 5
    %v3642 = vsel %vm3538, %v3640, %v3641
    %v3643 = vrot.slane %v3641, 4
    %v3644 = vrot.slane %v2480, 5
    %v3645 = vrot.slane %v3644, 4
    %v3646 = vrot.slane %v2481, 5
    %v3647 = vsel %vm3538, %v3645, %v3646
    %v3648 = vrot.slane %v3646, 4
    %v3649 = vrot.slane %v2482, 5
    %v3650 = vrot.slane %v3649, 4
    %v3651 = vrot.slane %v2483, 5
    %v3652 = vsel %vm3538, %v3650, %v3651
    %v3653 = vrot.slane %v3651, 4
    %v3654 = vrot.slane %v2484, 5
    %v3655 = vrot.slane %v3654, 4
    %v3656 = vrot.slane %v2485, 5
    %v3657 = vsel %vm3538, %v3655, %v3656
    %v3658 = vrot.slane %v3656, 4
    %v3659 = vrot.slane %v2486, 5
    %v3660 = vrot.slane %v3659, 4
    %v3661 = vrot.slane %v2487, 5
    %v3662 = vsel %vm3538, %v3660, %v3661
    %v3663 = vrot.slane %v3661, 4
    %v3664 = vrot.slane %v2488, 5
    %v3665 = vrot.slane %v3664, 4
    %v3666 = vrot.slane %v2489, 5
    %v3667 = vsel %vm3538, %v3665, %v3666
    %v3668 = vrot.slane %v3666, 4
    %v3669 = vrot.slane %v2490, 5
    %v3670 = vrot.slane %v3669, 4
    %v3671 = vrot.slane %v2491, 5
    %v3672 = vsel %vm3538, %v3670, %v3671
    %v3673 = vrot.slane %v3671, 4
    %v3674 = vrot.slane %v2492, 5
    %v3675 = vrot.slane %v3674, 4
    %v3676 = vrot.slane %v2493, 5
    %v3677 = vsel %vm3538, %v3675, %v3676
    %v3678 = vrot.slane %v3676, 4
    %v3679 = vrot.slane %v2494, 5
    %v3680 = vrot.slane %v3679, 4
    %v3681 = vrot.slane %v2495, 5
    %v3682 = vsel %vm3538, %v3680, %v3681
    %v3683 = vrot.slane %v3681, 4
    %v3684 = vrot.slane %v2496, 5
    %v3685 = vrot.slane %v3684, 4
    %v3686 = vrot.slane %v2497, 5
    %v3687 = vsel %vm3538, %v3685, %v3686
    %v3688 = vrot.slane %v3686, 4
    %v3689 = vrot.slane %v2498, 5
    %v3690 = vrot.slane %v3689, 4
    %v3691 = vrot.slane %v2499, 5
    %v3692 = vsel %vm3538, %v3690, %v3691
    %v3693 = vrot.slane %v3691, 4
    %v3694 = vrot.slane %v2500, 5
    %v3695 = vrot.slane %v3694, 4
    %v3696 = vrot.slane %v2501, 5
    %v3697 = vsel %vm3538, %v3695, %v3696
    %v3698 = vrot.slane %v3696, 4
    %3699 = vrot.lane.b32.xlu0 %v3542, 64
    %v3700 = vpop.permute.xlu0 %3699
    %3701 = vrot.lane.b32.xlu0 %v3543, 64
    %v3702 = vpop.permute.xlu0 %3701
    %3703 = vrot.lane.b32.xlu0 %v3547, 64
    %v3704 = vpop.permute.xlu0 %3703
    %3705 = vrot.lane.b32.xlu0 %v3548, 64
    %v3706 = vpop.permute.xlu0 %3705
    %3707 = vrot.lane.b32.xlu0 %v3552, 64
    %v3708 = vpop.permute.xlu0 %3707
    %3709 = vrot.lane.b32.xlu0 %v3553, 64
    %v3710 = vpop.permute.xlu0 %3709
    %3711 = vrot.lane.b32.xlu0 %v3557, 64
    %v3712 = vpop.permute.xlu0 %3711
    %3713 = vrot.lane.b32.xlu0 %v3558, 64
    %v3714 = vpop.permute.xlu0 %3713
    %3715 = vrot.lane.b32.xlu0 %v3562, 64
    %v3716 = vpop.permute.xlu0 %3715
    %3717 = vrot.lane.b32.xlu0 %v3563, 64
    %v3718 = vpop.permute.xlu0 %3717
    %3719 = vrot.lane.b32.xlu0 %v3567, 64
    %v3720 = vpop.permute.xlu0 %3719
    %3721 = vrot.lane.b32.xlu0 %v3568, 64
    %v3722 = vpop.permute.xlu0 %3721
    %3723 = vrot.lane.b32.xlu0 %v3572, 64
    %v3724 = vpop.permute.xlu0 %3723
    %3725 = vrot.lane.b32.xlu0 %v3573, 64
    %v3726 = vpop.permute.xlu0 %3725
    %3727 = vrot.lane.b32.xlu0 %v3577, 64
    %v3728 = vpop.permute.xlu0 %3727
    %3729 = vrot.lane.b32.xlu0 %v3578, 64
    %v3730 = vpop.permute.xlu0 %3729
    %3731 = vrot.lane.b32.xlu0 %v3582, 64
    %v3732 = vpop.permute.xlu0 %3731
    %3733 = vrot.lane.b32.xlu0 %v3583, 64
    %v3734 = vpop.permute.xlu0 %3733
    %3735 = vrot.lane.b32.xlu0 %v3587, 64
    %v3736 = vpop.permute.xlu0 %3735
    %3737 = vrot.lane.b32.xlu0 %v3588, 64
    %v3738 = vpop.permute.xlu0 %3737
    %3739 = vrot.lane.b32.xlu0 %v3592, 64
    %v3740 = vpop.permute.xlu0 %3739
    %3741 = vrot.lane.b32.xlu0 %v3593, 64
    %v3742 = vpop.permute.xlu0 %3741
    %3743 = vrot.lane.b32.xlu0 %v3597, 64
    %v3744 = vpop.permute.xlu0 %3743
    %3745 = vrot.lane.b32.xlu0 %v3598, 64
    %v3746 = vpop.permute.xlu0 %3745
    %3747 = vrot.lane.b32.xlu0 %v3602, 64
    %v3748 = vpop.permute.xlu0 %3747
    %3749 = vrot.lane.b32.xlu0 %v3603, 64
    %v3750 = vpop.permute.xlu0 %3749
    %3751 = vrot.lane.b32.xlu0 %v3607, 64
    %v3752 = vpop.permute.xlu0 %3751
    %3753 = vrot.lane.b32.xlu0 %v3608, 64
    %v3754 = vpop.permute.xlu0 %3753
    %3755 = vrot.lane.b32.xlu0 %v3612, 64
    %v3756 = vpop.permute.xlu0 %3755
    %3757 = vrot.lane.b32.xlu0 %v3613, 64
    %v3758 = vpop.permute.xlu0 %3757
    %3759 = vrot.lane.b32.xlu0 %v3617, 64
    %v3760 = vpop.permute.xlu0 %3759
    %3761 = vrot.lane.b32.xlu0 %v3618, 64
    %v3762 = vpop.permute.xlu0 %3761
    %3763 = vrot.lane.b32.xlu0 %v3622, 64
    %v3764 = vpop.permute.xlu0 %3763
    %3765 = vrot.lane.b32.xlu0 %v3623, 64
    %v3766 = vpop.permute.xlu0 %3765
    %3767 = vrot.lane.b32.xlu0 %v3627, 64
    %v3768 = vpop.permute.xlu0 %3767
    %3769 = vrot.lane.b32.xlu0 %v3628, 64
    %v3770 = vpop.permute.xlu0 %3769
    %3771 = vrot.lane.b32.xlu0 %v3632, 64
    %v3772 = vpop.permute.xlu0 %3771
    %3773 = vrot.lane.b32.xlu0 %v3633, 64
    %v3774 = vpop.permute.xlu0 %3773
    %3775 = vrot.lane.b32.xlu0 %v3637, 64
    %v3776 = vpop.permute.xlu0 %3775
    %3777 = vrot.lane.b32.xlu0 %v3638, 64
    %v3778 = vpop.permute.xlu0 %3777
    %3779 = vrot.lane.b32.xlu0 %v3642, 64
    %v3780 = vpop.permute.xlu0 %3779
    %3781 = vrot.lane.b32.xlu0 %v3643, 64
    %v3782 = vpop.permute.xlu0 %3781
    %3783 = vrot.lane.b32.xlu0 %v3647, 64
    %v3784 = vpop.permute.xlu0 %3783
    %3785 = vrot.lane.b32.xlu0 %v3648, 64
    %v3786 = vpop.permute.xlu0 %3785
    %3787 = vrot.lane.b32.xlu0 %v3652, 64
    %v3788 = vpop.permute.xlu0 %3787
    %3789 = vrot.lane.b32.xlu0 %v3653, 64
    %v3790 = vpop.permute.xlu0 %3789
    %3791 = vrot.lane.b32.xlu0 %v3657, 64
    %v3792 = vpop.permute.xlu0 %3791
    %3793 = vrot.lane.b32.xlu0 %v3658, 64
    %v3794 = vpop.permute.xlu0 %3793
    %3795 = vrot.lane.b32.xlu0 %v3662, 64
    %v3796 = vpop.permute.xlu0 %3795
    %3797 = vrot.lane.b32.xlu0 %v3663, 64
    %v3798 = vpop.permute.xlu0 %3797
    %3799 = vrot.lane.b32.xlu0 %v3667, 64
    %v3800 = vpop.permute.xlu0 %3799
    %3801 = vrot.lane.b32.xlu0 %v3668, 64
    %v3802 = vpop.permute.xlu0 %3801
    %3803 = vrot.lane.b32.xlu0 %v3672, 64
    %v3804 = vpop.permute.xlu0 %3803
    %3805 = vrot.lane.b32.xlu0 %v3673, 64
    %v3806 = vpop.permute.xlu0 %3805
    %3807 = vrot.lane.b32.xlu0 %v3677, 64
    %v3808 = vpop.permute.xlu0 %3807
    %3809 = vrot.lane.b32.xlu0 %v3678, 64
    %v3810 = vpop.permute.xlu0 %3809
    %3811 = vrot.lane.b32.xlu0 %v3682, 64
    %v3812 = vpop.permute.xlu0 %3811
    %3813 = vrot.lane.b32.xlu0 %v3683, 64
    %v3814 = vpop.permute.xlu0 %3813
    %3815 = vrot.lane.b32.xlu0 %v3687, 64
    %v3816 = vpop.permute.xlu0 %3815
    %3817 = vrot.lane.b32.xlu0 %v3688, 64
    %v3818 = vpop.permute.xlu0 %3817
    %3819 = vrot.lane.b32.xlu0 %v3692, 64
    %v3820 = vpop.permute.xlu0 %3819
    %3821 = vrot.lane.b32.xlu0 %v3693, 64
    %v3822 = vpop.permute.xlu0 %3821
    %3823 = vrot.lane.b32.xlu0 %v3697, 64
    %v3824 = vpop.permute.xlu0 %3823
    %3825 = vrot.lane.b32.xlu0 %v3698, 64
    %v3826 = vpop.permute.xlu0 %3825
    %vm3891 = vcmask 781824
    %3892 = vst.msk [vmem:[#allocation2] sm:$0xf] %vm3891, %v3700
    %vm3893 = vcmask 779776
    %3894 = vst.msk [vmem:[#allocation2 + $0x8] sm:$0x3] %vm3893, %v3702
    %3895 = vst.msk [vmem:[#allocation2 + $0x10] sm:$0xf] %vm3891, %v3704
    %3896 = vst.msk [vmem:[#allocation2 + $0x18] sm:$0x3] %vm3893, %v3706
    %3897 = vst.msk [vmem:[#allocation2 + $0x20] sm:$0xf] %vm3891, %v3708
    %3898 = vst.msk [vmem:[#allocation2 + $0x28] sm:$0x3] %vm3893, %v3710
    %3899 = vst.msk [vmem:[#allocation2 + $0x30] sm:$0xf] %vm3891, %v3712
    %3900 = vst.msk [vmem:[#allocation2 + $0x38] sm:$0x3] %vm3893, %v3714
    %3901 = vst.msk [vmem:[#allocation2 + $0x40] sm:$0xf] %vm3891, %v3716
    %3902 = vst.msk [vmem:[#allocation2 + $0x48] sm:$0x3] %vm3893, %v3718
    %3903 = vst.msk [vmem:[#allocation2 + $0x50] sm:$0xf] %vm3891, %v3720
    %3904 = vst.msk [vmem:[#allocation2 + $0x58] sm:$0x3] %vm3893, %v3722
    %3905 = vst.msk [vmem:[#allocation2 + $0x60] sm:$0xf] %vm3891, %v3724
    %3906 = vst.msk [vmem:[#allocation2 + $0x68] sm:$0x3] %vm3893, %v3726
    %3907 = vst.msk [vmem:[#allocation2 + $0x70] sm:$0xf] %vm3891, %v3728
    %3908 = vst.msk [vmem:[#allocation2 + $0x78] sm:$0x3] %vm3893, %v3730
    %3909 = vst.msk [vmem:[#allocation2 + $0x80] sm:$0xf] %vm3891, %v3732
    %3910 = vst.msk [vmem:[#allocation2 + $0x88] sm:$0x3] %vm3893, %v3734
    %3911 = vst.msk [vmem:[#allocation2 + $0x90] sm:$0xf] %vm3891, %v3736
    %3912 = vst.msk [vmem:[#allocation2 + $0x98] sm:$0x3] %vm3893, %v3738
    %3913 = vst.msk [vmem:[#allocation2 + $0xa0] sm:$0xf] %vm3891, %v3740
    %3914 = vst.msk [vmem:[#allocation2 + $0xa8] sm:$0x3] %vm3893, %v3742
    %3915 = vst.msk [vmem:[#allocation2 + $0xb0] sm:$0xf] %vm3891, %v3744
    %3916 = vst.msk [vmem:[#allocation2 + $0xb8] sm:$0x3] %vm3893, %v3746
    %3917 = vst.msk [vmem:[#allocation2 + $0xc0] sm:$0xf] %vm3891, %v3748
    %3918 = vst.msk [vmem:[#allocation2 + $0xc8] sm:$0x3] %vm3893, %v3750
    %3919 = vst.msk [vmem:[#allocation2 + $0xd0] sm:$0xf] %vm3891, %v3752
    %3920 = vst.msk [vmem:[#allocation2 + $0xd8] sm:$0x3] %vm3893, %v3754
    %3921 = vst.msk [vmem:[#allocation2 + $0xe0] sm:$0xf] %vm3891, %v3756
    %3922 = vst.msk [vmem:[#allocation2 + $0xe8] sm:$0x3] %vm3893, %v3758
    %3923 = vst.msk [vmem:[#allocation2 + $0xf0] sm:$0xf] %vm3891, %v3760
    %3924 = vst.msk [vmem:[#allocation2 + $0xf8] sm:$0x3] %vm3893, %v3762
    %3925 = vst.msk [vmem:[#allocation2 + $0x100] sm:$0xf] %vm3891, %v3764
    %3926 = vst.msk [vmem:[#allocation2 + $0x108] sm:$0x3] %vm3893, %v3766
    %3927 = vst.msk [vmem:[#allocation2 + $0x110] sm:$0xf] %vm3891, %v3768
    %3928 = vst.msk [vmem:[#allocation2 + $0x118] sm:$0x3] %vm3893, %v3770
    %3929 = vst.msk [vmem:[#allocation2 + $0x120] sm:$0xf] %vm3891, %v3772
    %3930 = vst.msk [vmem:[#allocation2 + $0x128] sm:$0x3] %vm3893, %v3774
    %3931 = vst.msk [vmem:[#allocation2 + $0x130] sm:$0xf] %vm3891, %v3776
    %3932 = vst.msk [vmem:[#allocation2 + $0x138] sm:$0x3] %vm3893, %v3778
    %3933 = vst.msk [vmem:[#allocation2 + $0x140] sm:$0xf] %vm3891, %v3780
    %3934 = vst.msk [vmem:[#allocation2 + $0x148] sm:$0x3] %vm3893, %v3782
    %3935 = vst.msk [vmem:[#allocation2 + $0x150] sm:$0xf] %vm3891, %v3784
    %3936 = vst.msk [vmem:[#allocation2 + $0x158] sm:$0x3] %vm3893, %v3786
    %3937 = vst.msk [vmem:[#allocation2 + $0x160] sm:$0xf] %vm3891, %v3788
    %3938 = vst.msk [vmem:[#allocation2 + $0x168] sm:$0x3] %vm3893, %v3790
    %3939 = vst.msk [vmem:[#allocation2 + $0x170] sm:$0xf] %vm3891, %v3792
    %3940 = vst.msk [vmem:[#allocation2 + $0x178] sm:$0x3] %vm3893, %v3794
    %3941 = vst.msk [vmem:[#allocation2 + $0x180] sm:$0xf] %vm3891, %v3796
    %3942 = vst.msk [vmem:[#allocation2 + $0x188] sm:$0x3] %vm3893, %v3798
    %3943 = vst.msk [vmem:[#allocation2 + $0x190] sm:$0xf] %vm3891, %v3800
    %3944 = vst.msk [vmem:[#allocation2 + $0x198] sm:$0x3] %vm3893, %v3802
    %3945 = vst.msk [vmem:[#allocation2 + $0x1a0] sm:$0xf] %vm3891, %v3804
    %3946 = vst.msk [vmem:[#allocation2 + $0x1a8] sm:$0x3] %vm3893, %v3806
    %3947 = vst.msk [vmem:[#allocation2 + $0x1b0] sm:$0xf] %vm3891, %v3808
    %3948 = vst.msk [vmem:[#allocation2 + $0x1b8] sm:$0x3] %vm3893, %v3810
    %3949 = vst.msk [vmem:[#allocation2 + $0x1c0] sm:$0xf] %vm3891, %v3812
    %3950 = vst.msk [vmem:[#allocation2 + $0x1c8] sm:$0x3] %vm3893, %v3814
    %3951 = vst.msk [vmem:[#allocation2 + $0x1d0] sm:$0xf] %vm3891, %v3816
    %3952 = vst.msk [vmem:[#allocation2 + $0x1d8] sm:$0x3] %vm3893, %v3818
    %3953 = vst.msk [vmem:[#allocation2 + $0x1e0] sm:$0xf] %vm3891, %v3820
    %3954 = vst.msk [vmem:[#allocation2 + $0x1e8] sm:$0x3] %vm3893, %v3822
    %3955 = vst.msk [vmem:[#allocation2 + $0x1f0] sm:$0xf] %vm3891, %v3824
    %3956 = vst.msk [vmem:[#allocation2 + $0x1f8] sm:$0x3] %vm3893, %v3826
    %vm3957 = vsmask.f32 2304
    %vm3958 = vsmask.f32 6416
    %vm3959 = vmor %vm3957, %vm3958
    %v3960 = vrot.slane %v2607, 5
    %v3961 = vrot.slane %v2610, 6
    %v3962 = vor.u32 %v3960, %v3961
    %v3963 = vrot.slane %v3962, 4
    %v3964 = vrot.slane %v2620, 5
    %v3965 = vrot.slane %v2616, 6
    %v3966 = vor.u32 %v3964, %v3965
    %v3967 = vsel %vm3959, %v3963, %v3966
    %v3968 = vrot.slane %v3966, 4
    %v3969 = vrot.slane %v2626, 5
    %v3970 = vrot.slane %v2629, 6
    %v3971 = vor.u32 %v3969, %v3970
    %v3972 = vrot.slane %v3971, 4
    %v3973 = vrot.slane %v2639, 5
    %v3974 = vrot.slane %v2635, 6
    %v3975 = vor.u32 %v3973, %v3974
    %v3976 = vsel %vm3959, %v3972, %v3975
    %v3977 = vrot.slane %v3975, 4
    %v3978 = vrot.slane %v2645, 5
    %v3979 = vrot.slane %v2648, 6
    %v3980 = vor.u32 %v3978, %v3979
    %v3981 = vrot.slane %v3980, 4
    %v3982 = vrot.slane %v2658, 5
    %v3983 = vrot.slane %v2654, 6
    %v3984 = vor.u32 %v3982, %v3983
    %v3985 = vsel %vm3959, %v3981, %v3984
    %v3986 = vrot.slane %v3984, 4
    %v3987 = vrot.slane %v2664, 5
    %v3988 = vrot.slane %v2667, 6
    %v3989 = vor.u32 %v3987, %v3988
    %v3990 = vrot.slane %v3989, 4
    %v3991 = vrot.slane %v2677, 5
    %v3992 = vrot.slane %v2673, 6
    %v3993 = vor.u32 %v3991, %v3992
    %v3994 = vsel %vm3959, %v3990, %v3993
    %v3995 = vrot.slane %v3993, 4
    %v3996 = vrot.slane %v2683, 5
    %v3997 = vrot.slane %v2686, 6
    %v3998 = vor.u32 %v3996, %v3997
    %v3999 = vrot.slane %v3998, 4
    %v4000 = vrot.slane %v2696, 5
    %v4001 = vrot.slane %v2692, 6
    %v4002 = vor.u32 %v4000, %v4001
    %v4003 = vsel %vm3959, %v3999, %v4002
    %v4004 = vrot.slane %v4002, 4
    %v4005 = vrot.slane %v2702, 5
    %v4006 = vrot.slane %v2705, 6
    %v4007 = vor.u32 %v4005, %v4006
    %v4008 = vrot.slane %v4007, 4
    %v4009 = vrot.slane %v2715, 5
    %v4010 = vrot.slane %v2711, 6
    %v4011 = vor.u32 %v4009, %v4010
    %v4012 = vsel %vm3959, %v4008, %v4011
    %v4013 = vrot.slane %v4011, 4
    %v4014 = vrot.slane %v2721, 5
    %v4015 = vrot.slane %v2724, 6
    %v4016 = vor.u32 %v4014, %v4015
    %v4017 = vrot.slane %v4016, 4
    %v4018 = vrot.slane %v2734, 5
    %v4019 = vrot.slane %v2730, 6
    %v4020 = vor.u32 %v4018, %v4019
    %v4021 = vsel %vm3959, %v4017, %v4020
    %v4022 = vrot.slane %v4020, 4
    %v4023 = vrot.slane %v2740, 5
    %v4024 = vrot.slane %v2743, 6
    %v4025 = vor.u32 %v4023, %v4024
    %v4026 = vrot.slane %v4025, 4
    %v4027 = vrot.slane %v2753, 5
    %v4028 = vrot.slane %v2749, 6
    %v4029 = vor.u32 %v4027, %v4028
    %v4030 = vsel %vm3959, %v4026, %v4029
    %v4031 = vrot.slane %v4029, 4
    %v4032 = vrot.slane %v2759, 5
    %v4033 = vrot.slane %v2762, 6
    %v4034 = vor.u32 %v4032, %v4033
    %v4035 = vrot.slane %v4034, 4
    %v4036 = vrot.slane %v2772, 5
    %v4037 = vrot.slane %v2768, 6
    %v4038 = vor.u32 %v4036, %v4037
    %v4039 = vsel %vm3959, %v4035, %v4038
    %v4040 = vrot.slane %v4038, 4
    %v4041 = vrot.slane %v2778, 5
    %v4042 = vrot.slane %v2781, 6
    %v4043 = vor.u32 %v4041, %v4042
    %v4044 = vrot.slane %v4043, 4
    %v4045 = vrot.slane %v2791, 5
    %v4046 = vrot.slane %v2787, 6
    %v4047 = vor.u32 %v4045, %v4046
    %v4048 = vsel %vm3959, %v4044, %v4047
    %v4049 = vrot.slane %v4047, 4
    %v4050 = vrot.slane %v2797, 5
    %v4051 = vrot.slane %v2800, 6
    %v4052 = vor.u32 %v4050, %v4051
    %v4053 = vrot.slane %v4052, 4
    %v4054 = vrot.slane %v2810, 5
    %v4055 = vrot.slane %v2806, 6
    %v4056 = vor.u32 %v4054, %v4055
    %v4057 = vsel %vm3959, %v4053, %v4056
    %v4058 = vrot.slane %v4056, 4
    %v4059 = vrot.slane %v2816, 5
    %v4060 = vrot.slane %v2819, 6
    %v4061 = vor.u32 %v4059, %v4060
    %v4062 = vrot.slane %v4061, 4
    %v4063 = vrot.slane %v2829, 5
    %v4064 = vrot.slane %v2825, 6
    %v4065 = vor.u32 %v4063, %v4064
    %v4066 = vsel %vm3959, %v4062, %v4065
    %v4067 = vrot.slane %v4065, 4
    %v4068 = vrot.slane %v2835, 5
    %v4069 = vrot.slane %v2838, 6
    %v4070 = vor.u32 %v4068, %v4069
    %v4071 = vrot.slane %v4070, 4
    %v4072 = vrot.slane %v2848, 5
    %v4073 = vrot.slane %v2844, 6
    %v4074 = vor.u32 %v4072, %v4073
    %v4075 = vsel %vm3959, %v4071, %v4074
    %v4076 = vrot.slane %v4074, 4
    %v4077 = vrot.slane %v2854, 5
    %v4078 = vrot.slane %v2857, 6
    %v4079 = vor.u32 %v4077, %v4078
    %v4080 = vrot.slane %v4079, 4
    %v4081 = vrot.slane %v2867, 5
    %v4082 = vrot.slane %v2863, 6
    %v4083 = vor.u32 %v4081, %v4082
    %v4084 = vsel %vm3959, %v4080, %v4083
    %v4085 = vrot.slane %v4083, 4
    %v4086 = vrot.slane %v2873, 5
    %v4087 = vrot.slane %v2876, 6
    %v4088 = vor.u32 %v4086, %v4087
    %v4089 = vrot.slane %v4088, 4
    %v4090 = vrot.slane %v2886, 5
    %v4091 = vrot.slane %v2882, 6
    %v4092 = vor.u32 %v4090, %v4091
    %v4093 = vsel %vm3959, %v4089, %v4092
    %v4094 = vrot.slane %v4092, 4
    %v4095 = vrot.slane %v2892, 5
    %v4096 = vrot.slane %v2895, 6
    %v4097 = vor.u32 %v4095, %v4096
    %v4098 = vrot.slane %v4097, 4
    %v4099 = vrot.slane %v2905, 5
    %v4100 = vrot.slane %v2901, 6
    %v4101 = vor.u32 %v4099, %v4100
    %v4102 = vsel %vm3959, %v4098, %v4101
    %v4103 = vrot.slane %v4101, 4
    %v4104 = vrot.slane %v2911, 5
    %v4105 = vrot.slane %v2914, 6
    %v4106 = vor.u32 %v4104, %v4105
    %v4107 = vrot.slane %v4106, 4
    %v4108 = vrot.slane %v2924, 5
    %v4109 = vrot.slane %v2920, 6
    %v4110 = vor.u32 %v4108, %v4109
    %v4111 = vsel %vm3959, %v4107, %v4110
    %v4112 = vrot.slane %v4110, 4
    %v4113 = vrot.slane %v2930, 5
    %v4114 = vrot.slane %v2933, 6
    %v4115 = vor.u32 %v4113, %v4114
    %v4116 = vrot.slane %v4115, 4
    %v4117 = vrot.slane %v2943, 5
    %v4118 = vrot.slane %v2939, 6
    %v4119 = vor.u32 %v4117, %v4118
    %v4120 = vsel %vm3959, %v4116, %v4119
    %v4121 = vrot.slane %v4119, 4
    %v4122 = vrot.slane %v2949, 5
    %v4123 = vrot.slane %v2952, 6
    %v4124 = vor.u32 %v4122, %v4123
    %v4125 = vrot.slane %v4124, 4
    %v4126 = vrot.slane %v2962, 5
    %v4127 = vrot.slane %v2958, 6
    %v4128 = vor.u32 %v4126, %v4127
    %v4129 = vsel %vm3959, %v4125, %v4128
    %v4130 = vrot.slane %v4128, 4
    %v4131 = vrot.slane %v2968, 5
    %v4132 = vrot.slane %v2971, 6
    %v4133 = vor.u32 %v4131, %v4132
    %v4134 = vrot.slane %v4133, 4
    %v4135 = vrot.slane %v2981, 5
    %v4136 = vrot.slane %v2977, 6
    %v4137 = vor.u32 %v4135, %v4136
    %v4138 = vsel %vm3959, %v4134, %v4137
    %v4139 = vrot.slane %v4137, 4
    %v4140 = vrot.slane %v2987, 5
    %v4141 = vrot.slane %v2990, 6
    %v4142 = vor.u32 %v4140, %v4141
    %v4143 = vrot.slane %v4142, 4
    %v4144 = vrot.slane %v3000, 5
    %v4145 = vrot.slane %v2996, 6
    %v4146 = vor.u32 %v4144, %v4145
    %v4147 = vsel %vm3959, %v4143, %v4146
    %v4148 = vrot.slane %v4146, 4
    %v4149 = vrot.slane %v3006, 5
    %v4150 = vrot.slane %v3009, 6
    %v4151 = vor.u32 %v4149, %v4150
    %v4152 = vrot.slane %v4151, 4
    %v4153 = vrot.slane %v3019, 5
    %v4154 = vrot.slane %v3015, 6
    %v4155 = vor.u32 %v4153, %v4154
    %v4156 = vsel %vm3959, %v4152, %v4155
    %v4157 = vrot.slane %v4155, 4
    %v4158 = vrot.slane %v3025, 5
    %v4159 = vrot.slane %v3028, 6
    %v4160 = vor.u32 %v4158, %v4159
    %v4161 = vrot.slane %v4160, 4
    %v4162 = vrot.slane %v3038, 5
    %v4163 = vrot.slane %v3034, 6
    %v4164 = vor.u32 %v4162, %v4163
    %v4165 = vsel %vm3959, %v4161, %v4164
    %v4166 = vrot.slane %v4164, 4
    %v4167 = vrot.slane %v3044, 5
    %v4168 = vrot.slane %v3047, 6
    %v4169 = vor.u32 %v4167, %v4168
    %v4170 = vrot.slane %v4169, 4
    %v4171 = vrot.slane %v3057, 5
    %v4172 = vrot.slane %v3053, 6
    %v4173 = vor.u32 %v4171, %v4172
    %v4174 = vsel %vm3959, %v4170, %v4173
    %v4175 = vrot.slane %v4173, 4
    %v4176 = vrot.slane %v3063, 5
    %v4177 = vrot.slane %v3066, 6
    %v4178 = vor.u32 %v4176, %v4177
    %v4179 = vrot.slane %v4178, 4
    %v4180 = vrot.slane %v3076, 5
    %v4181 = vrot.slane %v3072, 6
    %v4182 = vor.u32 %v4180, %v4181
    %v4183 = vsel %vm3959, %v4179, %v4182
    %v4184 = vrot.slane %v4182, 4
    %v4185 = vrot.slane %v3082, 5
    %v4186 = vrot.slane %v3085, 6
    %v4187 = vor.u32 %v4185, %v4186
    %v4188 = vrot.slane %v4187, 4
    %v4189 = vrot.slane %v3095, 5
    %v4190 = vrot.slane %v3091, 6
    %v4191 = vor.u32 %v4189, %v4190
    %v4192 = vsel %vm3959, %v4188, %v4191
    %v4193 = vrot.slane %v4191, 4
    %v4194 = vrot.slane %v3101, 5
    %v4195 = vrot.slane %v3104, 6
    %v4196 = vor.u32 %v4194, %v4195
    %v4197 = vrot.slane %v4196, 4
    %v4198 = vrot.slane %v3114, 5
    %v4199 = vrot.slane %v3110, 6
    %v4200 = vor.u32 %v4198, %v4199
    %v4201 = vsel %vm3959, %v4197, %v4200
    %v4202 = vrot.slane %v4200, 4
    %v4203 = vrot.slane %v3120, 5
    %v4204 = vrot.slane %v3123, 6
    %v4205 = vor.u32 %v4203, %v4204
    %v4206 = vrot.slane %v4205, 4
    %v4207 = vrot.slane %v3133, 5
    %v4208 = vrot.slane %v3129, 6
    %v4209 = vor.u32 %v4207, %v4208
    %v4210 = vsel %vm3959, %v4206, %v4209
    %v4211 = vrot.slane %v4209, 4
    %v4212 = vrot.slane %v3139, 5
    %v4213 = vrot.slane %v3142, 6
    %v4214 = vor.u32 %v4212, %v4213
    %v4215 = vrot.slane %v4214, 4
    %v4216 = vrot.slane %v3152, 5
    %v4217 = vrot.slane %v3148, 6
    %v4218 = vor.u32 %v4216, %v4217
    %v4219 = vsel %vm3959, %v4215, %v4218
    %v4220 = vrot.slane %v4218, 4
    %v4221 = vrot.slane %v3158, 5
    %v4222 = vrot.slane %v3161, 6
    %v4223 = vor.u32 %v4221, %v4222
    %v4224 = vrot.slane %v4223, 4
    %v4225 = vrot.slane %v3171, 5
    %v4226 = vrot.slane %v3167, 6
    %v4227 = vor.u32 %v4225, %v4226
    %v4228 = vsel %vm3959, %v4224, %v4227
    %v4229 = vrot.slane %v4227, 4
    %v4230 = vrot.slane %v3177, 5
    %v4231 = vrot.slane %v3180, 6
    %v4232 = vor.u32 %v4230, %v4231
    %v4233 = vrot.slane %v4232, 4
    %v4234 = vrot.slane %v3190, 5
    %v4235 = vrot.slane %v3186, 6
    %v4236 = vor.u32 %v4234, %v4235
    %v4237 = vsel %vm3959, %v4233, %v4236
    %v4238 = vrot.slane %v4236, 4
    %v4239 = vrot.slane %v3196, 5
    %v4240 = vrot.slane %v3199, 6
    %v4241 = vor.u32 %v4239, %v4240
    %v4242 = vrot.slane %v4241, 4
    %v4243 = vrot.slane %v3209, 5
    %v4244 = vrot.slane %v3205, 6
    %v4245 = vor.u32 %v4243, %v4244
    %v4246 = vsel %vm3959, %v4242, %v4245
    %v4247 = vrot.slane %v4245, 4
    %4248 = vrot.lane.b32.xlu0 %v3967, 96
    %v4249 = vpop.permute.xlu0 %4248
    %4250 = vrot.lane.b32.xlu0 %v3968, 96
    %v4251 = vpop.permute.xlu0 %4250
    %4252 = vrot.lane.b32.xlu0 %v3976, 96
    %v4253 = vpop.permute.xlu0 %4252
    %4254 = vrot.lane.b32.xlu0 %v3977, 96
    %v4255 = vpop.permute.xlu0 %4254
    %4256 = vrot.lane.b32.xlu0 %v3985, 96
    %v4257 = vpop.permute.xlu0 %4256
    %4258 = vrot.lane.b32.xlu0 %v3986, 96
    %v4259 = vpop.permute.xlu0 %4258
    %4260 = vrot.lane.b32.xlu0 %v3994, 96
    %v4261 = vpop.permute.xlu0 %4260
    %4262 = vrot.lane.b32.xlu0 %v3995, 96
    %v4263 = vpop.permute.xlu0 %4262
    %4264 = vrot.lane.b32.xlu0 %v4003, 96
    %v4265 = vpop.permute.xlu0 %4264
    %4266 = vrot.lane.b32.xlu0 %v4004, 96
    %v4267 = vpop.permute.xlu0 %4266
    %4268 = vrot.lane.b32.xlu0 %v4012, 96
    %v4269 = vpop.permute.xlu0 %4268
    %4270 = vrot.lane.b32.xlu0 %v4013, 96
    %v4271 = vpop.permute.xlu0 %4270
    %4272 = vrot.lane.b32.xlu0 %v4021, 96
    %v4273 = vpop.permute.xlu0 %4272
    %4274 = vrot.lane.b32.xlu0 %v4022, 96
    %v4275 = vpop.permute.xlu0 %4274
    %4276 = vrot.lane.b32.xlu0 %v4030, 96
    %v4277 = vpop.permute.xlu0 %4276
    %4278 = vrot.lane.b32.xlu0 %v4031, 96
    %v4279 = vpop.permute.xlu0 %4278
    %4280 = vrot.lane.b32.xlu0 %v4039, 96
    %v4281 = vpop.permute.xlu0 %4280
    %4282 = vrot.lane.b32.xlu0 %v4040, 96
    %v4283 = vpop.permute.xlu0 %4282
    %4284 = vrot.lane.b32.xlu0 %v4048, 96
    %v4285 = vpop.permute.xlu0 %4284
    %4286 = vrot.lane.b32.xlu0 %v4049, 96
    %v4287 = vpop.permute.xlu0 %4286
    %4288 = vrot.lane.b32.xlu0 %v4057, 96
    %v4289 = vpop.permute.xlu0 %4288
    %4290 = vrot.lane.b32.xlu0 %v4058, 96
    %v4291 = vpop.permute.xlu0 %4290
    %4292 = vrot.lane.b32.xlu0 %v4066, 96
    %v4293 = vpop.permute.xlu0 %4292
    %4294 = vrot.lane.b32.xlu0 %v4067, 96
    %v4295 = vpop.permute.xlu0 %4294
    %4296 = vrot.lane.b32.xlu0 %v4075, 96
    %v4297 = vpop.permute.xlu0 %4296
    %4298 = vrot.lane.b32.xlu0 %v4076, 96
    %v4299 = vpop.permute.xlu0 %4298
    %4300 = vrot.lane.b32.xlu0 %v4084, 96
    %v4301 = vpop.permute.xlu0 %4300
    %4302 = vrot.lane.b32.xlu0 %v4085, 96
    %v4303 = vpop.permute.xlu0 %4302
    %4304 = vrot.lane.b32.xlu0 %v4093, 96
    %v4305 = vpop.permute.xlu0 %4304
    %4306 = vrot.lane.b32.xlu0 %v4094, 96
    %v4307 = vpop.permute.xlu0 %4306
    %4308 = vrot.lane.b32.xlu0 %v4102, 96
    %v4309 = vpop.permute.xlu0 %4308
    %4310 = vrot.lane.b32.xlu0 %v4103, 96
    %v4311 = vpop.permute.xlu0 %4310
    %4312 = vrot.lane.b32.xlu0 %v4111, 96
    %v4313 = vpop.permute.xlu0 %4312
    %4314 = vrot.lane.b32.xlu0 %v4112, 96
    %v4315 = vpop.permute.xlu0 %4314
    %4316 = vrot.lane.b32.xlu0 %v4120, 96
    %v4317 = vpop.permute.xlu0 %4316
    %4318 = vrot.lane.b32.xlu0 %v4121, 96
    %v4319 = vpop.permute.xlu0 %4318
    %4320 = vrot.lane.b32.xlu0 %v4129, 96
    %v4321 = vpop.permute.xlu0 %4320
    %4322 = vrot.lane.b32.xlu0 %v4130, 96
    %v4323 = vpop.permute.xlu0 %4322
    %4324 = vrot.lane.b32.xlu0 %v4138, 96
    %v4325 = vpop.permute.xlu0 %4324
    %4326 = vrot.lane.b32.xlu0 %v4139, 96
    %v4327 = vpop.permute.xlu0 %4326
    %4328 = vrot.lane.b32.xlu0 %v4147, 96
    %v4329 = vpop.permute.xlu0 %4328
    %4330 = vrot.lane.b32.xlu0 %v4148, 96
    %v4331 = vpop.permute.xlu0 %4330
    %4332 = vrot.lane.b32.xlu0 %v4156, 96
    %v4333 = vpop.permute.xlu0 %4332
    %4334 = vrot.lane.b32.xlu0 %v4157, 96
    %v4335 = vpop.permute.xlu0 %4334
    %4336 = vrot.lane.b32.xlu0 %v4165, 96
    %v4337 = vpop.permute.xlu0 %4336
    %4338 = vrot.lane.b32.xlu0 %v4166, 96
    %v4339 = vpop.permute.xlu0 %4338
    %4340 = vrot.lane.b32.xlu0 %v4174, 96
    %v4341 = vpop.permute.xlu0 %4340
    %4342 = vrot.lane.b32.xlu0 %v4175, 96
    %v4343 = vpop.permute.xlu0 %4342
    %4344 = vrot.lane.b32.xlu0 %v4183, 96
    %v4345 = vpop.permute.xlu0 %4344
    %4346 = vrot.lane.b32.xlu0 %v4184, 96
    %v4347 = vpop.permute.xlu0 %4346
    %4348 = vrot.lane.b32.xlu0 %v4192, 96
    %v4349 = vpop.permute.xlu0 %4348
    %4350 = vrot.lane.b32.xlu0 %v4193, 96
    %v4351 = vpop.permute.xlu0 %4350
    %4352 = vrot.lane.b32.xlu0 %v4201, 96
    %v4353 = vpop.permute.xlu0 %4352
    %4354 = vrot.lane.b32.xlu0 %v4202, 96
    %v4355 = vpop.permute.xlu0 %4354
    %4356 = vrot.lane.b32.xlu0 %v4210, 96
    %v4357 = vpop.permute.xlu0 %4356
    %4358 = vrot.lane.b32.xlu0 %v4211, 96
    %v4359 = vpop.permute.xlu0 %4358
    %4360 = vrot.lane.b32.xlu0 %v4219, 96
    %v4361 = vpop.permute.xlu0 %4360
    %4362 = vrot.lane.b32.xlu0 %v4220, 96
    %v4363 = vpop.permute.xlu0 %4362
    %4364 = vrot.lane.b32.xlu0 %v4228, 96
    %v4365 = vpop.permute.xlu0 %4364
    %4366 = vrot.lane.b32.xlu0 %v4229, 96
    %v4367 = vpop.permute.xlu0 %4366
    %4368 = vrot.lane.b32.xlu0 %v4237, 96
    %v4369 = vpop.permute.xlu0 %4368
    %4370 = vrot.lane.b32.xlu0 %v4238, 96
    %v4371 = vpop.permute.xlu0 %4370
    %4372 = vrot.lane.b32.xlu0 %v4246, 96
    %v4373 = vpop.permute.xlu0 %4372
    %4374 = vrot.lane.b32.xlu0 %v4247, 96
    %v4375 = vpop.permute.xlu0 %4374
    %vm4440 = vcmask 1044224
    %4441 = vst.msk [vmem:[#allocation2] sm:$0xf] %vm4440, %v4249
    %vm4442 = vcmask 1042176
    %4443 = vst.msk [vmem:[#allocation2 + $0x8] sm:$0x3] %vm4442, %v4251
    %4444 = vst.msk [vmem:[#allocation2 + $0x10] sm:$0xf] %vm4440, %v4253
    %4445 = vst.msk [vmem:[#allocation2 + $0x18] sm:$0x3] %vm4442, %v4255
    %4446 = vst.msk [vmem:[#allocation2 + $0x20] sm:$0xf] %vm4440, %v4257
    %4447 = vst.msk [vmem:[#allocation2 + $0x28] sm:$0x3] %vm4442, %v4259
    %4448 = vst.msk [vmem:[#allocation2 + $0x30] sm:$0xf] %vm4440, %v4261
    %4449 = vst.msk [vmem:[#allocation2 + $0x38] sm:$0x3] %vm4442, %v4263
    %4450 = vst.msk [vmem:[#allocation2 + $0x40] sm:$0xf] %vm4440, %v4265
    %4451 = vst.msk [vmem:[#allocation2 + $0x48] sm:$0x3] %vm4442, %v4267
    %4452 = vst.msk [vmem:[#allocation2 + $0x50] sm:$0xf] %vm4440, %v4269
    %4453 = vst.msk [vmem:[#allocation2 + $0x58] sm:$0x3] %vm4442, %v4271
    %4454 = vst.msk [vmem:[#allocation2 + $0x60] sm:$0xf] %vm4440, %v4273
    %4455 = vst.msk [vmem:[#allocation2 + $0x68] sm:$0x3] %vm4442, %v4275
    %4456 = vst.msk [vmem:[#allocation2 + $0x70] sm:$0xf] %vm4440, %v4277
    %4457 = vst.msk [vmem:[#allocation2 + $0x78] sm:$0x3] %vm4442, %v4279
    %4458 = vst.msk [vmem:[#allocation2 + $0x80] sm:$0xf] %vm4440, %v4281
    %4459 = vst.msk [vmem:[#allocation2 + $0x88] sm:$0x3] %vm4442, %v4283
    %4460 = vst.msk [vmem:[#allocation2 + $0x90] sm:$0xf] %vm4440, %v4285
    %4461 = vst.msk [vmem:[#allocation2 + $0x98] sm:$0x3] %vm4442, %v4287
    %4462 = vst.msk [vmem:[#allocation2 + $0xa0] sm:$0xf] %vm4440, %v4289
    %4463 = vst.msk [vmem:[#allocation2 + $0xa8] sm:$0x3] %vm4442, %v4291
    %4464 = vst.msk [vmem:[#allocation2 + $0xb0] sm:$0xf] %vm4440, %v4293
    %4465 = vst.msk [vmem:[#allocation2 + $0xb8] sm:$0x3] %vm4442, %v4295
    %4466 = vst.msk [vmem:[#allocation2 + $0xc0] sm:$0xf] %vm4440, %v4297
    %4467 = vst.msk [vmem:[#allocation2 + $0xc8] sm:$0x3] %vm4442, %v4299
    %4468 = vst.msk [vmem:[#allocation2 + $0xd0] sm:$0xf] %vm4440, %v4301
    %4469 = vst.msk [vmem:[#allocation2 + $0xd8] sm:$0x3] %vm4442, %v4303
    %4470 = vst.msk [vmem:[#allocation2 + $0xe0] sm:$0xf] %vm4440, %v4305
    %4471 = vst.msk [vmem:[#allocation2 + $0xe8] sm:$0x3] %vm4442, %v4307
    %4472 = vst.msk [vmem:[#allocation2 + $0xf0] sm:$0xf] %vm4440, %v4309
    %4473 = vst.msk [vmem:[#allocation2 + $0xf8] sm:$0x3] %vm4442, %v4311
    %4474 = vst.msk [vmem:[#allocation2 + $0x100] sm:$0xf] %vm4440, %v4313
    %4475 = vst.msk [vmem:[#allocation2 + $0x108] sm:$0x3] %vm4442, %v4315
    %4476 = vst.msk [vmem:[#allocation2 + $0x110] sm:$0xf] %vm4440, %v4317
    %4477 = vst.msk [vmem:[#allocation2 + $0x118] sm:$0x3] %vm4442, %v4319
    %4478 = vst.msk [vmem:[#allocation2 + $0x120] sm:$0xf] %vm4440, %v4321
    %4479 = vst.msk [vmem:[#allocation2 + $0x128] sm:$0x3] %vm4442, %v4323
    %4480 = vst.msk [vmem:[#allocation2 + $0x130] sm:$0xf] %vm4440, %v4325
    %4481 = vst.msk [vmem:[#allocation2 + $0x138] sm:$0x3] %vm4442, %v4327
    %4482 = vst.msk [vmem:[#allocation2 + $0x140] sm:$0xf] %vm4440, %v4329
    %4483 = vst.msk [vmem:[#allocation2 + $0x148] sm:$0x3] %vm4442, %v4331
    %4484 = vst.msk [vmem:[#allocation2 + $0x150] sm:$0xf] %vm4440, %v4333
    %4485 = vst.msk [vmem:[#allocation2 + $0x158] sm:$0x3] %vm4442, %v4335
    %4486 = vst.msk [vmem:[#allocation2 + $0x160] sm:$0xf] %vm4440, %v4337
    %4487 = vst.msk [vmem:[#allocation2 + $0x168] sm:$0x3] %vm4442, %v4339
    %4488 = vst.msk [vmem:[#allocation2 + $0x170] sm:$0xf] %vm4440, %v4341
    %4489 = vst.msk [vmem:[#allocation2 + $0x178] sm:$0x3] %vm4442, %v4343
    %4490 = vst.msk [vmem:[#allocation2 + $0x180] sm:$0xf] %vm4440, %v4345
    %4491 = vst.msk [vmem:[#allocation2 + $0x188] sm:$0x3] %vm4442, %v4347
    %4492 = vst.msk [vmem:[#allocation2 + $0x190] sm:$0xf] %vm4440, %v4349
    %4493 = vst.msk [vmem:[#allocation2 + $0x198] sm:$0x3] %vm4442, %v4351
    %4494 = vst.msk [vmem:[#allocation2 + $0x1a0] sm:$0xf] %vm4440, %v4353
    %4495 = vst.msk [vmem:[#allocation2 + $0x1a8] sm:$0x3] %vm4442, %v4355
    %4496 = vst.msk [vmem:[#allocation2 + $0x1b0] sm:$0xf] %vm4440, %v4357
    %4497 = vst.msk [vmem:[#allocation2 + $0x1b8] sm:$0x3] %vm4442, %v4359
    %4498 = vst.msk [vmem:[#allocation2 + $0x1c0] sm:$0xf] %vm4440, %v4361
    %4499 = vst.msk [vmem:[#allocation2 + $0x1c8] sm:$0x3] %vm4442, %v4363
    %4500 = vst.msk [vmem:[#allocation2 + $0x1d0] sm:$0xf] %vm4440, %v4365
    %4501 = vst.msk [vmem:[#allocation2 + $0x1d8] sm:$0x3] %vm4442, %v4367
    %4502 = vst.msk [vmem:[#allocation2 + $0x1e0] sm:$0xf] %vm4440, %v4369
    %4503 = vst.msk [vmem:[#allocation2 + $0x1e8] sm:$0x3] %vm4442, %v4371
    %4504 = vst.msk [vmem:[#allocation2 + $0x1f0] sm:$0xf] %vm4440, %v4373
    %4505 = vst.msk [vmem:[#allocation2 + $0x1f8] sm:$0x3] %vm4442, %v4375
    %vm4506 = vcmask 1041408
    %vm4507 = vcmask 1045508
    %vm4508 = vmor %vm4506, %vm4507
    %v4509 = vrot.slane %v2438, 6
    %v4510 = vrot.slane %v4509, 4
    %v4511 = vrot.slane %v2439, 6
    %v4512 = vsel %vm4508, %v4510, %v4511
    %v4513 = vrot.slane %v4511, 4
    %v4514 = vrot.slane %v2440, 6
    %v4515 = vrot.slane %v4514, 4
    %v4516 = vrot.slane %v2441, 6
    %v4517 = vsel %vm4508, %v4515, %v4516
    %v4518 = vrot.slane %v4516, 4
    %v4519 = vrot.slane %v2442, 6
    %v4520 = vrot.slane %v4519, 4
    %v4521 = vrot.slane %v2443, 6
    %v4522 = vsel %vm4508, %v4520, %v4521
    %v4523 = vrot.slane %v4521, 4
    %v4524 = vrot.slane %v2444, 6
    %v4525 = vrot.slane %v4524, 4
    %v4526 = vrot.slane %v2445, 6
    %v4527 = vsel %vm4508, %v4525, %v4526
    %v4528 = vrot.slane %v4526, 4
    %v4529 = vrot.slane %v2446, 6
    %v4530 = vrot.slane %v4529, 4
    %v4531 = vrot.slane %v2447, 6
    %v4532 = vsel %vm4508, %v4530, %v4531
    %v4533 = vrot.slane %v4531, 4
    %v4534 = vrot.slane %v2448, 6
    %v4535 = vrot.slane %v4534, 4
    %v4536 = vrot.slane %v2449, 6
    %v4537 = vsel %vm4508, %v4535, %v4536
    %v4538 = vrot.slane %v4536, 4
    %v4539 = vrot.slane %v2450, 6
    %v4540 = vrot.slane %v4539, 4
    %v4541 = vrot.slane %v2451, 6
    %v4542 = vsel %vm4508, %v4540, %v4541
    %v4543 = vrot.slane %v4541, 4
    %v4544 = vrot.slane %v2452, 6
    %v4545 = vrot.slane %v4544, 4
    %v4546 = vrot.slane %v2453, 6
    %v4547 = vsel %vm4508, %v4545, %v4546
    %v4548 = vrot.slane %v4546, 4
    %v4549 = vrot.slane %v2454, 6
    %v4550 = vrot.slane %v4549, 4
    %v4551 = vrot.slane %v2455, 6
    %v4552 = vsel %vm4508, %v4550, %v4551
    %v4553 = vrot.slane %v4551, 4
    %v4554 = vrot.slane %v2456, 6
    %v4555 = vrot.slane %v4554, 4
    %v4556 = vrot.slane %v2457, 6
    %v4557 = vsel %vm4508, %v4555, %v4556
    %v4558 = vrot.slane %v4556, 4
    %v4559 = vrot.slane %v2458, 6
    %v4560 = vrot.slane %v4559, 4
    %v4561 = vrot.slane %v2459, 6
    %v4562 = vsel %vm4508, %v4560, %v4561
    %v4563 = vrot.slane %v4561, 4
    %v4564 = vrot.slane %v2460, 6
    %v4565 = vrot.slane %v4564, 4
    %v4566 = vrot.slane %v2461, 6
    %v4567 = vsel %vm4508, %v4565, %v4566
    %v4568 = vrot.slane %v4566, 4
    %v4569 = vrot.slane %v2462, 6
    %v4570 = vrot.slane %v4569, 4
    %v4571 = vrot.slane %v2463, 6
    %v4572 = vsel %vm4508, %v4570, %v4571
    %v4573 = vrot.slane %v4571, 4
    %v4574 = vrot.slane %v2464, 6
    %v4575 = vrot.slane %v4574, 4
    %v4576 = vrot.slane %v2465, 6
    %v4577 = vsel %vm4508, %v4575, %v4576
    %v4578 = vrot.slane %v4576, 4
    %v4579 = vrot.slane %v2466, 6
    %v4580 = vrot.slane %v4579, 4
    %v4581 = vrot.slane %v2467, 6
    %v4582 = vsel %vm4508, %v4580, %v4581
    %v4583 = vrot.slane %v4581, 4
    %v4584 = vrot.slane %v2468, 6
    %v4585 = vrot.slane %v4584, 4
    %v4586 = vrot.slane %v2469, 6
    %v4587 = vsel %vm4508, %v4585, %v4586
    %v4588 = vrot.slane %v4586, 4
    %v4589 = vrot.slane %v2470, 6
    %v4590 = vrot.slane %v4589, 4
    %v4591 = vrot.slane %v2471, 6
    %v4592 = vsel %vm4508, %v4590, %v4591
    %v4593 = vrot.slane %v4591, 4
    %v4594 = vrot.slane %v2472, 6
    %v4595 = vrot.slane %v4594, 4
    %v4596 = vrot.slane %v2473, 6
    %v4597 = vsel %vm4508, %v4595, %v4596
    %v4598 = vrot.slane %v4596, 4
    %v4599 = vrot.slane %v2474, 6
    %v4600 = vrot.slane %v4599, 4
    %v4601 = vrot.slane %v2475, 6
    %v4602 = vsel %vm4508, %v4600, %v4601
    %v4603 = vrot.slane %v4601, 4
    %v4604 = vrot.slane %v2476, 6
    %v4605 = vrot.slane %v4604, 4
    %v4606 = vrot.slane %v2477, 6
    %v4607 = vsel %vm4508, %v4605, %v4606
    %v4608 = vrot.slane %v4606, 4
    %v4609 = vrot.slane %v2478, 6
    %v4610 = vrot.slane %v4609, 4
    %v4611 = vrot.slane %v2479, 6
    %v4612 = vsel %vm4508, %v4610, %v4611
    %v4613 = vrot.slane %v4611, 4
    %v4614 = vrot.slane %v2480, 6
    %v4615 = vrot.slane %v4614, 4
    %v4616 = vrot.slane %v2481, 6
    %v4617 = vsel %vm4508, %v4615, %v4616
    %v4618 = vrot.slane %v4616, 4
    %v4619 = vrot.slane %v2482, 6
    %v4620 = vrot.slane %v4619, 4
    %v4621 = vrot.slane %v2483, 6
    %v4622 = vsel %vm4508, %v4620, %v4621
    %v4623 = vrot.slane %v4621, 4
    %v4624 = vrot.slane %v2484, 6
    %v4625 = vrot.slane %v4624, 4
    %v4626 = vrot.slane %v2485, 6
    %v4627 = vsel %vm4508, %v4625, %v4626
    %v4628 = vrot.slane %v4626, 4
    %v4629 = vrot.slane %v2486, 6
    %v4630 = vrot.slane %v4629, 4
    %v4631 = vrot.slane %v2487, 6
    %v4632 = vsel %vm4508, %v4630, %v4631
    %v4633 = vrot.slane %v4631, 4
    %v4634 = vrot.slane %v2488, 6
    %v4635 = vrot.slane %v4634, 4
    %v4636 = vrot.slane %v2489, 6
    %v4637 = vsel %vm4508, %v4635, %v4636
    %v4638 = vrot.slane %v4636, 4
    %v4639 = vrot.slane %v2490, 6
    %v4640 = vrot.slane %v4639, 4
    %v4641 = vrot.slane %v2491, 6
    %v4642 = vsel %vm4508, %v4640, %v4641
    %v4643 = vrot.slane %v4641, 4
    %v4644 = vrot.slane %v2492, 6
    %v4645 = vrot.slane %v4644, 4
    %v4646 = vrot.slane %v2493, 6
    %v4647 = vsel %vm4508, %v4645, %v4646
    %v4648 = vrot.slane %v4646, 4
    %v4649 = vrot.slane %v2494, 6
    %v4650 = vrot.slane %v4649, 4
    %v4651 = vrot.slane %v2495, 6
    %v4652 = vsel %vm4508, %v4650, %v4651
    %v4653 = vrot.slane %v4651, 4
    %v4654 = vrot.slane %v2496, 6
    %v4655 = vrot.slane %v4654, 4
    %v4656 = vrot.slane %v2497, 6
    %v4657 = vsel %vm4508, %v4655, %v4656
    %v4658 = vrot.slane %v4656, 4
    %v4659 = vrot.slane %v2498, 6
    %v4660 = vrot.slane %v4659, 4
    %v4661 = vrot.slane %v2499, 6
    %v4662 = vsel %vm4508, %v4660, %v4661
    %v4663 = vrot.slane %v4661, 4
    %v4664 = vrot.slane %v2500, 6
    %v4665 = vrot.slane %v4664, 4
    %v4666 = vrot.slane %v2501, 6
    %v4667 = vsel %vm4508, %v4665, %v4666
    %v4668 = vrot.slane %v4666, 4
    %4733 = vst.msk [vmem:[#allocation2 + $0x4] sm:$0xf] %vm2537, %v4512
    %4734 = vst.msk [vmem:[#allocation2 + $0xc] sm:$0x3] %vm2539, %v4513
    %4735 = vst.msk [vmem:[#allocation2 + $0x14] sm:$0xf] %vm2537, %v4517
    %4736 = vst.msk [vmem:[#allocation2 + $0x1c] sm:$0x3] %vm2539, %v4518
    %4737 = vst.msk [vmem:[#allocation2 + $0x24] sm:$0xf] %vm2537, %v4522
    %4738 = vst.msk [vmem:[#allocation2 + $0x2c] sm:$0x3] %vm2539, %v4523
    %4739 = vst.msk [vmem:[#allocation2 + $0x34] sm:$0xf] %vm2537, %v4527
    %4740 = vst.msk [vmem:[#allocation2 + $0x3c] sm:$0x3] %vm2539, %v4528
    %4741 = vst.msk [vmem:[#allocation2 + $0x44] sm:$0xf] %vm2537, %v4532
    %4742 = vst.msk [vmem:[#allocation2 + $0x4c] sm:$0x3] %vm2539, %v4533
    %4743 = vst.msk [vmem:[#allocation2 + $0x54] sm:$0xf] %vm2537, %v4537
    %4744 = vst.msk [vmem:[#allocation2 + $0x5c] sm:$0x3] %vm2539, %v4538
    %4745 = vst.msk [vmem:[#allocation2 + $0x64] sm:$0xf] %vm2537, %v4542
    %4746 = vst.msk [vmem:[#allocation2 + $0x6c] sm:$0x3] %vm2539, %v4543
    %4747 = vst.msk [vmem:[#allocation2 + $0x74] sm:$0xf] %vm2537, %v4547
    %4748 = vst.msk [vmem:[#allocation2 + $0x7c] sm:$0x3] %vm2539, %v4548
    %4749 = vst.msk [vmem:[#allocation2 + $0x84] sm:$0xf] %vm2537, %v4552
    %4750 = vst.msk [vmem:[#allocation2 + $0x8c] sm:$0x3] %vm2539, %v4553
    %4751 = vst.msk [vmem:[#allocation2 + $0x94] sm:$0xf] %vm2537, %v4557
    %4752 = vst.msk [vmem:[#allocation2 + $0x9c] sm:$0x3] %vm2539, %v4558
    %4753 = vst.msk [vmem:[#allocation2 + $0xa4] sm:$0xf] %vm2537, %v4562
    %4754 = vst.msk [vmem:[#allocation2 + $0xac] sm:$0x3] %vm2539, %v4563
    %4755 = vst.msk [vmem:[#allocation2 + $0xb4] sm:$0xf] %vm2537, %v4567
    %4756 = vst.msk [vmem:[#allocation2 + $0xbc] sm:$0x3] %vm2539, %v4568
    %4757 = vst.msk [vmem:[#allocation2 + $0xc4] sm:$0xf] %vm2537, %v4572
    %4758 = vst.msk [vmem:[#allocation2 + $0xcc] sm:$0x3] %vm2539, %v4573
    %4759 = vst.msk [vmem:[#allocation2 + $0xd4] sm:$0xf] %vm2537, %v4577
    %4760 = vst.msk [vmem:[#allocation2 + $0xdc] sm:$0x3] %vm2539, %v4578
    %4761 = vst.msk [vmem:[#allocation2 + $0xe4] sm:$0xf] %vm2537, %v4582
    %4762 = vst.msk [vmem:[#allocation2 + $0xec] sm:$0x3] %vm2539, %v4583
    %4763 = vst.msk [vmem:[#allocation2 + $0xf4] sm:$0xf] %vm2537, %v4587
    %4764 = vst.msk [vmem:[#allocation2 + $0xfc] sm:$0x3] %vm2539, %v4588
    %4765 = vst.msk [vmem:[#allocation2 + $0x104] sm:$0xf] %vm2537, %v4592
    %4766 = vst.msk [vmem:[#allocation2 + $0x10c] sm:$0x3] %vm2539, %v4593
    %4767 = vst.msk [vmem:[#allocation2 + $0x114] sm:$0xf] %vm2537, %v4597
    %4768 = vst.msk [vmem:[#allocation2 + $0x11c] sm:$0x3] %vm2539, %v4598
    %4769 = vst.msk [vmem:[#allocation2 + $0x124] sm:$0xf] %vm2537, %v4602
    %4770 = vst.msk [vmem:[#allocation2 + $0x12c] sm:$0x3] %vm2539, %v4603
    %4771 = vst.msk [vmem:[#allocation2 + $0x134] sm:$0xf] %vm2537, %v4607
    %4772 = vst.msk [vmem:[#allocation2 + $0x13c] sm:$0x3] %vm2539, %v4608
    %4773 = vst.msk [vmem:[#allocation2 + $0x144] sm:$0xf] %vm2537, %v4612
    %4774 = vst.msk [vmem:[#allocation2 + $0x14c] sm:$0x3] %vm2539, %v4613
    %4775 = vst.msk [vmem:[#allocation2 + $0x154] sm:$0xf] %vm2537, %v4617
    %4776 = vst.msk [vmem:[#allocation2 + $0x15c] sm:$0x3] %vm2539, %v4618
    %4777 = vst.msk [vmem:[#allocation2 + $0x164] sm:$0xf] %vm2537, %v4622
    %4778 = vst.msk [vmem:[#allocation2 + $0x16c] sm:$0x3] %vm2539, %v4623
    %4779 = vst.msk [vmem:[#allocation2 + $0x174] sm:$0xf] %vm2537, %v4627
    %4780 = vst.msk [vmem:[#allocation2 + $0x17c] sm:$0x3] %vm2539, %v4628
    %4781 = vst.msk [vmem:[#allocation2 + $0x184] sm:$0xf] %vm2537, %v4632
    %4782 = vst.msk [vmem:[#allocation2 + $0x18c] sm:$0x3] %vm2539, %v4633
    %4783 = vst.msk [vmem:[#allocation2 + $0x194] sm:$0xf] %vm2537, %v4637
    %4784 = vst.msk [vmem:[#allocation2 + $0x19c] sm:$0x3] %vm2539, %v4638
    %4785 = vst.msk [vmem:[#allocation2 + $0x1a4] sm:$0xf] %vm2537, %v4642
    %4786 = vst.msk [vmem:[#allocation2 + $0x1ac] sm:$0x3] %vm2539, %v4643
    %4787 = vst.msk [vmem:[#allocation2 + $0x1b4] sm:$0xf] %vm2537, %v4647
    %4788 = vst.msk [vmem:[#allocation2 + $0x1bc] sm:$0x3] %vm2539, %v4648
    %4789 = vst.msk [vmem:[#allocation2 + $0x1c4] sm:$0xf] %vm2537, %v4652
    %4790 = vst.msk [vmem:[#allocation2 + $0x1cc] sm:$0x3] %vm2539, %v4653
    %4791 = vst.msk [vmem:[#allocation2 + $0x1d4] sm:$0xf] %vm2537, %v4657
    %4792 = vst.msk [vmem:[#allocation2 + $0x1dc] sm:$0x3] %vm2539, %v4658
    %4793 = vst.msk [vmem:[#allocation2 + $0x1e4] sm:$0xf] %vm2537, %v4662
    %4794 = vst.msk [vmem:[#allocation2 + $0x1ec] sm:$0x3] %vm2539, %v4663
    %4795 = vst.msk [vmem:[#allocation2 + $0x1f4] sm:$0xf] %vm2537, %v4667
    %4796 = vst.msk [vmem:[#allocation2 + $0x1fc] sm:$0x3] %vm2539, %v4668
    %v4797 = vld [vmem:[#allocation2] sm:$0xff]
    %v4798 = vld [vmem:[#allocation2 + $0x8] sm:$0xff]
    %v4799 = vld [vmem:[#allocation2 + $0x10] sm:$0xff]
    %v4800 = vld [vmem:[#allocation2 + $0x18] sm:$0xff]
    %v4801 = vld [vmem:[#allocation2 + $0x20] sm:$0xff]
    %v4802 = vld [vmem:[#allocation2 + $0x28] sm:$0xff]
    %v4803 = vld [vmem:[#allocation2 + $0x30] sm:$0xff]
    %v4804 = vld [vmem:[#allocation2 + $0x38] sm:$0xff]
    %v4805 = vld [vmem:[#allocation2 + $0x40] sm:$0xff]
    %v4806 = vld [vmem:[#allocation2 + $0x48] sm:$0xff]
    %v4807 = vld [vmem:[#allocation2 + $0x50] sm:$0xff]
    %v4808 = vld [vmem:[#allocation2 + $0x58] sm:$0xff]
    %v4809 = vld [vmem:[#allocation2 + $0x60] sm:$0xff]
    %v4810 = vld [vmem:[#allocation2 + $0x68] sm:$0xff]
    %v4811 = vld [vmem:[#allocation2 + $0x70] sm:$0xff]
    %v4812 = vld [vmem:[#allocation2 + $0x78] sm:$0xff]
    %v4813 = vld [vmem:[#allocation2 + $0x80] sm:$0xff]
    %v4814 = vld [vmem:[#allocation2 + $0x88] sm:$0xff]
    %v4815 = vld [vmem:[#allocation2 + $0x90] sm:$0xff]
    %v4816 = vld [vmem:[#allocation2 + $0x98] sm:$0xff]
    %v4817 = vld [vmem:[#allocation2 + $0xa0] sm:$0xff]
    %v4818 = vld [vmem:[#allocation2 + $0xa8] sm:$0xff]
    %v4819 = vld [vmem:[#allocation2 + $0xb0] sm:$0xff]
    %v4820 = vld [vmem:[#allocation2 + $0xb8] sm:$0xff]
    %v4821 = vld [vmem:[#allocation2 + $0x100] sm:$0xff]
    %v4822 = vld [vmem:[#allocation2 + $0x108] sm:$0xff]
    %v4823 = vld [vmem:[#allocation2 + $0x110] sm:$0xff]
    %v4824 = vld [vmem:[#allocation2 + $0x118] sm:$0xff]
    %v4825 = vld [vmem:[#allocation2 + $0x120] sm:$0xff]
    %v4826 = vld [vmem:[#allocation2 + $0x128] sm:$0xff]
    %v4827 = vld [vmem:[#allocation2 + $0x130] sm:$0xff]
    %v4828 = vld [vmem:[#allocation2 + $0x138] sm:$0xff]
    %v4829 = vld [vmem:[#allocation2 + $0x140] sm:$0xff]
    %v4830 = vld [vmem:[#allocation2 + $0x148] sm:$0xff]
    %v4831 = vld [vmem:[#allocation2 + $0x150] sm:$0xff]
    %v4832 = vld [vmem:[#allocation2 + $0x158] sm:$0xff]
    %v4833 = vld [vmem:[#allocation2 + $0x160] sm:$0xff]
    %v4834 = vld [vmem:[#allocation2 + $0x168] sm:$0xff]
    %v4835 = vld [vmem:[#allocation2 + $0x170] sm:$0xff]
    %v4836 = vld [vmem:[#allocation2 + $0x178] sm:$0xff]
    %v4837 = vld [vmem:[#allocation2 + $0x180] sm:$0xff]
    %v4838 = vld [vmem:[#allocation2 + $0x188] sm:$0xff]
    %v4839 = vld [vmem:[#allocation2 + $0x190] sm:$0xff]
    %v4840 = vld [vmem:[#allocation2 + $0x198] sm:$0xff]
    %v4841 = vld [vmem:[#allocation2 + $0x1a0] sm:$0xff]
    %v4842 = vld [vmem:[#allocation2 + $0x1a8] sm:$0xff]
    %v4843 = vld [vmem:[#allocation2 + $0x1b0] sm:$0xff]
    %v4844 = vld [vmem:[#allocation2 + $0x1b8] sm:$0xff]
    %v4845 = vld [vmem:[%s3] sm:$0xf]
    %v4846 = vld [vmem:[%s3 + $0x4] sm:$0xf]
    %v4847 = vld [vmem:[%s3 + $0x8] sm:$0xf]
    %v4848 = vld [vmem:[%s3 + $0xc] sm:$0xf]
    %v4849 = vld [vmem:[%s3 + $0x10] sm:$0xf]
    %v4850 = vld [vmem:[%s3 + $0x14] sm:$0xf]
    %v4851 = vld [vmem:[%s3 + $0x18] sm:$0xf]
    %v4852 = vld [vmem:[%s3 + $0x1c] sm:$0xf]
    %v4853 = vld [vmem:[%s3 + $0x20] sm:$0xf]
    %v4854 = vld [vmem:[%s3 + $0x24] sm:$0xf]
    %v4855 = vld [vmem:[%s3 + $0x28] sm:$0xf]
    %v4856 = vld [vmem:[%s3 + $0x2c] sm:$0xf]
    %v4857 = vld [vmem:[%s3 + $0x30] sm:$0xf]
    %v4858 = vld [vmem:[%s3 + $0x34] sm:$0xf]
    %v4859 = vld [vmem:[%s3 + $0x38] sm:$0xf]
    %v4860 = vld [vmem:[%s3 + $0x3c] sm:$0xf]
    %v4861 = vld [vmem:[%s3 + $0x40] sm:$0xf]
    %v4862 = vld [vmem:[%s3 + $0x44] sm:$0xf]
    %v4863 = vld [vmem:[%s3 + $0x48] sm:$0xf]
    %v4864 = vld [vmem:[%s3 + $0x4c] sm:$0xf]
    %s4865 = scalar_lea.vmem [#allocation2], 16
    %v4866 = vld [vmem:[%s4865] sm:$0xff]
    %v4867 = vld [vmem:[%s4865 + $0x8] sm:$0xff]
    %v4868 = vld [vmem:[%s4865 + $0x10] sm:$0xff]
    %v4869 = vld [vmem:[%s4865 + $0x18] sm:$0xff]
    %v4870 = vld [vmem:[%s4865 + $0x20] sm:$0xff]
    %v4871 = vld [vmem:[%s4865 + $0x28] sm:$0xff]
    %v4872 = vld [vmem:[%s4865 + $0x30] sm:$0xff]
    %v4873 = vld [vmem:[%s4865 + $0x38] sm:$0xff]
    %v4874 = vld [vmem:[%s4865 + $0x40] sm:$0xff]
    %v4875 = vld [vmem:[%s4865 + $0x48] sm:$0xff]
    %v4876 = vld [vmem:[%s4865 + $0x50] sm:$0xff]
    %v4877 = vld [vmem:[%s4865 + $0x58] sm:$0xff]
    %v4878 = vld [vmem:[%s4865 + $0x60] sm:$0xff]
    %v4879 = vld [vmem:[%s4865 + $0x68] sm:$0xff]
    %v4880 = vld [vmem:[%s4865 + $0x70] sm:$0xff]
    %v4881 = vld [vmem:[%s4865 + $0x78] sm:$0xff]
    %v4882 = vld [vmem:[%s4865 + $0x80] sm:$0xff]
    %v4883 = vld [vmem:[%s4865 + $0x88] sm:$0xff]
    %v4884 = vld [vmem:[%s4865 + $0x90] sm:$0xff]
    %v4885 = vld [vmem:[%s4865 + $0x98] sm:$0xff]
    %v4886 = vld [vmem:[%s4865 + $0xa0] sm:$0xff]
    %v4887 = vld [vmem:[%s4865 + $0xa8] sm:$0xff]
    %v4888 = vld [vmem:[%s4865 + $0xb0] sm:$0xff]
    %v4889 = vld [vmem:[%s4865 + $0xb8] sm:$0xff]
    %v4890 = vld [vmem:[%s4865 + $0x100] sm:$0xff]
    %v4891 = vld [vmem:[%s4865 + $0x108] sm:$0xff]
    %v4892 = vld [vmem:[%s4865 + $0x110] sm:$0xff]
    %v4893 = vld [vmem:[%s4865 + $0x118] sm:$0xff]
    %v4894 = vld [vmem:[%s4865 + $0x120] sm:$0xff]
    %v4895 = vld [vmem:[%s4865 + $0x128] sm:$0xff]
    %v4896 = vld [vmem:[%s4865 + $0x130] sm:$0xff]
    %v4897 = vld [vmem:[%s4865 + $0x138] sm:$0xff]
    %v4898 = vld [vmem:[%s4865 + $0x140] sm:$0xff]
    %v4899 = vld [vmem:[%s4865 + $0x148] sm:$0xff]
    %v4900 = vld [vmem:[%s4865 + $0x150] sm:$0xff]
    %v4901 = vld [vmem:[%s4865 + $0x158] sm:$0xff]
    %v4902 = vld [vmem:[%s4865 + $0x160] sm:$0xff]
    %v4903 = vld [vmem:[%s4865 + $0x168] sm:$0xff]
    %v4904 = vld [vmem:[%s4865 + $0x170] sm:$0xff]
    %v4905 = vld [vmem:[%s4865 + $0x178] sm:$0xff]
    %v4906 = vld [vmem:[%s4865 + $0x180] sm:$0xff]
    %v4907 = vld [vmem:[%s4865 + $0x188] sm:$0xff]
    %v4908 = vld [vmem:[%s4865 + $0x190] sm:$0xff]
    %v4909 = vld [vmem:[%s4865 + $0x198] sm:$0xff]
    %v4910 = vld [vmem:[%s4865 + $0x1a0] sm:$0xff]
    %v4911 = vld [vmem:[%s4865 + $0x1a8] sm:$0xff]
    %v4912 = vld [vmem:[%s4865 + $0x1b0] sm:$0xff]
    %v4913 = vld [vmem:[%s4865 + $0x1b8] sm:$0xff]
    %s4914 = scalar_lea.vmem %s3, 80
    %v4915 = vld [vmem:[%s4914] sm:$0xf]
    %v4916 = vld [vmem:[%s4914 + $0x4] sm:$0xf]
    %v4917 = vld [vmem:[%s4914 + $0x8] sm:$0xf]
    %v4918 = vld [vmem:[%s4914 + $0xc] sm:$0xf]
    %v4919 = vld [vmem:[%s4914 + $0x10] sm:$0xf]
    %v4920 = vld [vmem:[%s4914 + $0x14] sm:$0xf]
    %v4921 = vld [vmem:[%s4914 + $0x18] sm:$0xf]
    %v4922 = vld [vmem:[%s4914 + $0x1c] sm:$0xf]
    %v4923 = vld [vmem:[%s4914 + $0x20] sm:$0xf]
    %v4924 = vld [vmem:[%s4914 + $0x24] sm:$0xf]
    %v4925 = vld [vmem:[%s4914 + $0x28] sm:$0xf]
    %v4926 = vld [vmem:[%s4914 + $0x2c] sm:$0xf]
    %v4927 = vld [vmem:[%s4914 + $0x30] sm:$0xf]
    %v4928 = vld [vmem:[%s4914 + $0x34] sm:$0xf]
    %v4929 = vld [vmem:[%s4914 + $0x38] sm:$0xf]
    %v4930 = vld [vmem:[%s4914 + $0x3c] sm:$0xf]
    %v4931 = vld [vmem:[%s4914 + $0x40] sm:$0xf]
    %v4932 = vld [vmem:[%s4914 + $0x44] sm:$0xf]
    %v4933 = vld [vmem:[%s4914 + $0x48] sm:$0xf]
    %v4934 = vld [vmem:[%s4914 + $0x4c] sm:$0xf]
    %v4983 = vunpack.c.l.b16 %v4866
    %v4984 = vunpack.c.h.b16 %v4866
    %v4985 = vunpack.c.l.b16 %v4867
    %v4986 = vunpack.c.h.b16 %v4867
    %v4987 = vunpack.c.l.b16 %v4868
    %v4988 = vunpack.c.h.b16 %v4868
    %v4989 = vunpack.c.l.b16 %v4869
    %v4990 = vunpack.c.h.b16 %v4869
    %v4991 = vunpack.c.l.b16 %v4870
    %v4992 = vunpack.c.h.b16 %v4870
    %v4993 = vunpack.c.l.b16 %v4871
    %v4994 = vunpack.c.h.b16 %v4871
    %v4995 = vunpack.c.l.b16 %v4872
    %v4996 = vunpack.c.h.b16 %v4872
    %v4997 = vunpack.c.l.b16 %v4873
    %v4998 = vunpack.c.h.b16 %v4873
    %v4999 = vunpack.c.l.b16 %v4874
    %v5000 = vunpack.c.h.b16 %v4874
    %v5001 = vunpack.c.l.b16 %v4875
    %v5002 = vunpack.c.h.b16 %v4875
    %v5003 = vunpack.c.l.b16 %v4876
    %v5004 = vunpack.c.h.b16 %v4876
    %v5005 = vunpack.c.l.b16 %v4877
    %v5006 = vunpack.c.h.b16 %v4877
    %v5007 = vunpack.c.l.b16 %v4878
    %v5008 = vunpack.c.h.b16 %v4878
    %v5009 = vunpack.c.l.b16 %v4879
    %v5010 = vunpack.c.h.b16 %v4879
    %v5011 = vunpack.c.l.b16 %v4880
    %v5012 = vunpack.c.h.b16 %v4880
    %v5013 = vunpack.c.l.b16 %v4881
    %v5014 = vunpack.c.h.b16 %v4881
    %v5015 = vunpack.c.l.b16 %v4882
    %v5016 = vunpack.c.h.b16 %v4882
    %v5017 = vunpack.c.l.b16 %v4883
    %v5018 = vunpack.c.h.b16 %v4883
    %v5019 = vunpack.c.l.b16 %v4884
    %v5020 = vunpack.c.h.b16 %v4884
    %v5021 = vunpack.c.l.b16 %v4885
    %v5022 = vunpack.c.h.b16 %v4885
    %v5023 = vunpack.c.l.b16 %v4886
    %v5024 = vunpack.c.h.b16 %v4886
    %v5025 = vunpack.c.l.b16 %v4887
    %v5026 = vunpack.c.h.b16 %v4887
    %v5027 = vunpack.c.l.b16 %v4888
    %v5028 = vunpack.c.h.b16 %v4888
    %v5029 = vunpack.c.l.b16 %v4889
    %v5030 = vunpack.c.h.b16 %v4889
    %v5031 = vunpack.c.l.b16 %v4890
    %v5032 = vunpack.c.h.b16 %v4890
    %v5033 = vunpack.c.l.b16 %v4891
    %v5034 = vunpack.c.h.b16 %v4891
    %v5035 = vunpack.c.l.b16 %v4892
    %v5036 = vunpack.c.h.b16 %v4892
    %v5037 = vunpack.c.l.b16 %v4893
    %v5038 = vunpack.c.h.b16 %v4893
    %v5039 = vunpack.c.l.b16 %v4894
    %v5040 = vunpack.c.h.b16 %v4894
    %v5041 = vunpack.c.l.b16 %v4895
    %v5042 = vunpack.c.h.b16 %v4895
    %v5043 = vunpack.c.l.b16 %v4896
    %v5044 = vunpack.c.h.b16 %v4896
    %v5045 = vunpack.c.l.b16 %v4897
    %v5046 = vunpack.c.h.b16 %v4897
    %v5047 = vunpack.c.l.b16 %v4898
    %v5048 = vunpack.c.h.b16 %v4898
    %v5049 = vunpack.c.l.b16 %v4899
    %v5050 = vunpack.c.h.b16 %v4899
    %v5051 = vunpack.c.l.b16 %v4900
    %v5052 = vunpack.c.h.b16 %v4900
    %v5053 = vunpack.c.l.b16 %v4901
    %v5054 = vunpack.c.h.b16 %v4901
    %v5055 = vunpack.c.l.b16 %v4902
    %v5056 = vunpack.c.h.b16 %v4902
    %v5057 = vunpack.c.l.b16 %v4903
    %v5058 = vunpack.c.h.b16 %v4903
    %v5059 = vunpack.c.l.b16 %v4904
    %v5060 = vunpack.c.h.b16 %v4904
    %v5061 = vunpack.c.l.b16 %v4905
    %v5062 = vunpack.c.h.b16 %v4905
    %v5063 = vunpack.c.l.b16 %v4906
    %v5064 = vunpack.c.h.b16 %v4906
    %v5065 = vunpack.c.l.b16 %v4907
    %v5066 = vunpack.c.h.b16 %v4907
    %v5067 = vunpack.c.l.b16 %v4908
    %v5068 = vunpack.c.h.b16 %v4908
    %v5069 = vunpack.c.l.b16 %v4909
    %v5070 = vunpack.c.h.b16 %v4909
    %v5071 = vunpack.c.l.b16 %v4910
    %v5072 = vunpack.c.h.b16 %v4910
    %v5073 = vunpack.c.l.b16 %v4911
    %v5074 = vunpack.c.h.b16 %v4911
    %v5075 = vunpack.c.l.b16 %v4912
    %v5076 = vunpack.c.h.b16 %v4912
    %v5077 = vunpack.c.l.b16 %v4913
    %v5078 = vunpack.c.h.b16 %v4913
    %v5079 = vpack.c.b16 %v4985, %v4983
    %v5080 = vpack.c.b16 %v4986, %v4984
    %v5081 = vpack.c.b16 %v4989, %v4987
    %v5082 = vpack.c.b16 %v4990, %v4988
    %v5083 = vpack.c.b16 %v4993, %v4991
    %v5084 = vpack.c.b16 %v4994, %v4992
    %v5085 = vpack.c.b16 %v4997, %v4995
    %v5086 = vpack.c.b16 %v4998, %v4996
    %v5087 = vpack.c.b16 %v5001, %v4999
    %v5088 = vpack.c.b16 %v5002, %v5000
    %v5089 = vpack.c.b16 %v5005, %v5003
    %v5090 = vpack.c.b16 %v5006, %v5004
    %v5091 = vpack.c.b16 %v5009, %v5007
    %v5092 = vpack.c.b16 %v5010, %v5008
    %v5093 = vpack.c.b16 %v5013, %v5011
    %v5094 = vpack.c.b16 %v5014, %v5012
    %v5095 = vpack.c.b16 %v5017, %v5015
    %v5096 = vpack.c.b16 %v5018, %v5016
    %v5097 = vpack.c.b16 %v5021, %v5019
    %v5098 = vpack.c.b16 %v5022, %v5020
    %v5099 = vpack.c.b16 %v5025, %v5023
    %v5100 = vpack.c.b16 %v5026, %v5024
    %v5101 = vpack.c.b16 %v5029, %v5027
    %v5102 = vpack.c.b16 %v5030, %v5028
    %v5103 = vpack.c.b16 %v5033, %v5031
    %v5104 = vpack.c.b16 %v5034, %v5032
    %v5105 = vpack.c.b16 %v5037, %v5035
    %v5106 = vpack.c.b16 %v5038, %v5036
    %v5107 = vpack.c.b16 %v5041, %v5039
    %v5108 = vpack.c.b16 %v5042, %v5040
    %v5109 = vpack.c.b16 %v5045, %v5043
    %v5110 = vpack.c.b16 %v5046, %v5044
    %v5111 = vpack.c.b16 %v5049, %v5047
    %v5112 = vpack.c.b16 %v5050, %v5048
    %v5113 = vpack.c.b16 %v5053, %v5051
    %v5114 = vpack.c.b16 %v5054, %v5052
    %v5115 = vpack.c.b16 %v5057, %v5055
    %v5116 = vpack.c.b16 %v5058, %v5056
    %v5117 = vpack.c.b16 %v5061, %v5059
    %v5118 = vpack.c.b16 %v5062, %v5060
    %v5119 = vpack.c.b16 %v5065, %v5063
    %v5120 = vpack.c.b16 %v5066, %v5064
    %v5121 = vpack.c.b16 %v5069, %v5067
    %v5122 = vpack.c.b16 %v5070, %v5068
    %v5123 = vpack.c.b16 %v5073, %v5071
    %v5124 = vpack.c.b16 %v5074, %v5072
    %v5125 = vpack.c.b16 %v5077, %v5075
    %v5126 = vpack.c.b16 %v5078, %v5076
    %v5171 = vunpack.c.l.b16 %v4915
    %v5172 = vunpack.c.l.b16 %v4916
    %v5173 = vunpack.c.l.b16 %v4917
    %v5174 = vunpack.c.l.b16 %v4918
    %v5175 = vunpack.c.l.b16 %v4919
    %v5176 = vunpack.c.l.b16 %v4920
    %v5177 = vunpack.c.l.b16 %v4921
    %v5178 = vunpack.c.l.b16 %v4922
    %v5179 = vunpack.c.l.b16 %v4923
    %v5180 = vunpack.c.l.b16 %v4924
    %v5181 = vunpack.c.l.b16 %v4925
    %v5182 = vunpack.c.l.b16 %v4926
    %v5183 = vunpack.c.l.b16 %v4927
    %v5184 = vunpack.c.l.b16 %v4928
    %v5185 = vunpack.c.l.b16 %v4929
    %v5186 = vunpack.c.l.b16 %v4930
    %v5187 = vunpack.c.l.b16 %v4931
    %v5188 = vunpack.c.l.b16 %v4932
    %v5189 = vunpack.c.l.b16 %v4933
    %v5190 = vunpack.c.l.b16 %v4934
    %v5191 = vpack.c.b16 %v5172, %v5171
    %v5192 = vpack.c.b16 %v5174, %v5173
    %v5193 = vpack.c.b16 %v5176, %v5175
    %v5194 = vpack.c.b16 %v5178, %v5177
    %v5195 = vpack.c.b16 %v5180, %v5179
    %v5196 = vpack.c.b16 %v5182, %v5181
    %v5197 = vpack.c.b16 %v5184, %v5183
    %v5198 = vpack.c.b16 %v5186, %v5185
    %v5199 = vpack.c.b16 %v5188, %v5187
    %v5200 = vpack.c.b16 %v5190, %v5189
    %v5212 = vsel %vm956, %v5080, 0
    %v5215 = vsel %vm956, %v5082, 0
    %v5218 = vsel %vm956, %v5084, 0
    %v5221 = vsel %vm956, %v5086, 0
    %v5224 = vsel %vm956, %v5088, 0
    %v5227 = vsel %vm956, %v5090, 0
    %v5230 = vsel %vm956, %v5092, 0
    %v5233 = vsel %vm956, %v5094, 0
    %v5236 = vsel %vm956, %v5096, 0
    %v5239 = vsel %vm956, %v5098, 0
    %v5242 = vsel %vm956, %v5100, 0
    %v5245 = vsel %vm956, %v5102, 0
    %v5248 = vsel %vm956, %v5104, 0
    %v5251 = vsel %vm956, %v5106, 0
    %v5254 = vsel %vm956, %v5108, 0
    %v5257 = vsel %vm956, %v5110, 0
    %v5260 = vsel %vm956, %v5112, 0
    %v5263 = vsel %vm956, %v5114, 0
    %v5266 = vsel %vm956, %v5116, 0
    %v5269 = vsel %vm956, %v5118, 0
    %v5272 = vsel %vm956, %v5120, 0
    %v5275 = vsel %vm956, %v5122, 0
    %v5278 = vsel %vm956, %v5124, 0
    %v5281 = vsel %vm956, %v5126, 0
    %5283 = vmatpush.bf16.msra.mxu0 %v5198
    %5284 = vmatpush.bf16.msra.mxu0 %v5197
    %5285 = vmatpush.bf16.msra.mxu0 %v5196
    %5286 = vmatpush.bf16.msra.mxu0 %v5195
    %5287 = vmatpush.bf16.msra.mxu0 %v5194
    %5288 = vmatpush.bf16.msra.mxu0 %v5193
    %5289 = vmatpush.bf16.msra.mxu0 %v5192
    %5290 = vmatpush.bf16.msra.mxu0 %v5191
    %5291 = vmatmul.bf16.gmra.mxu0 %v5079
    %v5292 = vpop.f32.mrf.mxu0
    %v5293 = vadd.f32 0.0, %v5292
    %v5294 = vpop.f32.mrf.mxu0
    %v5295 = vadd.f32 0.0, %v5294
    %5296 = vmatmul.bf16.gmra.mxu0 %v5081
    %v5297 = vpop.f32.mrf.mxu0
    %v5298 = vadd.f32 0.0, %v5297
    %v5299 = vpop.f32.mrf.mxu0
    %v5300 = vadd.f32 0.0, %v5299
    %5301 = vmatmul.bf16.gmra.mxu0 %v5083
    %v5302 = vpop.f32.mrf.mxu0
    %v5303 = vadd.f32 0.0, %v5302
    %v5304 = vpop.f32.mrf.mxu0
    %v5305 = vadd.f32 0.0, %v5304
    %5306 = vmatmul.bf16.gmra.mxu0 %v5085
    %v5307 = vpop.f32.mrf.mxu0
    %v5308 = vadd.f32 0.0, %v5307
    %v5309 = vpop.f32.mrf.mxu0
    %v5310 = vadd.f32 0.0, %v5309
    %5311 = vmatmul.bf16.gmra.mxu0 %v5087
    %v5312 = vpop.f32.mrf.mxu0
    %v5313 = vadd.f32 0.0, %v5312
    %v5314 = vpop.f32.mrf.mxu0
    %v5315 = vadd.f32 0.0, %v5314
    %5316 = vmatmul.bf16.gmra.mxu0 %v5089
    %v5317 = vpop.f32.mrf.mxu0
    %v5318 = vadd.f32 0.0, %v5317
    %v5319 = vpop.f32.mrf.mxu0
    %v5320 = vadd.f32 0.0, %v5319
    %5321 = vmatmul.bf16.gmra.mxu0 %v5091
    %v5322 = vpop.f32.mrf.mxu0
    %v5323 = vadd.f32 0.0, %v5322
    %v5324 = vpop.f32.mrf.mxu0
    %v5325 = vadd.f32 0.0, %v5324
    %5326 = vmatmul.bf16.gmra.mxu0 %v5093
    %v5327 = vpop.f32.mrf.mxu0
    %v5328 = vadd.f32 0.0, %v5327
    %v5329 = vpop.f32.mrf.mxu0
    %v5330 = vadd.f32 0.0, %v5329
    %5331 = vmatmul.bf16.gmra.mxu0 %v5095
    %v5332 = vpop.f32.mrf.mxu0
    %v5333 = vadd.f32 0.0, %v5332
    %v5334 = vpop.f32.mrf.mxu0
    %v5335 = vadd.f32 0.0, %v5334
    %5336 = vmatmul.bf16.gmra.mxu0 %v5097
    %v5337 = vpop.f32.mrf.mxu0
    %v5338 = vadd.f32 0.0, %v5337
    %v5339 = vpop.f32.mrf.mxu0
    %v5340 = vadd.f32 0.0, %v5339
    %5341 = vmatmul.bf16.gmra.mxu0 %v5099
    %v5342 = vpop.f32.mrf.mxu0
    %v5343 = vadd.f32 0.0, %v5342
    %v5344 = vpop.f32.mrf.mxu0
    %v5345 = vadd.f32 0.0, %v5344
    %5346 = vmatmul.bf16.gmra.mxu0 %v5101
    %v5347 = vpop.f32.mrf.mxu0
    %v5348 = vadd.f32 0.0, %v5347
    %v5349 = vpop.f32.mrf.mxu0
    %v5350 = vadd.f32 0.0, %v5349
    %5351 = vmatmul.bf16.gmra.mxu0 %v5103
    %v5352 = vpop.f32.mrf.mxu0
    %v5353 = vadd.f32 0.0, %v5352
    %v5354 = vpop.f32.mrf.mxu0
    %v5355 = vadd.f32 0.0, %v5354
    %5356 = vmatmul.bf16.gmra.mxu0 %v5105
    %v5357 = vpop.f32.mrf.mxu0
    %v5358 = vadd.f32 0.0, %v5357
    %v5359 = vpop.f32.mrf.mxu0
    %v5360 = vadd.f32 0.0, %v5359
    %5361 = vmatmul.bf16.gmra.mxu0 %v5107
    %v5362 = vpop.f32.mrf.mxu0
    %v5363 = vadd.f32 0.0, %v5362
    %v5364 = vpop.f32.mrf.mxu0
    %v5365 = vadd.f32 0.0, %v5364
    %5366 = vmatmul.bf16.gmra.mxu0 %v5109
    %v5367 = vpop.f32.mrf.mxu0
    %v5368 = vadd.f32 0.0, %v5367
    %v5369 = vpop.f32.mrf.mxu0
    %v5370 = vadd.f32 0.0, %v5369
    %5371 = vmatmul.bf16.gmra.mxu0 %v5111
    %v5372 = vpop.f32.mrf.mxu0
    %v5373 = vadd.f32 0.0, %v5372
    %v5374 = vpop.f32.mrf.mxu0
    %v5375 = vadd.f32 0.0, %v5374
    %5376 = vmatmul.bf16.gmra.mxu0 %v5113
    %v5377 = vpop.f32.mrf.mxu0
    %v5378 = vadd.f32 0.0, %v5377
    %v5379 = vpop.f32.mrf.mxu0
    %v5380 = vadd.f32 0.0, %v5379
    %5381 = vmatmul.bf16.gmra.mxu0 %v5115
    %v5382 = vpop.f32.mrf.mxu0
    %v5383 = vadd.f32 0.0, %v5382
    %v5384 = vpop.f32.mrf.mxu0
    %v5385 = vadd.f32 0.0, %v5384
    %5386 = vmatmul.bf16.gmra.mxu0 %v5117
    %v5387 = vpop.f32.mrf.mxu0
    %v5388 = vadd.f32 0.0, %v5387
    %v5389 = vpop.f32.mrf.mxu0
    %v5390 = vadd.f32 0.0, %v5389
    %5391 = vmatmul.bf16.gmra.mxu0 %v5119
    %v5392 = vpop.f32.mrf.mxu0
    %v5393 = vadd.f32 0.0, %v5392
    %v5394 = vpop.f32.mrf.mxu0
    %v5395 = vadd.f32 0.0, %v5394
    %5396 = vmatmul.bf16.gmra.mxu0 %v5121
    %v5397 = vpop.f32.mrf.mxu0
    %v5398 = vadd.f32 0.0, %v5397
    %v5399 = vpop.f32.mrf.mxu0
    %v5400 = vadd.f32 0.0, %v5399
    %5401 = vmatmul.bf16.gmra.mxu0 %v5123
    %v5402 = vpop.f32.mrf.mxu0
    %v5403 = vadd.f32 0.0, %v5402
    %v5404 = vpop.f32.mrf.mxu0
    %v5405 = vadd.f32 0.0, %v5404
    %5406 = vmatmul.bf16.gmra.mxu0 %v5125
    %v5407 = vpop.f32.mrf.mxu0
    %v5408 = vadd.f32 0.0, %v5407
    %v5409 = vpop.f32.mrf.mxu0
    %v5410 = vadd.f32 0.0, %v5409
    %5411 = vdwg.mxu0
    %5412 = vmatpush.bf16.msra.mxu0 0
    %5413 = vmatpush.bf16.msra.mxu0 0
    %5414 = vmatpush.bf16.msra.mxu0 0
    %5415 = vmatpush.bf16.msra.mxu0 0
    %5416 = vmatpush.bf16.msra.mxu0 0
    %5417 = vmatpush.bf16.msra.mxu0 0
    %5418 = vmatpush.bf16.msra.mxu0 %v5200
    %5419 = vmatpush.bf16.msra.mxu0 %v5199
    %5420 = vmatmul.bf16.gmra.mxu0 %v5212
    %v5421 = vpop.f32.mrf.mxu0
    %v5422 = vadd.f32 %v5293, %v5421
    %v5423 = vpop.f32.mrf.mxu0
    %v5424 = vadd.f32 %v5295, %v5423
    %5425 = vmatmul.bf16.gmra.mxu0 %v5215
    %v5426 = vpop.f32.mrf.mxu0
    %v5427 = vadd.f32 %v5298, %v5426
    %v5428 = vpop.f32.mrf.mxu0
    %v5429 = vadd.f32 %v5300, %v5428
    %5430 = vmatmul.bf16.gmra.mxu0 %v5218
    %v5431 = vpop.f32.mrf.mxu0
    %v5432 = vadd.f32 %v5303, %v5431
    %v5433 = vpop.f32.mrf.mxu0
    %v5434 = vadd.f32 %v5305, %v5433
    %5435 = vmatmul.bf16.gmra.mxu0 %v5221
    %v5436 = vpop.f32.mrf.mxu0
    %v5437 = vadd.f32 %v5308, %v5436
    %v5438 = vpop.f32.mrf.mxu0
    %v5439 = vadd.f32 %v5310, %v5438
    %5440 = vmatmul.bf16.gmra.mxu0 %v5224
    %v5441 = vpop.f32.mrf.mxu0
    %v5442 = vadd.f32 %v5313, %v5441
    %v5443 = vpop.f32.mrf.mxu0
    %v5444 = vadd.f32 %v5315, %v5443
    %5445 = vmatmul.bf16.gmra.mxu0 %v5227
    %v5446 = vpop.f32.mrf.mxu0
    %v5447 = vadd.f32 %v5318, %v5446
    %v5448 = vpop.f32.mrf.mxu0
    %v5449 = vadd.f32 %v5320, %v5448
    %5450 = vmatmul.bf16.gmra.mxu0 %v5230
    %v5451 = vpop.f32.mrf.mxu0
    %v5452 = vadd.f32 %v5323, %v5451
    %v5453 = vpop.f32.mrf.mxu0
    %v5454 = vadd.f32 %v5325, %v5453
    %5455 = vmatmul.bf16.gmra.mxu0 %v5233
    %v5456 = vpop.f32.mrf.mxu0
    %v5457 = vadd.f32 %v5328, %v5456
    %v5458 = vpop.f32.mrf.mxu0
    %v5459 = vadd.f32 %v5330, %v5458
    %5460 = vmatmul.bf16.gmra.mxu0 %v5236
    %v5461 = vpop.f32.mrf.mxu0
    %v5462 = vadd.f32 %v5333, %v5461
    %v5463 = vpop.f32.mrf.mxu0
    %v5464 = vadd.f32 %v5335, %v5463
    %5465 = vmatmul.bf16.gmra.mxu0 %v5239
    %v5466 = vpop.f32.mrf.mxu0
    %v5467 = vadd.f32 %v5338, %v5466
    %v5468 = vpop.f32.mrf.mxu0
    %v5469 = vadd.f32 %v5340, %v5468
    %5470 = vmatmul.bf16.gmra.mxu0 %v5242
    %v5471 = vpop.f32.mrf.mxu0
    %v5472 = vadd.f32 %v5343, %v5471
    %v5473 = vpop.f32.mrf.mxu0
    %v5474 = vadd.f32 %v5345, %v5473
    %5475 = vmatmul.bf16.gmra.mxu0 %v5245
    %v5476 = vpop.f32.mrf.mxu0
    %v5477 = vadd.f32 %v5348, %v5476
    %v5478 = vpop.f32.mrf.mxu0
    %v5479 = vadd.f32 %v5350, %v5478
    %5480 = vmatmul.bf16.gmra.mxu0 %v5248
    %v5481 = vpop.f32.mrf.mxu0
    %v5482 = vadd.f32 %v5353, %v5481
    %v5483 = vpop.f32.mrf.mxu0
    %v5484 = vadd.f32 %v5355, %v5483
    %5485 = vmatmul.bf16.gmra.mxu0 %v5251
    %v5486 = vpop.f32.mrf.mxu0
    %v5487 = vadd.f32 %v5358, %v5486
    %v5488 = vpop.f32.mrf.mxu0
    %v5489 = vadd.f32 %v5360, %v5488
    %5490 = vmatmul.bf16.gmra.mxu0 %v5254
    %v5491 = vpop.f32.mrf.mxu0
    %v5492 = vadd.f32 %v5363, %v5491
    %v5493 = vpop.f32.mrf.mxu0
    %v5494 = vadd.f32 %v5365, %v5493
    %5495 = vmatmul.bf16.gmra.mxu0 %v5257
    %v5496 = vpop.f32.mrf.mxu0
    %v5497 = vadd.f32 %v5368, %v5496
    %v5498 = vpop.f32.mrf.mxu0
    %v5499 = vadd.f32 %v5370, %v5498
    %5500 = vmatmul.bf16.gmra.mxu0 %v5260
    %v5501 = vpop.f32.mrf.mxu0
    %v5502 = vadd.f32 %v5373, %v5501
    %v5503 = vpop.f32.mrf.mxu0
    %v5504 = vadd.f32 %v5375, %v5503
    %5505 = vmatmul.bf16.gmra.mxu0 %v5263
    %v5506 = vpop.f32.mrf.mxu0
    %v5507 = vadd.f32 %v5378, %v5506
    %v5508 = vpop.f32.mrf.mxu0
    %v5509 = vadd.f32 %v5380, %v5508
    %5510 = vmatmul.bf16.gmra.mxu0 %v5266
    %v5511 = vpop.f32.mrf.mxu0
    %v5512 = vadd.f32 %v5383, %v5511
    %v5513 = vpop.f32.mrf.mxu0
    %v5514 = vadd.f32 %v5385, %v5513
    %5515 = vmatmul.bf16.gmra.mxu0 %v5269
    %v5516 = vpop.f32.mrf.mxu0
    %v5517 = vadd.f32 %v5388, %v5516
    %v5518 = vpop.f32.mrf.mxu0
    %v5519 = vadd.f32 %v5390, %v5518
    %5520 = vmatmul.bf16.gmra.mxu0 %v5272
    %v5521 = vpop.f32.mrf.mxu0
    %v5522 = vadd.f32 %v5393, %v5521
    %v5523 = vpop.f32.mrf.mxu0
    %v5524 = vadd.f32 %v5395, %v5523
    %5525 = vmatmul.bf16.gmra.mxu0 %v5275
    %v5526 = vpop.f32.mrf.mxu0
    %v5527 = vadd.f32 %v5398, %v5526
    %v5528 = vpop.f32.mrf.mxu0
    %v5529 = vadd.f32 %v5400, %v5528
    %5530 = vmatmul.bf16.gmra.mxu0 %v5278
    %v5531 = vpop.f32.mrf.mxu0
    %v5532 = vadd.f32 %v5403, %v5531
    %v5533 = vpop.f32.mrf.mxu0
    %v5534 = vadd.f32 %v5405, %v5533
    %5535 = vmatmul.bf16.gmra.mxu0 %v5281
    %v5536 = vpop.f32.mrf.mxu0
    %v5537 = vadd.f32 %v5408, %v5536
    %v5538 = vpop.f32.mrf.mxu0
    %v5539 = vadd.f32 %v5410, %v5538
    %5540 = vdwg.mxu0
    %v5589 = vunpack.c.l.b16 %v4797
    %v5590 = vunpack.c.h.b16 %v4797
    %v5591 = vunpack.c.l.b16 %v4798
    %v5592 = vunpack.c.h.b16 %v4798
    %v5593 = vunpack.c.l.b16 %v4799
    %v5594 = vunpack.c.h.b16 %v4799
    %v5595 = vunpack.c.l.b16 %v4800
    %v5596 = vunpack.c.h.b16 %v4800
    %v5597 = vunpack.c.l.b16 %v4801
    %v5598 = vunpack.c.h.b16 %v4801
    %v5599 = vunpack.c.l.b16 %v4802
    %v5600 = vunpack.c.h.b16 %v4802
    %v5601 = vunpack.c.l.b16 %v4803
    %v5602 = vunpack.c.h.b16 %v4803
    %v5603 = vunpack.c.l.b16 %v4804
    %v5604 = vunpack.c.h.b16 %v4804
    %v5605 = vunpack.c.l.b16 %v4805
    %v5606 = vunpack.c.h.b16 %v4805
    %v5607 = vunpack.c.l.b16 %v4806
    %v5608 = vunpack.c.h.b16 %v4806
    %v5609 = vunpack.c.l.b16 %v4807
    %v5610 = vunpack.c.h.b16 %v4807
    %v5611 = vunpack.c.l.b16 %v4808
    %v5612 = vunpack.c.h.b16 %v4808
    %v5613 = vunpack.c.l.b16 %v4809
    %v5614 = vunpack.c.h.b16 %v4809
    %v5615 = vunpack.c.l.b16 %v4810
    %v5616 = vunpack.c.h.b16 %v4810
    %v5617 = vunpack.c.l.b16 %v4811
    %v5618 = vunpack.c.h.b16 %v4811
    %v5619 = vunpack.c.l.b16 %v4812
    %v5620 = vunpack.c.h.b16 %v4812
    %v5621 = vunpack.c.l.b16 %v4813
    %v5622 = vunpack.c.h.b16 %v4813
    %v5623 = vunpack.c.l.b16 %v4814
    %v5624 = vunpack.c.h.b16 %v4814
    %v5625 = vunpack.c.l.b16 %v4815
    %v5626 = vunpack.c.h.b16 %v4815
    %v5627 = vunpack.c.l.b16 %v4816
    %v5628 = vunpack.c.h.b16 %v4816
    %v5629 = vunpack.c.l.b16 %v4817
    %v5630 = vunpack.c.h.b16 %v4817
    %v5631 = vunpack.c.l.b16 %v4818
    %v5632 = vunpack.c.h.b16 %v4818
    %v5633 = vunpack.c.l.b16 %v4819
    %v5634 = vunpack.c.h.b16 %v4819
    %v5635 = vunpack.c.l.b16 %v4820
    %v5636 = vunpack.c.h.b16 %v4820
    %v5637 = vunpack.c.l.b16 %v4821
    %v5638 = vunpack.c.h.b16 %v4821
    %v5639 = vunpack.c.l.b16 %v4822
    %v5640 = vunpack.c.h.b16 %v4822
    %v5641 = vunpack.c.l.b16 %v4823
    %v5642 = vunpack.c.h.b16 %v4823
    %v5643 = vunpack.c.l.b16 %v4824
    %v5644 = vunpack.c.h.b16 %v4824
    %v5645 = vunpack.c.l.b16 %v4825
    %v5646 = vunpack.c.h.b16 %v4825
    %v5647 = vunpack.c.l.b16 %v4826
    %v5648 = vunpack.c.h.b16 %v4826
    %v5649 = vunpack.c.l.b16 %v4827
    %v5650 = vunpack.c.h.b16 %v4827
    %v5651 = vunpack.c.l.b16 %v4828
    %v5652 = vunpack.c.h.b16 %v4828
    %v5653 = vunpack.c.l.b16 %v4829
    %v5654 = vunpack.c.h.b16 %v4829
    %v5655 = vunpack.c.l.b16 %v4830
    %v5656 = vunpack.c.h.b16 %v4830
    %v5657 = vunpack.c.l.b16 %v4831
    %v5658 = vunpack.c.h.b16 %v4831
    %v5659 = vunpack.c.l.b16 %v4832
    %v5660 = vunpack.c.h.b16 %v4832
    %v5661 = vunpack.c.l.b16 %v4833
    %v5662 = vunpack.c.h.b16 %v4833
    %v5663 = vunpack.c.l.b16 %v4834
    %v5664 = vunpack.c.h.b16 %v4834
    %v5665 = vunpack.c.l.b16 %v4835
    %v5666 = vunpack.c.h.b16 %v4835
    %v5667 = vunpack.c.l.b16 %v4836
    %v5668 = vunpack.c.h.b16 %v4836
    %v5669 = vunpack.c.l.b16 %v4837
    %v5670 = vunpack.c.h.b16 %v4837
    %v5671 = vunpack.c.l.b16 %v4838
    %v5672 = vunpack.c.h.b16 %v4838
    %v5673 = vunpack.c.l.b16 %v4839
    %v5674 = vunpack.c.h.b16 %v4839
    %v5675 = vunpack.c.l.b16 %v4840
    %v5676 = vunpack.c.h.b16 %v4840
    %v5677 = vunpack.c.l.b16 %v4841
    %v5678 = vunpack.c.h.b16 %v4841
    %v5679 = vunpack.c.l.b16 %v4842
    %v5680 = vunpack.c.h.b16 %v4842
    %v5681 = vunpack.c.l.b16 %v4843
    %v5682 = vunpack.c.h.b16 %v4843
    %v5683 = vunpack.c.l.b16 %v4844
    %v5684 = vunpack.c.h.b16 %v4844
    %v5685 = vpack.c.b16 %v5591, %v5589
    %v5686 = vpack.c.b16 %v5592, %v5590
    %v5687 = vpack.c.b16 %v5595, %v5593
    %v5688 = vpack.c.b16 %v5596, %v5594
    %v5689 = vpack.c.b16 %v5599, %v5597
    %v5690 = vpack.c.b16 %v5600, %v5598
    %v5691 = vpack.c.b16 %v5603, %v5601
    %v5692 = vpack.c.b16 %v5604, %v5602
    %v5693 = vpack.c.b16 %v5607, %v5605
    %v5694 = vpack.c.b16 %v5608, %v5606
    %v5695 = vpack.c.b16 %v5611, %v5609
    %v5696 = vpack.c.b16 %v5612, %v5610
    %v5697 = vpack.c.b16 %v5615, %v5613
    %v5698 = vpack.c.b16 %v5616, %v5614
    %v5699 = vpack.c.b16 %v5619, %v5617
    %v5700 = vpack.c.b16 %v5620, %v5618
    %v5701 = vpack.c.b16 %v5623, %v5621
    %v5702 = vpack.c.b16 %v5624, %v5622
    %v5703 = vpack.c.b16 %v5627, %v5625
    %v5704 = vpack.c.b16 %v5628, %v5626
    %v5705 = vpack.c.b16 %v5631, %v5629
    %v5706 = vpack.c.b16 %v5632, %v5630
    %v5707 = vpack.c.b16 %v5635, %v5633
    %v5708 = vpack.c.b16 %v5636, %v5634
    %v5709 = vpack.c.b16 %v5639, %v5637
    %v5710 = vpack.c.b16 %v5640, %v5638
    %v5711 = vpack.c.b16 %v5643, %v5641
    %v5712 = vpack.c.b16 %v5644, %v5642
    %v5713 = vpack.c.b16 %v5647, %v5645
    %v5714 = vpack.c.b16 %v5648, %v5646
    %v5715 = vpack.c.b16 %v5651, %v5649
    %v5716 = vpack.c.b16 %v5652, %v5650
    %v5717 = vpack.c.b16 %v5655, %v5653
    %v5718 = vpack.c.b16 %v5656, %v5654
    %v5719 = vpack.c.b16 %v5659, %v5657
    %v5720 = vpack.c.b16 %v5660, %v5658
    %v5721 = vpack.c.b16 %v5663, %v5661
    %v5722 = vpack.c.b16 %v5664, %v5662
    %v5723 = vpack.c.b16 %v5667, %v5665
    %v5724 = vpack.c.b16 %v5668, %v5666
    %v5725 = vpack.c.b16 %v5671, %v5669
    %v5726 = vpack.c.b16 %v5672, %v5670
    %v5727 = vpack.c.b16 %v5675, %v5673
    %v5728 = vpack.c.b16 %v5676, %v5674
    %v5729 = vpack.c.b16 %v5679, %v5677
    %v5730 = vpack.c.b16 %v5680, %v5678
    %v5731 = vpack.c.b16 %v5683, %v5681
    %v5732 = vpack.c.b16 %v5684, %v5682
    %v5777 = vunpack.c.l.b16 %v4845
    %v5778 = vunpack.c.l.b16 %v4846
    %v5779 = vunpack.c.l.b16 %v4847
    %v5780 = vunpack.c.l.b16 %v4848
    %v5781 = vunpack.c.l.b16 %v4849
    %v5782 = vunpack.c.l.b16 %v4850
    %v5783 = vunpack.c.l.b16 %v4851
    %v5784 = vunpack.c.l.b16 %v4852
    %v5785 = vunpack.c.l.b16 %v4853
    %v5786 = vunpack.c.l.b16 %v4854
    %v5787 = vunpack.c.l.b16 %v4855
    %v5788 = vunpack.c.l.b16 %v4856
    %v5789 = vunpack.c.l.b16 %v4857
    %v5790 = vunpack.c.l.b16 %v4858
    %v5791 = vunpack.c.l.b16 %v4859
    %v5792 = vunpack.c.l.b16 %v4860
    %v5793 = vunpack.c.l.b16 %v4861
    %v5794 = vunpack.c.l.b16 %v4862
    %v5795 = vunpack.c.l.b16 %v4863
    %v5796 = vunpack.c.l.b16 %v4864
    %v5797 = vpack.c.b16 %v5778, %v5777
    %v5798 = vpack.c.b16 %v5780, %v5779
    %v5799 = vpack.c.b16 %v5782, %v5781
    %v5800 = vpack.c.b16 %v5784, %v5783
    %v5801 = vpack.c.b16 %v5786, %v5785
    %v5802 = vpack.c.b16 %v5788, %v5787
    %v5803 = vpack.c.b16 %v5790, %v5789
    %v5804 = vpack.c.b16 %v5792, %v5791
    %v5805 = vpack.c.b16 %v5794, %v5793
    %v5806 = vpack.c.b16 %v5796, %v5795
    %v5818 = vsel %vm956, %v5686, 0
    %v5821 = vsel %vm956, %v5688, 0
    %v5824 = vsel %vm956, %v5690, 0
    %v5827 = vsel %vm956, %v5692, 0
    %v5830 = vsel %vm956, %v5694, 0
    %v5833 = vsel %vm956, %v5696, 0
    %v5836 = vsel %vm956, %v5698, 0
    %v5839 = vsel %vm956, %v5700, 0
    %v5842 = vsel %vm956, %v5702, 0
    %v5845 = vsel %vm956, %v5704, 0
    %v5848 = vsel %vm956, %v5706, 0
    %v5851 = vsel %vm956, %v5708, 0
    %v5854 = vsel %vm956, %v5710, 0
    %v5857 = vsel %vm956, %v5712, 0
    %v5860 = vsel %vm956, %v5714, 0
    %v5863 = vsel %vm956, %v5716, 0
    %v5866 = vsel %vm956, %v5718, 0
    %v5869 = vsel %vm956, %v5720, 0
    %v5872 = vsel %vm956, %v5722, 0
    %v5875 = vsel %vm956, %v5724, 0
    %v5878 = vsel %vm956, %v5726, 0
    %v5881 = vsel %vm956, %v5728, 0
    %v5884 = vsel %vm956, %v5730, 0
    %v5887 = vsel %vm956, %v5732, 0
    %5889 = vmatpush.bf16.msra.mxu0 %v5804
    %5890 = vmatpush.bf16.msra.mxu0 %v5803
    %5891 = vmatpush.bf16.msra.mxu0 %v5802
    %5892 = vmatpush.bf16.msra.mxu0 %v5801
    %5893 = vmatpush.bf16.msra.mxu0 %v5800
    %5894 = vmatpush.bf16.msra.mxu0 %v5799
    %5895 = vmatpush.bf16.msra.mxu0 %v5798
    %5896 = vmatpush.bf16.msra.mxu0 %v5797
    %5897 = vmatmul.bf16.gmra.mxu0 %v5685
    %v5898 = vpop.f32.mrf.mxu0
    %v5899 = vadd.f32 %v5422, %v5898
    %v5900 = vpop.f32.mrf.mxu0
    %v5901 = vadd.f32 %v5424, %v5900
    %5902 = vmatmul.bf16.gmra.mxu0 %v5687
    %v5903 = vpop.f32.mrf.mxu0
    %v5904 = vadd.f32 %v5427, %v5903
    %v5905 = vpop.f32.mrf.mxu0
    %v5906 = vadd.f32 %v5429, %v5905
    %5907 = vmatmul.bf16.gmra.mxu0 %v5689
    %v5908 = vpop.f32.mrf.mxu0
    %v5909 = vadd.f32 %v5432, %v5908
    %v5910 = vpop.f32.mrf.mxu0
    %v5911 = vadd.f32 %v5434, %v5910
    %5912 = vmatmul.bf16.gmra.mxu0 %v5691
    %v5913 = vpop.f32.mrf.mxu0
    %v5914 = vadd.f32 %v5437, %v5913
    %v5915 = vpop.f32.mrf.mxu0
    %v5916 = vadd.f32 %v5439, %v5915
    %5917 = vmatmul.bf16.gmra.mxu0 %v5693
    %v5918 = vpop.f32.mrf.mxu0
    %v5919 = vadd.f32 %v5442, %v5918
    %v5920 = vpop.f32.mrf.mxu0
    %v5921 = vadd.f32 %v5444, %v5920
    %5922 = vmatmul.bf16.gmra.mxu0 %v5695
    %v5923 = vpop.f32.mrf.mxu0
    %v5924 = vadd.f32 %v5447, %v5923
    %v5925 = vpop.f32.mrf.mxu0
    %v5926 = vadd.f32 %v5449, %v5925
    %5927 = vmatmul.bf16.gmra.mxu0 %v5697
    %v5928 = vpop.f32.mrf.mxu0
    %v5929 = vadd.f32 %v5452, %v5928
    %v5930 = vpop.f32.mrf.mxu0
    %v5931 = vadd.f32 %v5454, %v5930
    %5932 = vmatmul.bf16.gmra.mxu0 %v5699
    %v5933 = vpop.f32.mrf.mxu0
    %v5934 = vadd.f32 %v5457, %v5933
    %v5935 = vpop.f32.mrf.mxu0
    %v5936 = vadd.f32 %v5459, %v5935
    %5937 = vmatmul.bf16.gmra.mxu0 %v5701
    %v5938 = vpop.f32.mrf.mxu0
    %v5939 = vadd.f32 %v5462, %v5938
    %v5940 = vpop.f32.mrf.mxu0
    %v5941 = vadd.f32 %v5464, %v5940
    %5942 = vmatmul.bf16.gmra.mxu0 %v5703
    %v5943 = vpop.f32.mrf.mxu0
    %v5944 = vadd.f32 %v5467, %v5943
    %v5945 = vpop.f32.mrf.mxu0
    %v5946 = vadd.f32 %v5469, %v5945
    %5947 = vmatmul.bf16.gmra.mxu0 %v5705
    %v5948 = vpop.f32.mrf.mxu0
    %v5949 = vadd.f32 %v5472, %v5948
    %v5950 = vpop.f32.mrf.mxu0
    %v5951 = vadd.f32 %v5474, %v5950
    %5952 = vmatmul.bf16.gmra.mxu0 %v5707
    %v5953 = vpop.f32.mrf.mxu0
    %v5954 = vadd.f32 %v5477, %v5953
    %v5955 = vpop.f32.mrf.mxu0
    %v5956 = vadd.f32 %v5479, %v5955
    %5957 = vmatmul.bf16.gmra.mxu0 %v5709
    %v5958 = vpop.f32.mrf.mxu0
    %v5959 = vadd.f32 %v5482, %v5958
    %v5960 = vpop.f32.mrf.mxu0
    %v5961 = vadd.f32 %v5484, %v5960
    %5962 = vmatmul.bf16.gmra.mxu0 %v5711
    %v5963 = vpop.f32.mrf.mxu0
    %v5964 = vadd.f32 %v5487, %v5963
    %v5965 = vpop.f32.mrf.mxu0
    %v5966 = vadd.f32 %v5489, %v5965
    %5967 = vmatmul.bf16.gmra.mxu0 %v5713
    %v5968 = vpop.f32.mrf.mxu0
    %v5969 = vadd.f32 %v5492, %v5968
    %v5970 = vpop.f32.mrf.mxu0
    %v5971 = vadd.f32 %v5494, %v5970
    %5972 = vmatmul.bf16.gmra.mxu0 %v5715
    %v5973 = vpop.f32.mrf.mxu0
    %v5974 = vadd.f32 %v5497, %v5973
    %v5975 = vpop.f32.mrf.mxu0
    %v5976 = vadd.f32 %v5499, %v5975
    %5977 = vmatmul.bf16.gmra.mxu0 %v5717
    %v5978 = vpop.f32.mrf.mxu0
    %v5979 = vadd.f32 %v5502, %v5978
    %v5980 = vpop.f32.mrf.mxu0
    %v5981 = vadd.f32 %v5504, %v5980
    %5982 = vmatmul.bf16.gmra.mxu0 %v5719
    %v5983 = vpop.f32.mrf.mxu0
    %v5984 = vadd.f32 %v5507, %v5983
    %v5985 = vpop.f32.mrf.mxu0
    %v5986 = vadd.f32 %v5509, %v5985
    %5987 = vmatmul.bf16.gmra.mxu0 %v5721
    %v5988 = vpop.f32.mrf.mxu0
    %v5989 = vadd.f32 %v5512, %v5988
    %v5990 = vpop.f32.mrf.mxu0
    %v5991 = vadd.f32 %v5514, %v5990
    %5992 = vmatmul.bf16.gmra.mxu0 %v5723
    %v5993 = vpop.f32.mrf.mxu0
    %v5994 = vadd.f32 %v5517, %v5993
    %v5995 = vpop.f32.mrf.mxu0
    %v5996 = vadd.f32 %v5519, %v5995
    %5997 = vmatmul.bf16.gmra.mxu0 %v5725
    %v5998 = vpop.f32.mrf.mxu0
    %v5999 = vadd.f32 %v5522, %v5998
    %v6000 = vpop.f32.mrf.mxu0
    %v6001 = vadd.f32 %v5524, %v6000
    %6002 = vmatmul.bf16.gmra.mxu0 %v5727
    %v6003 = vpop.f32.mrf.mxu0
    %v6004 = vadd.f32 %v5527, %v6003
    %v6005 = vpop.f32.mrf.mxu0
    %v6006 = vadd.f32 %v5529, %v6005
    %6007 = vmatmul.bf16.gmra.mxu0 %v5729
    %v6008 = vpop.f32.mrf.mxu0
    %v6009 = vadd.f32 %v5532, %v6008
    %v6010 = vpop.f32.mrf.mxu0
    %v6011 = vadd.f32 %v5534, %v6010
    %6012 = vmatmul.bf16.gmra.mxu0 %v5731
    %v6013 = vpop.f32.mrf.mxu0
    %v6014 = vadd.f32 %v5537, %v6013
    %v6015 = vpop.f32.mrf.mxu0
    %v6016 = vadd.f32 %v5539, %v6015
    %6017 = vdwg.mxu0
    %6018 = vmatpush.bf16.msra.mxu0 0
    %6019 = vmatpush.bf16.msra.mxu0 0
    %6020 = vmatpush.bf16.msra.mxu0 0
    %6021 = vmatpush.bf16.msra.mxu0 0
    %6022 = vmatpush.bf16.msra.mxu0 0
    %6023 = vmatpush.bf16.msra.mxu0 0
    %6024 = vmatpush.bf16.msra.mxu0 %v5806
    %6025 = vmatpush.bf16.msra.mxu0 %v5805
    %6026 = vmatmul.bf16.gmra.mxu0 %v5818
    %v6027 = vpop.f32.mrf.mxu0
    %v6028 = vadd.f32 %v5899, %v6027
    %v6029 = vpop.f32.mrf.mxu0
    %v6030 = vadd.f32 %v5901, %v6029
    %6031 = vmatmul.bf16.gmra.mxu0 %v5821
    %v6032 = vpop.f32.mrf.mxu0
    %v6033 = vadd.f32 %v5904, %v6032
    %v6034 = vpop.f32.mrf.mxu0
    %v6035 = vadd.f32 %v5906, %v6034
    %6036 = vmatmul.bf16.gmra.mxu0 %v5824
    %v6037 = vpop.f32.mrf.mxu0
    %v6038 = vadd.f32 %v5909, %v6037
    %v6039 = vpop.f32.mrf.mxu0
    %v6040 = vadd.f32 %v5911, %v6039
    %6041 = vmatmul.bf16.gmra.mxu0 %v5827
    %v6042 = vpop.f32.mrf.mxu0
    %v6043 = vadd.f32 %v5914, %v6042
    %v6044 = vpop.f32.mrf.mxu0
    %v6045 = vadd.f32 %v5916, %v6044
    %6046 = vmatmul.bf16.gmra.mxu0 %v5830
    %v6047 = vpop.f32.mrf.mxu0
    %v6048 = vadd.f32 %v5919, %v6047
    %v6049 = vpop.f32.mrf.mxu0
    %v6050 = vadd.f32 %v5921, %v6049
    %6051 = vmatmul.bf16.gmra.mxu0 %v5833
    %v6052 = vpop.f32.mrf.mxu0
    %v6053 = vadd.f32 %v5924, %v6052
    %v6054 = vpop.f32.mrf.mxu0
    %v6055 = vadd.f32 %v5926, %v6054
    %6056 = vmatmul.bf16.gmra.mxu0 %v5836
    %v6057 = vpop.f32.mrf.mxu0
    %v6058 = vadd.f32 %v5929, %v6057
    %v6059 = vpop.f32.mrf.mxu0
    %v6060 = vadd.f32 %v5931, %v6059
    %6061 = vmatmul.bf16.gmra.mxu0 %v5839
    %v6062 = vpop.f32.mrf.mxu0
    %v6063 = vadd.f32 %v5934, %v6062
    %v6064 = vpop.f32.mrf.mxu0
    %v6065 = vadd.f32 %v5936, %v6064
    %6066 = vmatmul.bf16.gmra.mxu0 %v5842
    %v6067 = vpop.f32.mrf.mxu0
    %v6068 = vadd.f32 %v5939, %v6067
    %v6069 = vpop.f32.mrf.mxu0
    %v6070 = vadd.f32 %v5941, %v6069
    %6071 = vmatmul.bf16.gmra.mxu0 %v5845
    %v6072 = vpop.f32.mrf.mxu0
    %v6073 = vadd.f32 %v5944, %v6072
    %v6074 = vpop.f32.mrf.mxu0
    %v6075 = vadd.f32 %v5946, %v6074
    %6076 = vmatmul.bf16.gmra.mxu0 %v5848
    %v6077 = vpop.f32.mrf.mxu0
    %v6078 = vadd.f32 %v5949, %v6077
    %v6079 = vpop.f32.mrf.mxu0
    %v6080 = vadd.f32 %v5951, %v6079
    %6081 = vmatmul.bf16.gmra.mxu0 %v5851
    %v6082 = vpop.f32.mrf.mxu0
    %v6083 = vadd.f32 %v5954, %v6082
    %v6084 = vpop.f32.mrf.mxu0
    %v6085 = vadd.f32 %v5956, %v6084
    %6086 = vmatmul.bf16.gmra.mxu0 %v5854
    %v6087 = vpop.f32.mrf.mxu0
    %v6088 = vadd.f32 %v5959, %v6087
    %v6089 = vpop.f32.mrf.mxu0
    %v6090 = vadd.f32 %v5961, %v6089
    %6091 = vmatmul.bf16.gmra.mxu0 %v5857
    %v6092 = vpop.f32.mrf.mxu0
    %v6093 = vadd.f32 %v5964, %v6092
    %v6094 = vpop.f32.mrf.mxu0
    %v6095 = vadd.f32 %v5966, %v6094
    %6096 = vmatmul.bf16.gmra.mxu0 %v5860
    %v6097 = vpop.f32.mrf.mxu0
    %v6098 = vadd.f32 %v5969, %v6097
    %v6099 = vpop.f32.mrf.mxu0
    %v6100 = vadd.f32 %v5971, %v6099
    %6101 = vmatmul.bf16.gmra.mxu0 %v5863
    %v6102 = vpop.f32.mrf.mxu0
    %v6103 = vadd.f32 %v5974, %v6102
    %v6104 = vpop.f32.mrf.mxu0
    %v6105 = vadd.f32 %v5976, %v6104
    %6106 = vmatmul.bf16.gmra.mxu0 %v5866
    %v6107 = vpop.f32.mrf.mxu0
    %v6108 = vadd.f32 %v5979, %v6107
    %v6109 = vpop.f32.mrf.mxu0
    %v6110 = vadd.f32 %v5981, %v6109
    %6111 = vmatmul.bf16.gmra.mxu0 %v5869
    %v6112 = vpop.f32.mrf.mxu0
    %v6113 = vadd.f32 %v5984, %v6112
    %v6114 = vpop.f32.mrf.mxu0
    %v6115 = vadd.f32 %v5986, %v6114
    %6116 = vmatmul.bf16.gmra.mxu0 %v5872
    %v6117 = vpop.f32.mrf.mxu0
    %v6118 = vadd.f32 %v5989, %v6117
    %v6119 = vpop.f32.mrf.mxu0
    %v6120 = vadd.f32 %v5991, %v6119
    %6121 = vmatmul.bf16.gmra.mxu0 %v5875
    %v6122 = vpop.f32.mrf.mxu0
    %v6123 = vadd.f32 %v5994, %v6122
    %v6124 = vpop.f32.mrf.mxu0
    %v6125 = vadd.f32 %v5996, %v6124
    %6126 = vmatmul.bf16.gmra.mxu0 %v5878
    %v6127 = vpop.f32.mrf.mxu0
    %v6128 = vadd.f32 %v5999, %v6127
    %v6129 = vpop.f32.mrf.mxu0
    %v6130 = vadd.f32 %v6001, %v6129
    %6131 = vmatmul.bf16.gmra.mxu0 %v5881
    %v6132 = vpop.f32.mrf.mxu0
    %v6133 = vadd.f32 %v6004, %v6132
    %v6134 = vpop.f32.mrf.mxu0
    %v6135 = vadd.f32 %v6006, %v6134
    %6136 = vmatmul.bf16.gmra.mxu0 %v5884
    %v6137 = vpop.f32.mrf.mxu0
    %v6138 = vadd.f32 %v6009, %v6137
    %v6139 = vpop.f32.mrf.mxu0
    %v6140 = vadd.f32 %v6011, %v6139
    %6141 = vmatmul.bf16.gmra.mxu0 %v5887
    %v6142 = vpop.f32.mrf.mxu0
    %v6143 = vadd.f32 %v6014, %v6142
    %v6144 = vpop.f32.mrf.mxu0
    %v6145 = vadd.f32 %v6016, %v6144
    %6146 = vdwg.mxu0
    %s6147 = scalar_lea.vmem [#allocation2], 32
    %v6148 = vld [vmem:[%s6147] sm:$0xff]
    %v6149 = vld [vmem:[%s6147 + $0x8] sm:$0xff]
    %v6150 = vld [vmem:[%s6147 + $0x10] sm:$0xff]
    %v6151 = vld [vmem:[%s6147 + $0x18] sm:$0xff]
    %v6152 = vld [vmem:[%s6147 + $0x20] sm:$0xff]
    %v6153 = vld [vmem:[%s6147 + $0x28] sm:$0xff]
    %v6154 = vld [vmem:[%s6147 + $0x30] sm:$0xff]
    %v6155 = vld [vmem:[%s6147 + $0x38] sm:$0xff]
    %v6156 = vld [vmem:[%s6147 + $0x40] sm:$0xff]
    %v6157 = vld [vmem:[%s6147 + $0x48] sm:$0xff]
    %v6158 = vld [vmem:[%s6147 + $0x50] sm:$0xff]
    %v6159 = vld [vmem:[%s6147 + $0x58] sm:$0xff]
    %v6160 = vld [vmem:[%s6147 + $0x60] sm:$0xff]
    %v6161 = vld [vmem:[%s6147 + $0x68] sm:$0xff]
    %v6162 = vld [vmem:[%s6147 + $0x70] sm:$0xff]
    %v6163 = vld [vmem:[%s6147 + $0x78] sm:$0xff]
    %v6164 = vld [vmem:[%s6147 + $0x80] sm:$0xff]
    %v6165 = vld [vmem:[%s6147 + $0x88] sm:$0xff]
    %v6166 = vld [vmem:[%s6147 + $0x90] sm:$0xff]
    %v6167 = vld [vmem:[%s6147 + $0x98] sm:$0xff]
    %v6168 = vld [vmem:[%s6147 + $0xa0] sm:$0xff]
    %v6169 = vld [vmem:[%s6147 + $0xa8] sm:$0xff]
    %v6170 = vld [vmem:[%s6147 + $0xb0] sm:$0xff]
    %v6171 = vld [vmem:[%s6147 + $0xb8] sm:$0xff]
    %v6172 = vld [vmem:[%s6147 + $0x100] sm:$0xff]
    %v6173 = vld [vmem:[%s6147 + $0x108] sm:$0xff]
    %v6174 = vld [vmem:[%s6147 + $0x110] sm:$0xff]
    %v6175 = vld [vmem:[%s6147 + $0x118] sm:$0xff]
    %v6176 = vld [vmem:[%s6147 + $0x120] sm:$0xff]
    %v6177 = vld [vmem:[%s6147 + $0x128] sm:$0xff]
    %v6178 = vld [vmem:[%s6147 + $0x130] sm:$0xff]
    %v6179 = vld [vmem:[%s6147 + $0x138] sm:$0xff]
    %v6180 = vld [vmem:[%s6147 + $0x140] sm:$0xff]
    %v6181 = vld [vmem:[%s6147 + $0x148] sm:$0xff]
    %v6182 = vld [vmem:[%s6147 + $0x150] sm:$0xff]
    %v6183 = vld [vmem:[%s6147 + $0x158] sm:$0xff]
    %v6184 = vld [vmem:[%s6147 + $0x160] sm:$0xff]
    %v6185 = vld [vmem:[%s6147 + $0x168] sm:$0xff]
    %v6186 = vld [vmem:[%s6147 + $0x170] sm:$0xff]
    %v6187 = vld [vmem:[%s6147 + $0x178] sm:$0xff]
    %v6188 = vld [vmem:[%s6147 + $0x180] sm:$0xff]
    %v6189 = vld [vmem:[%s6147 + $0x188] sm:$0xff]
    %v6190 = vld [vmem:[%s6147 + $0x190] sm:$0xff]
    %v6191 = vld [vmem:[%s6147 + $0x198] sm:$0xff]
    %v6192 = vld [vmem:[%s6147 + $0x1a0] sm:$0xff]
    %v6193 = vld [vmem:[%s6147 + $0x1a8] sm:$0xff]
    %v6194 = vld [vmem:[%s6147 + $0x1b0] sm:$0xff]
    %v6195 = vld [vmem:[%s6147 + $0x1b8] sm:$0xff]
    %s6196 = scalar_lea.vmem %s3, 160
    %v6197 = vld [vmem:[%s6196] sm:$0xf]
    %v6198 = vld [vmem:[%s6196 + $0x4] sm:$0xf]
    %v6199 = vld [vmem:[%s6196 + $0x8] sm:$0xf]
    %v6200 = vld [vmem:[%s6196 + $0xc] sm:$0xf]
    %v6201 = vld [vmem:[%s6196 + $0x10] sm:$0xf]
    %v6202 = vld [vmem:[%s6196 + $0x14] sm:$0xf]
    %v6203 = vld [vmem:[%s6196 + $0x18] sm:$0xf]
    %v6204 = vld [vmem:[%s6196 + $0x1c] sm:$0xf]
    %v6205 = vld [vmem:[%s6196 + $0x20] sm:$0xf]
    %v6206 = vld [vmem:[%s6196 + $0x24] sm:$0xf]
    %v6207 = vld [vmem:[%s6196 + $0x28] sm:$0xf]
    %v6208 = vld [vmem:[%s6196 + $0x2c] sm:$0xf]
    %v6209 = vld [vmem:[%s6196 + $0x30] sm:$0xf]
    %v6210 = vld [vmem:[%s6196 + $0x34] sm:$0xf]
    %v6211 = vld [vmem:[%s6196 + $0x38] sm:$0xf]
    %v6212 = vld [vmem:[%s6196 + $0x3c] sm:$0xf]
    %v6213 = vld [vmem:[%s6196 + $0x40] sm:$0xf]
    %v6214 = vld [vmem:[%s6196 + $0x44] sm:$0xf]
    %v6215 = vld [vmem:[%s6196 + $0x48] sm:$0xf]
    %v6216 = vld [vmem:[%s6196 + $0x4c] sm:$0xf]
    %v6265 = vunpack.c.l.b16 %v6148
    %v6266 = vunpack.c.h.b16 %v6148
    %v6267 = vunpack.c.l.b16 %v6149
    %v6268 = vunpack.c.h.b16 %v6149
    %v6269 = vunpack.c.l.b16 %v6150
    %v6270 = vunpack.c.h.b16 %v6150
    %v6271 = vunpack.c.l.b16 %v6151
    %v6272 = vunpack.c.h.b16 %v6151
    %v6273 = vunpack.c.l.b16 %v6152
    %v6274 = vunpack.c.h.b16 %v6152
    %v6275 = vunpack.c.l.b16 %v6153
    %v6276 = vunpack.c.h.b16 %v6153
    %v6277 = vunpack.c.l.b16 %v6154
    %v6278 = vunpack.c.h.b16 %v6154
    %v6279 = vunpack.c.l.b16 %v6155
    %v6280 = vunpack.c.h.b16 %v6155
    %v6281 = vunpack.c.l.b16 %v6156
    %v6282 = vunpack.c.h.b16 %v6156
    %v6283 = vunpack.c.l.b16 %v6157
    %v6284 = vunpack.c.h.b16 %v6157
    %v6285 = vunpack.c.l.b16 %v6158
    %v6286 = vunpack.c.h.b16 %v6158
    %v6287 = vunpack.c.l.b16 %v6159
    %v6288 = vunpack.c.h.b16 %v6159
    %v6289 = vunpack.c.l.b16 %v6160
    %v6290 = vunpack.c.h.b16 %v6160
    %v6291 = vunpack.c.l.b16 %v6161
    %v6292 = vunpack.c.h.b16 %v6161
    %v6293 = vunpack.c.l.b16 %v6162
    %v6294 = vunpack.c.h.b16 %v6162
    %v6295 = vunpack.c.l.b16 %v6163
    %v6296 = vunpack.c.h.b16 %v6163
    %v6297 = vunpack.c.l.b16 %v6164
    %v6298 = vunpack.c.h.b16 %v6164
    %v6299 = vunpack.c.l.b16 %v6165
    %v6300 = vunpack.c.h.b16 %v6165
    %v6301 = vunpack.c.l.b16 %v6166
    %v6302 = vunpack.c.h.b16 %v6166
    %v6303 = vunpack.c.l.b16 %v6167
    %v6304 = vunpack.c.h.b16 %v6167
    %v6305 = vunpack.c.l.b16 %v6168
    %v6306 = vunpack.c.h.b16 %v6168
    %v6307 = vunpack.c.l.b16 %v6169
    %v6308 = vunpack.c.h.b16 %v6169
    %v6309 = vunpack.c.l.b16 %v6170
    %v6310 = vunpack.c.h.b16 %v6170
    %v6311 = vunpack.c.l.b16 %v6171
    %v6312 = vunpack.c.h.b16 %v6171
    %v6313 = vunpack.c.l.b16 %v6172
    %v6314 = vunpack.c.h.b16 %v6172
    %v6315 = vunpack.c.l.b16 %v6173
    %v6316 = vunpack.c.h.b16 %v6173
    %v6317 = vunpack.c.l.b16 %v6174
    %v6318 = vunpack.c.h.b16 %v6174
    %v6319 = vunpack.c.l.b16 %v6175
    %v6320 = vunpack.c.h.b16 %v6175
    %v6321 = vunpack.c.l.b16 %v6176
    %v6322 = vunpack.c.h.b16 %v6176
    %v6323 = vunpack.c.l.b16 %v6177
    %v6324 = vunpack.c.h.b16 %v6177
    %v6325 = vunpack.c.l.b16 %v6178
    %v6326 = vunpack.c.h.b16 %v6178
    %v6327 = vunpack.c.l.b16 %v6179
    %v6328 = vunpack.c.h.b16 %v6179
    %v6329 = vunpack.c.l.b16 %v6180
    %v6330 = vunpack.c.h.b16 %v6180
    %v6331 = vunpack.c.l.b16 %v6181
    %v6332 = vunpack.c.h.b16 %v6181
    %v6333 = vunpack.c.l.b16 %v6182
    %v6334 = vunpack.c.h.b16 %v6182
    %v6335 = vunpack.c.l.b16 %v6183
    %v6336 = vunpack.c.h.b16 %v6183
    %v6337 = vunpack.c.l.b16 %v6184
    %v6338 = vunpack.c.h.b16 %v6184
    %v6339 = vunpack.c.l.b16 %v6185
    %v6340 = vunpack.c.h.b16 %v6185
    %v6341 = vunpack.c.l.b16 %v6186
    %v6342 = vunpack.c.h.b16 %v6186
    %v6343 = vunpack.c.l.b16 %v6187
    %v6344 = vunpack.c.h.b16 %v6187
    %v6345 = vunpack.c.l.b16 %v6188
    %v6346 = vunpack.c.h.b16 %v6188
    %v6347 = vunpack.c.l.b16 %v6189
    %v6348 = vunpack.c.h.b16 %v6189
    %v6349 = vunpack.c.l.b16 %v6190
    %v6350 = vunpack.c.h.b16 %v6190
    %v6351 = vunpack.c.l.b16 %v6191
    %v6352 = vunpack.c.h.b16 %v6191
    %v6353 = vunpack.c.l.b16 %v6192
    %v6354 = vunpack.c.h.b16 %v6192
    %v6355 = vunpack.c.l.b16 %v6193
    %v6356 = vunpack.c.h.b16 %v6193
    %v6357 = vunpack.c.l.b16 %v6194
    %v6358 = vunpack.c.h.b16 %v6194
    %v6359 = vunpack.c.l.b16 %v6195
    %v6360 = vunpack.c.h.b16 %v6195
    %v6361 = vpack.c.b16 %v6267, %v6265
    %v6362 = vpack.c.b16 %v6268, %v6266
    %v6363 = vpack.c.b16 %v6271, %v6269
    %v6364 = vpack.c.b16 %v6272, %v6270
    %v6365 = vpack.c.b16 %v6275, %v6273
    %v6366 = vpack.c.b16 %v6276, %v6274
    %v6367 = vpack.c.b16 %v6279, %v6277
    %v6368 = vpack.c.b16 %v6280, %v6278
    %v6369 = vpack.c.b16 %v6283, %v6281
    %v6370 = vpack.c.b16 %v6284, %v6282
    %v6371 = vpack.c.b16 %v6287, %v6285
    %v6372 = vpack.c.b16 %v6288, %v6286
    %v6373 = vpack.c.b16 %v6291, %v6289
    %v6374 = vpack.c.b16 %v6292, %v6290
    %v6375 = vpack.c.b16 %v6295, %v6293
    %v6376 = vpack.c.b16 %v6296, %v6294
    %v6377 = vpack.c.b16 %v6299, %v6297
    %v6378 = vpack.c.b16 %v6300, %v6298
    %v6379 = vpack.c.b16 %v6303, %v6301
    %v6380 = vpack.c.b16 %v6304, %v6302
    %v6381 = vpack.c.b16 %v6307, %v6305
    %v6382 = vpack.c.b16 %v6308, %v6306
    %v6383 = vpack.c.b16 %v6311, %v6309
    %v6384 = vpack.c.b16 %v6312, %v6310
    %v6385 = vpack.c.b16 %v6315, %v6313
    %v6386 = vpack.c.b16 %v6316, %v6314
    %v6387 = vpack.c.b16 %v6319, %v6317
    %v6388 = vpack.c.b16 %v6320, %v6318
    %v6389 = vpack.c.b16 %v6323, %v6321
    %v6390 = vpack.c.b16 %v6324, %v6322
    %v6391 = vpack.c.b16 %v6327, %v6325
    %v6392 = vpack.c.b16 %v6328, %v6326
    %v6393 = vpack.c.b16 %v6331, %v6329
    %v6394 = vpack.c.b16 %v6332, %v6330
    %v6395 = vpack.c.b16 %v6335, %v6333
    %v6396 = vpack.c.b16 %v6336, %v6334
    %v6397 = vpack.c.b16 %v6339, %v6337
    %v6398 = vpack.c.b16 %v6340, %v6338
    %v6399 = vpack.c.b16 %v6343, %v6341
    %v6400 = vpack.c.b16 %v6344, %v6342
    %v6401 = vpack.c.b16 %v6347, %v6345
    %v6402 = vpack.c.b16 %v6348, %v6346
    %v6403 = vpack.c.b16 %v6351, %v6349
    %v6404 = vpack.c.b16 %v6352, %v6350
    %v6405 = vpack.c.b16 %v6355, %v6353
    %v6406 = vpack.c.b16 %v6356, %v6354
    %v6407 = vpack.c.b16 %v6359, %v6357
    %v6408 = vpack.c.b16 %v6360, %v6358
    %v6453 = vunpack.c.l.b16 %v6197
    %v6454 = vunpack.c.l.b16 %v6198
    %v6455 = vunpack.c.l.b16 %v6199
    %v6456 = vunpack.c.l.b16 %v6200
    %v6457 = vunpack.c.l.b16 %v6201
    %v6458 = vunpack.c.l.b16 %v6202
    %v6459 = vunpack.c.l.b16 %v6203
    %v6460 = vunpack.c.l.b16 %v6204
    %v6461 = vunpack.c.l.b16 %v6205
    %v6462 = vunpack.c.l.b16 %v6206
    %v6463 = vunpack.c.l.b16 %v6207
    %v6464 = vunpack.c.l.b16 %v6208
    %v6465 = vunpack.c.l.b16 %v6209
    %v6466 = vunpack.c.l.b16 %v6210
    %v6467 = vunpack.c.l.b16 %v6211
    %v6468 = vunpack.c.l.b16 %v6212
    %v6469 = vunpack.c.l.b16 %v6213
    %v6470 = vunpack.c.l.b16 %v6214
    %v6471 = vunpack.c.l.b16 %v6215
    %v6472 = vunpack.c.l.b16 %v6216
    %v6473 = vpack.c.b16 %v6454, %v6453
    %v6474 = vpack.c.b16 %v6456, %v6455
    %v6475 = vpack.c.b16 %v6458, %v6457
    %v6476 = vpack.c.b16 %v6460, %v6459
    %v6477 = vpack.c.b16 %v6462, %v6461
    %v6478 = vpack.c.b16 %v6464, %v6463
    %v6479 = vpack.c.b16 %v6466, %v6465
    %v6480 = vpack.c.b16 %v6468, %v6467
    %v6481 = vpack.c.b16 %v6470, %v6469
    %v6482 = vpack.c.b16 %v6472, %v6471
    %v6494 = vsel %vm956, %v6362, 0
    %v6497 = vsel %vm956, %v6364, 0
    %v6500 = vsel %vm956, %v6366, 0
    %v6503 = vsel %vm956, %v6368, 0
    %v6506 = vsel %vm956, %v6370, 0
    %v6509 = vsel %vm956, %v6372, 0
    %v6512 = vsel %vm956, %v6374, 0
    %v6515 = vsel %vm956, %v6376, 0
    %v6518 = vsel %vm956, %v6378, 0
    %v6521 = vsel %vm956, %v6380, 0
    %v6524 = vsel %vm956, %v6382, 0
    %v6527 = vsel %vm956, %v6384, 0
    %v6530 = vsel %vm956, %v6386, 0
    %v6533 = vsel %vm956, %v6388, 0
    %v6536 = vsel %vm956, %v6390, 0
    %v6539 = vsel %vm956, %v6392, 0
    %v6542 = vsel %vm956, %v6394, 0
    %v6545 = vsel %vm956, %v6396, 0
    %v6548 = vsel %vm956, %v6398, 0
    %v6551 = vsel %vm956, %v6400, 0
    %v6554 = vsel %vm956, %v6402, 0
    %v6557 = vsel %vm956, %v6404, 0
    %v6560 = vsel %vm956, %v6406, 0
    %v6563 = vsel %vm956, %v6408, 0
    %6565 = vmatpush.bf16.msra.mxu0 %v6480
    %6566 = vmatpush.bf16.msra.mxu0 %v6479
    %6567 = vmatpush.bf16.msra.mxu0 %v6478
    %6568 = vmatpush.bf16.msra.mxu0 %v6477
    %6569 = vmatpush.bf16.msra.mxu0 %v6476
    %6570 = vmatpush.bf16.msra.mxu0 %v6475
    %6571 = vmatpush.bf16.msra.mxu0 %v6474
    %6572 = vmatpush.bf16.msra.mxu0 %v6473
    %6573 = vmatmul.bf16.gmra.mxu0 %v6361
    %v6574 = vpop.f32.mrf.mxu0
    %v6575 = vadd.f32 0.0, %v6574
    %v6576 = vpop.f32.mrf.mxu0
    %v6577 = vadd.f32 0.0, %v6576
    %6578 = vmatmul.bf16.gmra.mxu0 %v6363
    %v6579 = vpop.f32.mrf.mxu0
    %v6580 = vadd.f32 0.0, %v6579
    %v6581 = vpop.f32.mrf.mxu0
    %v6582 = vadd.f32 0.0, %v6581
    %6583 = vmatmul.bf16.gmra.mxu0 %v6365
    %v6584 = vpop.f32.mrf.mxu0
    %v6585 = vadd.f32 0.0, %v6584
    %v6586 = vpop.f32.mrf.mxu0
    %v6587 = vadd.f32 0.0, %v6586
    %6588 = vmatmul.bf16.gmra.mxu0 %v6367
    %v6589 = vpop.f32.mrf.mxu0
    %v6590 = vadd.f32 0.0, %v6589
    %v6591 = vpop.f32.mrf.mxu0
    %v6592 = vadd.f32 0.0, %v6591
    %6593 = vmatmul.bf16.gmra.mxu0 %v6369
    %v6594 = vpop.f32.mrf.mxu0
    %v6595 = vadd.f32 0.0, %v6594
    %v6596 = vpop.f32.mrf.mxu0
    %v6597 = vadd.f32 0.0, %v6596
    %6598 = vmatmul.bf16.gmra.mxu0 %v6371
    %v6599 = vpop.f32.mrf.mxu0
    %v6600 = vadd.f32 0.0, %v6599
    %v6601 = vpop.f32.mrf.mxu0
    %v6602 = vadd.f32 0.0, %v6601
    %6603 = vmatmul.bf16.gmra.mxu0 %v6373
    %v6604 = vpop.f32.mrf.mxu0
    %v6605 = vadd.f32 0.0, %v6604
    %v6606 = vpop.f32.mrf.mxu0
    %v6607 = vadd.f32 0.0, %v6606
    %6608 = vmatmul.bf16.gmra.mxu0 %v6375
    %v6609 = vpop.f32.mrf.mxu0
    %v6610 = vadd.f32 0.0, %v6609
    %v6611 = vpop.f32.mrf.mxu0
    %v6612 = vadd.f32 0.0, %v6611
    %6613 = vmatmul.bf16.gmra.mxu0 %v6377
    %v6614 = vpop.f32.mrf.mxu0
    %v6615 = vadd.f32 0.0, %v6614
    %v6616 = vpop.f32.mrf.mxu0
    %v6617 = vadd.f32 0.0, %v6616
    %6618 = vmatmul.bf16.gmra.mxu0 %v6379
    %v6619 = vpop.f32.mrf.mxu0
    %v6620 = vadd.f32 0.0, %v6619
    %v6621 = vpop.f32.mrf.mxu0
    %v6622 = vadd.f32 0.0, %v6621
    %6623 = vmatmul.bf16.gmra.mxu0 %v6381
    %v6624 = vpop.f32.mrf.mxu0
    %v6625 = vadd.f32 0.0, %v6624
    %v6626 = vpop.f32.mrf.mxu0
    %v6627 = vadd.f32 0.0, %v6626
    %6628 = vmatmul.bf16.gmra.mxu0 %v6383
    %v6629 = vpop.f32.mrf.mxu0
    %v6630 = vadd.f32 0.0, %v6629
    %v6631 = vpop.f32.mrf.mxu0
    %v6632 = vadd.f32 0.0, %v6631
    %6633 = vmatmul.bf16.gmra.mxu0 %v6385
    %v6634 = vpop.f32.mrf.mxu0
    %v6635 = vadd.f32 0.0, %v6634
    %v6636 = vpop.f32.mrf.mxu0
    %v6637 = vadd.f32 0.0, %v6636
    %6638 = vmatmul.bf16.gmra.mxu0 %v6387
    %v6639 = vpop.f32.mrf.mxu0
    %v6640 = vadd.f32 0.0, %v6639
    %v6641 = vpop.f32.mrf.mxu0
    %v6642 = vadd.f32 0.0, %v6641
    %6643 = vmatmul.bf16.gmra.mxu0 %v6389
    %v6644 = vpop.f32.mrf.mxu0
    %v6645 = vadd.f32 0.0, %v6644
    %v6646 = vpop.f32.mrf.mxu0
    %v6647 = vadd.f32 0.0, %v6646
    %6648 = vmatmul.bf16.gmra.mxu0 %v6391
    %v6649 = vpop.f32.mrf.mxu0
    %v6650 = vadd.f32 0.0, %v6649
    %v6651 = vpop.f32.mrf.mxu0
    %v6652 = vadd.f32 0.0, %v6651
    %6653 = vmatmul.bf16.gmra.mxu0 %v6393
    %v6654 = vpop.f32.mrf.mxu0
    %v6655 = vadd.f32 0.0, %v6654
    %v6656 = vpop.f32.mrf.mxu0
    %v6657 = vadd.f32 0.0, %v6656
    %6658 = vmatmul.bf16.gmra.mxu0 %v6395
    %v6659 = vpop.f32.mrf.mxu0
    %v6660 = vadd.f32 0.0, %v6659
    %v6661 = vpop.f32.mrf.mxu0
    %v6662 = vadd.f32 0.0, %v6661
    %6663 = vmatmul.bf16.gmra.mxu0 %v6397
    %v6664 = vpop.f32.mrf.mxu0
    %v6665 = vadd.f32 0.0, %v6664
    %v6666 = vpop.f32.mrf.mxu0
    %v6667 = vadd.f32 0.0, %v6666
    %6668 = vmatmul.bf16.gmra.mxu0 %v6399
    %v6669 = vpop.f32.mrf.mxu0
    %v6670 = vadd.f32 0.0, %v6669
    %v6671 = vpop.f32.mrf.mxu0
    %v6672 = vadd.f32 0.0, %v6671
    %6673 = vmatmul.bf16.gmra.mxu0 %v6401
    %v6674 = vpop.f32.mrf.mxu0
    %v6675 = vadd.f32 0.0, %v6674
    %v6676 = vpop.f32.mrf.mxu0
    %v6677 = vadd.f32 0.0, %v6676
    %6678 = vmatmul.bf16.gmra.mxu0 %v6403
    %v6679 = vpop.f32.mrf.mxu0
    %v6680 = vadd.f32 0.0, %v6679
    %v6681 = vpop.f32.mrf.mxu0
    %v6682 = vadd.f32 0.0, %v6681
    %6683 = vmatmul.bf16.gmra.mxu0 %v6405
    %v6684 = vpop.f32.mrf.mxu0
    %v6685 = vadd.f32 0.0, %v6684
    %v6686 = vpop.f32.mrf.mxu0
    %v6687 = vadd.f32 0.0, %v6686
    %6688 = vmatmul.bf16.gmra.mxu0 %v6407
    %v6689 = vpop.f32.mrf.mxu0
    %v6690 = vadd.f32 0.0, %v6689
    %v6691 = vpop.f32.mrf.mxu0
    %v6692 = vadd.f32 0.0, %v6691
    %6693 = vdwg.mxu0
    %6694 = vmatpush.bf16.msra.mxu0 0
    %6695 = vmatpush.bf16.msra.mxu0 0
    %6696 = vmatpush.bf16.msra.mxu0 0
    %6697 = vmatpush.bf16.msra.mxu0 0
    %6698 = vmatpush.bf16.msra.mxu0 0
    %6699 = vmatpush.bf16.msra.mxu0 0
    %6700 = vmatpush.bf16.msra.mxu0 %v6482
    %6701 = vmatpush.bf16.msra.mxu0 %v6481
    %6702 = vmatmul.bf16.gmra.mxu0 %v6494
    %v6703 = vpop.f32.mrf.mxu0
    %v6704 = vadd.f32 %v6575, %v6703
    %v6705 = vpop.f32.mrf.mxu0
    %v6706 = vadd.f32 %v6577, %v6705
    %6707 = vmatmul.bf16.gmra.mxu0 %v6497
    %v6708 = vpop.f32.mrf.mxu0
    %v6709 = vadd.f32 %v6580, %v6708
    %v6710 = vpop.f32.mrf.mxu0
    %v6711 = vadd.f32 %v6582, %v6710
    %6712 = vmatmul.bf16.gmra.mxu0 %v6500
    %v6713 = vpop.f32.mrf.mxu0
    %v6714 = vadd.f32 %v6585, %v6713
    %v6715 = vpop.f32.mrf.mxu0
    %v6716 = vadd.f32 %v6587, %v6715
    %6717 = vmatmul.bf16.gmra.mxu0 %v6503
    %v6718 = vpop.f32.mrf.mxu0
    %v6719 = vadd.f32 %v6590, %v6718
    %v6720 = vpop.f32.mrf.mxu0
    %v6721 = vadd.f32 %v6592, %v6720
    %6722 = vmatmul.bf16.gmra.mxu0 %v6506
    %v6723 = vpop.f32.mrf.mxu0
    %v6724 = vadd.f32 %v6595, %v6723
    %v6725 = vpop.f32.mrf.mxu0
    %v6726 = vadd.f32 %v6597, %v6725
    %6727 = vmatmul.bf16.gmra.mxu0 %v6509
    %v6728 = vpop.f32.mrf.mxu0
    %v6729 = vadd.f32 %v6600, %v6728
    %v6730 = vpop.f32.mrf.mxu0
    %v6731 = vadd.f32 %v6602, %v6730
    %6732 = vmatmul.bf16.gmra.mxu0 %v6512
    %v6733 = vpop.f32.mrf.mxu0
    %v6734 = vadd.f32 %v6605, %v6733
    %v6735 = vpop.f32.mrf.mxu0
    %v6736 = vadd.f32 %v6607, %v6735
    %6737 = vmatmul.bf16.gmra.mxu0 %v6515
    %v6738 = vpop.f32.mrf.mxu0
    %v6739 = vadd.f32 %v6610, %v6738
    %v6740 = vpop.f32.mrf.mxu0
    %v6741 = vadd.f32 %v6612, %v6740
    %6742 = vmatmul.bf16.gmra.mxu0 %v6518
    %v6743 = vpop.f32.mrf.mxu0
    %v6744 = vadd.f32 %v6615, %v6743
    %v6745 = vpop.f32.mrf.mxu0
    %v6746 = vadd.f32 %v6617, %v6745
    %6747 = vmatmul.bf16.gmra.mxu0 %v6521
    %v6748 = vpop.f32.mrf.mxu0
    %v6749 = vadd.f32 %v6620, %v6748
    %v6750 = vpop.f32.mrf.mxu0
    %v6751 = vadd.f32 %v6622, %v6750
    %6752 = vmatmul.bf16.gmra.mxu0 %v6524
    %v6753 = vpop.f32.mrf.mxu0
    %v6754 = vadd.f32 %v6625, %v6753
    %v6755 = vpop.f32.mrf.mxu0
    %v6756 = vadd.f32 %v6627, %v6755
    %6757 = vmatmul.bf16.gmra.mxu0 %v6527
    %v6758 = vpop.f32.mrf.mxu0
    %v6759 = vadd.f32 %v6630, %v6758
    %v6760 = vpop.f32.mrf.mxu0
    %v6761 = vadd.f32 %v6632, %v6760
    %6762 = vmatmul.bf16.gmra.mxu0 %v6530
    %v6763 = vpop.f32.mrf.mxu0
    %v6764 = vadd.f32 %v6635, %v6763
    %v6765 = vpop.f32.mrf.mxu0
    %v6766 = vadd.f32 %v6637, %v6765
    %6767 = vmatmul.bf16.gmra.mxu0 %v6533
    %v6768 = vpop.f32.mrf.mxu0
    %v6769 = vadd.f32 %v6640, %v6768
    %v6770 = vpop.f32.mrf.mxu0
    %v6771 = vadd.f32 %v6642, %v6770
    %6772 = vmatmul.bf16.gmra.mxu0 %v6536
    %v6773 = vpop.f32.mrf.mxu0
    %v6774 = vadd.f32 %v6645, %v6773
    %v6775 = vpop.f32.mrf.mxu0
    %v6776 = vadd.f32 %v6647, %v6775
    %6777 = vmatmul.bf16.gmra.mxu0 %v6539
    %v6778 = vpop.f32.mrf.mxu0
    %v6779 = vadd.f32 %v6650, %v6778
    %v6780 = vpop.f32.mrf.mxu0
    %v6781 = vadd.f32 %v6652, %v6780
    %6782 = vmatmul.bf16.gmra.mxu0 %v6542
    %v6783 = vpop.f32.mrf.mxu0
    %v6784 = vadd.f32 %v6655, %v6783
    %v6785 = vpop.f32.mrf.mxu0
    %v6786 = vadd.f32 %v6657, %v6785
    %6787 = vmatmul.bf16.gmra.mxu0 %v6545
    %v6788 = vpop.f32.mrf.mxu0
    %v6789 = vadd.f32 %v6660, %v6788
    %v6790 = vpop.f32.mrf.mxu0
    %v6791 = vadd.f32 %v6662, %v6790
    %6792 = vmatmul.bf16.gmra.mxu0 %v6548
    %v6793 = vpop.f32.mrf.mxu0
    %v6794 = vadd.f32 %v6665, %v6793
    %v6795 = vpop.f32.mrf.mxu0
    %v6796 = vadd.f32 %v6667, %v6795
    %6797 = vmatmul.bf16.gmra.mxu0 %v6551
    %v6798 = vpop.f32.mrf.mxu0
    %v6799 = vadd.f32 %v6670, %v6798
    %v6800 = vpop.f32.mrf.mxu0
    %v6801 = vadd.f32 %v6672, %v6800
    %6802 = vmatmul.bf16.gmra.mxu0 %v6554
    %v6803 = vpop.f32.mrf.mxu0
    %v6804 = vadd.f32 %v6675, %v6803
    %v6805 = vpop.f32.mrf.mxu0
    %v6806 = vadd.f32 %v6677, %v6805
    %6807 = vmatmul.bf16.gmra.mxu0 %v6557
    %v6808 = vpop.f32.mrf.mxu0
    %v6809 = vadd.f32 %v6680, %v6808
    %v6810 = vpop.f32.mrf.mxu0
    %v6811 = vadd.f32 %v6682, %v6810
    %6812 = vmatmul.bf16.gmra.mxu0 %v6560
    %v6813 = vpop.f32.mrf.mxu0
    %v6814 = vadd.f32 %v6685, %v6813
    %v6815 = vpop.f32.mrf.mxu0
    %v6816 = vadd.f32 %v6687, %v6815
    %6817 = vmatmul.bf16.gmra.mxu0 %v6563
    %v6818 = vpop.f32.mrf.mxu0
    %v6819 = vadd.f32 %v6690, %v6818
    %v6820 = vpop.f32.mrf.mxu0
    %v6821 = vadd.f32 %v6692, %v6820
    %6822 = vdwg.mxu0
    %v6823 = vadd.f32 %v6028, %v6704
    %v6824 = vadd.f32 %v6030, %v6706
    %v6825 = vadd.f32 %v6033, %v6709
    %v6826 = vadd.f32 %v6035, %v6711
    %v6827 = vadd.f32 %v6038, %v6714
    %v6828 = vadd.f32 %v6040, %v6716
    %v6829 = vadd.f32 %v6043, %v6719
    %v6830 = vadd.f32 %v6045, %v6721
    %v6831 = vadd.f32 %v6048, %v6724
    %v6832 = vadd.f32 %v6050, %v6726
    %v6833 = vadd.f32 %v6053, %v6729
    %v6834 = vadd.f32 %v6055, %v6731
    %v6835 = vadd.f32 %v6058, %v6734
    %v6836 = vadd.f32 %v6060, %v6736
    %v6837 = vadd.f32 %v6063, %v6739
    %v6838 = vadd.f32 %v6065, %v6741
    %v6839 = vadd.f32 %v6068, %v6744
    %v6840 = vadd.f32 %v6070, %v6746
    %v6841 = vadd.f32 %v6073, %v6749
    %v6842 = vadd.f32 %v6075, %v6751
    %v6843 = vadd.f32 %v6078, %v6754
    %v6844 = vadd.f32 %v6080, %v6756
    %v6845 = vadd.f32 %v6083, %v6759
    %v6846 = vadd.f32 %v6085, %v6761
    %v6847 = vadd.f32 %v6088, %v6764
    %v6848 = vadd.f32 %v6090, %v6766
    %v6849 = vadd.f32 %v6093, %v6769
    %v6850 = vadd.f32 %v6095, %v6771
    %v6851 = vadd.f32 %v6098, %v6774
    %v6852 = vadd.f32 %v6100, %v6776
    %v6853 = vadd.f32 %v6103, %v6779
    %v6854 = vadd.f32 %v6105, %v6781
    %v6855 = vadd.f32 %v6108, %v6784
    %v6856 = vadd.f32 %v6110, %v6786
    %v6857 = vadd.f32 %v6113, %v6789
    %v6858 = vadd.f32 %v6115, %v6791
    %v6859 = vadd.f32 %v6118, %v6794
    %v6860 = vadd.f32 %v6120, %v6796
    %v6861 = vadd.f32 %v6123, %v6799
    %v6862 = vadd.f32 %v6125, %v6801
    %v6863 = vadd.f32 %v6128, %v6804
    %v6864 = vadd.f32 %v6130, %v6806
    %v6865 = vadd.f32 %v6133, %v6809
    %v6866 = vadd.f32 %v6135, %v6811
    %v6867 = vadd.f32 %v6138, %v6814
    %v6868 = vadd.f32 %v6140, %v6816
    %v6869 = vadd.f32 %v6143, %v6819
    %v6870 = vadd.f32 %v6145, %v6821
    %s6871 = scalar_lea.vmem [#allocation2], 48
    %v6872 = vld [vmem:[%s6871] sm:$0xff]
    %v6873 = vld [vmem:[%s6871 + $0x8] sm:$0xff]
    %v6874 = vld [vmem:[%s6871 + $0x10] sm:$0xff]
    %v6875 = vld [vmem:[%s6871 + $0x18] sm:$0xff]
    %v6876 = vld [vmem:[%s6871 + $0x20] sm:$0xff]
    %v6877 = vld [vmem:[%s6871 + $0x28] sm:$0xff]
    %v6878 = vld [vmem:[%s6871 + $0x30] sm:$0xff]
    %v6879 = vld [vmem:[%s6871 + $0x38] sm:$0xff]
    %v6880 = vld [vmem:[%s6871 + $0x40] sm:$0xff]
    %v6881 = vld [vmem:[%s6871 + $0x48] sm:$0xff]
    %v6882 = vld [vmem:[%s6871 + $0x50] sm:$0xff]
    %v6883 = vld [vmem:[%s6871 + $0x58] sm:$0xff]
    %v6884 = vld [vmem:[%s6871 + $0x60] sm:$0xff]
    %v6885 = vld [vmem:[%s6871 + $0x68] sm:$0xff]
    %v6886 = vld [vmem:[%s6871 + $0x70] sm:$0xff]
    %v6887 = vld [vmem:[%s6871 + $0x78] sm:$0xff]
    %v6888 = vld [vmem:[%s6871 + $0x80] sm:$0xff]
    %v6889 = vld [vmem:[%s6871 + $0x88] sm:$0xff]
    %v6890 = vld [vmem:[%s6871 + $0x90] sm:$0xff]
    %v6891 = vld [vmem:[%s6871 + $0x98] sm:$0xff]
    %v6892 = vld [vmem:[%s6871 + $0xa0] sm:$0xff]
    %v6893 = vld [vmem:[%s6871 + $0xa8] sm:$0xff]
    %v6894 = vld [vmem:[%s6871 + $0xb0] sm:$0xff]
    %v6895 = vld [vmem:[%s6871 + $0xb8] sm:$0xff]
    %v6896 = vld [vmem:[%s6871 + $0x100] sm:$0xff]
    %v6897 = vld [vmem:[%s6871 + $0x108] sm:$0xff]
    %v6898 = vld [vmem:[%s6871 + $0x110] sm:$0xff]
    %v6899 = vld [vmem:[%s6871 + $0x118] sm:$0xff]
    %v6900 = vld [vmem:[%s6871 + $0x120] sm:$0xff]
    %v6901 = vld [vmem:[%s6871 + $0x128] sm:$0xff]
    %v6902 = vld [vmem:[%s6871 + $0x130] sm:$0xff]
    %v6903 = vld [vmem:[%s6871 + $0x138] sm:$0xff]
    %v6904 = vld [vmem:[%s6871 + $0x140] sm:$0xff]
    %v6905 = vld [vmem:[%s6871 + $0x148] sm:$0xff]
    %v6906 = vld [vmem:[%s6871 + $0x150] sm:$0xff]
    %v6907 = vld [vmem:[%s6871 + $0x158] sm:$0xff]
    %v6908 = vld [vmem:[%s6871 + $0x160] sm:$0xff]
    %v6909 = vld [vmem:[%s6871 + $0x168] sm:$0xff]
    %v6910 = vld [vmem:[%s6871 + $0x170] sm:$0xff]
    %v6911 = vld [vmem:[%s6871 + $0x178] sm:$0xff]
    %v6912 = vld [vmem:[%s6871 + $0x180] sm:$0xff]
    %v6913 = vld [vmem:[%s6871 + $0x188] sm:$0xff]
    %v6914 = vld [vmem:[%s6871 + $0x190] sm:$0xff]
    %v6915 = vld [vmem:[%s6871 + $0x198] sm:$0xff]
    %v6916 = vld [vmem:[%s6871 + $0x1a0] sm:$0xff]
    %v6917 = vld [vmem:[%s6871 + $0x1a8] sm:$0xff]
    %v6918 = vld [vmem:[%s6871 + $0x1b0] sm:$0xff]
    %v6919 = vld [vmem:[%s6871 + $0x1b8] sm:$0xff]
    %s6920 = scalar_lea.vmem %s3, 240
    %v6921 = vld [vmem:[%s6920] sm:$0xf]
    %v6922 = vld [vmem:[%s6920 + $0x4] sm:$0xf]
    %v6923 = vld [vmem:[%s6920 + $0x8] sm:$0xf]
    %v6924 = vld [vmem:[%s6920 + $0xc] sm:$0xf]
    %v6925 = vld [vmem:[%s6920 + $0x10] sm:$0xf]
    %v6926 = vld [vmem:[%s6920 + $0x14] sm:$0xf]
    %v6927 = vld [vmem:[%s6920 + $0x18] sm:$0xf]
    %v6928 = vld [vmem:[%s6920 + $0x1c] sm:$0xf]
    %v6929 = vld [vmem:[%s6920 + $0x20] sm:$0xf]
    %v6930 = vld [vmem:[%s6920 + $0x24] sm:$0xf]
    %v6931 = vld [vmem:[%s6920 + $0x28] sm:$0xf]
    %v6932 = vld [vmem:[%s6920 + $0x2c] sm:$0xf]
    %v6933 = vld [vmem:[%s6920 + $0x30] sm:$0xf]
    %v6934 = vld [vmem:[%s6920 + $0x34] sm:$0xf]
    %v6935 = vld [vmem:[%s6920 + $0x38] sm:$0xf]
    %v6936 = vld [vmem:[%s6920 + $0x3c] sm:$0xf]
    %v6937 = vld [vmem:[%s6920 + $0x40] sm:$0xf]
    %v6938 = vld [vmem:[%s6920 + $0x44] sm:$0xf]
    %v6939 = vld [vmem:[%s6920 + $0x48] sm:$0xf]
    %v6940 = vld [vmem:[%s6920 + $0x4c] sm:$0xf]
    %v6989 = vunpack.c.l.b16 %v6872
    %v6990 = vunpack.c.h.b16 %v6872
    %v6991 = vunpack.c.l.b16 %v6873
    %v6992 = vunpack.c.h.b16 %v6873
    %v6993 = vunpack.c.l.b16 %v6874
    %v6994 = vunpack.c.h.b16 %v6874
    %v6995 = vunpack.c.l.b16 %v6875
    %v6996 = vunpack.c.h.b16 %v6875
    %v6997 = vunpack.c.l.b16 %v6876
    %v6998 = vunpack.c.h.b16 %v6876
    %v6999 = vunpack.c.l.b16 %v6877
    %v7000 = vunpack.c.h.b16 %v6877
    %v7001 = vunpack.c.l.b16 %v6878
    %v7002 = vunpack.c.h.b16 %v6878
    %v7003 = vunpack.c.l.b16 %v6879
    %v7004 = vunpack.c.h.b16 %v6879
    %v7005 = vunpack.c.l.b16 %v6880
    %v7006 = vunpack.c.h.b16 %v6880
    %v7007 = vunpack.c.l.b16 %v6881
    %v7008 = vunpack.c.h.b16 %v6881
    %v7009 = vunpack.c.l.b16 %v6882
    %v7010 = vunpack.c.h.b16 %v6882
    %v7011 = vunpack.c.l.b16 %v6883
    %v7012 = vunpack.c.h.b16 %v6883
    %v7013 = vunpack.c.l.b16 %v6884
    %v7014 = vunpack.c.h.b16 %v6884
    %v7015 = vunpack.c.l.b16 %v6885
    %v7016 = vunpack.c.h.b16 %v6885
    %v7017 = vunpack.c.l.b16 %v6886
    %v7018 = vunpack.c.h.b16 %v6886
    %v7019 = vunpack.c.l.b16 %v6887
    %v7020 = vunpack.c.h.b16 %v6887
    %v7021 = vunpack.c.l.b16 %v6888
    %v7022 = vunpack.c.h.b16 %v6888
    %v7023 = vunpack.c.l.b16 %v6889
    %v7024 = vunpack.c.h.b16 %v6889
    %v7025 = vunpack.c.l.b16 %v6890
    %v7026 = vunpack.c.h.b16 %v6890
    %v7027 = vunpack.c.l.b16 %v6891
    %v7028 = vunpack.c.h.b16 %v6891
    %v7029 = vunpack.c.l.b16 %v6892
    %v7030 = vunpack.c.h.b16 %v6892
    %v7031 = vunpack.c.l.b16 %v6893
    %v7032 = vunpack.c.h.b16 %v6893
    %v7033 = vunpack.c.l.b16 %v6894
    %v7034 = vunpack.c.h.b16 %v6894
    %v7035 = vunpack.c.l.b16 %v6895
    %v7036 = vunpack.c.h.b16 %v6895
    %v7037 = vunpack.c.l.b16 %v6896
    %v7038 = vunpack.c.h.b16 %v6896
    %v7039 = vunpack.c.l.b16 %v6897
    %v7040 = vunpack.c.h.b16 %v6897
    %v7041 = vunpack.c.l.b16 %v6898
    %v7042 = vunpack.c.h.b16 %v6898
    %v7043 = vunpack.c.l.b16 %v6899
    %v7044 = vunpack.c.h.b16 %v6899
    %v7045 = vunpack.c.l.b16 %v6900
    %v7046 = vunpack.c.h.b16 %v6900
    %v7047 = vunpack.c.l.b16 %v6901
    %v7048 = vunpack.c.h.b16 %v6901
    %v7049 = vunpack.c.l.b16 %v6902
    %v7050 = vunpack.c.h.b16 %v6902
    %v7051 = vunpack.c.l.b16 %v6903
    %v7052 = vunpack.c.h.b16 %v6903
    %v7053 = vunpack.c.l.b16 %v6904
    %v7054 = vunpack.c.h.b16 %v6904
    %v7055 = vunpack.c.l.b16 %v6905
    %v7056 = vunpack.c.h.b16 %v6905
    %v7057 = vunpack.c.l.b16 %v6906
    %v7058 = vunpack.c.h.b16 %v6906
    %v7059 = vunpack.c.l.b16 %v6907
    %v7060 = vunpack.c.h.b16 %v6907
    %v7061 = vunpack.c.l.b16 %v6908
    %v7062 = vunpack.c.h.b16 %v6908
    %v7063 = vunpack.c.l.b16 %v6909
    %v7064 = vunpack.c.h.b16 %v6909
    %v7065 = vunpack.c.l.b16 %v6910
    %v7066 = vunpack.c.h.b16 %v6910
    %v7067 = vunpack.c.l.b16 %v6911
    %v7068 = vunpack.c.h.b16 %v6911
    %v7069 = vunpack.c.l.b16 %v6912
    %v7070 = vunpack.c.h.b16 %v6912
    %v7071 = vunpack.c.l.b16 %v6913
    %v7072 = vunpack.c.h.b16 %v6913
    %v7073 = vunpack.c.l.b16 %v6914
    %v7074 = vunpack.c.h.b16 %v6914
    %v7075 = vunpack.c.l.b16 %v6915
    %v7076 = vunpack.c.h.b16 %v6915
    %v7077 = vunpack.c.l.b16 %v6916
    %v7078 = vunpack.c.h.b16 %v6916
    %v7079 = vunpack.c.l.b16 %v6917
    %v7080 = vunpack.c.h.b16 %v6917
    %v7081 = vunpack.c.l.b16 %v6918
    %v7082 = vunpack.c.h.b16 %v6918
    %v7083 = vunpack.c.l.b16 %v6919
    %v7084 = vunpack.c.h.b16 %v6919
    %v7085 = vpack.c.b16 %v6991, %v6989
    %v7086 = vpack.c.b16 %v6992, %v6990
    %v7087 = vpack.c.b16 %v6995, %v6993
    %v7088 = vpack.c.b16 %v6996, %v6994
    %v7089 = vpack.c.b16 %v6999, %v6997
    %v7090 = vpack.c.b16 %v7000, %v6998
    %v7091 = vpack.c.b16 %v7003, %v7001
    %v7092 = vpack.c.b16 %v7004, %v7002
    %v7093 = vpack.c.b16 %v7007, %v7005
    %v7094 = vpack.c.b16 %v7008, %v7006
    %v7095 = vpack.c.b16 %v7011, %v7009
    %v7096 = vpack.c.b16 %v7012, %v7010
    %v7097 = vpack.c.b16 %v7015, %v7013
    %v7098 = vpack.c.b16 %v7016, %v7014
    %v7099 = vpack.c.b16 %v7019, %v7017
    %v7100 = vpack.c.b16 %v7020, %v7018
    %v7101 = vpack.c.b16 %v7023, %v7021
    %v7102 = vpack.c.b16 %v7024, %v7022
    %v7103 = vpack.c.b16 %v7027, %v7025
    %v7104 = vpack.c.b16 %v7028, %v7026
    %v7105 = vpack.c.b16 %v7031, %v7029
    %v7106 = vpack.c.b16 %v7032, %v7030
    %v7107 = vpack.c.b16 %v7035, %v7033
    %v7108 = vpack.c.b16 %v7036, %v7034
    %v7109 = vpack.c.b16 %v7039, %v7037
    %v7110 = vpack.c.b16 %v7040, %v7038
    %v7111 = vpack.c.b16 %v7043, %v7041
    %v7112 = vpack.c.b16 %v7044, %v7042
    %v7113 = vpack.c.b16 %v7047, %v7045
    %v7114 = vpack.c.b16 %v7048, %v7046
    %v7115 = vpack.c.b16 %v7051, %v7049
    %v7116 = vpack.c.b16 %v7052, %v7050
    %v7117 = vpack.c.b16 %v7055, %v7053
    %v7118 = vpack.c.b16 %v7056, %v7054
    %v7119 = vpack.c.b16 %v7059, %v7057
    %v7120 = vpack.c.b16 %v7060, %v7058
    %v7121 = vpack.c.b16 %v7063, %v7061
    %v7122 = vpack.c.b16 %v7064, %v7062
    %v7123 = vpack.c.b16 %v7067, %v7065
    %v7124 = vpack.c.b16 %v7068, %v7066
    %v7125 = vpack.c.b16 %v7071, %v7069
    %v7126 = vpack.c.b16 %v7072, %v7070
    %v7127 = vpack.c.b16 %v7075, %v7073
    %v7128 = vpack.c.b16 %v7076, %v7074
    %v7129 = vpack.c.b16 %v7079, %v7077
    %v7130 = vpack.c.b16 %v7080, %v7078
    %v7131 = vpack.c.b16 %v7083, %v7081
    %v7132 = vpack.c.b16 %v7084, %v7082
    %v7177 = vunpack.c.l.b16 %v6921
    %v7178 = vunpack.c.l.b16 %v6922
    %v7179 = vunpack.c.l.b16 %v6923
    %v7180 = vunpack.c.l.b16 %v6924
    %v7181 = vunpack.c.l.b16 %v6925
    %v7182 = vunpack.c.l.b16 %v6926
    %v7183 = vunpack.c.l.b16 %v6927
    %v7184 = vunpack.c.l.b16 %v6928
    %v7185 = vunpack.c.l.b16 %v6929
    %v7186 = vunpack.c.l.b16 %v6930
    %v7187 = vunpack.c.l.b16 %v6931
    %v7188 = vunpack.c.l.b16 %v6932
    %v7189 = vunpack.c.l.b16 %v6933
    %v7190 = vunpack.c.l.b16 %v6934
    %v7191 = vunpack.c.l.b16 %v6935
    %v7192 = vunpack.c.l.b16 %v6936
    %v7193 = vunpack.c.l.b16 %v6937
    %v7194 = vunpack.c.l.b16 %v6938
    %v7195 = vunpack.c.l.b16 %v6939
    %v7196 = vunpack.c.l.b16 %v6940
    %v7197 = vpack.c.b16 %v7178, %v7177
    %v7198 = vpack.c.b16 %v7180, %v7179
    %v7199 = vpack.c.b16 %v7182, %v7181
    %v7200 = vpack.c.b16 %v7184, %v7183
    %v7201 = vpack.c.b16 %v7186, %v7185
    %v7202 = vpack.c.b16 %v7188, %v7187
    %v7203 = vpack.c.b16 %v7190, %v7189
    %v7204 = vpack.c.b16 %v7192, %v7191
    %v7205 = vpack.c.b16 %v7194, %v7193
    %v7206 = vpack.c.b16 %v7196, %v7195
    %v7218 = vsel %vm956, %v7086, 0
    %v7221 = vsel %vm956, %v7088, 0
    %v7224 = vsel %vm956, %v7090, 0
    %v7227 = vsel %vm956, %v7092, 0
    %v7230 = vsel %vm956, %v7094, 0
    %v7233 = vsel %vm956, %v7096, 0
    %v7236 = vsel %vm956, %v7098, 0
    %v7239 = vsel %vm956, %v7100, 0
    %v7242 = vsel %vm956, %v7102, 0
    %v7245 = vsel %vm956, %v7104, 0
    %v7248 = vsel %vm956, %v7106, 0
    %v7251 = vsel %vm956, %v7108, 0
    %v7254 = vsel %vm956, %v7110, 0
    %v7257 = vsel %vm956, %v7112, 0
    %v7260 = vsel %vm956, %v7114, 0
    %v7263 = vsel %vm956, %v7116, 0
    %v7266 = vsel %vm956, %v7118, 0
    %v7269 = vsel %vm956, %v7120, 0
    %v7272 = vsel %vm956, %v7122, 0
    %v7275 = vsel %vm956, %v7124, 0
    %v7278 = vsel %vm956, %v7126, 0
    %v7281 = vsel %vm956, %v7128, 0
    %v7284 = vsel %vm956, %v7130, 0
    %v7287 = vsel %vm956, %v7132, 0
    %7289 = vmatpush.bf16.msra.mxu0 %v7204
    %7290 = vmatpush.bf16.msra.mxu0 %v7203
    %7291 = vmatpush.bf16.msra.mxu0 %v7202
    %7292 = vmatpush.bf16.msra.mxu0 %v7201
    %7293 = vmatpush.bf16.msra.mxu0 %v7200
    %7294 = vmatpush.bf16.msra.mxu0 %v7199
    %7295 = vmatpush.bf16.msra.mxu0 %v7198
    %7296 = vmatpush.bf16.msra.mxu0 %v7197
    %7297 = vmatmul.bf16.gmra.mxu0 %v7085
    %v7298 = vpop.f32.mrf.mxu0
    %v7299 = vadd.f32 0.0, %v7298
    %v7300 = vpop.f32.mrf.mxu0
    %v7301 = vadd.f32 0.0, %v7300
    %7302 = vmatmul.bf16.gmra.mxu0 %v7087
    %v7303 = vpop.f32.mrf.mxu0
    %v7304 = vadd.f32 0.0, %v7303
    %v7305 = vpop.f32.mrf.mxu0
    %v7306 = vadd.f32 0.0, %v7305
    %7307 = vmatmul.bf16.gmra.mxu0 %v7089
    %v7308 = vpop.f32.mrf.mxu0
    %v7309 = vadd.f32 0.0, %v7308
    %v7310 = vpop.f32.mrf.mxu0
    %v7311 = vadd.f32 0.0, %v7310
    %7312 = vmatmul.bf16.gmra.mxu0 %v7091
    %v7313 = vpop.f32.mrf.mxu0
    %v7314 = vadd.f32 0.0, %v7313
    %v7315 = vpop.f32.mrf.mxu0
    %v7316 = vadd.f32 0.0, %v7315
    %7317 = vmatmul.bf16.gmra.mxu0 %v7093
    %v7318 = vpop.f32.mrf.mxu0
    %v7319 = vadd.f32 0.0, %v7318
    %v7320 = vpop.f32.mrf.mxu0
    %v7321 = vadd.f32 0.0, %v7320
    %7322 = vmatmul.bf16.gmra.mxu0 %v7095
    %v7323 = vpop.f32.mrf.mxu0
    %v7324 = vadd.f32 0.0, %v7323
    %v7325 = vpop.f32.mrf.mxu0
    %v7326 = vadd.f32 0.0, %v7325
    %7327 = vmatmul.bf16.gmra.mxu0 %v7097
    %v7328 = vpop.f32.mrf.mxu0
    %v7329 = vadd.f32 0.0, %v7328
    %v7330 = vpop.f32.mrf.mxu0
    %v7331 = vadd.f32 0.0, %v7330
    %7332 = vmatmul.bf16.gmra.mxu0 %v7099
    %v7333 = vpop.f32.mrf.mxu0
    %v7334 = vadd.f32 0.0, %v7333
    %v7335 = vpop.f32.mrf.mxu0
    %v7336 = vadd.f32 0.0, %v7335
    %7337 = vmatmul.bf16.gmra.mxu0 %v7101
    %v7338 = vpop.f32.mrf.mxu0
    %v7339 = vadd.f32 0.0, %v7338
    %v7340 = vpop.f32.mrf.mxu0
    %v7341 = vadd.f32 0.0, %v7340
    %7342 = vmatmul.bf16.gmra.mxu0 %v7103
    %v7343 = vpop.f32.mrf.mxu0
    %v7344 = vadd.f32 0.0, %v7343
    %v7345 = vpop.f32.mrf.mxu0
    %v7346 = vadd.f32 0.0, %v7345
    %7347 = vmatmul.bf16.gmra.mxu0 %v7105
    %v7348 = vpop.f32.mrf.mxu0
    %v7349 = vadd.f32 0.0, %v7348
    %v7350 = vpop.f32.mrf.mxu0
    %v7351 = vadd.f32 0.0, %v7350
    %7352 = vmatmul.bf16.gmra.mxu0 %v7107
    %v7353 = vpop.f32.mrf.mxu0
    %v7354 = vadd.f32 0.0, %v7353
    %v7355 = vpop.f32.mrf.mxu0
    %v7356 = vadd.f32 0.0, %v7355
    %7357 = vmatmul.bf16.gmra.mxu0 %v7109
    %v7358 = vpop.f32.mrf.mxu0
    %v7359 = vadd.f32 0.0, %v7358
    %v7360 = vpop.f32.mrf.mxu0
    %v7361 = vadd.f32 0.0, %v7360
    %7362 = vmatmul.bf16.gmra.mxu0 %v7111
    %v7363 = vpop.f32.mrf.mxu0
    %v7364 = vadd.f32 0.0, %v7363
    %v7365 = vpop.f32.mrf.mxu0
    %v7366 = vadd.f32 0.0, %v7365
    %7367 = vmatmul.bf16.gmra.mxu0 %v7113
    %v7368 = vpop.f32.mrf.mxu0
    %v7369 = vadd.f32 0.0, %v7368
    %v7370 = vpop.f32.mrf.mxu0
    %v7371 = vadd.f32 0.0, %v7370
    %7372 = vmatmul.bf16.gmra.mxu0 %v7115
    %v7373 = vpop.f32.mrf.mxu0
    %v7374 = vadd.f32 0.0, %v7373
    %v7375 = vpop.f32.mrf.mxu0
    %v7376 = vadd.f32 0.0, %v7375
    %7377 = vmatmul.bf16.gmra.mxu0 %v7117
    %v7378 = vpop.f32.mrf.mxu0
    %v7379 = vadd.f32 0.0, %v7378
    %v7380 = vpop.f32.mrf.mxu0
    %v7381 = vadd.f32 0.0, %v7380
    %7382 = vmatmul.bf16.gmra.mxu0 %v7119
    %v7383 = vpop.f32.mrf.mxu0
    %v7384 = vadd.f32 0.0, %v7383
    %v7385 = vpop.f32.mrf.mxu0
    %v7386 = vadd.f32 0.0, %v7385
    %7387 = vmatmul.bf16.gmra.mxu0 %v7121
    %v7388 = vpop.f32.mrf.mxu0
    %v7389 = vadd.f32 0.0, %v7388
    %v7390 = vpop.f32.mrf.mxu0
    %v7391 = vadd.f32 0.0, %v7390
    %7392 = vmatmul.bf16.gmra.mxu0 %v7123
    %v7393 = vpop.f32.mrf.mxu0
    %v7394 = vadd.f32 0.0, %v7393
    %v7395 = vpop.f32.mrf.mxu0
    %v7396 = vadd.f32 0.0, %v7395
    %7397 = vmatmul.bf16.gmra.mxu0 %v7125
    %v7398 = vpop.f32.mrf.mxu0
    %v7399 = vadd.f32 0.0, %v7398
    %v7400 = vpop.f32.mrf.mxu0
    %v7401 = vadd.f32 0.0, %v7400
    %7402 = vmatmul.bf16.gmra.mxu0 %v7127
    %v7403 = vpop.f32.mrf.mxu0
    %v7404 = vadd.f32 0.0, %v7403
    %v7405 = vpop.f32.mrf.mxu0
    %v7406 = vadd.f32 0.0, %v7405
    %7407 = vmatmul.bf16.gmra.mxu0 %v7129
    %v7408 = vpop.f32.mrf.mxu0
    %v7409 = vadd.f32 0.0, %v7408
    %v7410 = vpop.f32.mrf.mxu0
    %v7411 = vadd.f32 0.0, %v7410
    %7412 = vmatmul.bf16.gmra.mxu0 %v7131
    %v7413 = vpop.f32.mrf.mxu0
    %v7414 = vadd.f32 0.0, %v7413
    %v7415 = vpop.f32.mrf.mxu0
    %v7416 = vadd.f32 0.0, %v7415
    %7417 = vdwg.mxu0
    %7418 = vmatpush.bf16.msra.mxu0 0
    %7419 = vmatpush.bf16.msra.mxu0 0
    %7420 = vmatpush.bf16.msra.mxu0 0
    %7421 = vmatpush.bf16.msra.mxu0 0
    %7422 = vmatpush.bf16.msra.mxu0 0
    %7423 = vmatpush.bf16.msra.mxu0 0
    %7424 = vmatpush.bf16.msra.mxu0 %v7206
    %7425 = vmatpush.bf16.msra.mxu0 %v7205
    %7426 = vmatmul.bf16.gmra.mxu0 %v7218
    %v7427 = vpop.f32.mrf.mxu0
    %v7428 = vadd.f32 %v7299, %v7427
    %v7429 = vpop.f32.mrf.mxu0
    %v7430 = vadd.f32 %v7301, %v7429
    %7431 = vmatmul.bf16.gmra.mxu0 %v7221
    %v7432 = vpop.f32.mrf.mxu0
    %v7433 = vadd.f32 %v7304, %v7432
    %v7434 = vpop.f32.mrf.mxu0
    %v7435 = vadd.f32 %v7306, %v7434
    %7436 = vmatmul.bf16.gmra.mxu0 %v7224
    %v7437 = vpop.f32.mrf.mxu0
    %v7438 = vadd.f32 %v7309, %v7437
    %v7439 = vpop.f32.mrf.mxu0
    %v7440 = vadd.f32 %v7311, %v7439
    %7441 = vmatmul.bf16.gmra.mxu0 %v7227
    %v7442 = vpop.f32.mrf.mxu0
    %v7443 = vadd.f32 %v7314, %v7442
    %v7444 = vpop.f32.mrf.mxu0
    %v7445 = vadd.f32 %v7316, %v7444
    %7446 = vmatmul.bf16.gmra.mxu0 %v7230
    %v7447 = vpop.f32.mrf.mxu0
    %v7448 = vadd.f32 %v7319, %v7447
    %v7449 = vpop.f32.mrf.mxu0
    %v7450 = vadd.f32 %v7321, %v7449
    %7451 = vmatmul.bf16.gmra.mxu0 %v7233
    %v7452 = vpop.f32.mrf.mxu0
    %v7453 = vadd.f32 %v7324, %v7452
    %v7454 = vpop.f32.mrf.mxu0
    %v7455 = vadd.f32 %v7326, %v7454
    %7456 = vmatmul.bf16.gmra.mxu0 %v7236
    %v7457 = vpop.f32.mrf.mxu0
    %v7458 = vadd.f32 %v7329, %v7457
    %v7459 = vpop.f32.mrf.mxu0
    %v7460 = vadd.f32 %v7331, %v7459
    %7461 = vmatmul.bf16.gmra.mxu0 %v7239
    %v7462 = vpop.f32.mrf.mxu0
    %v7463 = vadd.f32 %v7334, %v7462
    %v7464 = vpop.f32.mrf.mxu0
    %v7465 = vadd.f32 %v7336, %v7464
    %7466 = vmatmul.bf16.gmra.mxu0 %v7242
    %v7467 = vpop.f32.mrf.mxu0
    %v7468 = vadd.f32 %v7339, %v7467
    %v7469 = vpop.f32.mrf.mxu0
    %v7470 = vadd.f32 %v7341, %v7469
    %7471 = vmatmul.bf16.gmra.mxu0 %v7245
    %v7472 = vpop.f32.mrf.mxu0
    %v7473 = vadd.f32 %v7344, %v7472
    %v7474 = vpop.f32.mrf.mxu0
    %v7475 = vadd.f32 %v7346, %v7474
    %7476 = vmatmul.bf16.gmra.mxu0 %v7248
    %v7477 = vpop.f32.mrf.mxu0
    %v7478 = vadd.f32 %v7349, %v7477
    %v7479 = vpop.f32.mrf.mxu0
    %v7480 = vadd.f32 %v7351, %v7479
    %7481 = vmatmul.bf16.gmra.mxu0 %v7251
    %v7482 = vpop.f32.mrf.mxu0
    %v7483 = vadd.f32 %v7354, %v7482
    %v7484 = vpop.f32.mrf.mxu0
    %v7485 = vadd.f32 %v7356, %v7484
    %7486 = vmatmul.bf16.gmra.mxu0 %v7254
    %v7487 = vpop.f32.mrf.mxu0
    %v7488 = vadd.f32 %v7359, %v7487
    %v7489 = vpop.f32.mrf.mxu0
    %v7490 = vadd.f32 %v7361, %v7489
    %7491 = vmatmul.bf16.gmra.mxu0 %v7257
    %v7492 = vpop.f32.mrf.mxu0
    %v7493 = vadd.f32 %v7364, %v7492
    %v7494 = vpop.f32.mrf.mxu0
    %v7495 = vadd.f32 %v7366, %v7494
    %7496 = vmatmul.bf16.gmra.mxu0 %v7260
    %v7497 = vpop.f32.mrf.mxu0
    %v7498 = vadd.f32 %v7369, %v7497
    %v7499 = vpop.f32.mrf.mxu0
    %v7500 = vadd.f32 %v7371, %v7499
    %7501 = vmatmul.bf16.gmra.mxu0 %v7263
    %v7502 = vpop.f32.mrf.mxu0
    %v7503 = vadd.f32 %v7374, %v7502
    %v7504 = vpop.f32.mrf.mxu0
    %v7505 = vadd.f32 %v7376, %v7504
    %7506 = vmatmul.bf16.gmra.mxu0 %v7266
    %v7507 = vpop.f32.mrf.mxu0
    %v7508 = vadd.f32 %v7379, %v7507
    %v7509 = vpop.f32.mrf.mxu0
    %v7510 = vadd.f32 %v7381, %v7509
    %7511 = vmatmul.bf16.gmra.mxu0 %v7269
    %v7512 = vpop.f32.mrf.mxu0
    %v7513 = vadd.f32 %v7384, %v7512
    %v7514 = vpop.f32.mrf.mxu0
    %v7515 = vadd.f32 %v7386, %v7514
    %7516 = vmatmul.bf16.gmra.mxu0 %v7272
    %v7517 = vpop.f32.mrf.mxu0
    %v7518 = vadd.f32 %v7389, %v7517
    %v7519 = vpop.f32.mrf.mxu0
    %v7520 = vadd.f32 %v7391, %v7519
    %7521 = vmatmul.bf16.gmra.mxu0 %v7275
    %v7522 = vpop.f32.mrf.mxu0
    %v7523 = vadd.f32 %v7394, %v7522
    %v7524 = vpop.f32.mrf.mxu0
    %v7525 = vadd.f32 %v7396, %v7524
    %7526 = vmatmul.bf16.gmra.mxu0 %v7278
    %v7527 = vpop.f32.mrf.mxu0
    %v7528 = vadd.f32 %v7399, %v7527
    %v7529 = vpop.f32.mrf.mxu0
    %v7530 = vadd.f32 %v7401, %v7529
    %7531 = vmatmul.bf16.gmra.mxu0 %v7281
    %v7532 = vpop.f32.mrf.mxu0
    %v7533 = vadd.f32 %v7404, %v7532
    %v7534 = vpop.f32.mrf.mxu0
    %v7535 = vadd.f32 %v7406, %v7534
    %7536 = vmatmul.bf16.gmra.mxu0 %v7284
    %v7537 = vpop.f32.mrf.mxu0
    %v7538 = vadd.f32 %v7409, %v7537
    %v7539 = vpop.f32.mrf.mxu0
    %v7540 = vadd.f32 %v7411, %v7539
    %7541 = vmatmul.bf16.gmra.mxu0 %v7287
    %v7542 = vpop.f32.mrf.mxu0
    %v7543 = vadd.f32 %v7414, %v7542
    %v7544 = vpop.f32.mrf.mxu0
    %v7545 = vadd.f32 %v7416, %v7544
    %7546 = vdwg.mxu0
    %v7547 = vadd.f32 %v6823, %v7428
    %v7548 = vadd.f32 %v6824, %v7430
    %v7549 = vadd.f32 %v6825, %v7433
    %v7550 = vadd.f32 %v6826, %v7435
    %v7551 = vadd.f32 %v6827, %v7438
    %v7552 = vadd.f32 %v6828, %v7440
    %v7553 = vadd.f32 %v6829, %v7443
    %v7554 = vadd.f32 %v6830, %v7445
    %v7555 = vadd.f32 %v6831, %v7448
    %v7556 = vadd.f32 %v6832, %v7450
    %v7557 = vadd.f32 %v6833, %v7453
    %v7558 = vadd.f32 %v6834, %v7455
    %v7559 = vadd.f32 %v6835, %v7458
    %v7560 = vadd.f32 %v6836, %v7460
    %v7561 = vadd.f32 %v6837, %v7463
    %v7562 = vadd.f32 %v6838, %v7465
    %v7563 = vadd.f32 %v6839, %v7468
    %v7564 = vadd.f32 %v6840, %v7470
    %v7565 = vadd.f32 %v6841, %v7473
    %v7566 = vadd.f32 %v6842, %v7475
    %v7567 = vadd.f32 %v6843, %v7478
    %v7568 = vadd.f32 %v6844, %v7480
    %v7569 = vadd.f32 %v6845, %v7483
    %v7570 = vadd.f32 %v6846, %v7485
    %v7571 = vadd.f32 %v6847, %v7488
    %v7572 = vadd.f32 %v6848, %v7490
    %v7573 = vadd.f32 %v6849, %v7493
    %v7574 = vadd.f32 %v6850, %v7495
    %v7575 = vadd.f32 %v6851, %v7498
    %v7576 = vadd.f32 %v6852, %v7500
    %v7577 = vadd.f32 %v6853, %v7503
    %v7578 = vadd.f32 %v6854, %v7505
    %v7579 = vadd.f32 %v6855, %v7508
    %v7580 = vadd.f32 %v6856, %v7510
    %v7581 = vadd.f32 %v6857, %v7513
    %v7582 = vadd.f32 %v6858, %v7515
    %v7583 = vadd.f32 %v6859, %v7518
    %v7584 = vadd.f32 %v6860, %v7520
    %v7585 = vadd.f32 %v6861, %v7523
    %v7586 = vadd.f32 %v6862, %v7525
    %v7587 = vadd.f32 %v6863, %v7528
    %v7588 = vadd.f32 %v6864, %v7530
    %v7589 = vadd.f32 %v6865, %v7533
    %v7590 = vadd.f32 %v6866, %v7535
    %v7591 = vadd.f32 %v6867, %v7538
    %v7592 = vadd.f32 %v6868, %v7540
    %v7593 = vadd.f32 %v6869, %v7543
    %v7594 = vadd.f32 %v6870, %v7545
    %s7595 = scalar_lea.vmem [#allocation2], 64
    %v7596 = vld [vmem:[%s7595] sm:$0xff]
    %v7597 = vld [vmem:[%s7595 + $0x8] sm:$0xff]
    %v7598 = vld [vmem:[%s7595 + $0x10] sm:$0xff]
    %v7599 = vld [vmem:[%s7595 + $0x18] sm:$0xff]
    %v7600 = vld [vmem:[%s7595 + $0x20] sm:$0xff]
    %v7601 = vld [vmem:[%s7595 + $0x28] sm:$0xff]
    %v7602 = vld [vmem:[%s7595 + $0x30] sm:$0xff]
    %v7603 = vld [vmem:[%s7595 + $0x38] sm:$0xff]
    %v7604 = vld [vmem:[%s7595 + $0x40] sm:$0xff]
    %v7605 = vld [vmem:[%s7595 + $0x48] sm:$0xff]
    %v7606 = vld [vmem:[%s7595 + $0x50] sm:$0xff]
    %v7607 = vld [vmem:[%s7595 + $0x58] sm:$0xff]
    %v7608 = vld [vmem:[%s7595 + $0x60] sm:$0xff]
    %v7609 = vld [vmem:[%s7595 + $0x68] sm:$0xff]
    %v7610 = vld [vmem:[%s7595 + $0x70] sm:$0xff]
    %v7611 = vld [vmem:[%s7595 + $0x78] sm:$0xff]
    %v7612 = vld [vmem:[%s7595 + $0x80] sm:$0xff]
    %v7613 = vld [vmem:[%s7595 + $0x88] sm:$0xff]
    %v7614 = vld [vmem:[%s7595 + $0x90] sm:$0xff]
    %v7615 = vld [vmem:[%s7595 + $0x98] sm:$0xff]
    %v7616 = vld [vmem:[%s7595 + $0xa0] sm:$0xff]
    %v7617 = vld [vmem:[%s7595 + $0xa8] sm:$0xff]
    %v7618 = vld [vmem:[%s7595 + $0xb0] sm:$0xff]
    %v7619 = vld [vmem:[%s7595 + $0xb8] sm:$0xff]
    %v7620 = vld [vmem:[%s7595 + $0x100] sm:$0xff]
    %v7621 = vld [vmem:[%s7595 + $0x108] sm:$0xff]
    %v7622 = vld [vmem:[%s7595 + $0x110] sm:$0xff]
    %v7623 = vld [vmem:[%s7595 + $0x118] sm:$0xff]
    %v7624 = vld [vmem:[%s7595 + $0x120] sm:$0xff]
    %v7625 = vld [vmem:[%s7595 + $0x128] sm:$0xff]
    %v7626 = vld [vmem:[%s7595 + $0x130] sm:$0xff]
    %v7627 = vld [vmem:[%s7595 + $0x138] sm:$0xff]
    %v7628 = vld [vmem:[%s7595 + $0x140] sm:$0xff]
    %v7629 = vld [vmem:[%s7595 + $0x148] sm:$0xff]
    %v7630 = vld [vmem:[%s7595 + $0x150] sm:$0xff]
    %v7631 = vld [vmem:[%s7595 + $0x158] sm:$0xff]
    %v7632 = vld [vmem:[%s7595 + $0x160] sm:$0xff]
    %v7633 = vld [vmem:[%s7595 + $0x168] sm:$0xff]
    %v7634 = vld [vmem:[%s7595 + $0x170] sm:$0xff]
    %v7635 = vld [vmem:[%s7595 + $0x178] sm:$0xff]
    %v7636 = vld [vmem:[%s7595 + $0x180] sm:$0xff]
    %v7637 = vld [vmem:[%s7595 + $0x188] sm:$0xff]
    %v7638 = vld [vmem:[%s7595 + $0x190] sm:$0xff]
    %v7639 = vld [vmem:[%s7595 + $0x198] sm:$0xff]
    %v7640 = vld [vmem:[%s7595 + $0x1a0] sm:$0xff]
    %v7641 = vld [vmem:[%s7595 + $0x1a8] sm:$0xff]
    %v7642 = vld [vmem:[%s7595 + $0x1b0] sm:$0xff]
    %v7643 = vld [vmem:[%s7595 + $0x1b8] sm:$0xff]
    %s7644 = scalar_lea.vmem %s3, 320
    %v7645 = vld [vmem:[%s7644] sm:$0xf]
    %v7646 = vld [vmem:[%s7644 + $0x4] sm:$0xf]
    %v7647 = vld [vmem:[%s7644 + $0x8] sm:$0xf]
    %v7648 = vld [vmem:[%s7644 + $0xc] sm:$0xf]
    %v7649 = vld [vmem:[%s7644 + $0x10] sm:$0xf]
    %v7650 = vld [vmem:[%s7644 + $0x14] sm:$0xf]
    %v7651 = vld [vmem:[%s7644 + $0x18] sm:$0xf]
    %v7652 = vld [vmem:[%s7644 + $0x1c] sm:$0xf]
    %v7653 = vld [vmem:[%s7644 + $0x20] sm:$0xf]
    %v7654 = vld [vmem:[%s7644 + $0x24] sm:$0xf]
    %v7655 = vld [vmem:[%s7644 + $0x28] sm:$0xf]
    %v7656 = vld [vmem:[%s7644 + $0x2c] sm:$0xf]
    %v7657 = vld [vmem:[%s7644 + $0x30] sm:$0xf]
    %v7658 = vld [vmem:[%s7644 + $0x34] sm:$0xf]
    %v7659 = vld [vmem:[%s7644 + $0x38] sm:$0xf]
    %v7660 = vld [vmem:[%s7644 + $0x3c] sm:$0xf]
    %v7661 = vld [vmem:[%s7644 + $0x40] sm:$0xf]
    %v7662 = vld [vmem:[%s7644 + $0x44] sm:$0xf]
    %v7663 = vld [vmem:[%s7644 + $0x48] sm:$0xf]
    %v7664 = vld [vmem:[%s7644 + $0x4c] sm:$0xf]
    %v7713 = vunpack.c.l.b16 %v7596
    %v7714 = vunpack.c.h.b16 %v7596
    %v7715 = vunpack.c.l.b16 %v7597
    %v7716 = vunpack.c.h.b16 %v7597
    %v7717 = vunpack.c.l.b16 %v7598
    %v7718 = vunpack.c.h.b16 %v7598
    %v7719 = vunpack.c.l.b16 %v7599
    %v7720 = vunpack.c.h.b16 %v7599
    %v7721 = vunpack.c.l.b16 %v7600
    %v7722 = vunpack.c.h.b16 %v7600
    %v7723 = vunpack.c.l.b16 %v7601
    %v7724 = vunpack.c.h.b16 %v7601
    %v7725 = vunpack.c.l.b16 %v7602
    %v7726 = vunpack.c.h.b16 %v7602
    %v7727 = vunpack.c.l.b16 %v7603
    %v7728 = vunpack.c.h.b16 %v7603
    %v7729 = vunpack.c.l.b16 %v7604
    %v7730 = vunpack.c.h.b16 %v7604
    %v7731 = vunpack.c.l.b16 %v7605
    %v7732 = vunpack.c.h.b16 %v7605
    %v7733 = vunpack.c.l.b16 %v7606
    %v7734 = vunpack.c.h.b16 %v7606
    %v7735 = vunpack.c.l.b16 %v7607
    %v7736 = vunpack.c.h.b16 %v7607
    %v7737 = vunpack.c.l.b16 %v7608
    %v7738 = vunpack.c.h.b16 %v7608
    %v7739 = vunpack.c.l.b16 %v7609
    %v7740 = vunpack.c.h.b16 %v7609
    %v7741 = vunpack.c.l.b16 %v7610
    %v7742 = vunpack.c.h.b16 %v7610
    %v7743 = vunpack.c.l.b16 %v7611
    %v7744 = vunpack.c.h.b16 %v7611
    %v7745 = vunpack.c.l.b16 %v7612
    %v7746 = vunpack.c.h.b16 %v7612
    %v7747 = vunpack.c.l.b16 %v7613
    %v7748 = vunpack.c.h.b16 %v7613
    %v7749 = vunpack.c.l.b16 %v7614
    %v7750 = vunpack.c.h.b16 %v7614
    %v7751 = vunpack.c.l.b16 %v7615
    %v7752 = vunpack.c.h.b16 %v7615
    %v7753 = vunpack.c.l.b16 %v7616
    %v7754 = vunpack.c.h.b16 %v7616
    %v7755 = vunpack.c.l.b16 %v7617
    %v7756 = vunpack.c.h.b16 %v7617
    %v7757 = vunpack.c.l.b16 %v7618
    %v7758 = vunpack.c.h.b16 %v7618
    %v7759 = vunpack.c.l.b16 %v7619
    %v7760 = vunpack.c.h.b16 %v7619
    %v7761 = vunpack.c.l.b16 %v7620
    %v7762 = vunpack.c.h.b16 %v7620
    %v7763 = vunpack.c.l.b16 %v7621
    %v7764 = vunpack.c.h.b16 %v7621
    %v7765 = vunpack.c.l.b16 %v7622
    %v7766 = vunpack.c.h.b16 %v7622
    %v7767 = vunpack.c.l.b16 %v7623
    %v7768 = vunpack.c.h.b16 %v7623
    %v7769 = vunpack.c.l.b16 %v7624
    %v7770 = vunpack.c.h.b16 %v7624
    %v7771 = vunpack.c.l.b16 %v7625
    %v7772 = vunpack.c.h.b16 %v7625
    %v7773 = vunpack.c.l.b16 %v7626
    %v7774 = vunpack.c.h.b16 %v7626
    %v7775 = vunpack.c.l.b16 %v7627
    %v7776 = vunpack.c.h.b16 %v7627
    %v7777 = vunpack.c.l.b16 %v7628
    %v7778 = vunpack.c.h.b16 %v7628
    %v7779 = vunpack.c.l.b16 %v7629
    %v7780 = vunpack.c.h.b16 %v7629
    %v7781 = vunpack.c.l.b16 %v7630
    %v7782 = vunpack.c.h.b16 %v7630
    %v7783 = vunpack.c.l.b16 %v7631
    %v7784 = vunpack.c.h.b16 %v7631
    %v7785 = vunpack.c.l.b16 %v7632
    %v7786 = vunpack.c.h.b16 %v7632
    %v7787 = vunpack.c.l.b16 %v7633
    %v7788 = vunpack.c.h.b16 %v7633
    %v7789 = vunpack.c.l.b16 %v7634
    %v7790 = vunpack.c.h.b16 %v7634
    %v7791 = vunpack.c.l.b16 %v7635
    %v7792 = vunpack.c.h.b16 %v7635
    %v7793 = vunpack.c.l.b16 %v7636
    %v7794 = vunpack.c.h.b16 %v7636
    %v7795 = vunpack.c.l.b16 %v7637
    %v7796 = vunpack.c.h.b16 %v7637
    %v7797 = vunpack.c.l.b16 %v7638
    %v7798 = vunpack.c.h.b16 %v7638
    %v7799 = vunpack.c.l.b16 %v7639
    %v7800 = vunpack.c.h.b16 %v7639
    %v7801 = vunpack.c.l.b16 %v7640
    %v7802 = vunpack.c.h.b16 %v7640
    %v7803 = vunpack.c.l.b16 %v7641
    %v7804 = vunpack.c.h.b16 %v7641
    %v7805 = vunpack.c.l.b16 %v7642
    %v7806 = vunpack.c.h.b16 %v7642
    %v7807 = vunpack.c.l.b16 %v7643
    %v7808 = vunpack.c.h.b16 %v7643
    %v7809 = vpack.c.b16 %v7715, %v7713
    %v7810 = vpack.c.b16 %v7716, %v7714
    %v7811 = vpack.c.b16 %v7719, %v7717
    %v7812 = vpack.c.b16 %v7720, %v7718
    %v7813 = vpack.c.b16 %v7723, %v7721
    %v7814 = vpack.c.b16 %v7724, %v7722
    %v7815 = vpack.c.b16 %v7727, %v7725
    %v7816 = vpack.c.b16 %v7728, %v7726
    %v7817 = vpack.c.b16 %v7731, %v7729
    %v7818 = vpack.c.b16 %v7732, %v7730
    %v7819 = vpack.c.b16 %v7735, %v7733
    %v7820 = vpack.c.b16 %v7736, %v7734
    %v7821 = vpack.c.b16 %v7739, %v7737
    %v7822 = vpack.c.b16 %v7740, %v7738
    %v7823 = vpack.c.b16 %v7743, %v7741
    %v7824 = vpack.c.b16 %v7744, %v7742
    %v7825 = vpack.c.b16 %v7747, %v7745
    %v7826 = vpack.c.b16 %v7748, %v7746
    %v7827 = vpack.c.b16 %v7751, %v7749
    %v7828 = vpack.c.b16 %v7752, %v7750
    %v7829 = vpack.c.b16 %v7755, %v7753
    %v7830 = vpack.c.b16 %v7756, %v7754
    %v7831 = vpack.c.b16 %v7759, %v7757
    %v7832 = vpack.c.b16 %v7760, %v7758
    %v7833 = vpack.c.b16 %v7763, %v7761
    %v7834 = vpack.c.b16 %v7764, %v7762
    %v7835 = vpack.c.b16 %v7767, %v7765
    %v7836 = vpack.c.b16 %v7768, %v7766
    %v7837 = vpack.c.b16 %v7771, %v7769
    %v7838 = vpack.c.b16 %v7772, %v7770
    %v7839 = vpack.c.b16 %v7775, %v7773
    %v7840 = vpack.c.b16 %v7776, %v7774
    %v7841 = vpack.c.b16 %v7779, %v7777
    %v7842 = vpack.c.b16 %v7780, %v7778
    %v7843 = vpack.c.b16 %v7783, %v7781
    %v7844 = vpack.c.b16 %v7784, %v7782
    %v7845 = vpack.c.b16 %v7787, %v7785
    %v7846 = vpack.c.b16 %v7788, %v7786
    %v7847 = vpack.c.b16 %v7791, %v7789
    %v7848 = vpack.c.b16 %v7792, %v7790
    %v7849 = vpack.c.b16 %v7795, %v7793
    %v7850 = vpack.c.b16 %v7796, %v7794
    %v7851 = vpack.c.b16 %v7799, %v7797
    %v7852 = vpack.c.b16 %v7800, %v7798
    %v7853 = vpack.c.b16 %v7803, %v7801
    %v7854 = vpack.c.b16 %v7804, %v7802
    %v7855 = vpack.c.b16 %v7807, %v7805
    %v7856 = vpack.c.b16 %v7808, %v7806
    %v7901 = vunpack.c.l.b16 %v7645
    %v7902 = vunpack.c.l.b16 %v7646
    %v7903 = vunpack.c.l.b16 %v7647
    %v7904 = vunpack.c.l.b16 %v7648
    %v7905 = vunpack.c.l.b16 %v7649
    %v7906 = vunpack.c.l.b16 %v7650
    %v7907 = vunpack.c.l.b16 %v7651
    %v7908 = vunpack.c.l.b16 %v7652
    %v7909 = vunpack.c.l.b16 %v7653
    %v7910 = vunpack.c.l.b16 %v7654
    %v7911 = vunpack.c.l.b16 %v7655
    %v7912 = vunpack.c.l.b16 %v7656
    %v7913 = vunpack.c.l.b16 %v7657
    %v7914 = vunpack.c.l.b16 %v7658
    %v7915 = vunpack.c.l.b16 %v7659
    %v7916 = vunpack.c.l.b16 %v7660
    %v7917 = vunpack.c.l.b16 %v7661
    %v7918 = vunpack.c.l.b16 %v7662
    %v7919 = vunpack.c.l.b16 %v7663
    %v7920 = vunpack.c.l.b16 %v7664
    %v7921 = vpack.c.b16 %v7902, %v7901
    %v7922 = vpack.c.b16 %v7904, %v7903
    %v7923 = vpack.c.b16 %v7906, %v7905
    %v7924 = vpack.c.b16 %v7908, %v7907
    %v7925 = vpack.c.b16 %v7910, %v7909
    %v7926 = vpack.c.b16 %v7912, %v7911
    %v7927 = vpack.c.b16 %v7914, %v7913
    %v7928 = vpack.c.b16 %v7916, %v7915
    %v7929 = vpack.c.b16 %v7918, %v7917
    %v7930 = vpack.c.b16 %v7920, %v7919
    %v7942 = vsel %vm956, %v7810, 0
    %v7945 = vsel %vm956, %v7812, 0
    %v7948 = vsel %vm956, %v7814, 0
    %v7951 = vsel %vm956, %v7816, 0
    %v7954 = vsel %vm956, %v7818, 0
    %v7957 = vsel %vm956, %v7820, 0
    %v7960 = vsel %vm956, %v7822, 0
    %v7963 = vsel %vm956, %v7824, 0
    %v7966 = vsel %vm956, %v7826, 0
    %v7969 = vsel %vm956, %v7828, 0
    %v7972 = vsel %vm956, %v7830, 0
    %v7975 = vsel %vm956, %v7832, 0
    %v7978 = vsel %vm956, %v7834, 0
    %v7981 = vsel %vm956, %v7836, 0
    %v7984 = vsel %vm956, %v7838, 0
    %v7987 = vsel %vm956, %v7840, 0
    %v7990 = vsel %vm956, %v7842, 0
    %v7993 = vsel %vm956, %v7844, 0
    %v7996 = vsel %vm956, %v7846, 0
    %v7999 = vsel %vm956, %v7848, 0
    %v8002 = vsel %vm956, %v7850, 0
    %v8005 = vsel %vm956, %v7852, 0
    %v8008 = vsel %vm956, %v7854, 0
    %v8011 = vsel %vm956, %v7856, 0
    %8013 = vmatpush.bf16.msra.mxu0 %v7928
    %8014 = vmatpush.bf16.msra.mxu0 %v7927
    %8015 = vmatpush.bf16.msra.mxu0 %v7926
    %8016 = vmatpush.bf16.msra.mxu0 %v7925
    %8017 = vmatpush.bf16.msra.mxu0 %v7924
    %8018 = vmatpush.bf16.msra.mxu0 %v7923
    %8019 = vmatpush.bf16.msra.mxu0 %v7922
    %8020 = vmatpush.bf16.msra.mxu0 %v7921
    %8021 = vmatmul.bf16.gmra.mxu0 %v7809
    %v8022 = vpop.f32.mrf.mxu0
    %v8023 = vadd.f32 0.0, %v8022
    %v8024 = vpop.f32.mrf.mxu0
    %v8025 = vadd.f32 0.0, %v8024
    %8026 = vmatmul.bf16.gmra.mxu0 %v7811
    %v8027 = vpop.f32.mrf.mxu0
    %v8028 = vadd.f32 0.0, %v8027
    %v8029 = vpop.f32.mrf.mxu0
    %v8030 = vadd.f32 0.0, %v8029
    %8031 = vmatmul.bf16.gmra.mxu0 %v7813
    %v8032 = vpop.f32.mrf.mxu0
    %v8033 = vadd.f32 0.0, %v8032
    %v8034 = vpop.f32.mrf.mxu0
    %v8035 = vadd.f32 0.0, %v8034
    %8036 = vmatmul.bf16.gmra.mxu0 %v7815
    %v8037 = vpop.f32.mrf.mxu0
    %v8038 = vadd.f32 0.0, %v8037
    %v8039 = vpop.f32.mrf.mxu0
    %v8040 = vadd.f32 0.0, %v8039
    %8041 = vmatmul.bf16.gmra.mxu0 %v7817
    %v8042 = vpop.f32.mrf.mxu0
    %v8043 = vadd.f32 0.0, %v8042
    %v8044 = vpop.f32.mrf.mxu0
    %v8045 = vadd.f32 0.0, %v8044
    %8046 = vmatmul.bf16.gmra.mxu0 %v7819
    %v8047 = vpop.f32.mrf.mxu0
    %v8048 = vadd.f32 0.0, %v8047
    %v8049 = vpop.f32.mrf.mxu0
    %v8050 = vadd.f32 0.0, %v8049
    %8051 = vmatmul.bf16.gmra.mxu0 %v7821
    %v8052 = vpop.f32.mrf.mxu0
    %v8053 = vadd.f32 0.0, %v8052
    %v8054 = vpop.f32.mrf.mxu0
    %v8055 = vadd.f32 0.0, %v8054
    %8056 = vmatmul.bf16.gmra.mxu0 %v7823
    %v8057 = vpop.f32.mrf.mxu0
    %v8058 = vadd.f32 0.0, %v8057
    %v8059 = vpop.f32.mrf.mxu0
    %v8060 = vadd.f32 0.0, %v8059
    %8061 = vmatmul.bf16.gmra.mxu0 %v7825
    %v8062 = vpop.f32.mrf.mxu0
    %v8063 = vadd.f32 0.0, %v8062
    %v8064 = vpop.f32.mrf.mxu0
    %v8065 = vadd.f32 0.0, %v8064
    %8066 = vmatmul.bf16.gmra.mxu0 %v7827
    %v8067 = vpop.f32.mrf.mxu0
    %v8068 = vadd.f32 0.0, %v8067
    %v8069 = vpop.f32.mrf.mxu0
    %v8070 = vadd.f32 0.0, %v8069
    %8071 = vmatmul.bf16.gmra.mxu0 %v7829
    %v8072 = vpop.f32.mrf.mxu0
    %v8073 = vadd.f32 0.0, %v8072
    %v8074 = vpop.f32.mrf.mxu0
    %v8075 = vadd.f32 0.0, %v8074
    %8076 = vmatmul.bf16.gmra.mxu0 %v7831
    %v8077 = vpop.f32.mrf.mxu0
    %v8078 = vadd.f32 0.0, %v8077
    %v8079 = vpop.f32.mrf.mxu0
    %v8080 = vadd.f32 0.0, %v8079
    %8081 = vmatmul.bf16.gmra.mxu0 %v7833
    %v8082 = vpop.f32.mrf.mxu0
    %v8083 = vadd.f32 0.0, %v8082
    %v8084 = vpop.f32.mrf.mxu0
    %v8085 = vadd.f32 0.0, %v8084
    %8086 = vmatmul.bf16.gmra.mxu0 %v7835
    %v8087 = vpop.f32.mrf.mxu0
    %v8088 = vadd.f32 0.0, %v8087
    %v8089 = vpop.f32.mrf.mxu0
    %v8090 = vadd.f32 0.0, %v8089
    %8091 = vmatmul.bf16.gmra.mxu0 %v7837
    %v8092 = vpop.f32.mrf.mxu0
    %v8093 = vadd.f32 0.0, %v8092
    %v8094 = vpop.f32.mrf.mxu0
    %v8095 = vadd.f32 0.0, %v8094
    %8096 = vmatmul.bf16.gmra.mxu0 %v7839
    %v8097 = vpop.f32.mrf.mxu0
    %v8098 = vadd.f32 0.0, %v8097
    %v8099 = vpop.f32.mrf.mxu0
    %v8100 = vadd.f32 0.0, %v8099
    %8101 = vmatmul.bf16.gmra.mxu0 %v7841
    %v8102 = vpop.f32.mrf.mxu0
    %v8103 = vadd.f32 0.0, %v8102
    %v8104 = vpop.f32.mrf.mxu0
    %v8105 = vadd.f32 0.0, %v8104
    %8106 = vmatmul.bf16.gmra.mxu0 %v7843
    %v8107 = vpop.f32.mrf.mxu0
    %v8108 = vadd.f32 0.0, %v8107
    %v8109 = vpop.f32.mrf.mxu0
    %v8110 = vadd.f32 0.0, %v8109
    %8111 = vmatmul.bf16.gmra.mxu0 %v7845
    %v8112 = vpop.f32.mrf.mxu0
    %v8113 = vadd.f32 0.0, %v8112
    %v8114 = vpop.f32.mrf.mxu0
    %v8115 = vadd.f32 0.0, %v8114
    %8116 = vmatmul.bf16.gmra.mxu0 %v7847
    %v8117 = vpop.f32.mrf.mxu0
    %v8118 = vadd.f32 0.0, %v8117
    %v8119 = vpop.f32.mrf.mxu0
    %v8120 = vadd.f32 0.0, %v8119
    %8121 = vmatmul.bf16.gmra.mxu0 %v7849
    %v8122 = vpop.f32.mrf.mxu0
    %v8123 = vadd.f32 0.0, %v8122
    %v8124 = vpop.f32.mrf.mxu0
    %v8125 = vadd.f32 0.0, %v8124
    %8126 = vmatmul.bf16.gmra.mxu0 %v7851
    %v8127 = vpop.f32.mrf.mxu0
    %v8128 = vadd.f32 0.0, %v8127
    %v8129 = vpop.f32.mrf.mxu0
    %v8130 = vadd.f32 0.0, %v8129
    %8131 = vmatmul.bf16.gmra.mxu0 %v7853
    %v8132 = vpop.f32.mrf.mxu0
    %v8133 = vadd.f32 0.0, %v8132
    %v8134 = vpop.f32.mrf.mxu0
    %v8135 = vadd.f32 0.0, %v8134
    %8136 = vmatmul.bf16.gmra.mxu0 %v7855
    %v8137 = vpop.f32.mrf.mxu0
    %v8138 = vadd.f32 0.0, %v8137
    %v8139 = vpop.f32.mrf.mxu0
    %v8140 = vadd.f32 0.0, %v8139
    %8141 = vdwg.mxu0
    %8142 = vmatpush.bf16.msra.mxu0 0
    %8143 = vmatpush.bf16.msra.mxu0 0
    %8144 = vmatpush.bf16.msra.mxu0 0
    %8145 = vmatpush.bf16.msra.mxu0 0
    %8146 = vmatpush.bf16.msra.mxu0 0
    %8147 = vmatpush.bf16.msra.mxu0 0
    %8148 = vmatpush.bf16.msra.mxu0 %v7930
    %8149 = vmatpush.bf16.msra.mxu0 %v7929
    %8150 = vmatmul.bf16.gmra.mxu0 %v7942
    %v8151 = vpop.f32.mrf.mxu0
    %v8152 = vadd.f32 %v8023, %v8151
    %v8153 = vpop.f32.mrf.mxu0
    %v8154 = vadd.f32 %v8025, %v8153
    %8155 = vmatmul.bf16.gmra.mxu0 %v7945
    %v8156 = vpop.f32.mrf.mxu0
    %v8157 = vadd.f32 %v8028, %v8156
    %v8158 = vpop.f32.mrf.mxu0
    %v8159 = vadd.f32 %v8030, %v8158
    %8160 = vmatmul.bf16.gmra.mxu0 %v7948
    %v8161 = vpop.f32.mrf.mxu0
    %v8162 = vadd.f32 %v8033, %v8161
    %v8163 = vpop.f32.mrf.mxu0
    %v8164 = vadd.f32 %v8035, %v8163
    %8165 = vmatmul.bf16.gmra.mxu0 %v7951
    %v8166 = vpop.f32.mrf.mxu0
    %v8167 = vadd.f32 %v8038, %v8166
    %v8168 = vpop.f32.mrf.mxu0
    %v8169 = vadd.f32 %v8040, %v8168
    %8170 = vmatmul.bf16.gmra.mxu0 %v7954
    %v8171 = vpop.f32.mrf.mxu0
    %v8172 = vadd.f32 %v8043, %v8171
    %v8173 = vpop.f32.mrf.mxu0
    %v8174 = vadd.f32 %v8045, %v8173
    %8175 = vmatmul.bf16.gmra.mxu0 %v7957
    %v8176 = vpop.f32.mrf.mxu0
    %v8177 = vadd.f32 %v8048, %v8176
    %v8178 = vpop.f32.mrf.mxu0
    %v8179 = vadd.f32 %v8050, %v8178
    %8180 = vmatmul.bf16.gmra.mxu0 %v7960
    %v8181 = vpop.f32.mrf.mxu0
    %v8182 = vadd.f32 %v8053, %v8181
    %v8183 = vpop.f32.mrf.mxu0
    %v8184 = vadd.f32 %v8055, %v8183
    %8185 = vmatmul.bf16.gmra.mxu0 %v7963
    %v8186 = vpop.f32.mrf.mxu0
    %v8187 = vadd.f32 %v8058, %v8186
    %v8188 = vpop.f32.mrf.mxu0
    %v8189 = vadd.f32 %v8060, %v8188
    %8190 = vmatmul.bf16.gmra.mxu0 %v7966
    %v8191 = vpop.f32.mrf.mxu0
    %v8192 = vadd.f32 %v8063, %v8191
    %v8193 = vpop.f32.mrf.mxu0
    %v8194 = vadd.f32 %v8065, %v8193
    %8195 = vmatmul.bf16.gmra.mxu0 %v7969
    %v8196 = vpop.f32.mrf.mxu0
    %v8197 = vadd.f32 %v8068, %v8196
    %v8198 = vpop.f32.mrf.mxu0
    %v8199 = vadd.f32 %v8070, %v8198
    %8200 = vmatmul.bf16.gmra.mxu0 %v7972
    %v8201 = vpop.f32.mrf.mxu0
    %v8202 = vadd.f32 %v8073, %v8201
    %v8203 = vpop.f32.mrf.mxu0
    %v8204 = vadd.f32 %v8075, %v8203
    %8205 = vmatmul.bf16.gmra.mxu0 %v7975
    %v8206 = vpop.f32.mrf.mxu0
    %v8207 = vadd.f32 %v8078, %v8206
    %v8208 = vpop.f32.mrf.mxu0
    %v8209 = vadd.f32 %v8080, %v8208
    %8210 = vmatmul.bf16.gmra.mxu0 %v7978
    %v8211 = vpop.f32.mrf.mxu0
    %v8212 = vadd.f32 %v8083, %v8211
    %v8213 = vpop.f32.mrf.mxu0
    %v8214 = vadd.f32 %v8085, %v8213
    %8215 = vmatmul.bf16.gmra.mxu0 %v7981
    %v8216 = vpop.f32.mrf.mxu0
    %v8217 = vadd.f32 %v8088, %v8216
    %v8218 = vpop.f32.mrf.mxu0
    %v8219 = vadd.f32 %v8090, %v8218
    %8220 = vmatmul.bf16.gmra.mxu0 %v7984
    %v8221 = vpop.f32.mrf.mxu0
    %v8222 = vadd.f32 %v8093, %v8221
    %v8223 = vpop.f32.mrf.mxu0
    %v8224 = vadd.f32 %v8095, %v8223
    %8225 = vmatmul.bf16.gmra.mxu0 %v7987
    %v8226 = vpop.f32.mrf.mxu0
    %v8227 = vadd.f32 %v8098, %v8226
    %v8228 = vpop.f32.mrf.mxu0
    %v8229 = vadd.f32 %v8100, %v8228
    %8230 = vmatmul.bf16.gmra.mxu0 %v7990
    %v8231 = vpop.f32.mrf.mxu0
    %v8232 = vadd.f32 %v8103, %v8231
    %v8233 = vpop.f32.mrf.mxu0
    %v8234 = vadd.f32 %v8105, %v8233
    %8235 = vmatmul.bf16.gmra.mxu0 %v7993
    %v8236 = vpop.f32.mrf.mxu0
    %v8237 = vadd.f32 %v8108, %v8236
    %v8238 = vpop.f32.mrf.mxu0
    %v8239 = vadd.f32 %v8110, %v8238
    %8240 = vmatmul.bf16.gmra.mxu0 %v7996
    %v8241 = vpop.f32.mrf.mxu0
    %v8242 = vadd.f32 %v8113, %v8241
    %v8243 = vpop.f32.mrf.mxu0
    %v8244 = vadd.f32 %v8115, %v8243
    %8245 = vmatmul.bf16.gmra.mxu0 %v7999
    %v8246 = vpop.f32.mrf.mxu0
    %v8247 = vadd.f32 %v8118, %v8246
    %v8248 = vpop.f32.mrf.mxu0
    %v8249 = vadd.f32 %v8120, %v8248
    %8250 = vmatmul.bf16.gmra.mxu0 %v8002
    %v8251 = vpop.f32.mrf.mxu0
    %v8252 = vadd.f32 %v8123, %v8251
    %v8253 = vpop.f32.mrf.mxu0
    %v8254 = vadd.f32 %v8125, %v8253
    %8255 = vmatmul.bf16.gmra.mxu0 %v8005
    %v8256 = vpop.f32.mrf.mxu0
    %v8257 = vadd.f32 %v8128, %v8256
    %v8258 = vpop.f32.mrf.mxu0
    %v8259 = vadd.f32 %v8130, %v8258
    %8260 = vmatmul.bf16.gmra.mxu0 %v8008
    %v8261 = vpop.f32.mrf.mxu0
    %v8262 = vadd.f32 %v8133, %v8261
    %v8263 = vpop.f32.mrf.mxu0
    %v8264 = vadd.f32 %v8135, %v8263
    %8265 = vmatmul.bf16.gmra.mxu0 %v8011
    %v8266 = vpop.f32.mrf.mxu0
    %v8267 = vadd.f32 %v8138, %v8266
    %v8268 = vpop.f32.mrf.mxu0
    %v8269 = vadd.f32 %v8140, %v8268
    %8270 = vdwg.mxu0
    %v8271 = vadd.f32 %v7547, %v8152
    %v8272 = vadd.f32 %v7548, %v8154
    %v8273 = vadd.f32 %v7549, %v8157
    %v8274 = vadd.f32 %v7550, %v8159
    %v8275 = vadd.f32 %v7551, %v8162
    %v8276 = vadd.f32 %v7552, %v8164
    %v8277 = vadd.f32 %v7553, %v8167
    %v8278 = vadd.f32 %v7554, %v8169
    %v8279 = vadd.f32 %v7555, %v8172
    %v8280 = vadd.f32 %v7556, %v8174
    %v8281 = vadd.f32 %v7557, %v8177
    %v8282 = vadd.f32 %v7558, %v8179
    %v8283 = vadd.f32 %v7559, %v8182
    %v8284 = vadd.f32 %v7560, %v8184
    %v8285 = vadd.f32 %v7561, %v8187
    %v8286 = vadd.f32 %v7562, %v8189
    %v8287 = vadd.f32 %v7563, %v8192
    %v8288 = vadd.f32 %v7564, %v8194
    %v8289 = vadd.f32 %v7565, %v8197
    %v8290 = vadd.f32 %v7566, %v8199
    %v8291 = vadd.f32 %v7567, %v8202
    %v8292 = vadd.f32 %v7568, %v8204
    %v8293 = vadd.f32 %v7569, %v8207
    %v8294 = vadd.f32 %v7570, %v8209
    %v8295 = vadd.f32 %v7571, %v8212
    %v8296 = vadd.f32 %v7572, %v8214
    %v8297 = vadd.f32 %v7573, %v8217
    %v8298 = vadd.f32 %v7574, %v8219
    %v8299 = vadd.f32 %v7575, %v8222
    %v8300 = vadd.f32 %v7576, %v8224
    %v8301 = vadd.f32 %v7577, %v8227
    %v8302 = vadd.f32 %v7578, %v8229
    %v8303 = vadd.f32 %v7579, %v8232
    %v8304 = vadd.f32 %v7580, %v8234
    %v8305 = vadd.f32 %v7581, %v8237
    %v8306 = vadd.f32 %v7582, %v8239
    %v8307 = vadd.f32 %v7583, %v8242
    %v8308 = vadd.f32 %v7584, %v8244
    %v8309 = vadd.f32 %v7585, %v8247
    %v8310 = vadd.f32 %v7586, %v8249
    %v8311 = vadd.f32 %v7587, %v8252
    %v8312 = vadd.f32 %v7588, %v8254
    %v8313 = vadd.f32 %v7589, %v8257
    %v8314 = vadd.f32 %v7590, %v8259
    %v8315 = vadd.f32 %v7591, %v8262
    %v8316 = vadd.f32 %v7592, %v8264
    %v8317 = vadd.f32 %v7593, %v8267
    %v8318 = vadd.f32 %v7594, %v8269
    %v8319 = vld [vmem:[%s4] sm:$0x1]
    %v8321 = vperm.slane %v8319, 0
    %v8323 = vadd.f32 %v8271, %v8321
    %v8324 = vadd.f32 %v8272, %v8321
    %v8325 = vadd.f32 %v8273, %v8321
    %v8326 = vadd.f32 %v8274, %v8321
    %v8327 = vadd.f32 %v8275, %v8321
    %v8328 = vadd.f32 %v8276, %v8321
    %v8329 = vadd.f32 %v8277, %v8321
    %v8330 = vadd.f32 %v8278, %v8321
    %v8331 = vadd.f32 %v8279, %v8321
    %v8332 = vadd.f32 %v8280, %v8321
    %v8333 = vadd.f32 %v8281, %v8321
    %v8334 = vadd.f32 %v8282, %v8321
    %v8335 = vadd.f32 %v8283, %v8321
    %v8336 = vadd.f32 %v8284, %v8321
    %v8337 = vadd.f32 %v8285, %v8321
    %v8338 = vadd.f32 %v8286, %v8321
    %v8339 = vadd.f32 %v8287, %v8321
    %v8340 = vadd.f32 %v8288, %v8321
    %v8341 = vadd.f32 %v8289, %v8321
    %v8342 = vadd.f32 %v8290, %v8321
    %v8343 = vadd.f32 %v8291, %v8321
    %v8344 = vadd.f32 %v8292, %v8321
    %v8345 = vadd.f32 %v8293, %v8321
    %v8346 = vadd.f32 %v8294, %v8321
    %v8347 = vadd.f32 %v8295, %v8321
    %v8348 = vadd.f32 %v8296, %v8321
    %v8349 = vadd.f32 %v8297, %v8321
    %v8350 = vadd.f32 %v8298, %v8321
    %v8351 = vadd.f32 %v8299, %v8321
    %v8352 = vadd.f32 %v8300, %v8321
    %v8353 = vadd.f32 %v8301, %v8321
    %v8354 = vadd.f32 %v8302, %v8321
    %v8355 = vadd.f32 %v8303, %v8321
    %v8356 = vadd.f32 %v8304, %v8321
    %v8357 = vadd.f32 %v8305, %v8321
    %v8358 = vadd.f32 %v8306, %v8321
    %v8359 = vadd.f32 %v8307, %v8321
    %v8360 = vadd.f32 %v8308, %v8321
    %v8361 = vadd.f32 %v8309, %v8321
    %v8362 = vadd.f32 %v8310, %v8321
    %v8363 = vadd.f32 %v8311, %v8321
    %v8364 = vadd.f32 %v8312, %v8321
    %v8365 = vadd.f32 %v8313, %v8321
    %v8366 = vadd.f32 %v8314, %v8321
    %v8367 = vadd.f32 %v8315, %v8321
    %v8368 = vadd.f32 %v8316, %v8321
    %v8369 = vadd.f32 %v8317, %v8321
    %v8370 = vadd.f32 %v8318, %v8321
    %v8371 = vmax.f32 %v8323, 0.0
    %v8372 = vmax.f32 %v8324, 0.0
    %v8373 = vmax.f32 %v8325, 0.0
    %v8374 = vmax.f32 %v8326, 0.0
    %v8375 = vmax.f32 %v8327, 0.0
    %v8376 = vmax.f32 %v8328, 0.0
    %v8377 = vmax.f32 %v8329, 0.0
    %v8378 = vmax.f32 %v8330, 0.0
    %v8379 = vmax.f32 %v8331, 0.0
    %v8380 = vmax.f32 %v8332, 0.0
    %v8381 = vmax.f32 %v8333, 0.0
    %v8382 = vmax.f32 %v8334, 0.0
    %v8383 = vmax.f32 %v8335, 0.0
    %v8384 = vmax.f32 %v8336, 0.0
    %v8385 = vmax.f32 %v8337, 0.0
    %v8386 = vmax.f32 %v8338, 0.0
    %v8387 = vmax.f32 %v8339, 0.0
    %v8388 = vmax.f32 %v8340, 0.0
    %v8389 = vmax.f32 %v8341, 0.0
    %v8390 = vmax.f32 %v8342, 0.0
    %v8391 = vmax.f32 %v8343, 0.0
    %v8392 = vmax.f32 %v8344, 0.0
    %v8393 = vmax.f32 %v8345, 0.0
    %v8394 = vmax.f32 %v8346, 0.0
    %v8395 = vmax.f32 %v8347, 0.0
    %v8396 = vmax.f32 %v8348, 0.0
    %v8397 = vmax.f32 %v8349, 0.0
    %v8398 = vmax.f32 %v8350, 0.0
    %v8399 = vmax.f32 %v8351, 0.0
    %v8400 = vmax.f32 %v8352, 0.0
    %v8401 = vmax.f32 %v8353, 0.0
    %v8402 = vmax.f32 %v8354, 0.0
    %v8403 = vmax.f32 %v8355, 0.0
    %v8404 = vmax.f32 %v8356, 0.0
    %v8405 = vmax.f32 %v8357, 0.0
    %v8406 = vmax.f32 %v8358, 0.0
    %v8407 = vmax.f32 %v8359, 0.0
    %v8408 = vmax.f32 %v8360, 0.0
    %v8409 = vmax.f32 %v8361, 0.0
    %v8410 = vmax.f32 %v8362, 0.0
    %v8411 = vmax.f32 %v8363, 0.0
    %v8412 = vmax.f32 %v8364, 0.0
    %v8413 = vmax.f32 %v8365, 0.0
    %v8414 = vmax.f32 %v8366, 0.0
    %v8415 = vmax.f32 %v8367, 0.0
    %v8416 = vmax.f32 %v8368, 0.0
    %v8417 = vmax.f32 %v8369, 0.0
    %v8418 = vmax.f32 %v8370, 0.0
    %v8419 = vmax.f32 %v8371, %v8373
    %v8420 = vmax.f32 %v8372, %v8374
    %v8421 = vmax.f32 %v8395, %v8397
    %v8422 = vmax.f32 %v8396, %v8398
    %v8423 = vmax.f32 %v8419, %v8375
    %v8424 = vmax.f32 %v8420, %v8376
    %v8425 = vmax.f32 %v8421, %v8399
    %v8426 = vmax.f32 %v8422, %v8400
    %v8429 = vrot.slane %v8423, 1
    %v8430 = vrot.slane %v8425, 1
    %v8433 = vmax.f32 %v8423, %v8429
    %v8434 = vmax.f32 %v8425, %v8430
    %v8435 = vrot.slane %v8423, 2
    %v8436 = vrot.slane %v8425, 2
    %v8439 = vmax.f32 %v8433, %v8435
    %v8440 = vmax.f32 %v8434, %v8436
    %v8441 = vpack.c.bf16 %v8439, %v8439
    %v8442 = vpack.c.bf16 %v8440, %v8440
    %vm8443 = vcmask 516096
    %vm8444 = vsmask.f32 256
    %vm8445 = vmand %vm8443, %vm8444
    %v8446 = vld [vmem:[#allocation3] sm:$0x1]
    %v8447 = vsel %vm8445, %v8441, %v8446
    %8448 = vst [vmem:[#allocation3] sm:$0x1] %v8447
    %v8449 = vld [vmem:[#allocation3 + $0x8] sm:$0x1]
    %v8450 = vsel %vm8445, %v8442, %v8449
    %8451 = vst [vmem:[#allocation3 + $0x8] sm:$0x1] %v8450
    %v8454 = vrot.slane %v8441, 2
    %v8455 = vrot.slane %v8442, 2
    %vm8456 = vcmask 1041408
    %v8459 = vsel %vm8456, %v8441, %v8454
    %v8463 = vsel %vm8456, %v8442, %v8455
    %v8465 = vrot.slane %v8459, 7
    %v8466 = vrot.slane %v8465, 2
    %v8467 = vrot.slane %v8463, 7
    %v8468 = vrot.slane %v8467, 2
    %vm8471 = vsmask.f32 7938
    %vm8472 = vmand %vm8443, %vm8471
    %v8473 = vld [vmem:[#allocation3] sm:$0x1]
    %v8474 = vsel %vm8472, %v8466, %v8473
    %8475 = vst [vmem:[#allocation3] sm:$0x1] %v8474
    %v8476 = vld [vmem:[#allocation3 + $0x8] sm:$0x1]
    %v8477 = vsel %vm8472, %v8468, %v8476
    %8478 = vst [vmem:[#allocation3 + $0x8] sm:$0x1] %v8477
    %v8481 = vrot.slane %v8424, 2
    %v8482 = vrot.slane %v8426, 2
    %v8485 = vmax.f32 %v8433, %v8481
    %v8486 = vmax.f32 %v8434, %v8482
    %v8487 = vpack.c.bf16 %v8485, %v8485
    %v8488 = vpack.c.bf16 %v8486, %v8486
    %8490 = vst.sshfl [vmem:[#allocation1] sm:$0xff pattern:$0x75643120] %v8487
    %s8491 = scalar_lea.vmem [#allocation1], 1
    %v8492 = vld [vmem:[%s8491] ss:$2 sm:$0xff]
    %8494 = vst.sshfl [vmem:[#allocation1 + $0x10] sm:$0xff pattern:$0x75643120] %v8488
    %s8495 = scalar_lea.vmem [#allocation1], 17
    %v8496 = vld [vmem:[%s8495] ss:$2 sm:$0xff]
    %vm8499 = vcmask 517121
    %vm8500 = vsmask.f32 1280
    %vm8501 = vmand %vm8499, %vm8500
    %v8502 = vld [vmem:[#allocation3] sm:$0x2]
    %v8503 = vsel %vm8501, %v8492, %v8502
    %8504 = vst [vmem:[#allocation3] sm:$0x2] %v8503
    %v8505 = vld [vmem:[#allocation3 + $0x8] sm:$0x2]
    %v8506 = vsel %vm8501, %v8496, %v8505
    %8507 = vst [vmem:[#allocation3 + $0x8] sm:$0x2] %v8506
    %v8508 = vrot.slane %v8424, 1
    %v8509 = vrot.slane %v8426, 1
    %v8512 = vmax.f32 %v8424, %v8508
    %v8513 = vmax.f32 %v8426, %v8509
    %v8514 = vmax.f32 %v8512, %v8481
    %v8515 = vmax.f32 %v8513, %v8482
    %v8516 = vpack.c.bf16 %v8514, %v8514
    %v8517 = vpack.c.bf16 %v8515, %v8515
    %v8520 = vrot.slane %v8516, 2
    %v8521 = vrot.slane %v8517, 2
    %v8524 = vsel %vm8456, %v8516, %v8520
    %v8528 = vsel %vm8456, %v8517, %v8521
    %v8530 = vrot.slane %v8524, 7
    %v8531 = vrot.slane %v8528, 7
    %vm8534 = vsmask.f32 7942
    %vm8535 = vmand %vm8499, %vm8534
    %v8536 = vld [vmem:[#allocation3] sm:$0x2]
    %v8537 = vsel %vm8535, %v8530, %v8536
    %8538 = vst [vmem:[#allocation3] sm:$0x2] %v8537
    %v8539 = vld [vmem:[#allocation3 + $0x8] sm:$0x2]
    %v8540 = vsel %vm8535, %v8531, %v8539
    %8541 = vst [vmem:[#allocation3 + $0x8] sm:$0x2] %v8540
    %v8542 = vmax.f32 %v8377, %v8379
    %v8543 = vmax.f32 %v8378, %v8380
    %v8544 = vmax.f32 %v8401, %v8403
    %v8545 = vmax.f32 %v8402, %v8404
    %v8546 = vmax.f32 %v8542, %v8381
    %v8547 = vmax.f32 %v8543, %v8382
    %v8548 = vmax.f32 %v8544, %v8405
    %v8549 = vmax.f32 %v8545, %v8406
    %v8552 = vrot.slane %v8546, 1
    %v8553 = vrot.slane %v8548, 1
    %v8556 = vmax.f32 %v8546, %v8552
    %v8557 = vmax.f32 %v8548, %v8553
    %v8558 = vrot.slane %v8546, 2
    %v8559 = vrot.slane %v8548, 2
    %v8562 = vmax.f32 %v8556, %v8558
    %v8563 = vmax.f32 %v8557, %v8559
    %v8564 = vpack.c.bf16 %v8562, %v8562
    %v8565 = vpack.c.bf16 %v8563, %v8563
    %s8566 = scalar_lea.vmem [#allocation3], 2
    %v8567 = vld [vmem:[%s8566] sm:$0x1]
    %v8568 = vsel %vm8445, %v8564, %v8567
    %8569 = vst [vmem:[%s8566] sm:$0x1] %v8568
    %v8570 = vld [vmem:[%s8566 + $0x8] sm:$0x1]
    %v8571 = vsel %vm8445, %v8565, %v8570
    %8572 = vst [vmem:[%s8566 + $0x8] sm:$0x1] %v8571
    %v8575 = vrot.slane %v8564, 2
    %v8576 = vrot.slane %v8565, 2
    %v8579 = vsel %vm8456, %v8564, %v8575
    %v8583 = vsel %vm8456, %v8565, %v8576
    %v8585 = vrot.slane %v8579, 7
    %v8586 = vrot.slane %v8585, 2
    %v8587 = vrot.slane %v8583, 7
    %v8588 = vrot.slane %v8587, 2
    %v8591 = vld [vmem:[%s8566] sm:$0x1]
    %v8592 = vsel %vm8472, %v8586, %v8591
    %8593 = vst [vmem:[%s8566] sm:$0x1] %v8592
    %v8594 = vld [vmem:[%s8566 + $0x8] sm:$0x1]
    %v8595 = vsel %vm8472, %v8588, %v8594
    %8596 = vst [vmem:[%s8566 + $0x8] sm:$0x1] %v8595
    %v8599 = vrot.slane %v8547, 2
    %v8600 = vrot.slane %v8549, 2
    %v8603 = vmax.f32 %v8556, %v8599
    %v8604 = vmax.f32 %v8557, %v8600
    %v8605 = vpack.c.bf16 %v8603, %v8603
    %v8606 = vpack.c.bf16 %v8604, %v8604
    %8608 = vst.sshfl [vmem:[#allocation1] sm:$0xff pattern:$0x75643120] %v8605
    %s8609 = scalar_lea.vmem [#allocation1], 1
    %v8610 = vld [vmem:[%s8609] ss:$2 sm:$0xff]
    %8612 = vst.sshfl [vmem:[#allocation1 + $0x10] sm:$0xff pattern:$0x75643120] %v8606
    %s8613 = scalar_lea.vmem [#allocation1], 17
    %v8614 = vld [vmem:[%s8613] ss:$2 sm:$0xff]
    %v8617 = vld [vmem:[%s8566] sm:$0x2]
    %v8618 = vsel %vm8501, %v8610, %v8617
    %8619 = vst [vmem:[%s8566] sm:$0x2] %v8618
    %v8620 = vld [vmem:[%s8566 + $0x8] sm:$0x2]
    %v8621 = vsel %vm8501, %v8614, %v8620
    %8622 = vst [vmem:[%s8566 + $0x8] sm:$0x2] %v8621
    %v8623 = vrot.slane %v8547, 1
    %v8624 = vrot.slane %v8549, 1
    %v8627 = vmax.f32 %v8547, %v8623
    %v8628 = vmax.f32 %v8549, %v8624
    %v8629 = vmax.f32 %v8627, %v8599
    %v8630 = vmax.f32 %v8628, %v8600
    %v8631 = vpack.c.bf16 %v8629, %v8629
    %v8632 = vpack.c.bf16 %v8630, %v8630
    %v8635 = vrot.slane %v8631, 2
    %v8636 = vrot.slane %v8632, 2
    %v8639 = vsel %vm8456, %v8631, %v8635
    %v8643 = vsel %vm8456, %v8632, %v8636
    %v8645 = vrot.slane %v8639, 7
    %v8646 = vrot.slane %v8643, 7
    %v8649 = vld [vmem:[%s8566] sm:$0x2]
    %v8650 = vsel %vm8535, %v8645, %v8649
    %8651 = vst [vmem:[%s8566] sm:$0x2] %v8650
    %v8652 = vld [vmem:[%s8566 + $0x8] sm:$0x2]
    %v8653 = vsel %vm8535, %v8646, %v8652
    %8654 = vst [vmem:[%s8566 + $0x8] sm:$0x2] %v8653
    %v8655 = vmax.f32 %v8383, %v8385
    %v8656 = vmax.f32 %v8384, %v8386
    %v8657 = vmax.f32 %v8407, %v8409
    %v8658 = vmax.f32 %v8408, %v8410
    %v8659 = vmax.f32 %v8655, %v8387
    %v8660 = vmax.f32 %v8656, %v8388
    %v8661 = vmax.f32 %v8657, %v8411
    %v8662 = vmax.f32 %v8658, %v8412
    %v8665 = vrot.slane %v8659, 1
    %v8666 = vrot.slane %v8661, 1
    %v8669 = vmax.f32 %v8659, %v8665
    %v8670 = vmax.f32 %v8661, %v8666
    %v8671 = vrot.slane %v8659, 2
    %v8672 = vrot.slane %v8661, 2
    %v8675 = vmax.f32 %v8669, %v8671
    %v8676 = vmax.f32 %v8670, %v8672
    %v8677 = vpack.c.bf16 %v8675, %v8675
    %v8678 = vpack.c.bf16 %v8676, %v8676
    %s8679 = scalar_lea.vmem [#allocation3], 4
    %v8680 = vld [vmem:[%s8679] sm:$0x1]
    %v8681 = vsel %vm8445, %v8677, %v8680
    %8682 = vst [vmem:[%s8679] sm:$0x1] %v8681
    %v8683 = vld [vmem:[%s8679 + $0x8] sm:$0x1]
    %v8684 = vsel %vm8445, %v8678, %v8683
    %8685 = vst [vmem:[%s8679 + $0x8] sm:$0x1] %v8684
    %v8688 = vrot.slane %v8677, 2
    %v8689 = vrot.slane %v8678, 2
    %v8692 = vsel %vm8456, %v8677, %v8688
    %v8696 = vsel %vm8456, %v8678, %v8689
    %v8698 = vrot.slane %v8692, 7
    %v8699 = vrot.slane %v8698, 2
    %v8700 = vrot.slane %v8696, 7
    %v8701 = vrot.slane %v8700, 2
    %v8704 = vld [vmem:[%s8679] sm:$0x1]
    %v8705 = vsel %vm8472, %v8699, %v8704
    %8706 = vst [vmem:[%s8679] sm:$0x1] %v8705
    %v8707 = vld [vmem:[%s8679 + $0x8] sm:$0x1]
    %v8708 = vsel %vm8472, %v8701, %v8707
    %8709 = vst [vmem:[%s8679 + $0x8] sm:$0x1] %v8708
    %v8712 = vrot.slane %v8660, 2
    %v8713 = vrot.slane %v8662, 2
    %v8716 = vmax.f32 %v8669, %v8712
    %v8717 = vmax.f32 %v8670, %v8713
    %v8718 = vpack.c.bf16 %v8716, %v8716
    %v8719 = vpack.c.bf16 %v8717, %v8717
    %8721 = vst.sshfl [vmem:[#allocation1] sm:$0xff pattern:$0x75643120] %v8718
    %s8722 = scalar_lea.vmem [#allocation1], 1
    %v8723 = vld [vmem:[%s8722] ss:$2 sm:$0xff]
    %8725 = vst.sshfl [vmem:[#allocation1 + $0x10] sm:$0xff pattern:$0x75643120] %v8719
    %s8726 = scalar_lea.vmem [#allocation1], 17
    %v8727 = vld [vmem:[%s8726] ss:$2 sm:$0xff]
    %v8730 = vld [vmem:[%s8679] sm:$0x2]
    %v8731 = vsel %vm8501, %v8723, %v8730
    %8732 = vst [vmem:[%s8679] sm:$0x2] %v8731
    %v8733 = vld [vmem:[%s8679 + $0x8] sm:$0x2]
    %v8734 = vsel %vm8501, %v8727, %v8733
    %8735 = vst [vmem:[%s8679 + $0x8] sm:$0x2] %v8734
    %v8736 = vrot.slane %v8660, 1
    %v8737 = vrot.slane %v8662, 1
    %v8740 = vmax.f32 %v8660, %v8736
    %v8741 = vmax.f32 %v8662, %v8737
    %v8742 = vmax.f32 %v8740, %v8712
    %v8743 = vmax.f32 %v8741, %v8713
    %v8744 = vpack.c.bf16 %v8742, %v8742
    %v8745 = vpack.c.bf16 %v8743, %v8743
    %v8748 = vrot.slane %v8744, 2
    %v8749 = vrot.slane %v8745, 2
    %v8752 = vsel %vm8456, %v8744, %v8748
    %v8756 = vsel %vm8456, %v8745, %v8749
    %v8758 = vrot.slane %v8752, 7
    %v8759 = vrot.slane %v8756, 7
    %v8762 = vld [vmem:[%s8679] sm:$0x2]
    %v8763 = vsel %vm8535, %v8758, %v8762
    %8764 = vst [vmem:[%s8679] sm:$0x2] %v8763
    %v8765 = vld [vmem:[%s8679 + $0x8] sm:$0x2]
    %v8766 = vsel %vm8535, %v8759, %v8765
    %8767 = vst [vmem:[%s8679 + $0x8] sm:$0x2] %v8766
    %v8768 = vmax.f32 %v8389, %v8391
    %v8769 = vmax.f32 %v8390, %v8392
    %v8770 = vmax.f32 %v8413, %v8415
    %v8771 = vmax.f32 %v8414, %v8416
    %v8772 = vmax.f32 %v8768, %v8393
    %v8773 = vmax.f32 %v8769, %v8394
    %v8774 = vmax.f32 %v8770, %v8417
    %v8775 = vmax.f32 %v8771, %v8418
    %v8778 = vrot.slane %v8772, 1
    %v8779 = vrot.slane %v8774, 1
    %v8782 = vmax.f32 %v8772, %v8778
    %v8783 = vmax.f32 %v8774, %v8779
    %v8784 = vrot.slane %v8772, 2
    %v8785 = vrot.slane %v8774, 2
    %v8788 = vmax.f32 %v8782, %v8784
    %v8789 = vmax.f32 %v8783, %v8785
    %v8790 = vpack.c.bf16 %v8788, %v8788
    %v8791 = vpack.c.bf16 %v8789, %v8789
    %s8792 = scalar_lea.vmem [#allocation3], 6
    %v8793 = vld [vmem:[%s8792] sm:$0x1]
    %v8794 = vsel %vm8445, %v8790, %v8793
    %8795 = vst [vmem:[%s8792] sm:$0x1] %v8794
    %v8796 = vld [vmem:[%s8792 + $0x8] sm:$0x1]
    %v8797 = vsel %vm8445, %v8791, %v8796
    %8798 = vst [vmem:[%s8792 + $0x8] sm:$0x1] %v8797
    %v8801 = vrot.slane %v8790, 2
    %v8802 = vrot.slane %v8791, 2
    %v8805 = vsel %vm8456, %v8790, %v8801
    %v8809 = vsel %vm8456, %v8791, %v8802
    %v8811 = vrot.slane %v8805, 7
    %v8812 = vrot.slane %v8811, 2
    %v8813 = vrot.slane %v8809, 7
    %v8814 = vrot.slane %v8813, 2
    %v8817 = vld [vmem:[%s8792] sm:$0x1]
    %v8818 = vsel %vm8472, %v8812, %v8817
    %8819 = vst [vmem:[%s8792] sm:$0x1] %v8818
    %v8820 = vld [vmem:[%s8792 + $0x8] sm:$0x1]
    %v8821 = vsel %vm8472, %v8814, %v8820
    %8822 = vst [vmem:[%s8792 + $0x8] sm:$0x1] %v8821
    %v8825 = vrot.slane %v8773, 2
    %v8826 = vrot.slane %v8775, 2
    %v8829 = vmax.f32 %v8782, %v8825
    %v8830 = vmax.f32 %v8783, %v8826
    %v8831 = vpack.c.bf16 %v8829, %v8829
    %v8832 = vpack.c.bf16 %v8830, %v8830
    %8834 = vst.sshfl [vmem:[#allocation1] sm:$0xff pattern:$0x75643120] %v8831
    %s8835 = scalar_lea.vmem [#allocation1], 1
    %v8836 = vld [vmem:[%s8835] ss:$2 sm:$0xff]
    %8838 = vst.sshfl [vmem:[#allocation1 + $0x10] sm:$0xff pattern:$0x75643120] %v8832
    %s8839 = scalar_lea.vmem [#allocation1], 17
    %v8840 = vld [vmem:[%s8839] ss:$2 sm:$0xff]
    %v8843 = vld [vmem:[%s8792] sm:$0x2]
    %v8844 = vsel %vm8501, %v8836, %v8843
    %8845 = vst [vmem:[%s8792] sm:$0x2] %v8844
    %v8846 = vld [vmem:[%s8792 + $0x8] sm:$0x2]
    %v8847 = vsel %vm8501, %v8840, %v8846
    %8848 = vst [vmem:[%s8792 + $0x8] sm:$0x2] %v8847
    %v8849 = vrot.slane %v8773, 1
    %v8850 = vrot.slane %v8775, 1
    %v8853 = vmax.f32 %v8773, %v8849
    %v8854 = vmax.f32 %v8775, %v8850
    %v8855 = vmax.f32 %v8853, %v8825
    %v8856 = vmax.f32 %v8854, %v8826
    %v8857 = vpack.c.bf16 %v8855, %v8855
    %v8858 = vpack.c.bf16 %v8856, %v8856
    %v8861 = vrot.slane %v8857, 2
    %v8862 = vrot.slane %v8858, 2
    %v8865 = vsel %vm8456, %v8857, %v8861
    %v8869 = vsel %vm8456, %v8858, %v8862
    %v8871 = vrot.slane %v8865, 7
    %v8872 = vrot.slane %v8869, 7
    %v8875 = vld [vmem:[%s8792] sm:$0x2]
    %v8876 = vsel %vm8535, %v8871, %v8875
    %8877 = vst [vmem:[%s8792] sm:$0x2] %v8876
    %v8878 = vld [vmem:[%s8792 + $0x8] sm:$0x2]
    %v8879 = vsel %vm8535, %v8872, %v8878
    %8880 = vst [vmem:[%s8792 + $0x8] sm:$0x2] %v8879
    %v8881 = vld [vmem:[#allocation3] sm:$0x1]
    %v8882 = vld [vmem:[#allocation3 + $0x8] sm:$0x1]
    %v8883 = vld [vmem:[%s5] sm:$0xf]
    %v8884 = vld [vmem:[%s5 + $0x4] sm:$0xf]
    %v8885 = vld [vmem:[%s5 + $0x8] sm:$0xf]
    %v8886 = vld [vmem:[%s5 + $0xc] sm:$0xf]
    %v8887 = vld [vmem:[%s5 + $0x10] sm:$0xf]
    %v8888 = vld [vmem:[%s5 + $0x14] sm:$0xf]
    %v8889 = vld [vmem:[%s5 + $0x18] sm:$0xf]
    %v8890 = vld [vmem:[%s5 + $0x1c] sm:$0xf]
    %s8891 = scalar_lea.vmem %s5, 32
    %v8892 = vld [vmem:[%s8891] sm:$0xf]
    %v8893 = vld [vmem:[%s8891 + $0x4] sm:$0xf]
    %v8894 = vld [vmem:[%s8891 + $0x8] sm:$0xf]
    %v8895 = vld [vmem:[%s8891 + $0xc] sm:$0xf]
    %v8896 = vld [vmem:[%s8891 + $0x10] sm:$0xf]
    %v8897 = vld [vmem:[%s8891 + $0x14] sm:$0xf]
    %v8898 = vld [vmem:[%s8891 + $0x18] sm:$0xf]
    %v8899 = vld [vmem:[%s8891 + $0x1c] sm:$0xf]
    %8901 = vst [vmem:[#allocation1] ss:$4 sm:$0xff] %v8881
    %v8902 = vld.sshfl [vmem:[#allocation1] sm:$0xff pattern:$0x73625140]
    %s8905 = scalar_lea.vmem [#allocation1], 32
    %8906 = vst [vmem:[%s8905] ss:$4 sm:$0xff] %v8882
    %v8907 = vld.sshfl [vmem:[#allocation1 + $0x20] sm:$0xff pattern:$0x73625140]
    %v8909 = vunpack.c.l.b16 %v8902
    %v8910 = vunpack.c.l.b16 %v8907
    %v8911 = vrot.slane %v8909, 1
    %vm8912 = vcmask 1041409
    %v8913 = vsel %vm8912, %v8910, %v8911
    %v8914 = vpack.c.b16 %v8913, %v8913
    %v8923 = vunpack.c.l.b16 %v8892
    %v8924 = vunpack.c.l.b16 %v8893
    %v8925 = vunpack.c.l.b16 %v8894
    %v8926 = vunpack.c.l.b16 %v8895
    %v8927 = vunpack.c.l.b16 %v8896
    %v8928 = vunpack.c.l.b16 %v8897
    %v8929 = vunpack.c.l.b16 %v8898
    %v8930 = vunpack.c.l.b16 %v8899
    %v8931 = vpack.c.b16 %v8924, %v8923
    %v8932 = vpack.c.b16 %v8926, %v8925
    %v8933 = vpack.c.b16 %v8928, %v8927
    %v8934 = vpack.c.b16 %v8930, %v8929
    %vm8939 = vcmask 523264
    %v8941 = vsel %vm8939, %v8914, 0
    %8943 = vmatpush.bf16.msra.mxu0 0
    %8944 = vmatpush.bf16.msra.mxu0 0
    %8945 = vmatpush.bf16.msra.mxu0 0
    %8946 = vmatpush.bf16.msra.mxu0 0
    %8947 = vmatpush.bf16.msra.mxu0 %v8934
    %8948 = vmatpush.bf16.msra.mxu0 %v8933
    %8949 = vmatpush.bf16.msra.mxu0 %v8932
    %8950 = vmatpush.bf16.msra.mxu0 %v8931
    %8951 = vmatmul.bf16.gmra.mxu0 %v8941
    %v8952 = vpop.f32.mrf.mxu0
    %v8953 = vadd.f32 0.0, %v8952
    %v8954 = vpop.f32.mrf.mxu0
    %8955 = vdwg.mxu0
    %8956 = vst [vmem:[#allocation1] ss:$4 sm:$0xff] %v8881
    %v8957 = vld.sshfl [vmem:[#allocation1] sm:$0xff pattern:$0x73625140]
    %s8959 = scalar_lea.vmem [#allocation1], 32
    %8960 = vst [vmem:[%s8959] ss:$4 sm:$0xff] %v8882
    %v8961 = vld.sshfl [vmem:[#allocation1 + $0x20] sm:$0xff pattern:$0x73625140]
    %v8963 = vunpack.c.l.b16 %v8957
    %v8964 = vunpack.c.l.b16 %v8961
    %v8965 = vrot.slane %v8964, 7
    %v8966 = vsel %vm8912, %v8965, %v8963
    %v8967 = vpack.c.b16 %v8966, %v8966
    %v8976 = vunpack.c.l.b16 %v8883
    %v8977 = vunpack.c.l.b16 %v8884
    %v8978 = vunpack.c.l.b16 %v8885
    %v8979 = vunpack.c.l.b16 %v8886
    %v8980 = vunpack.c.l.b16 %v8887
    %v8981 = vunpack.c.l.b16 %v8888
    %v8982 = vunpack.c.l.b16 %v8889
    %v8983 = vunpack.c.l.b16 %v8890
    %v8984 = vpack.c.b16 %v8977, %v8976
    %v8985 = vpack.c.b16 %v8979, %v8978
    %v8986 = vpack.c.b16 %v8981, %v8980
    %v8987 = vpack.c.b16 %v8983, %v8982
    %v8993 = vsel %vm8939, %v8967, 0
    %8995 = vmatpush.bf16.msra.mxu0 0
    %8996 = vmatpush.bf16.msra.mxu0 0
    %8997 = vmatpush.bf16.msra.mxu0 0
    %8998 = vmatpush.bf16.msra.mxu0 0
    %8999 = vmatpush.bf16.msra.mxu0 %v8987
    %9000 = vmatpush.bf16.msra.mxu0 %v8986
    %9001 = vmatpush.bf16.msra.mxu0 %v8985
    %9002 = vmatpush.bf16.msra.mxu0 %v8984
    %9003 = vmatmul.bf16.gmra.mxu0 %v8993
    %v9004 = vpop.f32.mrf.mxu0
    %v9005 = vadd.f32 %v8953, %v9004
    %v9006 = vpop.f32.mrf.mxu0
    %9007 = vdwg.mxu0
    %v9008 = vld [vmem:[#allocation3] sm:$0x2]
    %v9009 = vld [vmem:[#allocation3 + $0x8] sm:$0x2]
    %s9010 = scalar_lea.vmem %s5, 64
    %v9011 = vld [vmem:[%s9010] sm:$0xf]
    %v9012 = vld [vmem:[%s9010 + $0x4] sm:$0xf]
    %v9013 = vld [vmem:[%s9010 + $0x8] sm:$0xf]
    %v9014 = vld [vmem:[%s9010 + $0xc] sm:$0xf]
    %v9015 = vld [vmem:[%s9010 + $0x10] sm:$0xf]
    %v9016 = vld [vmem:[%s9010 + $0x14] sm:$0xf]
    %v9017 = vld [vmem:[%s9010 + $0x18] sm:$0xf]
    %v9018 = vld [vmem:[%s9010 + $0x1c] sm:$0xf]
    %9020 = vst [vmem:[#allocation1] ss:$4 sm:$0xff] %v9008
    %v9021 = vld.sshfl [vmem:[#allocation1] sm:$0xff pattern:$0x73625140]
    %s9024 = scalar_lea.vmem [#allocation1], 32
    %9025 = vst [vmem:[%s9024] ss:$4 sm:$0xff] %v9009
    %v9026 = vld.sshfl [vmem:[#allocation1 + $0x20] sm:$0xff pattern:$0x73625140]
    %v9028 = vunpack.c.l.b16 %v9021
    %v9029 = vunpack.c.l.b16 %v9026
    %v9030 = vrot.slane %v9028, 2
    %v9031 = vrot.slane %v9029, 1
    %v9032 = vsel %vm8912, %v9031, %v9030
    %v9033 = vpack.c.b16 %v9032, %v9032
    %v9042 = vunpack.c.l.b16 %v9011
    %v9043 = vunpack.c.l.b16 %v9012
    %v9044 = vunpack.c.l.b16 %v9013
    %v9045 = vunpack.c.l.b16 %v9014
    %v9046 = vunpack.c.l.b16 %v9015
    %v9047 = vunpack.c.l.b16 %v9016
    %v9048 = vunpack.c.l.b16 %v9017
    %v9049 = vunpack.c.l.b16 %v9018
    %v9050 = vpack.c.b16 %v9043, %v9042
    %v9051 = vpack.c.b16 %v9045, %v9044
    %v9052 = vpack.c.b16 %v9047, %v9046
    %v9053 = vpack.c.b16 %v9049, %v9048
    %v9059 = vsel %vm8939, %v9033, 0
    %9061 = vmatpush.bf16.msra.mxu0 0
    %9062 = vmatpush.bf16.msra.mxu0 0
    %9063 = vmatpush.bf16.msra.mxu0 0
    %9064 = vmatpush.bf16.msra.mxu0 0
    %9065 = vmatpush.bf16.msra.mxu0 %v9053
    %9066 = vmatpush.bf16.msra.mxu0 %v9052
    %9067 = vmatpush.bf16.msra.mxu0 %v9051
    %9068 = vmatpush.bf16.msra.mxu0 %v9050
    %9069 = vmatmul.bf16.gmra.mxu0 %v9059
    %v9070 = vpop.f32.mrf.mxu0
    %v9071 = vadd.f32 0.0, %v9070
    %v9072 = vpop.f32.mrf.mxu0
    %9073 = vdwg.mxu0
    %v9074 = vadd.f32 %v9005, %v9071
    %v9075 = vld [vmem:[%s8566] sm:$0x1]
    %v9076 = vld [vmem:[%s8566 + $0x8] sm:$0x1]
    %s9077 = scalar_lea.vmem %s5, 96
    %v9078 = vld [vmem:[%s9077] sm:$0xf]
    %v9079 = vld [vmem:[%s9077 + $0x4] sm:$0xf]
    %v9080 = vld [vmem:[%s9077 + $0x8] sm:$0xf]
    %v9081 = vld [vmem:[%s9077 + $0xc] sm:$0xf]
    %v9082 = vld [vmem:[%s9077 + $0x10] sm:$0xf]
    %v9083 = vld [vmem:[%s9077 + $0x14] sm:$0xf]
    %v9084 = vld [vmem:[%s9077 + $0x18] sm:$0xf]
    %v9085 = vld [vmem:[%s9077 + $0x1c] sm:$0xf]
    %9087 = vst [vmem:[#allocation1] ss:$4 sm:$0xff] %v9075
    %v9088 = vld.sshfl [vmem:[#allocation1] sm:$0xff pattern:$0x73625140]
    %s9091 = scalar_lea.vmem [#allocation1], 32
    %9092 = vst [vmem:[%s9091] ss:$4 sm:$0xff] %v9076
    %v9093 = vld.sshfl [vmem:[#allocation1 + $0x20] sm:$0xff pattern:$0x73625140]
    %v9095 = vunpack.c.l.b16 %v9088
    %v9096 = vunpack.c.l.b16 %v9093
    %v9097 = vrot.slane %v9096, 7
    %v9098 = vsel %vm8912, %v9097, %v9095
    %v9099 = vpack.c.b16 %v9098, %v9098
    %v9108 = vunpack.c.l.b16 %v9078
    %v9109 = vunpack.c.l.b16 %v9079
    %v9110 = vunpack.c.l.b16 %v9080
    %v9111 = vunpack.c.l.b16 %v9081
    %v9112 = vunpack.c.l.b16 %v9082
    %v9113 = vunpack.c.l.b16 %v9083
    %v9114 = vunpack.c.l.b16 %v9084
    %v9115 = vunpack.c.l.b16 %v9085
    %v9116 = vpack.c.b16 %v9109, %v9108
    %v9117 = vpack.c.b16 %v9111, %v9110
    %v9118 = vpack.c.b16 %v9113, %v9112
    %v9119 = vpack.c.b16 %v9115, %v9114
    %v9125 = vsel %vm8939, %v9099, 0
    %9127 = vmatpush.bf16.msra.mxu0 0
    %9128 = vmatpush.bf16.msra.mxu0 0
    %9129 = vmatpush.bf16.msra.mxu0 0
    %9130 = vmatpush.bf16.msra.mxu0 0
    %9131 = vmatpush.bf16.msra.mxu0 %v9119
    %9132 = vmatpush.bf16.msra.mxu0 %v9118
    %9133 = vmatpush.bf16.msra.mxu0 %v9117
    %9134 = vmatpush.bf16.msra.mxu0 %v9116
    %9135 = vmatmul.bf16.gmra.mxu0 %v9125
    %v9136 = vpop.f32.mrf.mxu0
    %v9137 = vadd.f32 0.0, %v9136
    %v9138 = vpop.f32.mrf.mxu0
    %9139 = vdwg.mxu0
    %v9140 = vadd.f32 %v9074, %v9137
    %v9141 = vld [vmem:[%s8566] sm:$0x1]
    %v9142 = vld [vmem:[%s8566 + $0x8] sm:$0x1]
    %s9143 = scalar_lea.vmem %s5, 128
    %v9144 = vld [vmem:[%s9143] sm:$0xf]
    %v9145 = vld [vmem:[%s9143 + $0x4] sm:$0xf]
    %v9146 = vld [vmem:[%s9143 + $0x8] sm:$0xf]
    %v9147 = vld [vmem:[%s9143 + $0xc] sm:$0xf]
    %v9148 = vld [vmem:[%s9143 + $0x10] sm:$0xf]
    %v9149 = vld [vmem:[%s9143 + $0x14] sm:$0xf]
    %v9150 = vld [vmem:[%s9143 + $0x18] sm:$0xf]
    %v9151 = vld [vmem:[%s9143 + $0x1c] sm:$0xf]
    %9153 = vst [vmem:[#allocation1] ss:$4 sm:$0xff] %v9141
    %v9154 = vld.sshfl [vmem:[#allocation1] sm:$0xff pattern:$0x73625140]
    %s9157 = scalar_lea.vmem [#allocation1], 32
    %9158 = vst [vmem:[%s9157] ss:$4 sm:$0xff] %v9142
    %v9159 = vld.sshfl [vmem:[#allocation1 + $0x20] sm:$0xff pattern:$0x73625140]
    %v9161 = vunpack.c.l.b16 %v9154
    %v9162 = vunpack.c.l.b16 %v9159
    %v9163 = vrot.slane %v9161, 1
    %v9164 = vsel %vm8912, %v9162, %v9163
    %v9165 = vpack.c.b16 %v9164, %v9164
    %v9174 = vunpack.c.l.b16 %v9144
    %v9175 = vunpack.c.l.b16 %v9145
    %v9176 = vunpack.c.l.b16 %v9146
    %v9177 = vunpack.c.l.b16 %v9147
    %v9178 = vunpack.c.l.b16 %v9148
    %v9179 = vunpack.c.l.b16 %v9149
    %v9180 = vunpack.c.l.b16 %v9150
    %v9181 = vunpack.c.l.b16 %v9151
    %v9182 = vpack.c.b16 %v9175, %v9174
    %v9183 = vpack.c.b16 %v9177, %v9176
    %v9184 = vpack.c.b16 %v9179, %v9178
    %v9185 = vpack.c.b16 %v9181, %v9180
    %v9191 = vsel %vm8939, %v9165, 0
    %9193 = vmatpush.bf16.msra.mxu0 0
    %9194 = vmatpush.bf16.msra.mxu0 0
    %9195 = vmatpush.bf16.msra.mxu0 0
    %9196 = vmatpush.bf16.msra.mxu0 0
    %9197 = vmatpush.bf16.msra.mxu0 %v9185
    %9198 = vmatpush.bf16.msra.mxu0 %v9184
    %9199 = vmatpush.bf16.msra.mxu0 %v9183
    %9200 = vmatpush.bf16.msra.mxu0 %v9182
    %9201 = vmatmul.bf16.gmra.mxu0 %v9191
    %v9202 = vpop.f32.mrf.mxu0
    %v9203 = vadd.f32 0.0, %v9202
    %v9204 = vpop.f32.mrf.mxu0
    %9205 = vdwg.mxu0
    %v9206 = vadd.f32 %v9140, %v9203
    %v9207 = vld [vmem:[%s8566] sm:$0x2]
    %v9208 = vld [vmem:[%s8566 + $0x8] sm:$0x2]
    %s9209 = scalar_lea.vmem %s5, 160
    %v9210 = vld [vmem:[%s9209] sm:$0xf]
    %v9211 = vld [vmem:[%s9209 + $0x4] sm:$0xf]
    %v9212 = vld [vmem:[%s9209 + $0x8] sm:$0xf]
    %v9213 = vld [vmem:[%s9209 + $0xc] sm:$0xf]
    %v9214 = vld [vmem:[%s9209 + $0x10] sm:$0xf]
    %v9215 = vld [vmem:[%s9209 + $0x14] sm:$0xf]
    %v9216 = vld [vmem:[%s9209 + $0x18] sm:$0xf]
    %v9217 = vld [vmem:[%s9209 + $0x1c] sm:$0xf]
    %9219 = vst [vmem:[#allocation1] ss:$4 sm:$0xff] %v9207
    %v9220 = vld.sshfl [vmem:[#allocation1] sm:$0xff pattern:$0x73625140]
    %s9223 = scalar_lea.vmem [#allocation1], 32
    %9224 = vst [vmem:[%s9223] ss:$4 sm:$0xff] %v9208
    %v9225 = vld.sshfl [vmem:[#allocation1 + $0x20] sm:$0xff pattern:$0x73625140]
    %v9227 = vunpack.c.l.b16 %v9220
    %v9228 = vunpack.c.l.b16 %v9225
    %v9229 = vrot.slane %v9227, 2
    %v9230 = vrot.slane %v9228, 1
    %v9231 = vsel %vm8912, %v9230, %v9229
    %v9232 = vpack.c.b16 %v9231, %v9231
    %v9241 = vunpack.c.l.b16 %v9210
    %v9242 = vunpack.c.l.b16 %v9211
    %v9243 = vunpack.c.l.b16 %v9212
    %v9244 = vunpack.c.l.b16 %v9213
    %v9245 = vunpack.c.l.b16 %v9214
    %v9246 = vunpack.c.l.b16 %v9215
    %v9247 = vunpack.c.l.b16 %v9216
    %v9248 = vunpack.c.l.b16 %v9217
    %v9249 = vpack.c.b16 %v9242, %v9241
    %v9250 = vpack.c.b16 %v9244, %v9243
    %v9251 = vpack.c.b16 %v9246, %v9245
    %v9252 = vpack.c.b16 %v9248, %v9247
    %v9258 = vsel %vm8939, %v9232, 0
    %9260 = vmatpush.bf16.msra.mxu0 0
    %9261 = vmatpush.bf16.msra.mxu0 0
    %9262 = vmatpush.bf16.msra.mxu0 0
    %9263 = vmatpush.bf16.msra.mxu0 0
    %9264 = vmatpush.bf16.msra.mxu0 %v9252
    %9265 = vmatpush.bf16.msra.mxu0 %v9251
    %9266 = vmatpush.bf16.msra.mxu0 %v9250
    %9267 = vmatpush.bf16.msra.mxu0 %v9249
    %9268 = vmatmul.bf16.gmra.mxu0 %v9258
    %v9269 = vpop.f32.mrf.mxu0
    %v9270 = vadd.f32 0.0, %v9269
    %v9271 = vpop.f32.mrf.mxu0
    %9272 = vdwg.mxu0
    %v9273 = vadd.f32 %v9206, %v9270
    %v9274 = vld [vmem:[%s8679] sm:$0x1]
    %v9275 = vld [vmem:[%s8679 + $0x8] sm:$0x1]
    %s9276 = scalar_lea.vmem %s5, 192
    %v9277 = vld [vmem:[%s9276] sm:$0xf]
    %v9278 = vld [vmem:[%s9276 + $0x4] sm:$0xf]
    %v9279 = vld [vmem:[%s9276 + $0x8] sm:$0xf]
    %v9280 = vld [vmem:[%s9276 + $0xc] sm:$0xf]
    %v9281 = vld [vmem:[%s9276 + $0x10] sm:$0xf]
    %v9282 = vld [vmem:[%s9276 + $0x14] sm:$0xf]
    %v9283 = vld [vmem:[%s9276 + $0x18] sm:$0xf]
    %v9284 = vld [vmem:[%s9276 + $0x1c] sm:$0xf]
    %9286 = vst [vmem:[#allocation1] ss:$4 sm:$0xff] %v9274
    %v9287 = vld.sshfl [vmem:[#allocation1] sm:$0xff pattern:$0x73625140]
    %s9290 = scalar_lea.vmem [#allocation1], 32
    %9291 = vst [vmem:[%s9290] ss:$4 sm:$0xff] %v9275
    %v9292 = vld.sshfl [vmem:[#allocation1 + $0x20] sm:$0xff pattern:$0x73625140]
    %v9294 = vunpack.c.l.b16 %v9287
    %v9295 = vunpack.c.l.b16 %v9292
    %v9296 = vrot.slane %v9295, 7
    %v9297 = vsel %vm8912, %v9296, %v9294
    %v9298 = vpack.c.b16 %v9297, %v9297
    %v9307 = vunpack.c.l.b16 %v9277
    %v9308 = vunpack.c.l.b16 %v9278
    %v9309 = vunpack.c.l.b16 %v9279
    %v9310 = vunpack.c.l.b16 %v9280
    %v9311 = vunpack.c.l.b16 %v9281
    %v9312 = vunpack.c.l.b16 %v9282
    %v9313 = vunpack.c.l.b16 %v9283
    %v9314 = vunpack.c.l.b16 %v9284
    %v9315 = vpack.c.b16 %v9308, %v9307
    %v9316 = vpack.c.b16 %v9310, %v9309
    %v9317 = vpack.c.b16 %v9312, %v9311
    %v9318 = vpack.c.b16 %v9314, %v9313
    %v9324 = vsel %vm8939, %v9298, 0
    %9326 = vmatpush.bf16.msra.mxu0 0
    %9327 = vmatpush.bf16.msra.mxu0 0
    %9328 = vmatpush.bf16.msra.mxu0 0
    %9329 = vmatpush.bf16.msra.mxu0 0
    %9330 = vmatpush.bf16.msra.mxu0 %v9318
    %9331 = vmatpush.bf16.msra.mxu0 %v9317
    %9332 = vmatpush.bf16.msra.mxu0 %v9316
    %9333 = vmatpush.bf16.msra.mxu0 %v9315
    %9334 = vmatmul.bf16.gmra.mxu0 %v9324
    %v9335 = vpop.f32.mrf.mxu0
    %v9336 = vadd.f32 0.0, %v9335
    %v9337 = vpop.f32.mrf.mxu0
    %9338 = vdwg.mxu0
    %v9339 = vadd.f32 %v9273, %v9336
    %v9340 = vld [vmem:[%s8679] sm:$0x1]
    %v9341 = vld [vmem:[%s8679 + $0x8] sm:$0x1]
    %s9342 = scalar_lea.vmem %s5, 224
    %v9343 = vld [vmem:[%s9342] sm:$0xf]
    %v9344 = vld [vmem:[%s9342 + $0x4] sm:$0xf]
    %v9345 = vld [vmem:[%s9342 + $0x8] sm:$0xf]
    %v9346 = vld [vmem:[%s9342 + $0xc] sm:$0xf]
    %v9347 = vld [vmem:[%s9342 + $0x10] sm:$0xf]
    %v9348 = vld [vmem:[%s9342 + $0x14] sm:$0xf]
    %v9349 = vld [vmem:[%s9342 + $0x18] sm:$0xf]
    %v9350 = vld [vmem:[%s9342 + $0x1c] sm:$0xf]
    %9352 = vst [vmem:[#allocation1] ss:$4 sm:$0xff] %v9340
    %v9353 = vld.sshfl [vmem:[#allocation1] sm:$0xff pattern:$0x73625140]
    %s9356 = scalar_lea.vmem [#allocation1], 32
    %9357 = vst [vmem:[%s9356] ss:$4 sm:$0xff] %v9341
    %v9358 = vld.sshfl [vmem:[#allocation1 + $0x20] sm:$0xff pattern:$0x73625140]
    %v9360 = vunpack.c.l.b16 %v9353
    %v9361 = vunpack.c.l.b16 %v9358
    %v9362 = vrot.slane %v9360, 1
    %v9363 = vsel %vm8912, %v9361, %v9362
    %v9364 = vpack.c.b16 %v9363, %v9363
    %v9373 = vunpack.c.l.b16 %v9343
    %v9374 = vunpack.c.l.b16 %v9344
    %v9375 = vunpack.c.l.b16 %v9345
    %v9376 = vunpack.c.l.b16 %v9346
    %v9377 = vunpack.c.l.b16 %v9347
    %v9378 = vunpack.c.l.b16 %v9348
    %v9379 = vunpack.c.l.b16 %v9349
    %v9380 = vunpack.c.l.b16 %v9350
    %v9381 = vpack.c.b16 %v9374, %v9373
    %v9382 = vpack.c.b16 %v9376, %v9375
    %v9383 = vpack.c.b16 %v9378, %v9377
    %v9384 = vpack.c.b16 %v9380, %v9379
    %v9390 = vsel %vm8939, %v9364, 0
    %9392 = vmatpush.bf16.msra.mxu0 0
    %9393 = vmatpush.bf16.msra.mxu0 0
    %9394 = vmatpush.bf16.msra.mxu0 0
    %9395 = vmatpush.bf16.msra.mxu0 0
    %9396 = vmatpush.bf16.msra.mxu0 %v9384
    %9397 = vmatpush.bf16.msra.mxu0 %v9383
    %9398 = vmatpush.bf16.msra.mxu0 %v9382
    %9399 = vmatpush.bf16.msra.mxu0 %v9381
    %9400 = vmatmul.bf16.gmra.mxu0 %v9390
    %v9401 = vpop.f32.mrf.mxu0
    %v9402 = vadd.f32 0.0, %v9401
    %v9403 = vpop.f32.mrf.mxu0
    %9404 = vdwg.mxu0
    %v9405 = vadd.f32 %v9339, %v9402
    %v9406 = vld [vmem:[%s8679] sm:$0x2]
    %v9407 = vld [vmem:[%s8679 + $0x8] sm:$0x2]
    %s9408 = scalar_lea.vmem %s5, 256
    %v9409 = vld [vmem:[%s9408] sm:$0xf]
    %v9410 = vld [vmem:[%s9408 + $0x4] sm:$0xf]
    %v9411 = vld [vmem:[%s9408 + $0x8] sm:$0xf]
    %v9412 = vld [vmem:[%s9408 + $0xc] sm:$0xf]
    %v9413 = vld [vmem:[%s9408 + $0x10] sm:$0xf]
    %v9414 = vld [vmem:[%s9408 + $0x14] sm:$0xf]
    %v9415 = vld [vmem:[%s9408 + $0x18] sm:$0xf]
    %v9416 = vld [vmem:[%s9408 + $0x1c] sm:$0xf]
    %9418 = vst [vmem:[#allocation1] ss:$4 sm:$0xff] %v9406
    %v9419 = vld.sshfl [vmem:[#allocation1] sm:$0xff pattern:$0x73625140]
    %s9422 = scalar_lea.vmem [#allocation1], 32
    %9423 = vst [vmem:[%s9422] ss:$4 sm:$0xff] %v9407
    %v9424 = vld.sshfl [vmem:[#allocation1 + $0x20] sm:$0xff pattern:$0x73625140]
    %v9426 = vunpack.c.l.b16 %v9419
    %v9427 = vunpack.c.l.b16 %v9424
    %v9428 = vrot.slane %v9426, 2
    %v9429 = vrot.slane %v9427, 1
    %v9430 = vsel %vm8912, %v9429, %v9428
    %v9431 = vpack.c.b16 %v9430, %v9430
    %v9440 = vunpack.c.l.b16 %v9409
    %v9441 = vunpack.c.l.b16 %v9410
    %v9442 = vunpack.c.l.b16 %v9411
    %v9443 = vunpack.c.l.b16 %v9412
    %v9444 = vunpack.c.l.b16 %v9413
    %v9445 = vunpack.c.l.b16 %v9414
    %v9446 = vunpack.c.l.b16 %v9415
    %v9447 = vunpack.c.l.b16 %v9416
    %v9448 = vpack.c.b16 %v9441, %v9440
    %v9449 = vpack.c.b16 %v9443, %v9442
    %v9450 = vpack.c.b16 %v9445, %v9444
    %v9451 = vpack.c.b16 %v9447, %v9446
    %v9457 = vsel %vm8939, %v9431, 0
    %9459 = vmatpush.bf16.msra.mxu0 0
    %9460 = vmatpush.bf16.msra.mxu0 0
    %9461 = vmatpush.bf16.msra.mxu0 0
    %9462 = vmatpush.bf16.msra.mxu0 0
    %9463 = vmatpush.bf16.msra.mxu0 %v9451
    %9464 = vmatpush.bf16.msra.mxu0 %v9450
    %9465 = vmatpush.bf16.msra.mxu0 %v9449
    %9466 = vmatpush.bf16.msra.mxu0 %v9448
    %9467 = vmatmul.bf16.gmra.mxu0 %v9457
    %v9468 = vpop.f32.mrf.mxu0
    %v9469 = vadd.f32 0.0, %v9468
    %v9470 = vpop.f32.mrf.mxu0
    %9471 = vdwg.mxu0
    %v9472 = vadd.f32 %v9405, %v9469
    %v9473 = vld [vmem:[%s6] sm:$0x1]
    %v9475 = vperm.slane %v9473, 0
    %v9477 = vadd.f32 %v9472, %v9475
    %v9478 = vmax.f32 %v9477, 0.0
    %v9479 = vpack.c.bf16 %v9478, %v9478
    %v9480 = vld [vmem:[%s7] sm:$0xf]
    %v9481 = vld [vmem:[%s7 + $0x4] sm:$0xf]
    %v9482 = vld [vmem:[%s7 + $0x8] sm:$0xf]
    %v9483 = vld [vmem:[%s7 + $0xc] sm:$0xf]
    %v9484 = vld [vmem:[%s7 + $0x10] sm:$0xf]
    %v9485 = vld [vmem:[%s7 + $0x14] sm:$0xf]
    %v9486 = vld [vmem:[%s7 + $0x18] sm:$0xf]
    %v9487 = vld [vmem:[%s7 + $0x1c] sm:$0xf]
    %9488 = vst [vmem:[#allocation1] ss:$4 sm:$0xff] %v9008
    %v9489 = vld.sshfl [vmem:[#allocation1] sm:$0xff pattern:$0x73625140]
    %s9491 = scalar_lea.vmem [#allocation1], 32
    %9492 = vst [vmem:[%s9491] ss:$4 sm:$0xff] %v9009
    %v9493 = vld.sshfl [vmem:[#allocation1 + $0x20] sm:$0xff pattern:$0x73625140]
    %v9495 = vunpack.c.l.b16 %v9489
    %v9496 = vunpack.c.l.b16 %v9493
    %v9497 = vrot.slane %v9495, 2
    %v9498 = vrot.slane %v9496, 1
    %v9499 = vsel %vm8912, %v9498, %v9497
    %v9500 = vpack.c.b16 %v9499, %v9499
    %v9502 = vsel %vm8939, %v9500, 0
    %9504 = vmatpush.bf16.msra.mxu0 0
    %9505 = vmatpush.bf16.msra.mxu0 0
    %9506 = vmatpush.bf16.msra.mxu0 0
    %9507 = vmatpush.bf16.msra.mxu0 0
    %9508 = vmatpush.bf16.msra.mxu0 %v8934
    %9509 = vmatpush.bf16.msra.mxu0 %v8933
    %9510 = vmatpush.bf16.msra.mxu0 %v8932
    %9511 = vmatpush.bf16.msra.mxu0 %v8931
    %9512 = vmatmul.bf16.gmra.mxu0 %v9502
    %v9513 = vpop.f32.mrf.mxu0
    %v9514 = vadd.f32 0.0, %v9513
    %v9515 = vpop.f32.mrf.mxu0
    %9516 = vdwg.mxu0
    %9517 = vst [vmem:[#allocation1] ss:$4 sm:$0xff] %v8881
    %v9518 = vld.sshfl [vmem:[#allocation1] sm:$0xff pattern:$0x73625140]
    %s9520 = scalar_lea.vmem [#allocation1], 32
    %9521 = vst [vmem:[%s9520] ss:$4 sm:$0xff] %v8882
    %v9522 = vld.sshfl [vmem:[#allocation1 + $0x20] sm:$0xff pattern:$0x73625140]
    %v9524 = vunpack.c.l.b16 %v9518
    %v9525 = vunpack.c.l.b16 %v9522
    %v9526 = vrot.slane %v9524, 1
    %v9527 = vsel %vm8912, %v9525, %v9526
    %v9528 = vpack.c.b16 %v9527, %v9527
    %v9530 = vsel %vm8939, %v9528, 0
    %9532 = vmatpush.bf16.msra.mxu0 0
    %9533 = vmatpush.bf16.msra.mxu0 0
    %9534 = vmatpush.bf16.msra.mxu0 0
    %9535 = vmatpush.bf16.msra.mxu0 0
    %9536 = vmatpush.bf16.msra.mxu0 %v8987
    %9537 = vmatpush.bf16.msra.mxu0 %v8986
    %9538 = vmatpush.bf16.msra.mxu0 %v8985
    %9539 = vmatpush.bf16.msra.mxu0 %v8984
    %9540 = vmatmul.bf16.gmra.mxu0 %v9530
    %v9541 = vpop.f32.mrf.mxu0
    %v9542 = vadd.f32 %v9514, %v9541
    %v9543 = vpop.f32.mrf.mxu0
    %9544 = vdwg.mxu0
    %v9545 = vld [vmem:[#allocation3] sm:$0x2]
    %v9546 = vld [vmem:[#allocation3 + $0x8] sm:$0x2]
    %9548 = vst [vmem:[#allocation1] ss:$4 sm:$0xff] %v9545
    %v9549 = vld.sshfl [vmem:[#allocation1] sm:$0xff pattern:$0x73625140]
    %s9552 = scalar_lea.vmem [#allocation1], 32
    %9553 = vst [vmem:[%s9552] ss:$4 sm:$0xff] %v9546
    %v9554 = vld.sshfl [vmem:[#allocation1 + $0x20] sm:$0xff pattern:$0x73625140]
    %v9556 = vunpack.c.l.b16 %v9549
    %v9557 = vunpack.c.l.b16 %v9554
    %v9558 = vrot.slane %v9556, 3
    %v9559 = vrot.slane %v9557, 2
    %v9560 = vsel %vm8912, %v9559, %v9558
    %v9561 = vpack.c.b16 %v9560, %v9560
    %v9563 = vsel %vm8939, %v9561, 0
    %9565 = vmatpush.bf16.msra.mxu0 0
    %9566 = vmatpush.bf16.msra.mxu0 0
    %9567 = vmatpush.bf16.msra.mxu0 0
    %9568 = vmatpush.bf16.msra.mxu0 0
    %9569 = vmatpush.bf16.msra.mxu0 %v9053
    %9570 = vmatpush.bf16.msra.mxu0 %v9052
    %9571 = vmatpush.bf16.msra.mxu0 %v9051
    %9572 = vmatpush.bf16.msra.mxu0 %v9050
    %9573 = vmatmul.bf16.gmra.mxu0 %v9563
    %v9574 = vpop.f32.mrf.mxu0
    %v9575 = vadd.f32 0.0, %v9574
    %v9576 = vpop.f32.mrf.mxu0
    %9577 = vdwg.mxu0
    %v9578 = vadd.f32 %v9542, %v9575
    %9579 = vst [vmem:[#allocation1] ss:$4 sm:$0xff] %v9141
    %v9580 = vld.sshfl [vmem:[#allocation1] sm:$0xff pattern:$0x73625140]
    %s9582 = scalar_lea.vmem [#allocation1], 32
    %9583 = vst [vmem:[%s9582] ss:$4 sm:$0xff] %v9142
    %v9584 = vld.sshfl [vmem:[#allocation1 + $0x20] sm:$0xff pattern:$0x73625140]
    %v9586 = vunpack.c.l.b16 %v9580
    %v9587 = vunpack.c.l.b16 %v9584
    %v9588 = vrot.slane %v9586, 1
    %v9589 = vsel %vm8912, %v9587, %v9588
    %v9590 = vpack.c.b16 %v9589, %v9589
    %v9592 = vsel %vm8939, %v9590, 0
    %9594 = vmatpush.bf16.msra.mxu0 0
    %9595 = vmatpush.bf16.msra.mxu0 0
    %9596 = vmatpush.bf16.msra.mxu0 0
    %9597 = vmatpush.bf16.msra.mxu0 0
    %9598 = vmatpush.bf16.msra.mxu0 %v9119
    %9599 = vmatpush.bf16.msra.mxu0 %v9118
    %9600 = vmatpush.bf16.msra.mxu0 %v9117
    %9601 = vmatpush.bf16.msra.mxu0 %v9116
    %9602 = vmatmul.bf16.gmra.mxu0 %v9592
    %v9603 = vpop.f32.mrf.mxu0
    %v9604 = vadd.f32 0.0, %v9603
    %v9605 = vpop.f32.mrf.mxu0
    %9606 = vdwg.mxu0
    %v9607 = vadd.f32 %v9578, %v9604
    %9608 = vst [vmem:[#allocation1] ss:$4 sm:$0xff] %v9207
    %v9609 = vld.sshfl [vmem:[#allocation1] sm:$0xff pattern:$0x73625140]
    %s9611 = scalar_lea.vmem [#allocation1], 32
    %9612 = vst [vmem:[%s9611] ss:$4 sm:$0xff] %v9208
    %v9613 = vld.sshfl [vmem:[#allocation1 + $0x20] sm:$0xff pattern:$0x73625140]
    %v9615 = vunpack.c.l.b16 %v9609
    %v9616 = vunpack.c.l.b16 %v9613
    %v9617 = vrot.slane %v9615, 2
    %v9618 = vrot.slane %v9616, 1
    %v9619 = vsel %vm8912, %v9618, %v9617
    %v9620 = vpack.c.b16 %v9619, %v9619
    %v9622 = vsel %vm8939, %v9620, 0
    %9624 = vmatpush.bf16.msra.mxu0 0
    %9625 = vmatpush.bf16.msra.mxu0 0
    %9626 = vmatpush.bf16.msra.mxu0 0
    %9627 = vmatpush.bf16.msra.mxu0 0
    %9628 = vmatpush.bf16.msra.mxu0 %v9185
    %9629 = vmatpush.bf16.msra.mxu0 %v9184
    %9630 = vmatpush.bf16.msra.mxu0 %v9183
    %9631 = vmatpush.bf16.msra.mxu0 %v9182
    %9632 = vmatmul.bf16.gmra.mxu0 %v9622
    %v9633 = vpop.f32.mrf.mxu0
    %v9634 = vadd.f32 0.0, %v9633
    %v9635 = vpop.f32.mrf.mxu0
    %9636 = vdwg.mxu0
    %v9637 = vadd.f32 %v9607, %v9634
    %v9638 = vld [vmem:[%s8566] sm:$0x2]
    %v9639 = vld [vmem:[%s8566 + $0x8] sm:$0x2]
    %9641 = vst [vmem:[#allocation1] ss:$4 sm:$0xff] %v9638
    %v9642 = vld.sshfl [vmem:[#allocation1] sm:$0xff pattern:$0x73625140]
    %s9645 = scalar_lea.vmem [#allocation1], 32
    %9646 = vst [vmem:[%s9645] ss:$4 sm:$0xff] %v9639
    %v9647 = vld.sshfl [vmem:[#allocation1 + $0x20] sm:$0xff pattern:$0x73625140]
    %v9649 = vunpack.c.l.b16 %v9642
    %v9650 = vunpack.c.l.b16 %v9647
    %v9651 = vrot.slane %v9649, 3
    %v9652 = vrot.slane %v9650, 2
    %v9653 = vsel %vm8912, %v9652, %v9651
    %v9654 = vpack.c.b16 %v9653, %v9653
    %v9656 = vsel %vm8939, %v9654, 0
    %9658 = vmatpush.bf16.msra.mxu0 0
    %9659 = vmatpush.bf16.msra.mxu0 0
    %9660 = vmatpush.bf16.msra.mxu0 0
    %9661 = vmatpush.bf16.msra.mxu0 0
    %9662 = vmatpush.bf16.msra.mxu0 %v9252
    %9663 = vmatpush.bf16.msra.mxu0 %v9251
    %9664 = vmatpush.bf16.msra.mxu0 %v9250
    %9665 = vmatpush.bf16.msra.mxu0 %v9249
    %9666 = vmatmul.bf16.gmra.mxu0 %v9656
    %v9667 = vpop.f32.mrf.mxu0
    %v9668 = vadd.f32 0.0, %v9667
    %v9669 = vpop.f32.mrf.mxu0
    %9670 = vdwg.mxu0
    %v9671 = vadd.f32 %v9637, %v9668
    %9672 = vst [vmem:[#allocation1] ss:$4 sm:$0xff] %v9340
    %v9673 = vld.sshfl [vmem:[#allocation1] sm:$0xff pattern:$0x73625140]
    %s9675 = scalar_lea.vmem [#allocation1], 32
    %9676 = vst [vmem:[%s9675] ss:$4 sm:$0xff] %v9341
    %v9677 = vld.sshfl [vmem:[#allocation1 + $0x20] sm:$0xff pattern:$0x73625140]
    %v9679 = vunpack.c.l.b16 %v9673
    %v9680 = vunpack.c.l.b16 %v9677
    %v9681 = vrot.slane %v9679, 1
    %v9682 = vsel %vm8912, %v9680, %v9681
    %v9683 = vpack.c.b16 %v9682, %v9682
    %v9685 = vsel %vm8939, %v9683, 0
    %9687 = vmatpush.bf16.msra.mxu0 0
    %9688 = vmatpush.bf16.msra.mxu0 0
    %9689 = vmatpush.bf16.msra.mxu0 0
    %9690 = vmatpush.bf16.msra.mxu0 0
    %9691 = vmatpush.bf16.msra.mxu0 %v9318
    %9692 = vmatpush.bf16.msra.mxu0 %v9317
    %9693 = vmatpush.bf16.msra.mxu0 %v9316
    %9694 = vmatpush.bf16.msra.mxu0 %v9315
    %9695 = vmatmul.bf16.gmra.mxu0 %v9685
    %v9696 = vpop.f32.mrf.mxu0
    %v9697 = vadd.f32 0.0, %v9696
    %v9698 = vpop.f32.mrf.mxu0
    %9699 = vdwg.mxu0
    %v9700 = vadd.f32 %v9671, %v9697
    %9701 = vst [vmem:[#allocation1] ss:$4 sm:$0xff] %v9406
    %v9702 = vld.sshfl [vmem:[#allocation1] sm:$0xff pattern:$0x73625140]
    %s9704 = scalar_lea.vmem [#allocation1], 32
    %9705 = vst [vmem:[%s9704] ss:$4 sm:$0xff] %v9407
    %v9706 = vld.sshfl [vmem:[#allocation1 + $0x20] sm:$0xff pattern:$0x73625140]
    %v9708 = vunpack.c.l.b16 %v9702
    %v9709 = vunpack.c.l.b16 %v9706
    %v9710 = vrot.slane %v9708, 2
    %v9711 = vrot.slane %v9709, 1
    %v9712 = vsel %vm8912, %v9711, %v9710
    %v9713 = vpack.c.b16 %v9712, %v9712
    %v9715 = vsel %vm8939, %v9713, 0
    %9717 = vmatpush.bf16.msra.mxu0 0
    %9718 = vmatpush.bf16.msra.mxu0 0
    %9719 = vmatpush.bf16.msra.mxu0 0
    %9720 = vmatpush.bf16.msra.mxu0 0
    %9721 = vmatpush.bf16.msra.mxu0 %v9384
    %9722 = vmatpush.bf16.msra.mxu0 %v9383
    %9723 = vmatpush.bf16.msra.mxu0 %v9382
    %9724 = vmatpush.bf16.msra.mxu0 %v9381
    %9725 = vmatmul.bf16.gmra.mxu0 %v9715
    %v9726 = vpop.f32.mrf.mxu0
    %v9727 = vadd.f32 0.0, %v9726
    %v9728 = vpop.f32.mrf.mxu0
    %9729 = vdwg.mxu0
    %v9730 = vadd.f32 %v9700, %v9727
    %v9731 = vld [vmem:[%s8679] sm:$0x2]
    %v9732 = vld [vmem:[%s8679 + $0x8] sm:$0x2]
    %9734 = vst [vmem:[#allocation1] ss:$4 sm:$0xff] %v9731
    %v9735 = vld.sshfl [vmem:[#allocation1] sm:$0xff pattern:$0x73625140]
    %s9738 = scalar_lea.vmem [#allocation1], 32
    %9739 = vst [vmem:[%s9738] ss:$4 sm:$0xff] %v9732
    %v9740 = vld.sshfl [vmem:[#allocation1 + $0x20] sm:$0xff pattern:$0x73625140]
    %v9742 = vunpack.c.l.b16 %v9735
    %v9743 = vunpack.c.l.b16 %v9740
    %v9744 = vrot.slane %v9742, 3
    %v9745 = vrot.slane %v9743, 2
    %v9746 = vsel %vm8912, %v9745, %v9744
    %v9747 = vpack.c.b16 %v9746, %v9746
    %v9749 = vsel %vm8939, %v9747, 0
    %9751 = vmatpush.bf16.msra.mxu0 0
    %9752 = vmatpush.bf16.msra.mxu0 0
    %9753 = vmatpush.bf16.msra.mxu0 0
    %9754 = vmatpush.bf16.msra.mxu0 0
    %9755 = vmatpush.bf16.msra.mxu0 %v9451
    %9756 = vmatpush.bf16.msra.mxu0 %v9450
    %9757 = vmatpush.bf16.msra.mxu0 %v9449
    %9758 = vmatpush.bf16.msra.mxu0 %v9448
    %9759 = vmatmul.bf16.gmra.mxu0 %v9749
    %v9760 = vpop.f32.mrf.mxu0
    %v9761 = vadd.f32 0.0, %v9760
    %v9762 = vpop.f32.mrf.mxu0
    %9763 = vdwg.mxu0
    %v9764 = vadd.f32 %v9730, %v9761
    %v9765 = vadd.f32 %v9764, %v9475
    %v9766 = vmax.f32 %v9765, 0.0
    %v9767 = vpack.c.bf16 %v9766, %v9766
    %s9768 = scalar_lea.vmem %s7, 32
    %v9769 = vld [vmem:[%s9768] sm:$0xf]
    %v9770 = vld [vmem:[%s9768 + $0x4] sm:$0xf]
    %v9771 = vld [vmem:[%s9768 + $0x8] sm:$0xf]
    %v9772 = vld [vmem:[%s9768 + $0xc] sm:$0xf]
    %v9773 = vld [vmem:[%s9768 + $0x10] sm:$0xf]
    %v9774 = vld [vmem:[%s9768 + $0x14] sm:$0xf]
    %v9775 = vld [vmem:[%s9768 + $0x18] sm:$0xf]
    %v9776 = vld [vmem:[%s9768 + $0x1c] sm:$0xf]
    %v9785 = vunpack.c.l.b16 %v9769
    %v9786 = vunpack.c.l.b16 %v9770
    %v9787 = vunpack.c.l.b16 %v9771
    %v9788 = vunpack.c.l.b16 %v9772
    %v9789 = vunpack.c.l.b16 %v9773
    %v9790 = vunpack.c.l.b16 %v9774
    %v9791 = vunpack.c.l.b16 %v9775
    %v9792 = vunpack.c.l.b16 %v9776
    %v9793 = vpack.c.b16 %v9786, %v9785
    %v9794 = vpack.c.b16 %v9788, %v9787
    %v9795 = vpack.c.b16 %v9790, %v9789
    %v9796 = vpack.c.b16 %v9792, %v9791
    %v9802 = vsel %vm8939, %v9767, 0
    %9804 = vmatpush.bf16.msra.mxu0 0
    %9805 = vmatpush.bf16.msra.mxu0 0
    %9806 = vmatpush.bf16.msra.mxu0 0
    %9807 = vmatpush.bf16.msra.mxu0 0
    %9808 = vmatpush.bf16.msra.mxu0 %v9796
    %9809 = vmatpush.bf16.msra.mxu0 %v9795
    %9810 = vmatpush.bf16.msra.mxu0 %v9794
    %9811 = vmatpush.bf16.msra.mxu0 %v9793
    %9812 = vmatmul.bf16.gmra.mxu0 %v9802
    %v9813 = vpop.f32.mrf.mxu0
    %v9814 = vadd.f32 0.0, %v9813
    %v9815 = vpop.f32.mrf.mxu0
    %9816 = vdwg.mxu0
    %v9825 = vunpack.c.l.b16 %v9480
    %v9826 = vunpack.c.l.b16 %v9481
    %v9827 = vunpack.c.l.b16 %v9482
    %v9828 = vunpack.c.l.b16 %v9483
    %v9829 = vunpack.c.l.b16 %v9484
    %v9830 = vunpack.c.l.b16 %v9485
    %v9831 = vunpack.c.l.b16 %v9486
    %v9832 = vunpack.c.l.b16 %v9487
    %v9833 = vpack.c.b16 %v9826, %v9825
    %v9834 = vpack.c.b16 %v9828, %v9827
    %v9835 = vpack.c.b16 %v9830, %v9829
    %v9836 = vpack.c.b16 %v9832, %v9831
    %v9842 = vsel %vm8939, %v9479, 0
    %9844 = vmatpush.bf16.msra.mxu0 0
    %9845 = vmatpush.bf16.msra.mxu0 0
    %9846 = vmatpush.bf16.msra.mxu0 0
    %9847 = vmatpush.bf16.msra.mxu0 0
    %9848 = vmatpush.bf16.msra.mxu0 %v9836
    %9849 = vmatpush.bf16.msra.mxu0 %v9835
    %9850 = vmatpush.bf16.msra.mxu0 %v9834
    %9851 = vmatpush.bf16.msra.mxu0 %v9833
    %9852 = vmatmul.bf16.gmra.mxu0 %v9842
    %v9853 = vpop.f32.mrf.mxu0
    %v9854 = vadd.f32 %v9814, %v9853
    %v9855 = vpop.f32.mrf.mxu0
    %9856 = vdwg.mxu0
    %9857 = vst [vmem:[#allocation1] ss:$4 sm:$0xff] %v9141
    %v9858 = vld.sshfl [vmem:[#allocation1] sm:$0xff pattern:$0x73625140]
    %s9860 = scalar_lea.vmem [#allocation1], 32
    %9861 = vst [vmem:[%s9860] ss:$4 sm:$0xff] %v9142
    %v9862 = vld.sshfl [vmem:[#allocation1 + $0x20] sm:$0xff pattern:$0x73625140]
    %v9864 = vunpack.c.l.b16 %v9858
    %v9865 = vunpack.c.l.b16 %v9862
    %v9866 = vrot.slane %v9864, 1
    %v9867 = vsel %vm8912, %v9865, %v9866
    %v9868 = vpack.c.b16 %v9867, %v9867
    %v9870 = vsel %vm8939, %v9868, 0
    %9872 = vmatpush.bf16.msra.mxu0 0
    %9873 = vmatpush.bf16.msra.mxu0 0
    %9874 = vmatpush.bf16.msra.mxu0 0
    %9875 = vmatpush.bf16.msra.mxu0 0
    %9876 = vmatpush.bf16.msra.mxu0 %v8934
    %9877 = vmatpush.bf16.msra.mxu0 %v8933
    %9878 = vmatpush.bf16.msra.mxu0 %v8932
    %9879 = vmatpush.bf16.msra.mxu0 %v8931
    %9880 = vmatmul.bf16.gmra.mxu0 %v9870
    %v9881 = vpop.f32.mrf.mxu0
    %v9882 = vadd.f32 0.0, %v9881
    %v9883 = vpop.f32.mrf.mxu0
    %9884 = vdwg.mxu0
    %9885 = vst [vmem:[#allocation1] ss:$4 sm:$0xff] %v9075
    %v9886 = vld.sshfl [vmem:[#allocation1] sm:$0xff pattern:$0x73625140]
    %s9888 = scalar_lea.vmem [#allocation1], 32
    %9889 = vst [vmem:[%s9888] ss:$4 sm:$0xff] %v9076
    %v9890 = vld.sshfl [vmem:[#allocation1 + $0x20] sm:$0xff pattern:$0x73625140]
    %v9892 = vunpack.c.l.b16 %v9886
    %v9893 = vunpack.c.l.b16 %v9890
    %v9894 = vrot.slane %v9893, 7
    %v9895 = vsel %vm8912, %v9894, %v9892
    %v9896 = vpack.c.b16 %v9895, %v9895
    %v9898 = vsel %vm8939, %v9896, 0
    %9900 = vmatpush.bf16.msra.mxu0 0
    %9901 = vmatpush.bf16.msra.mxu0 0
    %9902 = vmatpush.bf16.msra.mxu0 0
    %9903 = vmatpush.bf16.msra.mxu0 0
    %9904 = vmatpush.bf16.msra.mxu0 %v8987
    %9905 = vmatpush.bf16.msra.mxu0 %v8986
    %9906 = vmatpush.bf16.msra.mxu0 %v8985
    %9907 = vmatpush.bf16.msra.mxu0 %v8984
    %9908 = vmatmul.bf16.gmra.mxu0 %v9898
    %v9909 = vpop.f32.mrf.mxu0
    %v9910 = vadd.f32 %v9882, %v9909
    %v9911 = vpop.f32.mrf.mxu0
    %9912 = vdwg.mxu0
    %9913 = vst [vmem:[#allocation1] ss:$4 sm:$0xff] %v9207
    %v9914 = vld.sshfl [vmem:[#allocation1] sm:$0xff pattern:$0x73625140]
    %s9916 = scalar_lea.vmem [#allocation1], 32
    %9917 = vst [vmem:[%s9916] ss:$4 sm:$0xff] %v9208
    %v9918 = vld.sshfl [vmem:[#allocation1 + $0x20] sm:$0xff pattern:$0x73625140]
    %v9920 = vunpack.c.l.b16 %v9914
    %v9921 = vunpack.c.l.b16 %v9918
    %v9922 = vrot.slane %v9920, 2
    %v9923 = vrot.slane %v9921, 1
    %v9924 = vsel %vm8912, %v9923, %v9922
    %v9925 = vpack.c.b16 %v9924, %v9924
    %v9927 = vsel %vm8939, %v9925, 0
    %9929 = vmatpush.bf16.msra.mxu0 0
    %9930 = vmatpush.bf16.msra.mxu0 0
    %9931 = vmatpush.bf16.msra.mxu0 0
    %9932 = vmatpush.bf16.msra.mxu0 0
    %9933 = vmatpush.bf16.msra.mxu0 %v9053
    %9934 = vmatpush.bf16.msra.mxu0 %v9052
    %9935 = vmatpush.bf16.msra.mxu0 %v9051
    %9936 = vmatpush.bf16.msra.mxu0 %v9050
    %9937 = vmatmul.bf16.gmra.mxu0 %v9927
    %v9938 = vpop.f32.mrf.mxu0
    %v9939 = vadd.f32 0.0, %v9938
    %v9940 = vpop.f32.mrf.mxu0
    %9941 = vdwg.mxu0
    %v9942 = vadd.f32 %v9910, %v9939
    %9943 = vst [vmem:[#allocation1] ss:$4 sm:$0xff] %v9274
    %v9944 = vld.sshfl [vmem:[#allocation1] sm:$0xff pattern:$0x73625140]
    %s9946 = scalar_lea.vmem [#allocation1], 32
    %9947 = vst [vmem:[%s9946] ss:$4 sm:$0xff] %v9275
    %v9948 = vld.sshfl [vmem:[#allocation1 + $0x20] sm:$0xff pattern:$0x73625140]
    %v9950 = vunpack.c.l.b16 %v9944
    %v9951 = vunpack.c.l.b16 %v9948
    %v9952 = vrot.slane %v9951, 7
    %v9953 = vsel %vm8912, %v9952, %v9950
    %v9954 = vpack.c.b16 %v9953, %v9953
    %v9956 = vsel %vm8939, %v9954, 0
    %9958 = vmatpush.bf16.msra.mxu0 0
    %9959 = vmatpush.bf16.msra.mxu0 0
    %9960 = vmatpush.bf16.msra.mxu0 0
    %9961 = vmatpush.bf16.msra.mxu0 0
    %9962 = vmatpush.bf16.msra.mxu0 %v9119
    %9963 = vmatpush.bf16.msra.mxu0 %v9118
    %9964 = vmatpush.bf16.msra.mxu0 %v9117
    %9965 = vmatpush.bf16.msra.mxu0 %v9116
    %9966 = vmatmul.bf16.gmra.mxu0 %v9956
    %v9967 = vpop.f32.mrf.mxu0
    %v9968 = vadd.f32 0.0, %v9967
    %v9969 = vpop.f32.mrf.mxu0
    %9970 = vdwg.mxu0
    %v9971 = vadd.f32 %v9942, %v9968
    %9972 = vst [vmem:[#allocation1] ss:$4 sm:$0xff] %v9340
    %v9973 = vld.sshfl [vmem:[#allocation1] sm:$0xff pattern:$0x73625140]
    %s9975 = scalar_lea.vmem [#allocation1], 32
    %9976 = vst [vmem:[%s9975] ss:$4 sm:$0xff] %v9341
    %v9977 = vld.sshfl [vmem:[#allocation1 + $0x20] sm:$0xff pattern:$0x73625140]
    %v9979 = vunpack.c.l.b16 %v9973
    %v9980 = vunpack.c.l.b16 %v9977
    %v9981 = vrot.slane %v9979, 1
    %v9982 = vsel %vm8912, %v9980, %v9981
    %v9983 = vpack.c.b16 %v9982, %v9982
    %v9985 = vsel %vm8939, %v9983, 0
    %9987 = vmatpush.bf16.msra.mxu0 0
    %9988 = vmatpush.bf16.msra.mxu0 0
    %9989 = vmatpush.bf16.msra.mxu0 0
    %9990 = vmatpush.bf16.msra.mxu0 0
    %9991 = vmatpush.bf16.msra.mxu0 %v9185
    %9992 = vmatpush.bf16.msra.mxu0 %v9184
    %9993 = vmatpush.bf16.msra.mxu0 %v9183
    %9994 = vmatpush.bf16.msra.mxu0 %v9182
    %9995 = vmatmul.bf16.gmra.mxu0 %v9985
    %v9996 = vpop.f32.mrf.mxu0
    %v9997 = vadd.f32 0.0, %v9996
    %v9998 = vpop.f32.mrf.mxu0
    %9999 = vdwg.mxu0
    %v10000 = vadd.f32 %v9971, %v9997
    %10001 = vst [vmem:[#allocation1] ss:$4 sm:$0xff] %v9406
    %v10002 = vld.sshfl [vmem:[#allocation1] sm:$0xff pattern:$0x73625140]
    %s10004 = scalar_lea.vmem [#allocation1], 32
    %10005 = vst [vmem:[%s10004] ss:$4 sm:$0xff] %v9407
    %v10006 = vld.sshfl [vmem:[#allocation1 + $0x20] sm:$0xff pattern:$0x73625140]
    %v10008 = vunpack.c.l.b16 %v10002
    %v10009 = vunpack.c.l.b16 %v10006
    %v10010 = vrot.slane %v10008, 2
    %v10011 = vrot.slane %v10009, 1
    %v10012 = vsel %vm8912, %v10011, %v10010
    %v10013 = vpack.c.b16 %v10012, %v10012
    %v10015 = vsel %vm8939, %v10013, 0
    %10017 = vmatpush.bf16.msra.mxu0 0
    %10018 = vmatpush.bf16.msra.mxu0 0
    %10019 = vmatpush.bf16.msra.mxu0 0
    %10020 = vmatpush.bf16.msra.mxu0 0
    %10021 = vmatpush.bf16.msra.mxu0 %v9252
    %10022 = vmatpush.bf16.msra.mxu0 %v9251
    %10023 = vmatpush.bf16.msra.mxu0 %v9250
    %10024 = vmatpush.bf16.msra.mxu0 %v9249
    %10025 = vmatmul.bf16.gmra.mxu0 %v10015
    %v10026 = vpop.f32.mrf.mxu0
    %v10027 = vadd.f32 0.0, %v10026
    %v10028 = vpop.f32.mrf.mxu0
    %10029 = vdwg.mxu0
    %v10030 = vadd.f32 %v10000, %v10027
    %v10031 = vld [vmem:[%s8792] sm:$0x1]
    %v10032 = vld [vmem:[%s8792 + $0x8] sm:$0x1]
    %10034 = vst [vmem:[#allocation1] ss:$4 sm:$0xff] %v10031
    %v10035 = vld.sshfl [vmem:[#allocation1] sm:$0xff pattern:$0x73625140]
    %s10038 = scalar_lea.vmem [#allocation1], 32
    %10039 = vst [vmem:[%s10038] ss:$4 sm:$0xff] %v10032
    %v10040 = vld.sshfl [vmem:[#allocation1 + $0x20] sm:$0xff pattern:$0x73625140]
    %v10042 = vunpack.c.l.b16 %v10035
    %v10043 = vunpack.c.l.b16 %v10040
    %v10044 = vrot.slane %v10043, 7
    %v10045 = vsel %vm8912, %v10044, %v10042
    %v10046 = vpack.c.b16 %v10045, %v10045
    %v10048 = vsel %vm8939, %v10046, 0
    %10050 = vmatpush.bf16.msra.mxu0 0
    %10051 = vmatpush.bf16.msra.mxu0 0
    %10052 = vmatpush.bf16.msra.mxu0 0
    %10053 = vmatpush.bf16.msra.mxu0 0
    %10054 = vmatpush.bf16.msra.mxu0 %v9318
    %10055 = vmatpush.bf16.msra.mxu0 %v9317
    %10056 = vmatpush.bf16.msra.mxu0 %v9316
    %10057 = vmatpush.bf16.msra.mxu0 %v9315
    %10058 = vmatmul.bf16.gmra.mxu0 %v10048
    %v10059 = vpop.f32.mrf.mxu0
    %v10060 = vadd.f32 0.0, %v10059
    %v10061 = vpop.f32.mrf.mxu0
    %10062 = vdwg.mxu0
    %v10063 = vadd.f32 %v10030, %v10060
    %v10064 = vld [vmem:[%s8792] sm:$0x1]
    %v10065 = vld [vmem:[%s8792 + $0x8] sm:$0x1]
    %10067 = vst [vmem:[#allocation1] ss:$4 sm:$0xff] %v10064
    %v10068 = vld.sshfl [vmem:[#allocation1] sm:$0xff pattern:$0x73625140]
    %s10071 = scalar_lea.vmem [#allocation1], 32
    %10072 = vst [vmem:[%s10071] ss:$4 sm:$0xff] %v10065
    %v10073 = vld.sshfl [vmem:[#allocation1 + $0x20] sm:$0xff pattern:$0x73625140]
    %v10075 = vunpack.c.l.b16 %v10068
    %v10076 = vunpack.c.l.b16 %v10073
    %v10077 = vrot.slane %v10075, 1
    %v10078 = vsel %vm8912, %v10076, %v10077
    %v10079 = vpack.c.b16 %v10078, %v10078
    %v10081 = vsel %vm8939, %v10079, 0
    %10083 = vmatpush.bf16.msra.mxu0 0
    %10084 = vmatpush.bf16.msra.mxu0 0
    %10085 = vmatpush.bf16.msra.mxu0 0
    %10086 = vmatpush.bf16.msra.mxu0 0
    %10087 = vmatpush.bf16.msra.mxu0 %v9384
    %10088 = vmatpush.bf16.msra.mxu0 %v9383
    %10089 = vmatpush.bf16.msra.mxu0 %v9382
    %10090 = vmatpush.bf16.msra.mxu0 %v9381
    %10091 = vmatmul.bf16.gmra.mxu0 %v10081
    %v10092 = vpop.f32.mrf.mxu0
    %v10093 = vadd.f32 0.0, %v10092
    %v10094 = vpop.f32.mrf.mxu0
    %10095 = vdwg.mxu0
    %v10096 = vadd.f32 %v10063, %v10093
    %v10097 = vld [vmem:[%s8792] sm:$0x2]
    %v10098 = vld [vmem:[%s8792 + $0x8] sm:$0x2]
    %10100 = vst [vmem:[#allocation1] ss:$4 sm:$0xff] %v10097
    %v10101 = vld.sshfl [vmem:[#allocation1] sm:$0xff pattern:$0x73625140]
    %s10104 = scalar_lea.vmem [#allocation1], 32
    %10105 = vst [vmem:[%s10104] ss:$4 sm:$0xff] %v10098
    %v10106 = vld.sshfl [vmem:[#allocation1 + $0x20] sm:$0xff pattern:$0x73625140]
    %v10108 = vunpack.c.l.b16 %v10101
    %v10109 = vunpack.c.l.b16 %v10106
    %v10110 = vrot.slane %v10108, 2
    %v10111 = vrot.slane %v10109, 1
    %v10112 = vsel %vm8912, %v10111, %v10110
    %v10113 = vpack.c.b16 %v10112, %v10112
    %v10115 = vsel %vm8939, %v10113, 0
    %10117 = vmatpush.bf16.msra.mxu0 0
    %10118 = vmatpush.bf16.msra.mxu0 0
    %10119 = vmatpush.bf16.msra.mxu0 0
    %10120 = vmatpush.bf16.msra.mxu0 0
    %10121 = vmatpush.bf16.msra.mxu0 %v9451
    %10122 = vmatpush.bf16.msra.mxu0 %v9450
    %10123 = vmatpush.bf16.msra.mxu0 %v9449
    %10124 = vmatpush.bf16.msra.mxu0 %v9448
    %10125 = vmatmul.bf16.gmra.mxu0 %v10115
    %v10126 = vpop.f32.mrf.mxu0
    %v10127 = vadd.f32 0.0, %v10126
    %v10128 = vpop.f32.mrf.mxu0
    %10129 = vdwg.mxu0
    %v10130 = vadd.f32 %v10096, %v10127
    %v10131 = vadd.f32 %v10130, %v9475
    %v10132 = vmax.f32 %v10131, 0.0
    %v10133 = vpack.c.bf16 %v10132, %v10132
    %s10134 = scalar_lea.vmem %s7, 64
    %v10135 = vld [vmem:[%s10134] sm:$0xf]
    %v10136 = vld [vmem:[%s10134 + $0x4] sm:$0xf]
    %v10137 = vld [vmem:[%s10134 + $0x8] sm:$0xf]
    %v10138 = vld [vmem:[%s10134 + $0xc] sm:$0xf]
    %v10139 = vld [vmem:[%s10134 + $0x10] sm:$0xf]
    %v10140 = vld [vmem:[%s10134 + $0x14] sm:$0xf]
    %v10141 = vld [vmem:[%s10134 + $0x18] sm:$0xf]
    %v10142 = vld [vmem:[%s10134 + $0x1c] sm:$0xf]
    %v10151 = vunpack.c.l.b16 %v10135
    %v10152 = vunpack.c.l.b16 %v10136
    %v10153 = vunpack.c.l.b16 %v10137
    %v10154 = vunpack.c.l.b16 %v10138
    %v10155 = vunpack.c.l.b16 %v10139
    %v10156 = vunpack.c.l.b16 %v10140
    %v10157 = vunpack.c.l.b16 %v10141
    %v10158 = vunpack.c.l.b16 %v10142
    %v10159 = vpack.c.b16 %v10152, %v10151
    %v10160 = vpack.c.b16 %v10154, %v10153
    %v10161 = vpack.c.b16 %v10156, %v10155
    %v10162 = vpack.c.b16 %v10158, %v10157
    %v10168 = vsel %vm8939, %v10133, 0
    %10170 = vmatpush.bf16.msra.mxu0 0
    %10171 = vmatpush.bf16.msra.mxu0 0
    %10172 = vmatpush.bf16.msra.mxu0 0
    %10173 = vmatpush.bf16.msra.mxu0 0
    %10174 = vmatpush.bf16.msra.mxu0 %v10162
    %10175 = vmatpush.bf16.msra.mxu0 %v10161
    %10176 = vmatpush.bf16.msra.mxu0 %v10160
    %10177 = vmatpush.bf16.msra.mxu0 %v10159
    %10178 = vmatmul.bf16.gmra.mxu0 %v10168
    %v10179 = vpop.f32.mrf.mxu0
    %v10180 = vadd.f32 0.0, %v10179
    %v10181 = vpop.f32.mrf.mxu0
    %10182 = vdwg.mxu0
    %v10183 = vadd.f32 %v9854, %v10180
    %10184 = vst [vmem:[#allocation1] ss:$4 sm:$0xff] %v9207
    %v10185 = vld.sshfl [vmem:[#allocation1] sm:$0xff pattern:$0x73625140]
    %s10187 = scalar_lea.vmem [#allocation1], 32
    %10188 = vst [vmem:[%s10187] ss:$4 sm:$0xff] %v9208
    %v10189 = vld.sshfl [vmem:[#allocation1 + $0x20] sm:$0xff pattern:$0x73625140]
    %v10191 = vunpack.c.l.b16 %v10185
    %v10192 = vunpack.c.l.b16 %v10189
    %v10193 = vrot.slane %v10191, 2
    %v10194 = vrot.slane %v10192, 1
    %v10195 = vsel %vm8912, %v10194, %v10193
    %v10196 = vpack.c.b16 %v10195, %v10195
    %v10198 = vsel %vm8939, %v10196, 0
    %10200 = vmatpush.bf16.msra.mxu0 0
    %10201 = vmatpush.bf16.msra.mxu0 0
    %10202 = vmatpush.bf16.msra.mxu0 0
    %10203 = vmatpush.bf16.msra.mxu0 0
    %10204 = vmatpush.bf16.msra.mxu0 %v8934
    %10205 = vmatpush.bf16.msra.mxu0 %v8933
    %10206 = vmatpush.bf16.msra.mxu0 %v8932
    %10207 = vmatpush.bf16.msra.mxu0 %v8931
    %10208 = vmatmul.bf16.gmra.mxu0 %v10198
    %v10209 = vpop.f32.mrf.mxu0
    %v10210 = vadd.f32 0.0, %v10209
    %v10211 = vpop.f32.mrf.mxu0
    %10212 = vdwg.mxu0
    %10213 = vst [vmem:[#allocation1] ss:$4 sm:$0xff] %v9141
    %v10214 = vld.sshfl [vmem:[#allocation1] sm:$0xff pattern:$0x73625140]
    %s10216 = scalar_lea.vmem [#allocation1], 32
    %10217 = vst [vmem:[%s10216] ss:$4 sm:$0xff] %v9142
    %v10218 = vld.sshfl [vmem:[#allocation1 + $0x20] sm:$0xff pattern:$0x73625140]
    %v10220 = vunpack.c.l.b16 %v10214
    %v10221 = vunpack.c.l.b16 %v10218
    %v10222 = vrot.slane %v10220, 1
    %v10223 = vsel %vm8912, %v10221, %v10222
    %v10224 = vpack.c.b16 %v10223, %v10223
    %v10226 = vsel %vm8939, %v10224, 0
    %10228 = vmatpush.bf16.msra.mxu0 0
    %10229 = vmatpush.bf16.msra.mxu0 0
    %10230 = vmatpush.bf16.msra.mxu0 0
    %10231 = vmatpush.bf16.msra.mxu0 0
    %10232 = vmatpush.bf16.msra.mxu0 %v8987
    %10233 = vmatpush.bf16.msra.mxu0 %v8986
    %10234 = vmatpush.bf16.msra.mxu0 %v8985
    %10235 = vmatpush.bf16.msra.mxu0 %v8984
    %10236 = vmatmul.bf16.gmra.mxu0 %v10226
    %v10237 = vpop.f32.mrf.mxu0
    %v10238 = vadd.f32 %v10210, %v10237
    %v10239 = vpop.f32.mrf.mxu0
    %10240 = vdwg.mxu0
    %10241 = vst [vmem:[#allocation1] ss:$4 sm:$0xff] %v9638
    %v10242 = vld.sshfl [vmem:[#allocation1] sm:$0xff pattern:$0x73625140]
    %s10244 = scalar_lea.vmem [#allocation1], 32
    %10245 = vst [vmem:[%s10244] ss:$4 sm:$0xff] %v9639
    %v10246 = vld.sshfl [vmem:[#allocation1 + $0x20] sm:$0xff pattern:$0x73625140]
    %v10248 = vunpack.c.l.b16 %v10242
    %v10249 = vunpack.c.l.b16 %v10246
    %v10250 = vrot.slane %v10248, 3
    %v10251 = vrot.slane %v10249, 2
    %v10252 = vsel %vm8912, %v10251, %v10250
    %v10253 = vpack.c.b16 %v10252, %v10252
    %v10255 = vsel %vm8939, %v10253, 0
    %10257 = vmatpush.bf16.msra.mxu0 0
    %10258 = vmatpush.bf16.msra.mxu0 0
    %10259 = vmatpush.bf16.msra.mxu0 0
    %10260 = vmatpush.bf16.msra.mxu0 0
    %10261 = vmatpush.bf16.msra.mxu0 %v9053
    %10262 = vmatpush.bf16.msra.mxu0 %v9052
    %10263 = vmatpush.bf16.msra.mxu0 %v9051
    %10264 = vmatpush.bf16.msra.mxu0 %v9050
    %10265 = vmatmul.bf16.gmra.mxu0 %v10255
    %v10266 = vpop.f32.mrf.mxu0
    %v10267 = vadd.f32 0.0, %v10266
    %v10268 = vpop.f32.mrf.mxu0
    %10269 = vdwg.mxu0
    %v10270 = vadd.f32 %v10238, %v10267
    %10271 = vst [vmem:[#allocation1] ss:$4 sm:$0xff] %v9340
    %v10272 = vld.sshfl [vmem:[#allocation1] sm:$0xff pattern:$0x73625140]
    %s10274 = scalar_lea.vmem [#allocation1], 32
    %10275 = vst [vmem:[%s10274] ss:$4 sm:$0xff] %v9341
    %v10276 = vld.sshfl [vmem:[#allocation1 + $0x20] sm:$0xff pattern:$0x73625140]
    %v10278 = vunpack.c.l.b16 %v10272
    %v10279 = vunpack.c.l.b16 %v10276
    %v10280 = vrot.slane %v10278, 1
    %v10281 = vsel %vm8912, %v10279, %v10280
    %v10282 = vpack.c.b16 %v10281, %v10281
    %v10284 = vsel %vm8939, %v10282, 0
    %10286 = vmatpush.bf16.msra.mxu0 0
    %10287 = vmatpush.bf16.msra.mxu0 0
    %10288 = vmatpush.bf16.msra.mxu0 0
    %10289 = vmatpush.bf16.msra.mxu0 0
    %10290 = vmatpush.bf16.msra.mxu0 %v9119
    %10291 = vmatpush.bf16.msra.mxu0 %v9118
    %10292 = vmatpush.bf16.msra.mxu0 %v9117
    %10293 = vmatpush.bf16.msra.mxu0 %v9116
    %10294 = vmatmul.bf16.gmra.mxu0 %v10284
    %v10295 = vpop.f32.mrf.mxu0
    %v10296 = vadd.f32 0.0, %v10295
    %v10297 = vpop.f32.mrf.mxu0
    %10298 = vdwg.mxu0
    %v10299 = vadd.f32 %v10270, %v10296
    %10300 = vst [vmem:[#allocation1] ss:$4 sm:$0xff] %v9406
    %v10301 = vld.sshfl [vmem:[#allocation1] sm:$0xff pattern:$0x73625140]
    %s10303 = scalar_lea.vmem [#allocation1], 32
    %10304 = vst [vmem:[%s10303] ss:$4 sm:$0xff] %v9407
    %v10305 = vld.sshfl [vmem:[#allocation1 + $0x20] sm:$0xff pattern:$0x73625140]
    %v10307 = vunpack.c.l.b16 %v10301
    %v10308 = vunpack.c.l.b16 %v10305
    %v10309 = vrot.slane %v10307, 2
    %v10310 = vrot.slane %v10308, 1
    %v10311 = vsel %vm8912, %v10310, %v10309
    %v10312 = vpack.c.b16 %v10311, %v10311
    %v10314 = vsel %vm8939, %v10312, 0
    %10316 = vmatpush.bf16.msra.mxu0 0
    %10317 = vmatpush.bf16.msra.mxu0 0
    %10318 = vmatpush.bf16.msra.mxu0 0
    %10319 = vmatpush.bf16.msra.mxu0 0
    %10320 = vmatpush.bf16.msra.mxu0 %v9185
    %10321 = vmatpush.bf16.msra.mxu0 %v9184
    %10322 = vmatpush.bf16.msra.mxu0 %v9183
    %10323 = vmatpush.bf16.msra.mxu0 %v9182
    %10324 = vmatmul.bf16.gmra.mxu0 %v10314
    %v10325 = vpop.f32.mrf.mxu0
    %v10326 = vadd.f32 0.0, %v10325
    %v10327 = vpop.f32.mrf.mxu0
    %10328 = vdwg.mxu0
    %v10329 = vadd.f32 %v10299, %v10326
    %10330 = vst [vmem:[#allocation1] ss:$4 sm:$0xff] %v9731
    %v10331 = vld.sshfl [vmem:[#allocation1] sm:$0xff pattern:$0x73625140]
    %s10333 = scalar_lea.vmem [#allocation1], 32
    %10334 = vst [vmem:[%s10333] ss:$4 sm:$0xff] %v9732
    %v10335 = vld.sshfl [vmem:[#allocation1 + $0x20] sm:$0xff pattern:$0x73625140]
    %v10337 = vunpack.c.l.b16 %v10331
    %v10338 = vunpack.c.l.b16 %v10335
    %v10339 = vrot.slane %v10337, 3
    %v10340 = vrot.slane %v10338, 2
    %v10341 = vsel %vm8912, %v10340, %v10339
    %v10342 = vpack.c.b16 %v10341, %v10341
    %v10344 = vsel %vm8939, %v10342, 0
    %10346 = vmatpush.bf16.msra.mxu0 0
    %10347 = vmatpush.bf16.msra.mxu0 0
    %10348 = vmatpush.bf16.msra.mxu0 0
    %10349 = vmatpush.bf16.msra.mxu0 0
    %10350 = vmatpush.bf16.msra.mxu0 %v9252
    %10351 = vmatpush.bf16.msra.mxu0 %v9251
    %10352 = vmatpush.bf16.msra.mxu0 %v9250
    %10353 = vmatpush.bf16.msra.mxu0 %v9249
    %10354 = vmatmul.bf16.gmra.mxu0 %v10344
    %v10355 = vpop.f32.mrf.mxu0
    %v10356 = vadd.f32 0.0, %v10355
    %v10357 = vpop.f32.mrf.mxu0
    %10358 = vdwg.mxu0
    %v10359 = vadd.f32 %v10329, %v10356
    %10360 = vst [vmem:[#allocation1] ss:$4 sm:$0xff] %v10064
    %v10361 = vld.sshfl [vmem:[#allocation1] sm:$0xff pattern:$0x73625140]
    %s10363 = scalar_lea.vmem [#allocation1], 32
    %10364 = vst [vmem:[%s10363] ss:$4 sm:$0xff] %v10065
    %v10365 = vld.sshfl [vmem:[#allocation1 + $0x20] sm:$0xff pattern:$0x73625140]
    %v10367 = vunpack.c.l.b16 %v10361
    %v10368 = vunpack.c.l.b16 %v10365
    %v10369 = vrot.slane %v10367, 1
    %v10370 = vsel %vm8912, %v10368, %v10369
    %v10371 = vpack.c.b16 %v10370, %v10370
    %v10373 = vsel %vm8939, %v10371, 0
    %10375 = vmatpush.bf16.msra.mxu0 0
    %10376 = vmatpush.bf16.msra.mxu0 0
    %10377 = vmatpush.bf16.msra.mxu0 0
    %10378 = vmatpush.bf16.msra.mxu0 0
    %10379 = vmatpush.bf16.msra.mxu0 %v9318
    %10380 = vmatpush.bf16.msra.mxu0 %v9317
    %10381 = vmatpush.bf16.msra.mxu0 %v9316
    %10382 = vmatpush.bf16.msra.mxu0 %v9315
    %10383 = vmatmul.bf16.gmra.mxu0 %v10373
    %v10384 = vpop.f32.mrf.mxu0
    %v10385 = vadd.f32 0.0, %v10384
    %v10386 = vpop.f32.mrf.mxu0
    %10387 = vdwg.mxu0
    %v10388 = vadd.f32 %v10359, %v10385
    %10389 = vst [vmem:[#allocation1] ss:$4 sm:$0xff] %v10097
    %v10390 = vld.sshfl [vmem:[#allocation1] sm:$0xff pattern:$0x73625140]
    %s10392 = scalar_lea.vmem [#allocation1], 32
    %10393 = vst [vmem:[%s10392] ss:$4 sm:$0xff] %v10098
    %v10394 = vld.sshfl [vmem:[#allocation1 + $0x20] sm:$0xff pattern:$0x73625140]
    %v10396 = vunpack.c.l.b16 %v10390
    %v10397 = vunpack.c.l.b16 %v10394
    %v10398 = vrot.slane %v10396, 2
    %v10399 = vrot.slane %v10397, 1
    %v10400 = vsel %vm8912, %v10399, %v10398
    %v10401 = vpack.c.b16 %v10400, %v10400
    %v10403 = vsel %vm8939, %v10401, 0
    %10405 = vmatpush.bf16.msra.mxu0 0
    %10406 = vmatpush.bf16.msra.mxu0 0
    %10407 = vmatpush.bf16.msra.mxu0 0
    %10408 = vmatpush.bf16.msra.mxu0 0
    %10409 = vmatpush.bf16.msra.mxu0 %v9384
    %10410 = vmatpush.bf16.msra.mxu0 %v9383
    %10411 = vmatpush.bf16.msra.mxu0 %v9382
    %10412 = vmatpush.bf16.msra.mxu0 %v9381
    %10413 = vmatmul.bf16.gmra.mxu0 %v10403
    %v10414 = vpop.f32.mrf.mxu0
    %v10415 = vadd.f32 0.0, %v10414
    %v10416 = vpop.f32.mrf.mxu0
    %10417 = vdwg.mxu0
    %v10418 = vadd.f32 %v10388, %v10415
    %v10419 = vld [vmem:[%s8792] sm:$0x2]
    %v10420 = vld [vmem:[%s8792 + $0x8] sm:$0x2]
    %10422 = vst [vmem:[#allocation1] ss:$4 sm:$0xff] %v10419
    %v10423 = vld.sshfl [vmem:[#allocation1] sm:$0xff pattern:$0x73625140]
    %s10426 = scalar_lea.vmem [#allocation1], 32
    %10427 = vst [vmem:[%s10426] ss:$4 sm:$0xff] %v10420
    %v10428 = vld.sshfl [vmem:[#allocation1 + $0x20] sm:$0xff pattern:$0x73625140]
    %v10430 = vunpack.c.l.b16 %v10423
    %v10431 = vunpack.c.l.b16 %v10428
    %v10432 = vrot.slane %v10430, 3
    %v10433 = vrot.slane %v10431, 2
    %v10434 = vsel %vm8912, %v10433, %v10432
    %v10435 = vpack.c.b16 %v10434, %v10434
    %v10437 = vsel %vm8939, %v10435, 0
    %10439 = vmatpush.bf16.msra.mxu0 0
    %10440 = vmatpush.bf16.msra.mxu0 0
    %10441 = vmatpush.bf16.msra.mxu0 0
    %10442 = vmatpush.bf16.msra.mxu0 0
    %10443 = vmatpush.bf16.msra.mxu0 %v9451
    %10444 = vmatpush.bf16.msra.mxu0 %v9450
    %10445 = vmatpush.bf16.msra.mxu0 %v9449
    %10446 = vmatpush.bf16.msra.mxu0 %v9448
    %10447 = vmatmul.bf16.gmra.mxu0 %v10437
    %v10448 = vpop.f32.mrf.mxu0
    %v10449 = vadd.f32 0.0, %v10448
    %v10450 = vpop.f32.mrf.mxu0
    %10451 = vdwg.mxu0
    %v10452 = vadd.f32 %v10418, %v10449
    %v10453 = vadd.f32 %v10452, %v9475
    %v10454 = vmax.f32 %v10453, 0.0
    %v10455 = vpack.c.bf16 %v10454, %v10454
    %s10456 = scalar_lea.vmem %s7, 96
    %v10457 = vld [vmem:[%s10456] sm:$0xf]
    %v10458 = vld [vmem:[%s10456 + $0x4] sm:$0xf]
    %v10459 = vld [vmem:[%s10456 + $0x8] sm:$0xf]
    %v10460 = vld [vmem:[%s10456 + $0xc] sm:$0xf]
    %v10461 = vld [vmem:[%s10456 + $0x10] sm:$0xf]
    %v10462 = vld [vmem:[%s10456 + $0x14] sm:$0xf]
    %v10463 = vld [vmem:[%s10456 + $0x18] sm:$0xf]
    %v10464 = vld [vmem:[%s10456 + $0x1c] sm:$0xf]
    %v10473 = vunpack.c.l.b16 %v10457
    %v10474 = vunpack.c.l.b16 %v10458
    %v10475 = vunpack.c.l.b16 %v10459
    %v10476 = vunpack.c.l.b16 %v10460
    %v10477 = vunpack.c.l.b16 %v10461
    %v10478 = vunpack.c.l.b16 %v10462
    %v10479 = vunpack.c.l.b16 %v10463
    %v10480 = vunpack.c.l.b16 %v10464
    %v10481 = vpack.c.b16 %v10474, %v10473
    %v10482 = vpack.c.b16 %v10476, %v10475
    %v10483 = vpack.c.b16 %v10478, %v10477
    %v10484 = vpack.c.b16 %v10480, %v10479
    %v10490 = vsel %vm8939, %v10455, 0
    %10492 = vmatpush.bf16.msra.mxu0 0
    %10493 = vmatpush.bf16.msra.mxu0 0
    %10494 = vmatpush.bf16.msra.mxu0 0
    %10495 = vmatpush.bf16.msra.mxu0 0
    %10496 = vmatpush.bf16.msra.mxu0 %v10484
    %10497 = vmatpush.bf16.msra.mxu0 %v10483
    %10498 = vmatpush.bf16.msra.mxu0 %v10482
    %10499 = vmatpush.bf16.msra.mxu0 %v10481
    %10500 = vmatmul.bf16.gmra.mxu0 %v10490
    %v10501 = vpop.f32.mrf.mxu0
    %v10502 = vadd.f32 0.0, %v10501
    %v10503 = vpop.f32.mrf.mxu0
    %10504 = vdwg.mxu0
    %v10505 = vadd.f32 %v10183, %v10502
    %v10506 = vld [vmem:[%s8] sm:$0x1]
    %v10508 = vperm.slane %v10506, 0
    %v10510 = vadd.f32 %v10505, %v10508
    %v10511 = vmax.f32 %v10510, 0.0
    %v10512 = vpack.c.bf16 %v10511, %v10511
    %v10513 = vld [vmem:[%s9] sm:$0xf]
    %v10514 = vld [vmem:[%s9 + $0x4] sm:$0xf]
    %v10515 = vld [vmem:[%s9 + $0x8] sm:$0xf]
    %v10516 = vld [vmem:[%s9 + $0xc] sm:$0xf]
    %v10517 = vld [vmem:[%s9 + $0x10] sm:$0xf]
    %v10518 = vld [vmem:[%s9 + $0x14] sm:$0xf]
    %v10519 = vld [vmem:[%s9 + $0x18] sm:$0xf]
    %v10520 = vld [vmem:[%s9 + $0x1c] sm:$0xf]
    %v10521 = vld [vmem:[%s10] sm:$0x1]
    %v10523 = vperm.slane %v10521, 0
    %v10533 = vunpack.c.l.b16 %v10513
    %v10534 = vunpack.c.l.b16 %v10514
    %v10535 = vunpack.c.l.b16 %v10515
    %v10536 = vunpack.c.l.b16 %v10516
    %v10537 = vunpack.c.l.b16 %v10517
    %v10538 = vunpack.c.l.b16 %v10518
    %v10539 = vunpack.c.l.b16 %v10519
    %v10540 = vunpack.c.l.b16 %v10520
    %v10541 = vpack.c.b16 %v10534, %v10533
    %v10542 = vpack.c.b16 %v10536, %v10535
    %v10543 = vpack.c.b16 %v10538, %v10537
    %v10544 = vpack.c.b16 %v10540, %v10539
    %v10550 = vsel %vm8939, %v10512, 0
    %10552 = vmatpush.bf16.msra.mxu0 0
    %10553 = vmatpush.bf16.msra.mxu0 0
    %10554 = vmatpush.bf16.msra.mxu0 0
    %10555 = vmatpush.bf16.msra.mxu0 0
    %10556 = vmatpush.bf16.msra.mxu0 %v10544
    %10557 = vmatpush.bf16.msra.mxu0 %v10543
    %10558 = vmatpush.bf16.msra.mxu0 %v10542
    %10559 = vmatpush.bf16.msra.mxu0 %v10541
    %10560 = vmatmul.bf16.gmra.mxu0 %v10550
    %v10561 = vpop.f32.mrf.mxu0
    %v10562 = vadd.f32 %v10523, %v10561
    %v10563 = vpop.f32.mrf.mxu0
    %10564 = vdwg.mxu0
    %10565 = vst [vmem:[#allocation4] sm:$0x3] %v10562
    // Predicated region
    $region46: #{convnet_forward.1} parent=1 // pred_check
      _
    $region47: #{convnet_forward.1} parent=1 // pred_check_branch
      %10567 = sbr.rel (0) target = $region49
    $region48: #{convnet_forward.1} parent=1 // pred_region
      %10569 = vsyncadd [#allocation5], 0
      %s10571 = sshll.u32 [#allocation4], 4
      %s10572 = int_to_ptr.vmem [resolvable:$true] %s10571
      %s10573 = sshll.u32 %s11, 4
      %s10574 = int_to_ptr.hbm [resolvable:$true] %s10573
      %10576 = dma.vmem_to_hbm [thread:$0]  %s10572, 32, %s10574, [#allocation5]
    $region49: #{convnet_forward.1} parent=1 // pred_fallthru
      _
    // Predicated region
    $region50: #{convnet_forward.1} parent=1 // pred_check
      _
    $region51: #{convnet_forward.1} parent=1 // pred_check_branch
      %10578 = sbr.rel (0) target = $region53
    $region52: #{convnet_forward.1} parent=1 // pred_region
      %10580 = dma.done [#allocation5], 32
    $region53: #{convnet_forward.1} parent=1 // pred_fallthru
      _
    %10581 = vsyncpa [#allocation5], 1

</llo_original>
